<compile_context>
chip_gen: v7x
topology: tpu7x:2x2x1
jax: 0.10.0
libtpu: 0.0.40
codegen_flags: <defaults>
</compile_context>

<pallas_src>
import functools

import jax
import jax.numpy as jnp
from jax import lax
from jax.experimental import pallas as pl
from jax.experimental.pallas import tpu as pltpu


# ----------------------------------------------------------------------------
# Fused kernel: expand -> depthwise -> SE -> project -> (+residual)
# ----------------------------------------------------------------------------
def _mbconv_fused_kernel(
    x_ref, w_exp_ref, b_exp_ref,
    w_dw_ref, b_dw_ref,
    w1_ref, b1_ref, w2_ref, b2_ref,
    wp_ref, bp_ref,
    o_ref,
    pad_ref, h2_ref,
    *, D, H, W, K, LW, use_residual):
    f32 = jnp.float32
    pad = (K - 1) // 2
    HW = H * W
    P = D * HW
    hidden = w_exp_ref.shape[0]
    Dp = D + 2 * pad
    w_off = pad * W + pad          # interior lane offset inside a padded slab row

    # ---- stage 1: 1x1x1 expand conv (BN scale pre-folded) + bias + ReLU6 -----------
    x = x_ref[0]                                                   # (C, P), P on lanes
    h = jnp.dot(w_exp_ref[...], x, preferred_element_type=f32)     # (hidden, P)
    h = jnp.clip(h + b_exp_ref[...], 0.0, 6.0)

    # ---- build the halo-padded activation volume in VMEM ---------------------------
    # Per depth slab the (H+2p, W) plane is flattened onto LANES (+ 2p guard cells at
    # the tail); channels sit on sublanes.  Interior slab rows are assembled in
    # registers (interior placed at lane offset w_off via roll; halo lanes zero) and
    # stored with ONE full-width unmasked vst; only the 2*pad depth-halo slabs get
    # explicit zero stores (halo-only zeroing).  Rewritten every grid step.
    zero_row = jnp.zeros((hidden, LW), f32)
    for dd in range(pad):
        pad_ref[dd] = zero_row
        pad_ref[Dp - 1 - dd] = zero_row
    zpad = jnp.zeros((hidden, LW - HW), f32)
    for d in range(D):
        h_slab = h[:, d * HW:(d + 1) * HW]                         # (hidden, HW)
        pad_ref[pad + d] = pltpu.roll(
            jnp.concatenate([h_slab, zpad], axis=-1), w_off, axis=1)

    # ---- stage 2: KxKxK depthwise conv (BN scale folded per-tap) + bias + ReLU6 ----
    # Tap (kd,kh,kw) of output slab d reads the padded slab d+kd shifted by the
    # constant lane offset kh*W+kw -> pltpu.roll (XLU).  W-boundary wrap-around is
    # removed with one lane mask per kw.  Weights / masks hoisted out of the loop.
    wdw = [[[w_dw_ref[(kd * K + kh) * K + kw]                       # (hidden, 1)
             for kw in range(K)] for kh in range(K)] for kd in range(K)]
    b_dw = b_dw_ref[...]                                            # (hidden, 1)

    col = lax.broadcasted_iota(jnp.int32, (1, LW), 1) % W           # output w-column
    kw_masks = []
    for kw in range(K):
        lo, hi = pad - kw, W + pad - kw
        if lo > 0 or hi < W:
            kw_masks.append(
                jnp.logical_and(col >= max(lo, 0), col < min(hi, W)).astype(f32))
        else:
            kw_masks.append(None)                                   # kw == pad: all valid

    pooled = jnp.zeros((hidden, 1), f32)     # incremental SE pooling accumulator
    for d in range(D):                       # static D -> fully unrolled
        slabs = [pad_ref[d + kd] for kd in range(K)]                # K x (hidden, LW)
        acc = jnp.zeros((hidden, LW), f32)
        for kw in range(K):
            part = jnp.zeros((hidden, LW), f32)
            for kd in range(K):
                for kh in range(K):
                    off = kh * W + kw
                    tap = slabs[kd] if off == 0 else pltpu.roll(
                        slabs[kd], LW - off, axis=1)                # == shift by -off
                    part = part + tap * wdw[kd][kh][kw]
            acc = acc + (part if kw_masks[kw] is None else part * kw_masks[kw])
        h2_slab = jnp.clip(acc[:, :HW] + b_dw, 0.0, 6.0)            # (hidden, HW)
        h2_ref[:, d * HW:(d + 1) * HW] = h2_slab
        pooled = pooled + jnp.sum(h2_slab, axis=1, keepdims=True)

    # ---- stage 3: squeeze-excite (tiny FCs as elementwise-mul + reduce) ------------
    pooled = pooled * (1.0 / P)                                               # (hidden, 1)
    z = jnp.sum(w1_ref[...] * pooled, axis=0, keepdims=True) + b1_ref[...]    # (1, cr)
    z = jnp.maximum(z, 0.0)
    se = jax.nn.sigmoid(
        jnp.sum(w2_ref[...] * z, axis=1, keepdims=True) + b2_ref[...])        # (hidden, 1)

    # ---- stage 4 (+5): 1x1x1 project conv (BN scale pre-folded) + bias (+residual) -
    h2s = h2_ref[...] * se                                                    # (hidden, P)
    y = jnp.dot(wp_ref[...], h2s, preferred_element_type=f32) + bp_ref[...]   # (Cout, P)
    if use_residual:
        y = y + x
    o_ref[0] = y                       # lane-dense (Cout, P) store (P multiple of 128)


# ----------------------------------------------------------------------------
# Wrapper: BN folding, lane-dense layout, pallas_call
# ----------------------------------------------------------------------------
def mbconv_block3d_forward(x_ncdhw, params, *, in_channels, out_channels,
                           stride=1, kernel_size=3):
    assert stride == 1, "stride=1 path implemented (the residual branch)"
    assert kernel_size % 2 == 1
    use_residual = (stride == 1) and (in_channels == out_channels)
    N, C, D, H, W = x_ncdhw.shape
    K = kernel_size
    pad = (K - 1) // 2
    HW = H * W
    P = D * HW
    hidden = params["w_exp"].shape[1]
    cr = params["w1"].shape[1]
    Cout = params["w_proj"].shape[1]

    # Lane width of one padded depth-slab row: flattened (H+2p, W) plane + 2p guard
    # cells, rounded up to a full 128-lane tile.
    Rp = HW + 2 * pad * W + 2 * pad
    LW = ((Rp + 127) // 128) * 128
    Dp = D + 2 * pad
    f32 = jnp.float32

    # ---- fold BN scales into the conv weights (kernel keeps only the bias adds) ----
    w_exp_k = (params["w_exp"] * params["s_exp"]).astype(f32).T          # (hidden, C)
    b_exp_k = params["b_exp"].astype(f32).reshape(hidden, 1)
    w_dw_k = (params["w_dw"] * params["s_dw"][0]).astype(f32).reshape(K * K * K, hidden, 1)
    b_dw_k = params["b_dw"].astype(f32).reshape(hidden, 1)
    w1_k = params["w1"].astype(f32)                                      # (hidden, cr)
    b1_k = params["b1"].astype(f32)                                      # (1, cr)
    w2_k = params["w2"].astype(f32).T                                    # (hidden, cr)
    b2_k = params["b2"].astype(f32).reshape(hidden, 1)
    wp_k = (params["w_proj"] * params["s_proj"]).astype(f32).T           # (Cout, hidden)
    bp_k = params["b_proj"].astype(f32).reshape(Cout, 1)

    # Lane-dense input: pure reshape of NCDHW (no transpose).
    x_flat = x_ncdhw.astype(f32).reshape(N, C, P)

    kern = functools.partial(_mbconv_fused_kernel, D=D, H=H, W=W, K=K, LW=LW,
                             use_residual=use_residual)
    bc2 = lambda n: (0, 0)
    bc3 = lambda n: (0, 0, 0)

    y_flat = pl.pallas_call(
        kern,
        out_shape=jax.ShapeDtypeStruct((N, Cout, P), f32),
        grid=(N,),
        in_specs=[
            pl.BlockSpec((1, C, P), lambda n: (n, 0, 0)),      # x  (channels, spatial-on-lanes)
            pl.BlockSpec((hidden, C), bc2),                    # expand weight (BN-folded)
            pl.BlockSpec((hidden, 1), bc2),                    # expand BN bias
            pl.BlockSpec((K * K * K, hidden, 1), bc3),         # depthwise taps (BN-folded)
            pl.BlockSpec((hidden, 1), bc2),                    # depthwise BN bias
            pl.BlockSpec((hidden, cr), bc2),                   # SE fc1 weight
            pl.BlockSpec((1, cr), bc2),                        # SE fc1 bias
            pl.BlockSpec((hidden, cr), bc2),                   # SE fc2 weight (transposed)
            pl.BlockSpec((hidden, 1), bc2),                    # SE fc2 bias
            pl.BlockSpec((Cout, hidden), bc2),                 # project weight (BN-folded)
            pl.BlockSpec((Cout, 1), bc2),                      # project BN bias
        ],
        out_specs=pl.BlockSpec((1, Cout, P), lambda n: (n, 0, 0)),
        scratch_shapes=[
            pltpu.VMEM((Dp, hidden, LW), f32),                 # halo-padded activation
            pltpu.VMEM((hidden, P), f32),                      # depthwise output
        ],
        compiler_params=pltpu.CompilerParams(
            dimension_semantics=("parallel",),                 # batch axis across TCs
            vmem_limit_bytes=32 * 1024 * 1024,                 # far above ~0.2 MiB footprint
        ),
    )(x_flat, w_exp_k, b_exp_k, w_dw_k, b_dw_k,
      w1_k, b1_k, w2_k, b2_k, wp_k, bp_k)

    # Pure reshape back to NCDHW (no transpose).
    return y_flat.reshape(N, Cout, D, H, W)


# ----------------------------------------------------------------------------
# Parameter construction (deterministic, mirrors the PyTorch module's shapes)
# ----------------------------------------------------------------------------
def fold_bn(gamma, beta, mean, var, eps=1e-5):
    scale = gamma / jnp.sqrt(var + eps)
    bias = beta - mean * scale
    return scale[None, :], bias[None, :]


def make_params(key, in_channels, out_channels, expansion_ratio, kernel_size,
                reduction_ratio_se):
    hidden = int(in_channels * expansion_ratio)
    cr = hidden // reduction_ratio_se
    ks = jax.random.split(key, 16)
    p = {}
    # expand conv: torch weight (hidden, in, 1,1,1) -> (in, hidden)
    p["w_exp"] = 0.2 * jax.random.normal(ks[0], (in_channels, hidden), jnp.float32)
    p["s_exp"], p["b_exp"] = fold_bn(
        1.0 + 0.1 * jax.random.normal(ks[1], (hidden,)),
        0.1 * jax.random.normal(ks[2], (hidden,)),
        0.05 * jax.random.normal(ks[3], (hidden,)),
        1.0 + 0.1 * jax.random.uniform(ks[4], (hidden,)))
    # depthwise conv: torch weight (hidden, 1, K, K, K) -> (K, K, K, hidden)
    p["w_dw"] = 0.2 * jax.random.normal(
        ks[5], (kernel_size, kernel_size, kernel_size, hidden), jnp.float32)
    p["s_dw"], p["b_dw"] = fold_bn(
        1.0 + 0.1 * jax.random.normal(ks[6], (hidden,)),
        0.1 * jax.random.normal(ks[7], (hidden,)),
        0.05 * jax.random.normal(ks[8], (hidden,)),
        1.0 + 0.1 * jax.random.uniform(ks[9], (hidden,)))
    # SE: fc1 (hidden -> hidden//r), fc2 (hidden//r -> hidden), both with bias
    p["w1"] = 0.2 * jax.random.normal(ks[10], (hidden, cr), jnp.float32)
    p["b1"] = 0.1 * jax.random.normal(ks[11], (1, cr), jnp.float32)
    p["w2"] = 0.2 * jax.random.normal(ks[12], (cr, hidden), jnp.float32)
    p["b2"] = 0.1 * jax.random.normal(ks[13], (1, hidden), jnp.float32)
    # project conv: torch weight (out, hidden, 1,1,1) -> (hidden, out)
    p["w_proj"] = 0.2 * jax.random.normal(ks[14], (hidden, out_channels), jnp.float32)
    p["s_proj"], p["b_proj"] = fold_bn(
        1.0 + 0.1 * jax.random.normal(ks[15], (out_channels,)),
        jnp.zeros((out_channels,)),
        jnp.zeros((out_channels,)),
        jnp.ones((out_channels,)))
    return p, hidden


# ----------------------------------------------------------------------------
# Pure-JAX reference for verification (uses the UNfolded BN params)
# ----------------------------------------------------------------------------
def reference_forward(x_ncdhw, params, *, kernel_size=3, use_residual=True):
    N, C, D, H, W = x_ncdhw.shape
    x = jnp.transpose(x_ncdhw, (0, 2, 3, 4, 1)).astype(jnp.float32)
    h = jnp.einsum("ndhwc,ce->ndhwe", x, params["w_exp"])
    h = jnp.clip(h * params["s_exp"][0] + params["b_exp"][0], 0.0, 6.0)
    pad = (kernel_size - 1) // 2
    hp = jnp.pad(h, ((0, 0), (pad, pad), (pad, pad), (pad, pad), (0, 0)))
    acc = jnp.zeros_like(h)
    for kd in range(kernel_size):
        for kh in range(kernel_size):
            for kw in range(kernel_size):
                acc = acc + hp[:, kd:kd + D, kh:kh + H, kw:kw + W, :] * params["w_dw"][kd, kh, kw]
    h2 = jnp.clip(acc * params["s_dw"][0] + params["b_dw"][0], 0.0, 6.0)
    pooled = jnp.mean(h2, axis=(1, 2, 3))                     # (N, Ch)
    z = jnp.maximum(pooled @ params["w1"] + params["b1"][0], 0.0)
    s = jax.nn.sigmoid(z @ params["w2"] + params["b2"][0])
    h3 = h2 * s[:, None, None, None, :]
    y = jnp.einsum("ndhwc,co->ndhwo", h3, params["w_proj"])
    y = y * params["s_proj"][0] + params["b_proj"][0]
    if use_residual:
        y = y + x
    return jnp.transpose(y, (0, 4, 1, 2, 3))


if __name__ == "__main__":
    # Small shapes consistent with the module:
    # batch=2, in_channels=out_channels=4, D=H=W=8, expansion=6 -> hidden=24, SE r=4.
    N, Cin, Cout, D, H, W = 2, 4, 4, 8, 8, 8
    key = jax.random.PRNGKey(0)
    kx, kp = jax.random.split(key)
    x = jax.random.normal(kx, (N, Cin, D, H, W), jnp.float32)

    params, hidden = make_params(kp, Cin, Cout, expansion_ratio=6,
                                 kernel_size=3, reduction_ratio_se=4)

    out = mbconv_block3d_forward(x, params, in_channels=Cin, out_channels=Cout,
                                 stride=1, kernel_size=3)
    out = jax.block_until_ready(out)

    ref = reference_forward(x, params, kernel_size=3, use_residual=True)
    assert out.shape == (N, Cout, D, H, W)
    err = float(jnp.max(jnp.abs(out - ref)))
    assert jnp.allclose(out, ref, atol=5e-4, rtol=5e-4), err

    # TODO(synk): training-mode BatchNorm (batch statistics + running-stat update)
    # is not reproduced; BN is folded to inference-mode scale/bias.
    print("KERNEL_OK")
</pallas_src>

<mosaic_0001>
module attributes {stable_mosaic.version = 11 : i64} {
  func.func @_mbconv_fused_kernel(%arg0: i32, %arg1: memref<1x4x512xf32, #tpu.memory_space<vmem>>, %arg2: memref<24x4xf32, #tpu.memory_space<vmem>>, %arg3: memref<24x1xf32, #tpu.memory_space<vmem>>, %arg4: memref<27x24x1xf32, #tpu.memory_space<vmem>>, %arg5: memref<24x1xf32, #tpu.memory_space<vmem>>, %arg6: memref<24x6xf32, #tpu.memory_space<vmem>>, %arg7: memref<1x6xf32, #tpu.memory_space<vmem>>, %arg8: memref<24x6xf32, #tpu.memory_space<vmem>>, %arg9: memref<24x1xf32, #tpu.memory_space<vmem>>, %arg10: memref<4x24xf32, #tpu.memory_space<vmem>>, %arg11: memref<4x1xf32, #tpu.memory_space<vmem>>, %arg12: memref<1x4x512xf32, #tpu.memory_space<vmem>>, %arg13: memref<10x24x128xf32, #tpu.memory_space<vmem>>, %arg14: memref<24x512xf32, #tpu.memory_space<vmem>>) attributes {dimension_semantics = [#tpu.dimension_semantics<parallel>], iteration_bounds = array<i64: 2>, scalar_prefetch = 0 : i64, scratch_operands = 2 : i64, tpu.core_type = #tpu.core_type<tc>, window_params = [{transform_indices = @transform_0, window_bounds = array<i64: 1, 4, 512>}, {pipeline_mode = #tpu.pipeline_mode<synchronous>, transform_indices = @transform_1, window_bounds = array<i64: 24, 4>}, {pipeline_mode = #tpu.pipeline_mode<synchronous>, transform_indices = @transform_2, window_bounds = array<i64: 24, 1>}, {pipeline_mode = #tpu.pipeline_mode<synchronous>, transform_indices = @transform_3, window_bounds = array<i64: 27, 24, 1>}, {pipeline_mode = #tpu.pipeline_mode<synchronous>, transform_indices = @transform_4, window_bounds = array<i64: 24, 1>}, {pipeline_mode = #tpu.pipeline_mode<synchronous>, transform_indices = @transform_5, window_bounds = array<i64: 24, 6>}, {pipeline_mode = #tpu.pipeline_mode<synchronous>, transform_indices = @transform_6, window_bounds = array<i64: 1, 6>}, {pipeline_mode = #tpu.pipeline_mode<synchronous>, transform_indices = @transform_7, window_bounds = array<i64: 24, 6>}, {pipeline_mode = #tpu.pipeline_mode<synchronous>, transform_indices = @transform_8, window_bounds = array<i64: 24, 1>}, {pipeline_mode = #tpu.pipeline_mode<synchronous>, transform_indices = @transform_9, window_bounds = array<i64: 4, 24>}, {pipeline_mode = #tpu.pipeline_mode<synchronous>, transform_indices = @transform_10, window_bounds = array<i64: 4, 1>}, {transform_indices = @transform_11, window_bounds = array<i64: 1, 4, 512>}]} {
    %c0 = arith.constant 0 : index
    %c0_0 = arith.constant 0 : index
    %c0_1 = arith.constant 0 : index
    %0 = vector.load %arg1[%c0, %c0_0, %c0_1] : memref<1x4x512xf32, #tpu.memory_space<vmem>>, vector<1x4x512xf32>
    %1 = vector.shape_cast %0 : vector<1x4x512xf32> to vector<4x512xf32>
    %c0_2 = arith.constant 0 : index
    %c0_3 = arith.constant 0 : index
    %2 = vector.load %arg2[%c0_2, %c0_3] : memref<24x4xf32, #tpu.memory_space<vmem>>, vector<24x4xf32>
    %cst = arith.constant dense<0.000000e+00> : vector<24x512xf32>
    %3 = tpu.matmul %2, %1, %cst {dimension_numbers = #tpu.dot_dimension_numbers<[1], [0], [0], [1], [0, 0, 1, 1], [], []>} : vector<24x4xf32>, vector<4x512xf32>, vector<24x512xf32> -> vector<24x512xf32>
    %c0_4 = arith.constant 0 : index
    %c0_5 = arith.constant 0 : index
    %4 = vector.load %arg3[%c0_4, %c0_5] : memref<24x1xf32, #tpu.memory_space<vmem>>, vector<24x1xf32>
    %5 = vector.broadcast %4 : vector<24x1xf32> to vector<24x512xf32>
    %6 = arith.addf %3, %5 : vector<24x512xf32>
    %cst_6 = arith.constant 0.000000e+00 : f32
    %cst_7 = arith.constant 6.000000e+00 : f32
    %7 = vector.broadcast %cst_6 : f32 to vector<24x512xf32>
    %8 = arith.maximumf %7, %6 : vector<24x512xf32>
    %9 = vector.broadcast %cst_7 : f32 to vector<24x512xf32>
    %10 = arith.minimumf %9, %8 : vector<24x512xf32>
    %cst_8 = arith.constant 0.000000e+00 : f32
    %11 = vector.broadcast %cst_8 : f32 to vector<24x128xf32>
    %c0_9 = arith.constant 0 : index
    %c0_10 = arith.constant 0 : index
    %c0_11 = arith.constant 0 : index
    %12 = vector.load %arg13[%c0_9, %c0_10, %c0_11] : memref<10x24x128xf32, #tpu.memory_space<vmem>>, vector<1x24x128xf32>
    %13 = vector.shape_cast %12 : vector<1x24x128xf32> to vector<24x128xf32>
    %14 = vector.shape_cast %11 : vector<24x128xf32> to vector<1x24x128xf32>
    tpu.vector_store %arg13[%c0_9, %c0_10, %c0_11], %14 {strides = array<i32>} : memref<10x24x128xf32, #tpu.memory_space<vmem>>, vector<1x24x128xf32>,
    %c9 = arith.constant 9 : index
    %c0_12 = arith.constant 0 : index
    %c0_13 = arith.constant 0 : index
    %15 = vector.load %arg13[%c9, %c0_12, %c0_13] : memref<10x24x128xf32, #tpu.memory_space<vmem>>, vector<1x24x128xf32>
    %16 = vector.shape_cast %15 : vector<1x24x128xf32> to vector<24x128xf32>
    %17 = vector.shape_cast %11 : vector<24x128xf32> to vector<1x24x128xf32>
    tpu.vector_store %arg13[%c9, %c0_12, %c0_13], %17 {strides = array<i32>} : memref<10x24x128xf32, #tpu.memory_space<vmem>>, vector<1x24x128xf32>,
    %cst_14 = arith.constant 0.000000e+00 : f32
    %18 = vector.broadcast %cst_14 : f32 to vector<24x64xf32>
    %19 = vector.extract_strided_slice %10 {offsets = [0, 0], sizes = [24, 64], strides = [1, 1]} : vector<24x512xf32> to vector<24x64xf32>
    %20 = tpu.concatenate %19, %18 in 1 : vector<24x64xf32>, vector<24x64xf32> -> vector<24x128xf32>
    %c9_i32 = arith.constant 9 : i32
    %21 = tpu.dynamic_rotate %20 by %c9_i32 dim 1 : vector<24x128xf32>, i32 -> vector<24x128xf32>
    %c1 = arith.constant 1 : index
    %c0_15 = arith.constant 0 : index
    %c0_16 = arith.constant 0 : index
    %22 = vector.load %arg13[%c1, %c0_15, %c0_16] : memref<10x24x128xf32, #tpu.memory_space<vmem>>, vector<1x24x128xf32>
    %23 = vector.shape_cast %22 : vector<1x24x128xf32> to vector<24x128xf32>
    %24 = vector.shape_cast %21 : vector<24x128xf32> to vector<1x24x128xf32>
    tpu.vector_store %arg13[%c1, %c0_15, %c0_16], %24 {strides = array<i32>} : memref<10x24x128xf32, #tpu.memory_space<vmem>>, vector<1x24x128xf32>,
    %25 = vector.extract_strided_slice %10 {offsets = [0, 64], sizes = [24, 64], strides = [1, 1]} : vector<24x512xf32> to vector<24x64xf32>
    %26 = tpu.concatenate %25, %18 in 1 : vector<24x64xf32>, vector<24x64xf32> -> vector<24x128xf32>
    %c9_i32_17 = arith.constant 9 : i32
    %27 = tpu.dynamic_rotate %26 by %c9_i32_17 dim 1 : vector<24x128xf32>, i32 -> vector<24x128xf32>
    %c2 = arith.constant 2 : index
    %c0_18 = arith.constant 0 : index
    %c0_19 = arith.constant 0 : index
    %28 = vector.load %arg13[%c2, %c0_18, %c0_19] : memref<10x24x128xf32, #tpu.memory_space<vmem>>, vector<1x24x128xf32>
    %29 = vector.shape_cast %28 : vector<1x24x128xf32> to vector<24x128xf32>
    %30 = vector.shape_cast %27 : vector<24x128xf32> to vector<1x24x128xf32>
    tpu.vector_store %arg13[%c2, %c0_18, %c0_19], %30 {strides = array<i32>} : memref<10x24x128xf32, #tpu.memory_space<vmem>>, vector<1x24x128xf32>,
    %31 = vector.extract_strided_slice %10 {offsets = [0, 128], sizes = [24, 64], strides = [1, 1]} : vector<24x512xf32> to vector<24x64xf32>
    %32 = tpu.concatenate %31, %18 in 1 : vector<24x64xf32>, vector<24x64xf32> -> vector<24x128xf32>
    %c9_i32_20 = arith.constant 9 : i32
    %33 = tpu.dynamic_rotate %32 by %c9_i32_20 dim 1 : vector<24x128xf32>, i32 -> vector<24x128xf32>
    %c3 = arith.constant 3 : index
    %c0_21 = arith.constant 0 : index
    %c0_22 = arith.constant 0 : index
    %34 = vector.load %arg13[%c3, %c0_21, %c0_22] : memref<10x24x128xf32, #tpu.memory_space<vmem>>, vector<1x24x128xf32>
    %35 = vector.shape_cast %34 : vector<1x24x128xf32> to vector<24x128xf32>
    %36 = vector.shape_cast %33 : vector<24x128xf32> to vector<1x24x128xf32>
    tpu.vector_store %arg13[%c3, %c0_21, %c0_22], %36 {strides = array<i32>} : memref<10x24x128xf32, #tpu.memory_space<vmem>>, vector<1x24x128xf32>,
    %37 = vector.extract_strided_slice %10 {offsets = [0, 192], sizes = [24, 64], strides = [1, 1]} : vector<24x512xf32> to vector<24x64xf32>
    %38 = tpu.concatenate %37, %18 in 1 : vector<24x64xf32>, vector<24x64xf32> -> vector<24x128xf32>
    %c9_i32_23 = arith.constant 9 : i32
    %39 = tpu.dynamic_rotate %38 by %c9_i32_23 dim 1 : vector<24x128xf32>, i32 -> vector<24x128xf32>
    %c4 = arith.constant 4 : index
    %c0_24 = arith.constant 0 : index
    %c0_25 = arith.constant 0 : index
    %40 = vector.load %arg13[%c4, %c0_24, %c0_25] : memref<10x24x128xf32, #tpu.memory_space<vmem>>, vector<1x24x128xf32>
    %41 = vector.shape_cast %40 : vector<1x24x128xf32> to vector<24x128xf32>
    %42 = vector.shape_cast %39 : vector<24x128xf32> to vector<1x24x128xf32>
    tpu.vector_store %arg13[%c4, %c0_24, %c0_25], %42 {strides = array<i32>} : memref<10x24x128xf32, #tpu.memory_space<vmem>>, vector<1x24x128xf32>,
    %43 = vector.extract_strided_slice %10 {offsets = [0, 256], sizes = [24, 64], strides = [1, 1]} : vector<24x512xf32> to vector<24x64xf32>
    %44 = tpu.concatenate %43, %18 in 1 : vector<24x64xf32>, vector<24x64xf32> -> vector<24x128xf32>
    %c9_i32_26 = arith.constant 9 : i32
    %45 = tpu.dynamic_rotate %44 by %c9_i32_26 dim 1 : vector<24x128xf32>, i32 -> vector<24x128xf32>
    %c5 = arith.constant 5 : index
    %c0_27 = arith.constant 0 : index
    %c0_28 = arith.constant 0 : index
    %46 = vector.load %arg13[%c5, %c0_27, %c0_28] : memref<10x24x128xf32, #tpu.memory_space<vmem>>, vector<1x24x128xf32>
    %47 = vector.shape_cast %46 : vector<1x24x128xf32> to vector<24x128xf32>
    %48 = vector.shape_cast %45 : vector<24x128xf32> to vector<1x24x128xf32>
    tpu.vector_store %arg13[%c5, %c0_27, %c0_28], %48 {strides = array<i32>} : memref<10x24x128xf32, #tpu.memory_space<vmem>>, vector<1x24x128xf32>,
    %49 = vector.extract_strided_slice %10 {offsets = [0, 320], sizes = [24, 64], strides = [1, 1]} : vector<24x512xf32> to vector<24x64xf32>
    %50 = tpu.concatenate %49, %18 in 1 : vector<24x64xf32>, vector<24x64xf32> -> vector<24x128xf32>
    %c9_i32_29 = arith.constant 9 : i32
    %51 = tpu.dynamic_rotate %50 by %c9_i32_29 dim 1 : vector<24x128xf32>, i32 -> vector<24x128xf32>
    %c6 = arith.constant 6 : index
    %c0_30 = arith.constant 0 : index
    %c0_31 = arith.constant 0 : index
    %52 = vector.load %arg13[%c6, %c0_30, %c0_31] : memref<10x24x128xf32, #tpu.memory_space<vmem>>, vector<1x24x128xf32>
    %53 = vector.shape_cast %52 : vector<1x24x128xf32> to vector<24x128xf32>
    %54 = vector.shape_cast %51 : vector<24x128xf32> to vector<1x24x128xf32>
    tpu.vector_store %arg13[%c6, %c0_30, %c0_31], %54 {strides = array<i32>} : memref<10x24x128xf32, #tpu.memory_space<vmem>>, vector<1x24x128xf32>,
    %55 = vector.extract_strided_slice %10 {offsets = [0, 384], sizes = [24, 64], strides = [1, 1]} : vector<24x512xf32> to vector<24x64xf32>
    %56 = tpu.concatenate %55, %18 in 1 : vector<24x64xf32>, vector<24x64xf32> -> vector<24x128xf32>
    %c9_i32_32 = arith.constant 9 : i32
    %57 = tpu.dynamic_rotate %56 by %c9_i32_32 dim 1 : vector<24x128xf32>, i32 -> vector<24x128xf32>
    %c7 = arith.constant 7 : index
    %c0_33 = arith.constant 0 : index
    %c0_34 = arith.constant 0 : index
    %58 = vector.load %arg13[%c7, %c0_33, %c0_34] : memref<10x24x128xf32, #tpu.memory_space<vmem>>, vector<1x24x128xf32>
    %59 = vector.shape_cast %58 : vector<1x24x128xf32> to vector<24x128xf32>
    %60 = vector.shape_cast %57 : vector<24x128xf32> to vector<1x24x128xf32>
    tpu.vector_store %arg13[%c7, %c0_33, %c0_34], %60 {strides = array<i32>} : memref<10x24x128xf32, #tpu.memory_space<vmem>>, vector<1x24x128xf32>,
    %61 = vector.extract_strided_slice %10 {offsets = [0, 448], sizes = [24, 64], strides = [1, 1]} : vector<24x512xf32> to vector<24x64xf32>
    %62 = tpu.concatenate %61, %18 in 1 : vector<24x64xf32>, vector<24x64xf32> -> vector<24x128xf32>
    %c9_i32_35 = arith.constant 9 : i32
    %63 = tpu.dynamic_rotate %62 by %c9_i32_35 dim 1 : vector<24x128xf32>, i32 -> vector<24x128xf32>
    %c8 = arith.constant 8 : index
    %c0_36 = arith.constant 0 : index
    %c0_37 = arith.constant 0 : index
    %64 = vector.load %arg13[%c8, %c0_36, %c0_37] : memref<10x24x128xf32, #tpu.memory_space<vmem>>, vector<1x24x128xf32>
    %65 = vector.shape_cast %64 : vector<1x24x128xf32> to vector<24x128xf32>
    %66 = vector.shape_cast %63 : vector<24x128xf32> to vector<1x24x128xf32>
    tpu.vector_store %arg13[%c8, %c0_36, %c0_37], %66 {strides = array<i32>} : memref<10x24x128xf32, #tpu.memory_space<vmem>>, vector<1x24x128xf32>,
    %c0_38 = arith.constant 0 : index
    %c0_39 = arith.constant 0 : index
    %c0_40 = arith.constant 0 : index
    %67 = vector.load %arg4[%c0_38, %c0_39, %c0_40] : memref<27x24x1xf32, #tpu.memory_space<vmem>>, vector<1x24x1xf32>
    %68 = vector.shape_cast %67 : vector<1x24x1xf32> to vector<24x1xf32>
    %c1_41 = arith.constant 1 : index
    %c0_42 = arith.constant 0 : index
    %c0_43 = arith.constant 0 : index
    %69 = vector.load %arg4[%c1_41, %c0_42, %c0_43] : memref<27x24x1xf32, #tpu.memory_space<vmem>>, vector<1x24x1xf32>
    %70 = vector.shape_cast %69 : vector<1x24x1xf32> to vector<24x1xf32>
    %c2_44 = arith.constant 2 : index
    %c0_45 = arith.constant 0 : index
    %c0_46 = arith.constant 0 : index
    %71 = vector.load %arg4[%c2_44, %c0_45, %c0_46] : memref<27x24x1xf32, #tpu.memory_space<vmem>>, vector<1x24x1xf32>
    %72 = vector.shape_cast %71 : vector<1x24x1xf32> to vector<24x1xf32>
    %c3_47 = arith.constant 3 : index
    %c0_48 = arith.constant 0 : index
    %c0_49 = arith.constant 0 : index
    %73 = vector.load %arg4[%c3_47, %c0_48, %c0_49] : memref<27x24x1xf32, #tpu.memory_space<vmem>>, vector<1x24x1xf32>
    %74 = vector.shape_cast %73 : vector<1x24x1xf32> to vector<24x1xf32>
    %c4_50 = arith.constant 4 : index
    %c0_51 = arith.constant 0 : index
    %c0_52 = arith.constant 0 : index
    %75 = vector.load %arg4[%c4_50, %c0_51, %c0_52] : memref<27x24x1xf32, #tpu.memory_space<vmem>>, vector<1x24x1xf32>
    %76 = vector.shape_cast %75 : vector<1x24x1xf32> to vector<24x1xf32>
    %c5_53 = arith.constant 5 : index
    %c0_54 = arith.constant 0 : index
    %c0_55 = arith.constant 0 : index
    %77 = vector.load %arg4[%c5_53, %c0_54, %c0_55] : memref<27x24x1xf32, #tpu.memory_space<vmem>>, vector<1x24x1xf32>
    %78 = vector.shape_cast %77 : vector<1x24x1xf32> to vector<24x1xf32>
    %c6_56 = arith.constant 6 : index
    %c0_57 = arith.constant 0 : index
    %c0_58 = arith.constant 0 : index
    %79 = vector.load %arg4[%c6_56, %c0_57, %c0_58] : memref<27x24x1xf32, #tpu.memory_space<vmem>>, vector<1x24x1xf32>
    %80 = vector.shape_cast %79 : vector<1x24x1xf32> to vector<24x1xf32>
    %c7_59 = arith.constant 7 : index
    %c0_60 = arith.constant 0 : index
    %c0_61 = arith.constant 0 : index
    %81 = vector.load %arg4[%c7_59, %c0_60, %c0_61] : memref<27x24x1xf32, #tpu.memory_space<vmem>>, vector<1x24x1xf32>
    %82 = vector.shape_cast %81 : vector<1x24x1xf32> to vector<24x1xf32>
    %c8_62 = arith.constant 8 : index
    %c0_63 = arith.constant 0 : index
    %c0_64 = arith.constant 0 : index
    %83 = vector.load %arg4[%c8_62, %c0_63, %c0_64] : memref<27x24x1xf32, #tpu.memory_space<vmem>>, vector<1x24x1xf32>
    %84 = vector.shape_cast %83 : vector<1x24x1xf32> to vector<24x1xf32>
    %c9_65 = arith.constant 9 : index
    %c0_66 = arith.constant 0 : index
    %c0_67 = arith.constant 0 : index
    %85 = vector.load %arg4[%c9_65, %c0_66, %c0_67] : memref<27x24x1xf32, #tpu.memory_space<vmem>>, vector<1x24x1xf32>
    %86 = vector.shape_cast %85 : vector<1x24x1xf32> to vector<24x1xf32>
    %c10 = arith.constant 10 : index
    %c0_68 = arith.constant 0 : index
    %c0_69 = arith.constant 0 : index
    %87 = vector.load %arg4[%c10, %c0_68, %c0_69] : memref<27x24x1xf32, #tpu.memory_space<vmem>>, vector<1x24x1xf32>
    %88 = vector.shape_cast %87 : vector<1x24x1xf32> to vector<24x1xf32>
    %c11 = arith.constant 11 : index
    %c0_70 = arith.constant 0 : index
    %c0_71 = arith.constant 0 : index
    %89 = vector.load %arg4[%c11, %c0_70, %c0_71] : memref<27x24x1xf32, #tpu.memory_space<vmem>>, vector<1x24x1xf32>
    %90 = vector.shape_cast %89 : vector<1x24x1xf32> to vector<24x1xf32>
    %c12 = arith.constant 12 : index
    %c0_72 = arith.constant 0 : index
    %c0_73 = arith.constant 0 : index
    %91 = vector.load %arg4[%c12, %c0_72, %c0_73] : memref<27x24x1xf32, #tpu.memory_space<vmem>>, vector<1x24x1xf32>
    %92 = vector.shape_cast %91 : vector<1x24x1xf32> to vector<24x1xf32>
    %c13 = arith.constant 13 : index
    %c0_74 = arith.constant 0 : index
    %c0_75 = arith.constant 0 : index
    %93 = vector.load %arg4[%c13, %c0_74, %c0_75] : memref<27x24x1xf32, #tpu.memory_space<vmem>>, vector<1x24x1xf32>
    %94 = vector.shape_cast %93 : vector<1x24x1xf32> to vector<24x1xf32>
    %c14 = arith.constant 14 : index
    %c0_76 = arith.constant 0 : index
    %c0_77 = arith.constant 0 : index
    %95 = vector.load %arg4[%c14, %c0_76, %c0_77] : memref<27x24x1xf32, #tpu.memory_space<vmem>>, vector<1x24x1xf32>
    %96 = vector.shape_cast %95 : vector<1x24x1xf32> to vector<24x1xf32>
    %c15 = arith.constant 15 : index
    %c0_78 = arith.constant 0 : index
    %c0_79 = arith.constant 0 : index
    %97 = vector.load %arg4[%c15, %c0_78, %c0_79] : memref<27x24x1xf32, #tpu.memory_space<vmem>>, vector<1x24x1xf32>
    %98 = vector.shape_cast %97 : vector<1x24x1xf32> to vector<24x1xf32>
    %c16 = arith.constant 16 : index
    %c0_80 = arith.constant 0 : index
    %c0_81 = arith.constant 0 : index
    %99 = vector.load %arg4[%c16, %c0_80, %c0_81] : memref<27x24x1xf32, #tpu.memory_space<vmem>>, vector<1x24x1xf32>
    %100 = vector.shape_cast %99 : vector<1x24x1xf32> to vector<24x1xf32>
    %c17 = arith.constant 17 : index
    %c0_82 = arith.constant 0 : index
    %c0_83 = arith.constant 0 : index
    %101 = vector.load %arg4[%c17, %c0_82, %c0_83] : memref<27x24x1xf32, #tpu.memory_space<vmem>>, vector<1x24x1xf32>
    %102 = vector.shape_cast %101 : vector<1x24x1xf32> to vector<24x1xf32>
    %c18 = arith.constant 18 : index
    %c0_84 = arith.constant 0 : index
    %c0_85 = arith.constant 0 : index
    %103 = vector.load %arg4[%c18, %c0_84, %c0_85] : memref<27x24x1xf32, #tpu.memory_space<vmem>>, vector<1x24x1xf32>
    %104 = vector.shape_cast %103 : vector<1x24x1xf32> to vector<24x1xf32>
    %c19 = arith.constant 19 : index
    %c0_86 = arith.constant 0 : index
    %c0_87 = arith.constant 0 : index
    %105 = vector.load %arg4[%c19, %c0_86, %c0_87] : memref<27x24x1xf32, #tpu.memory_space<vmem>>, vector<1x24x1xf32>
    %106 = vector.shape_cast %105 : vector<1x24x1xf32> to vector<24x1xf32>
    %c20 = arith.constant 20 : index
    %c0_88 = arith.constant 0 : index
    %c0_89 = arith.constant 0 : index
    %107 = vector.load %arg4[%c20, %c0_88, %c0_89] : memref<27x24x1xf32, #tpu.memory_space<vmem>>, vector<1x24x1xf32>
    %108 = vector.shape_cast %107 : vector<1x24x1xf32> to vector<24x1xf32>
    %c21 = arith.constant 21 : index
    %c0_90 = arith.constant 0 : index
    %c0_91 = arith.constant 0 : index
    %109 = vector.load %arg4[%c21, %c0_90, %c0_91] : memref<27x24x1xf32, #tpu.memory_space<vmem>>, vector<1x24x1xf32>
    %110 = vector.shape_cast %109 : vector<1x24x1xf32> to vector<24x1xf32>
    %c22 = arith.constant 22 : index
    %c0_92 = arith.constant 0 : index
    %c0_93 = arith.constant 0 : index
    %111 = vector.load %arg4[%c22, %c0_92, %c0_93] : memref<27x24x1xf32, #tpu.memory_space<vmem>>, vector<1x24x1xf32>
    %112 = vector.shape_cast %111 : vector<1x24x1xf32> to vector<24x1xf32>
    %c23 = arith.constant 23 : index
    %c0_94 = arith.constant 0 : index
    %c0_95 = arith.constant 0 : index
    %113 = vector.load %arg4[%c23, %c0_94, %c0_95] : memref<27x24x1xf32, #tpu.memory_space<vmem>>, vector<1x24x1xf32>
    %114 = vector.shape_cast %113 : vector<1x24x1xf32> to vector<24x1xf32>
    %c24 = arith.constant 24 : index
    %c0_96 = arith.constant 0 : index
    %c0_97 = arith.constant 0 : index
    %115 = vector.load %arg4[%c24, %c0_96, %c0_97] : memref<27x24x1xf32, #tpu.memory_space<vmem>>, vector<1x24x1xf32>
    %116 = vector.shape_cast %115 : vector<1x24x1xf32> to vector<24x1xf32>
    %c25 = arith.constant 25 : index
    %c0_98 = arith.constant 0 : index
    %c0_99 = arith.constant 0 : index
    %117 = vector.load %arg4[%c25, %c0_98, %c0_99] : memref<27x24x1xf32, #tpu.memory_space<vmem>>, vector<1x24x1xf32>
    %118 = vector.shape_cast %117 : vector<1x24x1xf32> to vector<24x1xf32>
    %c26 = arith.constant 26 : index
    %c0_100 = arith.constant 0 : index
    %c0_101 = arith.constant 0 : index
    %119 = vector.load %arg4[%c26, %c0_100, %c0_101] : memref<27x24x1xf32, #tpu.memory_space<vmem>>, vector<1x24x1xf32>
    %120 = vector.shape_cast %119 : vector<1x24x1xf32> to vector<24x1xf32>
    %c0_102 = arith.constant 0 : index
    %c0_103 = arith.constant 0 : index
    %121 = vector.load %arg5[%c0_102, %c0_103] : memref<24x1xf32, #tpu.memory_space<vmem>>, vector<24x1xf32>
    %122 = tpu.iota {dimensions = array<i32: 1>} : vector<1x128xi32>
    %c8_i32 = arith.constant 8 : i32
    %c0_i32 = arith.constant 0 : i32
    %123 = arith.cmpi eq, %c8_i32, %c0_i32 : i32
    %c1_i32 = arith.constant 1 : i32
    %124 = arith.select %123, %c1_i32, %c8_i32 : i32
    %125 = vector.broadcast %124 : i32 to vector<1x128xi32>
    %126 = arith.remsi %122, %125 : vector<1x128xi32>
    %c0_i32_104 = arith.constant 0 : i32
    %127 = vector.broadcast %c0_i32_104 : i32 to vector<1x128xi32>
    %128 = arith.cmpi ne, %126, %127 : vector<1x128xi32>
    %c0_i32_105 = arith.constant 0 : i32
    %129 = vector.broadcast %c0_i32_105 : i32 to vector<1x128xi32>
    %130 = arith.cmpi slt, %126, %129 : vector<1x128xi32>
    %c0_i32_106 = arith.constant 0 : i32
    %131 = arith.cmpi slt, %124, %c0_i32_106 : i32
    %132 = vector.broadcast %131 : i1 to vector<1x128xi1>
    %133 = vector.broadcast %132 : vector<1x128xi1> to vector<1x128xi1>
    %134 = arith.xori %130, %133 : vector<1x128xi1>
    %135 = arith.andi %134, %128 : vector<1x128xi1>
    %136 = vector.broadcast %124 : i32 to vector<1x128xi32>
    %137 = arith.addi %126, %136 : vector<1x128xi32>
    %138 = arith.select %135, %137, %126 : vector<1x128xi1>, vector<1x128xi32>
    %c1_i32_107 = arith.constant 1 : i32
    %139 = vector.broadcast %c1_i32_107 : i32 to vector<1x128xi32>
    %140 = arith.cmpi sge, %138, %139 : vector<1x128xi32>
    %c8_i32_108 = arith.constant 8 : i32
    %141 = vector.broadcast %c8_i32_108 : i32 to vector<1x128xi32>
    %142 = arith.cmpi slt, %138, %141 : vector<1x128xi32>
    %143 = arith.andi %140, %142 : vector<1x128xi1>
    %144 = arith.extui %143 : vector<1x128xi1> to vector<1x128xi32>
    %145 = arith.sitofp %144 : vector<1x128xi32> to vector<1x128xf32>
    %c0_i32_109 = arith.constant 0 : i32
    %146 = vector.broadcast %c0_i32_109 : i32 to vector<1x128xi32>
    %147 = arith.cmpi sge, %138, %146 : vector<1x128xi32>
    %c7_i32 = arith.constant 7 : i32
    %148 = vector.broadcast %c7_i32 : i32 to vector<1x128xi32>
    %149 = arith.cmpi slt, %138, %148 : vector<1x128xi32>
    %150 = arith.andi %147, %149 : vector<1x128xi1>
    %151 = arith.extui %150 : vector<1x128xi1> to vector<1x128xi32>
    %152 = arith.sitofp %151 : vector<1x128xi32> to vector<1x128xf32>
    %cst_110 = arith.constant 0.000000e+00 : f32
    %153 = vector.broadcast %cst_110 : f32 to vector<24x1xf32>
    %c0_111 = arith.constant 0 : index
    %c0_112 = arith.constant 0 : index
    %c0_113 = arith.constant 0 : index
    %154 = vector.load %arg13[%c0_111, %c0_112, %c0_113] : memref<10x24x128xf32, #tpu.memory_space<vmem>>, vector<1x24x128xf32>
    %155 = vector.shape_cast %154 : vector<1x24x128xf32> to vector<24x128xf32>
    %c1_114 = arith.constant 1 : index
    %c0_115 = arith.constant 0 : index
    %c0_116 = arith.constant 0 : index
    %156 = vector.load %arg13[%c1_114, %c0_115, %c0_116] : memref<10x24x128xf32, #tpu.memory_space<vmem>>, vector<1x24x128xf32>
    %157 = vector.shape_cast %156 : vector<1x24x128xf32> to vector<24x128xf32>
    %c2_117 = arith.constant 2 : index
    %c0_118 = arith.constant 0 : index
    %c0_119 = arith.constant 0 : index
    %158 = vector.load %arg13[%c2_117, %c0_118, %c0_119] : memref<10x24x128xf32, #tpu.memory_space<vmem>>, vector<1x24x128xf32>
    %159 = vector.shape_cast %158 : vector<1x24x128xf32> to vector<24x128xf32>
    %cst_120 = arith.constant 0.000000e+00 : f32
    %160 = vector.broadcast %cst_120 : f32 to vector<24x128xf32>
    %cst_121 = arith.constant 0.000000e+00 : f32
    %161 = vector.broadcast %cst_121 : f32 to vector<24x128xf32>
    %162 = vector.broadcast %68 : vector<24x1xf32> to vector<24x128xf32>
    %163 = arith.mulf %155, %162 : vector<24x128xf32>
    %164 = arith.addf %161, %163 : vector<24x128xf32>
    %c120_i32 = arith.constant 120 : i32
    %165 = tpu.dynamic_rotate %155 by %c120_i32 dim 1 : vector<24x128xf32>, i32 -> vector<24x128xf32>
    %166 = vector.broadcast %74 : vector<24x1xf32> to vector<24x128xf32>
    %167 = arith.mulf %165, %166 : vector<24x128xf32>
    %168 = arith.addf %164, %167 : vector<24x128xf32>
    %c112_i32 = arith.constant 112 : i32
    %169 = tpu.dynamic_rotate %155 by %c112_i32 dim 1 : vector<24x128xf32>, i32 -> vector<24x128xf32>
    %170 = vector.broadcast %80 : vector<24x1xf32> to vector<24x128xf32>
    %171 = arith.mulf %169, %170 : vector<24x128xf32>
    %172 = arith.addf %168, %171 : vector<24x128xf32>
    %173 = vector.broadcast %86 : vector<24x1xf32> to vector<24x128xf32>
    %174 = arith.mulf %157, %173 : vector<24x128xf32>
    %175 = arith.addf %172, %174 : vector<24x128xf32>
    %c120_i32_122 = arith.constant 120 : i32
    %176 = tpu.dynamic_rotate %157 by %c120_i32_122 dim 1 : vector<24x128xf32>, i32 -> vector<24x128xf32>
    %177 = vector.broadcast %92 : vector<24x1xf32> to vector<24x128xf32>
    %178 = arith.mulf %176, %177 : vector<24x128xf32>
    %179 = arith.addf %175, %178 : vector<24x128xf32>
    %c112_i32_123 = arith.constant 112 : i32
    %180 = tpu.dynamic_rotate %157 by %c112_i32_123 dim 1 : vector<24x128xf32>, i32 -> vector<24x128xf32>
    %181 = vector.broadcast %98 : vector<24x1xf32> to vector<24x128xf32>
    %182 = arith.mulf %180, %181 : vector<24x128xf32>
    %183 = arith.addf %179, %182 : vector<24x128xf32>
    %184 = vector.broadcast %104 : vector<24x1xf32> to vector<24x128xf32>
    %185 = arith.mulf %159, %184 : vector<24x128xf32>
    %186 = arith.addf %183, %185 : vector<24x128xf32>
    %c120_i32_124 = arith.constant 120 : i32
    %187 = tpu.dynamic_rotate %159 by %c120_i32_124 dim 1 : vector<24x128xf32>, i32 -> vector<24x128xf32>
    %188 = vector.broadcast %110 : vector<24x1xf32> to vector<24x128xf32>
    %189 = arith.mulf %187, %188 : vector<24x128xf32>
    %190 = arith.addf %186, %189 : vector<24x128xf32>
    %c112_i32_125 = arith.constant 112 : i32
    %191 = tpu.dynamic_rotate %159 by %c112_i32_125 dim 1 : vector<24x128xf32>, i32 -> vector<24x128xf32>
    %192 = vector.broadcast %116 : vector<24x1xf32> to vector<24x128xf32>
    %193 = arith.mulf %191, %192 : vector<24x128xf32>
    %194 = arith.addf %190, %193 : vector<24x128xf32>
    %195 = vector.broadcast %145 : vector<1x128xf32> to vector<24x128xf32>
    %196 = arith.mulf %194, %195 : vector<24x128xf32>
    %197 = arith.addf %160, %196 : vector<24x128xf32>
    %cst_126 = arith.constant 0.000000e+00 : f32
    %198 = vector.broadcast %cst_126 : f32 to vector<24x128xf32>
    %c127_i32 = arith.constant 127 : i32
    %199 = tpu.dynamic_rotate %155 by %c127_i32 dim 1 : vector<24x128xf32>, i32 -> vector<24x128xf32>
    %200 = vector.broadcast %70 : vector<24x1xf32> to vector<24x128xf32>
    %201 = arith.mulf %199, %200 : vector<24x128xf32>
    %202 = arith.addf %198, %201 : vector<24x128xf32>
    %c119_i32 = arith.constant 119 : i32
    %203 = tpu.dynamic_rotate %155 by %c119_i32 dim 1 : vector<24x128xf32>, i32 -> vector<24x128xf32>
    %204 = vector.broadcast %76 : vector<24x1xf32> to vector<24x128xf32>
    %205 = arith.mulf %203, %204 : vector<24x128xf32>
    %206 = arith.addf %202, %205 : vector<24x128xf32>
    %c111_i32 = arith.constant 111 : i32
    %207 = tpu.dynamic_rotate %155 by %c111_i32 dim 1 : vector<24x128xf32>, i32 -> vector<24x128xf32>
    %208 = vector.broadcast %82 : vector<24x1xf32> to vector<24x128xf32>
    %209 = arith.mulf %207, %208 : vector<24x128xf32>
    %210 = arith.addf %206, %209 : vector<24x128xf32>
    %c127_i32_127 = arith.constant 127 : i32
    %211 = tpu.dynamic_rotate %157 by %c127_i32_127 dim 1 : vector<24x128xf32>, i32 -> vector<24x128xf32>
    %212 = vector.broadcast %88 : vector<24x1xf32> to vector<24x128xf32>
    %213 = arith.mulf %211, %212 : vector<24x128xf32>
    %214 = arith.addf %210, %213 : vector<24x128xf32>
    %c119_i32_128 = arith.constant 119 : i32
    %215 = tpu.dynamic_rotate %157 by %c119_i32_128 dim 1 : vector<24x128xf32>, i32 -> vector<24x128xf32>
    %216 = vector.broadcast %94 : vector<24x1xf32> to vector<24x128xf32>
    %217 = arith.mulf %215, %216 : vector<24x128xf32>
    %218 = arith.addf %214, %217 : vector<24x128xf32>
    %c111_i32_129 = arith.constant 111 : i32
    %219 = tpu.dynamic_rotate %157 by %c111_i32_129 dim 1 : vector<24x128xf32>, i32 -> vector<24x128xf32>
    %220 = vector.broadcast %100 : vector<24x1xf32> to vector<24x128xf32>
    %221 = arith.mulf %219, %220 : vector<24x128xf32>
    %222 = arith.addf %218, %221 : vector<24x128xf32>
    %c127_i32_130 = arith.constant 127 : i32
    %223 = tpu.dynamic_rotate %159 by %c127_i32_130 dim 1 : vector<24x128xf32>, i32 -> vector<24x128xf32>
    %224 = vector.broadcast %106 : vector<24x1xf32> to vector<24x128xf32>
    %225 = arith.mulf %223, %224 : vector<24x128xf32>
    %226 = arith.addf %222, %225 : vector<24x128xf32>
    %c119_i32_131 = arith.constant 119 : i32
    %227 = tpu.dynamic_rotate %159 by %c119_i32_131 dim 1 : vector<24x128xf32>, i32 -> vector<24x128xf32>
    %228 = vector.broadcast %112 : vector<24x1xf32> to vector<24x128xf32>
    %229 = arith.mulf %227, %228 : vector<24x128xf32>
    %230 = arith.addf %226, %229 : vector<24x128xf32>
    %c111_i32_132 = arith.constant 111 : i32
    %231 = tpu.dynamic_rotate %159 by %c111_i32_132 dim 1 : vector<24x128xf32>, i32 -> vector<24x128xf32>
    %232 = vector.broadcast %118 : vector<24x1xf32> to vector<24x128xf32>
    %233 = arith.mulf %231, %232 : vector<24x128xf32>
    %234 = arith.addf %230, %233 : vector<24x128xf32>
    %235 = arith.addf %197, %234 : vector<24x128xf32>
    %cst_133 = arith.constant 0.000000e+00 : f32
    %236 = vector.broadcast %cst_133 : f32 to vector<24x128xf32>
    %c126_i32 = arith.constant 126 : i32
    %237 = tpu.dynamic_rotate %155 by %c126_i32 dim 1 : vector<24x128xf32>, i32 -> vector<24x128xf32>
    %238 = vector.broadcast %72 : vector<24x1xf32> to vector<24x128xf32>
    %239 = arith.mulf %237, %238 : vector<24x128xf32>
    %240 = arith.addf %236, %239 : vector<24x128xf32>
    %c118_i32 = arith.constant 118 : i32
    %241 = tpu.dynamic_rotate %155 by %c118_i32 dim 1 : vector<24x128xf32>, i32 -> vector<24x128xf32>
    %242 = vector.broadcast %78 : vector<24x1xf32> to vector<24x128xf32>
    %243 = arith.mulf %241, %242 : vector<24x128xf32>
    %244 = arith.addf %240, %243 : vector<24x128xf32>
    %c110_i32 = arith.constant 110 : i32
    %245 = tpu.dynamic_rotate %155 by %c110_i32 dim 1 : vector<24x128xf32>, i32 -> vector<24x128xf32>
    %246 = vector.broadcast %84 : vector<24x1xf32> to vector<24x128xf32>
    %247 = arith.mulf %245, %246 : vector<24x128xf32>
    %248 = arith.addf %244, %247 : vector<24x128xf32>
    %c126_i32_134 = arith.constant 126 : i32
    %249 = tpu.dynamic_rotate %157 by %c126_i32_134 dim 1 : vector<24x128xf32>, i32 -> vector<24x128xf32>
    %250 = vector.broadcast %90 : vector<24x1xf32> to vector<24x128xf32>
    %251 = arith.mulf %249, %250 : vector<24x128xf32>
    %252 = arith.addf %248, %251 : vector<24x128xf32>
    %c118_i32_135 = arith.constant 118 : i32
    %253 = tpu.dynamic_rotate %157 by %c118_i32_135 dim 1 : vector<24x128xf32>, i32 -> vector<24x128xf32>
    %254 = vector.broadcast %96 : vector<24x1xf32> to vector<24x128xf32>
    %255 = arith.mulf %253, %254 : vector<24x128xf32>
    %256 = arith.addf %252, %255 : vector<24x128xf32>
    %c110_i32_136 = arith.constant 110 : i32
    %257 = tpu.dynamic_rotate %157 by %c110_i32_136 dim 1 : vector<24x128xf32>, i32 -> vector<24x128xf32>
    %258 = vector.broadcast %102 : vector<24x1xf32> to vector<24x128xf32>
    %259 = arith.mulf %257, %258 : vector<24x128xf32>
    %260 = arith.addf %256, %259 : vector<24x128xf32>
    %c126_i32_137 = arith.constant 126 : i32
    %261 = tpu.dynamic_rotate %159 by %c126_i32_137 dim 1 : vector<24x128xf32>, i32 -> vector<24x128xf32>
    %262 = vector.broadcast %108 : vector<24x1xf32> to vector<24x128xf32>
    %263 = arith.mulf %261, %262 : vector<24x128xf32>
    %264 = arith.addf %260, %263 : vector<24x128xf32>
    %c118_i32_138 = arith.constant 118 : i32
    %265 = tpu.dynamic_rotate %159 by %c118_i32_138 dim 1 : vector<24x128xf32>, i32 -> vector<24x128xf32>
    %266 = vector.broadcast %114 : vector<24x1xf32> to vector<24x128xf32>
    %267 = arith.mulf %265, %266 : vector<24x128xf32>
    %268 = arith.addf %264, %267 : vector<24x128xf32>
    %c110_i32_139 = arith.constant 110 : i32
    %269 = tpu.dynamic_rotate %159 by %c110_i32_139 dim 1 : vector<24x128xf32>, i32 -> vector<24x128xf32>
    %270 = vector.broadcast %120 : vector<24x1xf32> to vector<24x128xf32>
    %271 = arith.mulf %269, %270 : vector<24x128xf32>
    %272 = arith.addf %268, %271 : vector<24x128xf32>
    %273 = vector.broadcast %152 : vector<1x128xf32> to vector<24x128xf32>
    %274 = arith.mulf %272, %273 : vector<24x128xf32>
    %275 = arith.addf %235, %274 : vector<24x128xf32>
    %276 = vector.extract_strided_slice %275 {offsets = [0, 0], sizes = [24, 64], strides = [1, 1]} : vector<24x128xf32> to vector<24x64xf32>
    %277 = vector.broadcast %121 : vector<24x1xf32> to vector<24x64xf32>
    %278 = arith.addf %276, %277 : vector<24x64xf32>
    %cst_140 = arith.constant 0.000000e+00 : f32
    %cst_141 = arith.constant 6.000000e+00 : f32
    %279 = vector.broadcast %cst_140 : f32 to vector<24x64xf32>
    %280 = arith.maximumf %279, %278 : vector<24x64xf32>
    %281 = vector.broadcast %cst_141 : f32 to vector<24x64xf32>
    %282 = arith.minimumf %281, %280 : vector<24x64xf32>
    %c0_142 = arith.constant 0 : index
    %c0_143 = arith.constant 0 : index
    %283 = vector.load %arg14[%c0_142, %c0_143] : memref<24x512xf32, #tpu.memory_space<vmem>>, vector<24x64xf32>
    tpu.vector_store %arg14[%c0_142, %c0_143], %282 {strides = array<i32>} : memref<24x512xf32, #tpu.memory_space<vmem>>, vector<24x64xf32>,
    %cst_144 = arith.constant dense<0.000000e+00> : vector<24xf32>
    %284 = vector.multi_reduction <add>, %282, %cst_144 [1] : vector<24x64xf32> to vector<24xf32>
    %285 = vector.shape_cast %284 : vector<24xf32> to vector<24x1xf32>
    %286 = arith.addf %153, %285 : vector<24x1xf32>
    %c1_145 = arith.constant 1 : index
    %c0_146 = arith.constant 0 : index
    %c0_147 = arith.constant 0 : index
    %287 = vector.load %arg13[%c1_145, %c0_146, %c0_147] : memref<10x24x128xf32, #tpu.memory_space<vmem>>, vector<1x24x128xf32>
    %288 = vector.shape_cast %287 : vector<1x24x128xf32> to vector<24x128xf32>
    %c2_148 = arith.constant 2 : index
    %c0_149 = arith.constant 0 : index
    %c0_150 = arith.constant 0 : index
    %289 = vector.load %arg13[%c2_148, %c0_149, %c0_150] : memref<10x24x128xf32, #tpu.memory_space<vmem>>, vector<1x24x128xf32>
    %290 = vector.shape_cast %289 : vector<1x24x128xf32> to vector<24x128xf32>
    %c3_151 = arith.constant 3 : index
    %c0_152 = arith.constant 0 : index
    %c0_153 = arith.constant 0 : index
    %291 = vector.load %arg13[%c3_151, %c0_152, %c0_153] : memref<10x24x128xf32, #tpu.memory_space<vmem>>, vector<1x24x128xf32>
    %292 = vector.shape_cast %291 : vector<1x24x128xf32> to vector<24x128xf32>
    %cst_154 = arith.constant 0.000000e+00 : f32
    %293 = vector.broadcast %cst_154 : f32 to vector<24x128xf32>
    %cst_155 = arith.constant 0.000000e+00 : f32
    %294 = vector.broadcast %cst_155 : f32 to vector<24x128xf32>
    %295 = vector.broadcast %68 : vector<24x1xf32> to vector<24x128xf32>
    %296 = arith.mulf %288, %295 : vector<24x128xf32>
    %297 = arith.addf %294, %296 : vector<24x128xf32>
    %c120_i32_156 = arith.constant 120 : i32
    %298 = tpu.dynamic_rotate %288 by %c120_i32_156 dim 1 : vector<24x128xf32>, i32 -> vector<24x128xf32>
    %299 = vector.broadcast %74 : vector<24x1xf32> to vector<24x128xf32>
    %300 = arith.mulf %298, %299 : vector<24x128xf32>
    %301 = arith.addf %297, %300 : vector<24x128xf32>
    %c112_i32_157 = arith.constant 112 : i32
    %302 = tpu.dynamic_rotate %288 by %c112_i32_157 dim 1 : vector<24x128xf32>, i32 -> vector<24x128xf32>
    %303 = vector.broadcast %80 : vector<24x1xf32> to vector<24x128xf32>
    %304 = arith.mulf %302, %303 : vector<24x128xf32>
    %305 = arith.addf %301, %304 : vector<24x128xf32>
    %306 = vector.broadcast %86 : vector<24x1xf32> to vector<24x128xf32>
    %307 = arith.mulf %290, %306 : vector<24x128xf32>
    %308 = arith.addf %305, %307 : vector<24x128xf32>
    %c120_i32_158 = arith.constant 120 : i32
    %309 = tpu.dynamic_rotate %290 by %c120_i32_158 dim 1 : vector<24x128xf32>, i32 -> vector<24x128xf32>
    %310 = vector.broadcast %92 : vector<24x1xf32> to vector<24x128xf32>
    %311 = arith.mulf %309, %310 : vector<24x128xf32>
    %312 = arith.addf %308, %311 : vector<24x128xf32>
    %c112_i32_159 = arith.constant 112 : i32
    %313 = tpu.dynamic_rotate %290 by %c112_i32_159 dim 1 : vector<24x128xf32>, i32 -> vector<24x128xf32>
    %314 = vector.broadcast %98 : vector<24x1xf32> to vector<24x128xf32>
    %315 = arith.mulf %313, %314 : vector<24x128xf32>
    %316 = arith.addf %312, %315 : vector<24x128xf32>
    %317 = vector.broadcast %104 : vector<24x1xf32> to vector<24x128xf32>
    %318 = arith.mulf %292, %317 : vector<24x128xf32>
    %319 = arith.addf %316, %318 : vector<24x128xf32>
    %c120_i32_160 = arith.constant 120 : i32
    %320 = tpu.dynamic_rotate %292 by %c120_i32_160 dim 1 : vector<24x128xf32>, i32 -> vector<24x128xf32>
    %321 = vector.broadcast %110 : vector<24x1xf32> to vector<24x128xf32>
    %322 = arith.mulf %320, %321 : vector<24x128xf32>
    %323 = arith.addf %319, %322 : vector<24x128xf32>
    %c112_i32_161 = arith.constant 112 : i32
    %324 = tpu.dynamic_rotate %292 by %c112_i32_161 dim 1 : vector<24x128xf32>, i32 -> vector<24x128xf32>
    %325 = vector.broadcast %116 : vector<24x1xf32> to vector<24x128xf32>
    %326 = arith.mulf %324, %325 : vector<24x128xf32>
    %327 = arith.addf %323, %326 : vector<24x128xf32>
    %328 = vector.broadcast %145 : vector<1x128xf32> to vector<24x128xf32>
    %329 = arith.mulf %327, %328 : vector<24x128xf32>
    %330 = arith.addf %293, %329 : vector<24x128xf32>
    %cst_162 = arith.constant 0.000000e+00 : f32
    %331 = vector.broadcast %cst_162 : f32 to vector<24x128xf32>
    %c127_i32_163 = arith.constant 127 : i32
    %332 = tpu.dynamic_rotate %288 by %c127_i32_163 dim 1 : vector<24x128xf32>, i32 -> vector<24x128xf32>
    %333 = vector.broadcast %70 : vector<24x1xf32> to vector<24x128xf32>
    %334 = arith.mulf %332, %333 : vector<24x128xf32>
    %335 = arith.addf %331, %334 : vector<24x128xf32>
    %c119_i32_164 = arith.constant 119 : i32
    %336 = tpu.dynamic_rotate %288 by %c119_i32_164 dim 1 : vector<24x128xf32>, i32 -> vector<24x128xf32>
    %337 = vector.broadcast %76 : vector<24x1xf32> to vector<24x128xf32>
    %338 = arith.mulf %336, %337 : vector<24x128xf32>
    %339 = arith.addf %335, %338 : vector<24x128xf32>
    %c111_i32_165 = arith.constant 111 : i32
    %340 = tpu.dynamic_rotate %288 by %c111_i32_165 dim 1 : vector<24x128xf32>, i32 -> vector<24x128xf32>
    %341 = vector.broadcast %82 : vector<24x1xf32> to vector<24x128xf32>
    %342 = arith.mulf %340, %341 : vector<24x128xf32>
    %343 = arith.addf %339, %342 : vector<24x128xf32>
    %c127_i32_166 = arith.constant 127 : i32
    %344 = tpu.dynamic_rotate %290 by %c127_i32_166 dim 1 : vector<24x128xf32>, i32 -> vector<24x128xf32>
    %345 = vector.broadcast %88 : vector<24x1xf32> to vector<24x128xf32>
    %346 = arith.mulf %344, %345 : vector<24x128xf32>
    %347 = arith.addf %343, %346 : vector<24x128xf32>
    %c119_i32_167 = arith.constant 119 : i32
    %348 = tpu.dynamic_rotate %290 by %c119_i32_167 dim 1 : vector<24x128xf32>, i32 -> vector<24x128xf32>
    %349 = vector.broadcast %94 : vector<24x1xf32> to vector<24x128xf32>
    %350 = arith.mulf %348, %349 : vector<24x128xf32>
    %351 = arith.addf %347, %350 : vector<24x128xf32>
    %c111_i32_168 = arith.constant 111 : i32
    %352 = tpu.dynamic_rotate %290 by %c111_i32_168 dim 1 : vector<24x128xf32>, i32 -> vector<24x128xf32>
    %353 = vector.broadcast %100 : vector<24x1xf32> to vector<24x128xf32>
    %354 = arith.mulf %352, %353 : vector<24x128xf32>
    %355 = arith.addf %351, %354 : vector<24x128xf32>
    %c127_i32_169 = arith.constant 127 : i32
    %356 = tpu.dynamic_rotate %292 by %c127_i32_169 dim 1 : vector<24x128xf32>, i32 -> vector<24x128xf32>
    %357 = vector.broadcast %106 : vector<24x1xf32> to vector<24x128xf32>
    %358 = arith.mulf %356, %357 : vector<24x128xf32>
    %359 = arith.addf %355, %358 : vector<24x128xf32>
    %c119_i32_170 = arith.constant 119 : i32
    %360 = tpu.dynamic_rotate %292 by %c119_i32_170 dim 1 : vector<24x128xf32>, i32 -> vector<24x128xf32>
    %361 = vector.broadcast %112 : vector<24x1xf32> to vector<24x128xf32>
    %362 = arith.mulf %360, %361 : vector<24x128xf32>
    %363 = arith.addf %359, %362 : vector<24x128xf32>
    %c111_i32_171 = arith.constant 111 : i32
    %364 = tpu.dynamic_rotate %292 by %c111_i32_171 dim 1 : vector<24x128xf32>, i32 -> vector<24x128xf32>
    %365 = vector.broadcast %118 : vector<24x1xf32> to vector<24x128xf32>
    %366 = arith.mulf %364, %365 : vector<24x128xf32>
    %367 = arith.addf %363, %366 : vector<24x128xf32>
    %368 = arith.addf %330, %367 : vector<24x128xf32>
    %cst_172 = arith.constant 0.000000e+00 : f32
    %369 = vector.broadcast %cst_172 : f32 to vector<24x128xf32>
    %c126_i32_173 = arith.constant 126 : i32
    %370 = tpu.dynamic_rotate %288 by %c126_i32_173 dim 1 : vector<24x128xf32>, i32 -> vector<24x128xf32>
    %371 = vector.broadcast %72 : vector<24x1xf32> to vector<24x128xf32>
    %372 = arith.mulf %370, %371 : vector<24x128xf32>
    %373 = arith.addf %369, %372 : vector<24x128xf32>
    %c118_i32_174 = arith.constant 118 : i32
    %374 = tpu.dynamic_rotate %288 by %c118_i32_174 dim 1 : vector<24x128xf32>, i32 -> vector<24x128xf32>
    %375 = vector.broadcast %78 : vector<24x1xf32> to vector<24x128xf32>
    %376 = arith.mulf %374, %375 : vector<24x128xf32>
    %377 = arith.addf %373, %376 : vector<24x128xf32>
    %c110_i32_175 = arith.constant 110 : i32
    %378 = tpu.dynamic_rotate %288 by %c110_i32_175 dim 1 : vector<24x128xf32>, i32 -> vector<24x128xf32>
    %379 = vector.broadcast %84 : vector<24x1xf32> to vector<24x128xf32>
    %380 = arith.mulf %378, %379 : vector<24x128xf32>
    %381 = arith.addf %377, %380 : vector<24x128xf32>
    %c126_i32_176 = arith.constant 126 : i32
    %382 = tpu.dynamic_rotate %290 by %c126_i32_176 dim 1 : vector<24x128xf32>, i32 -> vector<24x128xf32>
    %383 = vector.broadcast %90 : vector<24x1xf32> to vector<24x128xf32>
    %384 = arith.mulf %382, %383 : vector<24x128xf32>
    %385 = arith.addf %381, %384 : vector<24x128xf32>
    %c118_i32_177 = arith.constant 118 : i32
    %386 = tpu.dynamic_rotate %290 by %c118_i32_177 dim 1 : vector<24x128xf32>, i32 -> vector<24x128xf32>
    %387 = vector.broadcast %96 : vector<24x1xf32> to vector<24x128xf32>
    %388 = arith.mulf %386, %387 : vector<24x128xf32>
    %389 = arith.addf %385, %388 : vector<24x128xf32>
    %c110_i32_178 = arith.constant 110 : i32
    %390 = tpu.dynamic_rotate %290 by %c110_i32_178 dim 1 : vector<24x128xf32>, i32 -> vector<24x128xf32>
    %391 = vector.broadcast %102 : vector<24x1xf32> to vector<24x128xf32>
    %392 = arith.mulf %390, %391 : vector<24x128xf32>
    %393 = arith.addf %389, %392 : vector<24x128xf32>
    %c126_i32_179 = arith.constant 126 : i32
    %394 = tpu.dynamic_rotate %292 by %c126_i32_179 dim 1 : vector<24x128xf32>, i32 -> vector<24x128xf32>
    %395 = vector.broadcast %108 : vector<24x1xf32> to vector<24x128xf32>
    %396 = arith.mulf %394, %395 : vector<24x128xf32>
    %397 = arith.addf %393, %396 : vector<24x128xf32>
    %c118_i32_180 = arith.constant 118 : i32
    %398 = tpu.dynamic_rotate %292 by %c118_i32_180 dim 1 : vector<24x128xf32>, i32 -> vector<24x128xf32>
    %399 = vector.broadcast %114 : vector<24x1xf32> to vector<24x128xf32>
    %400 = arith.mulf %398, %399 : vector<24x128xf32>
    %401 = arith.addf %397, %400 : vector<24x128xf32>
    %c110_i32_181 = arith.constant 110 : i32
    %402 = tpu.dynamic_rotate %292 by %c110_i32_181 dim 1 : vector<24x128xf32>, i32 -> vector<24x128xf32>
    %403 = vector.broadcast %120 : vector<24x1xf32> to vector<24x128xf32>
    %404 = arith.mulf %402, %403 : vector<24x128xf32>
    %405 = arith.addf %401, %404 : vector<24x128xf32>
    %406 = vector.broadcast %152 : vector<1x128xf32> to vector<24x128xf32>
    %407 = arith.mulf %405, %406 : vector<24x128xf32>
    %408 = arith.addf %368, %407 : vector<24x128xf32>
    %409 = vector.extract_strided_slice %408 {offsets = [0, 0], sizes = [24, 64], strides = [1, 1]} : vector<24x128xf32> to vector<24x64xf32>
    %410 = vector.broadcast %121 : vector<24x1xf32> to vector<24x64xf32>
    %411 = arith.addf %409, %410 : vector<24x64xf32>
    %cst_182 = arith.constant 0.000000e+00 : f32
    %cst_183 = arith.constant 6.000000e+00 : f32
    %412 = vector.broadcast %cst_182 : f32 to vector<24x64xf32>
    %413 = arith.maximumf %412, %411 : vector<24x64xf32>
    %414 = vector.broadcast %cst_183 : f32 to vector<24x64xf32>
    %415 = arith.minimumf %414, %413 : vector<24x64xf32>
    %c0_184 = arith.constant 0 : index
    %c64 = arith.constant 64 : index
    %416 = vector.load %arg14[%c0_184, %c64] : memref<24x512xf32, #tpu.memory_space<vmem>>, vector<24x64xf32>
    tpu.vector_store %arg14[%c0_184, %c64], %415 {strides = array<i32>} : memref<24x512xf32, #tpu.memory_space<vmem>>, vector<24x64xf32>,
    %cst_185 = arith.constant dense<0.000000e+00> : vector<24xf32>
    %417 = vector.multi_reduction <add>, %415, %cst_185 [1] : vector<24x64xf32> to vector<24xf32>
    %418 = vector.shape_cast %417 : vector<24xf32> to vector<24x1xf32>
    %419 = arith.addf %286, %418 : vector<24x1xf32>
    %c2_186 = arith.constant 2 : index
    %c0_187 = arith.constant 0 : index
    %c0_188 = arith.constant 0 : index
    %420 = vector.load %arg13[%c2_186, %c0_187, %c0_188] : memref<10x24x128xf32, #tpu.memory_space<vmem>>, vector<1x24x128xf32>
    %421 = vector.shape_cast %420 : vector<1x24x128xf32> to vector<24x128xf32>
    %c3_189 = arith.constant 3 : index
    %c0_190 = arith.constant 0 : index
    %c0_191 = arith.constant 0 : index
    %422 = vector.load %arg13[%c3_189, %c0_190, %c0_191] : memref<10x24x128xf32, #tpu.memory_space<vmem>>, vector<1x24x128xf32>
    %423 = vector.shape_cast %422 : vector<1x24x128xf32> to vector<24x128xf32>
    %c4_192 = arith.constant 4 : index
    %c0_193 = arith.constant 0 : index
    %c0_194 = arith.constant 0 : index
    %424 = vector.load %arg13[%c4_192, %c0_193, %c0_194] : memref<10x24x128xf32, #tpu.memory_space<vmem>>, vector<1x24x128xf32>
    %425 = vector.shape_cast %424 : vector<1x24x128xf32> to vector<24x128xf32>
    %cst_195 = arith.constant 0.000000e+00 : f32
    %426 = vector.broadcast %cst_195 : f32 to vector<24x128xf32>
    %cst_196 = arith.constant 0.000000e+00 : f32
    %427 = vector.broadcast %cst_196 : f32 to vector<24x128xf32>
    %428 = vector.broadcast %68 : vector<24x1xf32> to vector<24x128xf32>
    %429 = arith.mulf %421, %428 : vector<24x128xf32>
    %430 = arith.addf %427, %429 : vector<24x128xf32>
    %c120_i32_197 = arith.constant 120 : i32
    %431 = tpu.dynamic_rotate %421 by %c120_i32_197 dim 1 : vector<24x128xf32>, i32 -> vector<24x128xf32>
    %432 = vector.broadcast %74 : vector<24x1xf32> to vector<24x128xf32>
    %433 = arith.mulf %431, %432 : vector<24x128xf32>
    %434 = arith.addf %430, %433 : vector<24x128xf32>
    %c112_i32_198 = arith.constant 112 : i32
    %435 = tpu.dynamic_rotate %421 by %c112_i32_198 dim 1 : vector<24x128xf32>, i32 -> vector<24x128xf32>
    %436 = vector.broadcast %80 : vector<24x1xf32> to vector<24x128xf32>
    %437 = arith.mulf %435, %436 : vector<24x128xf32>
    %438 = arith.addf %434, %437 : vector<24x128xf32>
    %439 = vector.broadcast %86 : vector<24x1xf32> to vector<24x128xf32>
    %440 = arith.mulf %423, %439 : vector<24x128xf32>
    %441 = arith.addf %438, %440 : vector<24x128xf32>
    %c120_i32_199 = arith.constant 120 : i32
    %442 = tpu.dynamic_rotate %423 by %c120_i32_199 dim 1 : vector<24x128xf32>, i32 -> vector<24x128xf32>
    %443 = vector.broadcast %92 : vector<24x1xf32> to vector<24x128xf32>
    %444 = arith.mulf %442, %443 : vector<24x128xf32>
    %445 = arith.addf %441, %444 : vector<24x128xf32>
    %c112_i32_200 = arith.constant 112 : i32
    %446 = tpu.dynamic_rotate %423 by %c112_i32_200 dim 1 : vector<24x128xf32>, i32 -> vector<24x128xf32>
    %447 = vector.broadcast %98 : vector<24x1xf32> to vector<24x128xf32>
    %448 = arith.mulf %446, %447 : vector<24x128xf32>
    %449 = arith.addf %445, %448 : vector<24x128xf32>
    %450 = vector.broadcast %104 : vector<24x1xf32> to vector<24x128xf32>
    %451 = arith.mulf %425, %450 : vector<24x128xf32>
    %452 = arith.addf %449, %451 : vector<24x128xf32>
    %c120_i32_201 = arith.constant 120 : i32
    %453 = tpu.dynamic_rotate %425 by %c120_i32_201 dim 1 : vector<24x128xf32>, i32 -> vector<24x128xf32>
    %454 = vector.broadcast %110 : vector<24x1xf32> to vector<24x128xf32>
    %455 = arith.mulf %453, %454 : vector<24x128xf32>
    %456 = arith.addf %452, %455 : vector<24x128xf32>
    %c112_i32_202 = arith.constant 112 : i32
    %457 = tpu.dynamic_rotate %425 by %c112_i32_202 dim 1 : vector<24x128xf32>, i32 -> vector<24x128xf32>
    %458 = vector.broadcast %116 : vector<24x1xf32> to vector<24x128xf32>
    %459 = arith.mulf %457, %458 : vector<24x128xf32>
    %460 = arith.addf %456, %459 : vector<24x128xf32>
    %461 = vector.broadcast %145 : vector<1x128xf32> to vector<24x128xf32>
    %462 = arith.mulf %460, %461 : vector<24x128xf32>
    %463 = arith.addf %426, %462 : vector<24x128xf32>
    %cst_203 = arith.constant 0.000000e+00 : f32
    %464 = vector.broadcast %cst_203 : f32 to vector<24x128xf32>
    %c127_i32_204 = arith.constant 127 : i32
    %465 = tpu.dynamic_rotate %421 by %c127_i32_204 dim 1 : vector<24x128xf32>, i32 -> vector<24x128xf32>
    %466 = vector.broadcast %70 : vector<24x1xf32> to vector<24x128xf32>
    %467 = arith.mulf %465, %466 : vector<24x128xf32>
    %468 = arith.addf %464, %467 : vector<24x128xf32>
    %c119_i32_205 = arith.constant 119 : i32
    %469 = tpu.dynamic_rotate %421 by %c119_i32_205 dim 1 : vector<24x128xf32>, i32 -> vector<24x128xf32>
    %470 = vector.broadcast %76 : vector<24x1xf32> to vector<24x128xf32>
    %471 = arith.mulf %469, %470 : vector<24x128xf32>
    %472 = arith.addf %468, %471 : vector<24x128xf32>
    %c111_i32_206 = arith.constant 111 : i32
    %473 = tpu.dynamic_rotate %421 by %c111_i32_206 dim 1 : vector<24x128xf32>, i32 -> vector<24x128xf32>
    %474 = vector.broadcast %82 : vector<24x1xf32> to vector<24x128xf32>
    %475 = arith.mulf %473, %474 : vector<24x128xf32>
    %476 = arith.addf %472, %475 : vector<24x128xf32>
    %c127_i32_207 = arith.constant 127 : i32
    %477 = tpu.dynamic_rotate %423 by %c127_i32_207 dim 1 : vector<24x128xf32>, i32 -> vector<24x128xf32>
    %478 = vector.broadcast %88 : vector<24x1xf32> to vector<24x128xf32>
    %479 = arith.mulf %477, %478 : vector<24x128xf32>
    %480 = arith.addf %476, %479 : vector<24x128xf32>
    %c119_i32_208 = arith.constant 119 : i32
    %481 = tpu.dynamic_rotate %423 by %c119_i32_208 dim 1 : vector<24x128xf32>, i32 -> vector<24x128xf32>
    %482 = vector.broadcast %94 : vector<24x1xf32> to vector<24x128xf32>
    %483 = arith.mulf %481, %482 : vector<24x128xf32>
    %484 = arith.addf %480, %483 : vector<24x128xf32>
    %c111_i32_209 = arith.constant 111 : i32
    %485 = tpu.dynamic_rotate %423 by %c111_i32_209 dim 1 : vector<24x128xf32>, i32 -> vector<24x128xf32>
    %486 = vector.broadcast %100 : vector<24x1xf32> to vector<24x128xf32>
    %487 = arith.mulf %485, %486 : vector<24x128xf32>
    %488 = arith.addf %484, %487 : vector<24x128xf32>
    %c127_i32_210 = arith.constant 127 : i32
    %489 = tpu.dynamic_rotate %425 by %c127_i32_210 dim 1 : vector<24x128xf32>, i32 -> vector<24x128xf32>
    %490 = vector.broadcast %106 : vector<24x1xf32> to vector<24x128xf32>
    %491 = arith.mulf %489, %490 : vector<24x128xf32>
    %492 = arith.addf %488, %491 : vector<24x128xf32>
    %c119_i32_211 = arith.constant 119 : i32
    %493 = tpu.dynamic_rotate %425 by %c119_i32_211 dim 1 : vector<24x128xf32>, i32 -> vector<24x128xf32>
    %494 = vector.broadcast %112 : vector<24x1xf32> to vector<24x128xf32>
    %495 = arith.mulf %493, %494 : vector<24x128xf32>
    %496 = arith.addf %492, %495 : vector<24x128xf32>
    %c111_i32_212 = arith.constant 111 : i32
    %497 = tpu.dynamic_rotate %425 by %c111_i32_212 dim 1 : vector<24x128xf32>, i32 -> vector<24x128xf32>
    %498 = vector.broadcast %118 : vector<24x1xf32> to vector<24x128xf32>
    %499 = arith.mulf %497, %498 : vector<24x128xf32>
    %500 = arith.addf %496, %499 : vector<24x128xf32>
    %501 = arith.addf %463, %500 : vector<24x128xf32>
    %cst_213 = arith.constant 0.000000e+00 : f32
    %502 = vector.broadcast %cst_213 : f32 to vector<24x128xf32>
    %c126_i32_214 = arith.constant 126 : i32
    %503 = tpu.dynamic_rotate %421 by %c126_i32_214 dim 1 : vector<24x128xf32>, i32 -> vector<24x128xf32>
    %504 = vector.broadcast %72 : vector<24x1xf32> to vector<24x128xf32>
    %505 = arith.mulf %503, %504 : vector<24x128xf32>
    %506 = arith.addf %502, %505 : vector<24x128xf32>
    %c118_i32_215 = arith.constant 118 : i32
    %507 = tpu.dynamic_rotate %421 by %c118_i32_215 dim 1 : vector<24x128xf32>, i32 -> vector<24x128xf32>
    %508 = vector.broadcast %78 : vector<24x1xf32> to vector<24x128xf32>
    %509 = arith.mulf %507, %508 : vector<24x128xf32>
    %510 = arith.addf %506, %509 : vector<24x128xf32>
    %c110_i32_216 = arith.constant 110 : i32
    %511 = tpu.dynamic_rotate %421 by %c110_i32_216 dim 1 : vector<24x128xf32>, i32 -> vector<24x128xf32>
    %512 = vector.broadcast %84 : vector<24x1xf32> to vector<24x128xf32>
    %513 = arith.mulf %511, %512 : vector<24x128xf32>
    %514 = arith.addf %510, %513 : vector<24x128xf32>
    %c126_i32_217 = arith.constant 126 : i32
    %515 = tpu.dynamic_rotate %423 by %c126_i32_217 dim 1 : vector<24x128xf32>, i32 -> vector<24x128xf32>
    %516 = vector.broadcast %90 : vector<24x1xf32> to vector<24x128xf32>
    %517 = arith.mulf %515, %516 : vector<24x128xf32>
    %518 = arith.addf %514, %517 : vector<24x128xf32>
    %c118_i32_218 = arith.constant 118 : i32
    %519 = tpu.dynamic_rotate %423 by %c118_i32_218 dim 1 : vector<24x128xf32>, i32 -> vector<24x128xf32>
    %520 = vector.broadcast %96 : vector<24x1xf32> to vector<24x128xf32>
    %521 = arith.mulf %519, %520 : vector<24x128xf32>
    %522 = arith.addf %518, %521 : vector<24x128xf32>
    %c110_i32_219 = arith.constant 110 : i32
    %523 = tpu.dynamic_rotate %423 by %c110_i32_219 dim 1 : vector<24x128xf32>, i32 -> vector<24x128xf32>
    %524 = vector.broadcast %102 : vector<24x1xf32> to vector<24x128xf32>
    %525 = arith.mulf %523, %524 : vector<24x128xf32>
    %526 = arith.addf %522, %525 : vector<24x128xf32>
    %c126_i32_220 = arith.constant 126 : i32
    %527 = tpu.dynamic_rotate %425 by %c126_i32_220 dim 1 : vector<24x128xf32>, i32 -> vector<24x128xf32>
    %528 = vector.broadcast %108 : vector<24x1xf32> to vector<24x128xf32>
    %529 = arith.mulf %527, %528 : vector<24x128xf32>
    %530 = arith.addf %526, %529 : vector<24x128xf32>
    %c118_i32_221 = arith.constant 118 : i32
    %531 = tpu.dynamic_rotate %425 by %c118_i32_221 dim 1 : vector<24x128xf32>, i32 -> vector<24x128xf32>
    %532 = vector.broadcast %114 : vector<24x1xf32> to vector<24x128xf32>
    %533 = arith.mulf %531, %532 : vector<24x128xf32>
    %534 = arith.addf %530, %533 : vector<24x128xf32>
    %c110_i32_222 = arith.constant 110 : i32
    %535 = tpu.dynamic_rotate %425 by %c110_i32_222 dim 1 : vector<24x128xf32>, i32 -> vector<24x128xf32>
    %536 = vector.broadcast %120 : vector<24x1xf32> to vector<24x128xf32>
    %537 = arith.mulf %535, %536 : vector<24x128xf32>
    %538 = arith.addf %534, %537 : vector<24x128xf32>
    %539 = vector.broadcast %152 : vector<1x128xf32> to vector<24x128xf32>
    %540 = arith.mulf %538, %539 : vector<24x128xf32>
    %541 = arith.addf %501, %540 : vector<24x128xf32>
    %542 = vector.extract_strided_slice %541 {offsets = [0, 0], sizes = [24, 64], strides = [1, 1]} : vector<24x128xf32> to vector<24x64xf32>
    %543 = vector.broadcast %121 : vector<24x1xf32> to vector<24x64xf32>
    %544 = arith.addf %542, %543 : vector<24x64xf32>
    %cst_223 = arith.constant 0.000000e+00 : f32
    %cst_224 = arith.constant 6.000000e+00 : f32
    %545 = vector.broadcast %cst_223 : f32 to vector<24x64xf32>
    %546 = arith.maximumf %545, %544 : vector<24x64xf32>
    %547 = vector.broadcast %cst_224 : f32 to vector<24x64xf32>
    %548 = arith.minimumf %547, %546 : vector<24x64xf32>
    %c0_225 = arith.constant 0 : index
    %c128 = arith.constant 128 : index
    %549 = vector.load %arg14[%c0_225, %c128] : memref<24x512xf32, #tpu.memory_space<vmem>>, vector<24x64xf32>
    tpu.vector_store %arg14[%c0_225, %c128], %548 {strides = array<i32>} : memref<24x512xf32, #tpu.memory_space<vmem>>, vector<24x64xf32>,
    %cst_226 = arith.constant dense<0.000000e+00> : vector<24xf32>
    %550 = vector.multi_reduction <add>, %548, %cst_226 [1] : vector<24x64xf32> to vector<24xf32>
    %551 = vector.shape_cast %550 : vector<24xf32> to vector<24x1xf32>
    %552 = arith.addf %419, %551 : vector<24x1xf32>
    %c3_227 = arith.constant 3 : index
    %c0_228 = arith.constant 0 : index
    %c0_229 = arith.constant 0 : index
    %553 = vector.load %arg13[%c3_227, %c0_228, %c0_229] : memref<10x24x128xf32, #tpu.memory_space<vmem>>, vector<1x24x128xf32>
    %554 = vector.shape_cast %553 : vector<1x24x128xf32> to vector<24x128xf32>
    %c4_230 = arith.constant 4 : index
    %c0_231 = arith.constant 0 : index
    %c0_232 = arith.constant 0 : index
    %555 = vector.load %arg13[%c4_230, %c0_231, %c0_232] : memref<10x24x128xf32, #tpu.memory_space<vmem>>, vector<1x24x128xf32>
    %556 = vector.shape_cast %555 : vector<1x24x128xf32> to vector<24x128xf32>
    %c5_233 = arith.constant 5 : index
    %c0_234 = arith.constant 0 : index
    %c0_235 = arith.constant 0 : index
    %557 = vector.load %arg13[%c5_233, %c0_234, %c0_235] : memref<10x24x128xf32, #tpu.memory_space<vmem>>, vector<1x24x128xf32>
    %558 = vector.shape_cast %557 : vector<1x24x128xf32> to vector<24x128xf32>
    %cst_236 = arith.constant 0.000000e+00 : f32
    %559 = vector.broadcast %cst_236 : f32 to vector<24x128xf32>
    %cst_237 = arith.constant 0.000000e+00 : f32
    %560 = vector.broadcast %cst_237 : f32 to vector<24x128xf32>
    %561 = vector.broadcast %68 : vector<24x1xf32> to vector<24x128xf32>
    %562 = arith.mulf %554, %561 : vector<24x128xf32>
    %563 = arith.addf %560, %562 : vector<24x128xf32>
    %c120_i32_238 = arith.constant 120 : i32
    %564 = tpu.dynamic_rotate %554 by %c120_i32_238 dim 1 : vector<24x128xf32>, i32 -> vector<24x128xf32>
    %565 = vector.broadcast %74 : vector<24x1xf32> to vector<24x128xf32>
    %566 = arith.mulf %564, %565 : vector<24x128xf32>
    %567 = arith.addf %563, %566 : vector<24x128xf32>
    %c112_i32_239 = arith.constant 112 : i32
    %568 = tpu.dynamic_rotate %554 by %c112_i32_239 dim 1 : vector<24x128xf32>, i32 -> vector<24x128xf32>
    %569 = vector.broadcast %80 : vector<24x1xf32> to vector<24x128xf32>
    %570 = arith.mulf %568, %569 : vector<24x128xf32>
    %571 = arith.addf %567, %570 : vector<24x128xf32>
    %572 = vector.broadcast %86 : vector<24x1xf32> to vector<24x128xf32>
    %573 = arith.mulf %556, %572 : vector<24x128xf32>
    %574 = arith.addf %571, %573 : vector<24x128xf32>
    %c120_i32_240 = arith.constant 120 : i32
    %575 = tpu.dynamic_rotate %556 by %c120_i32_240 dim 1 : vector<24x128xf32>, i32 -> vector<24x128xf32>
    %576 = vector.broadcast %92 : vector<24x1xf32> to vector<24x128xf32>
    %577 = arith.mulf %575, %576 : vector<24x128xf32>
    %578 = arith.addf %574, %577 : vector<24x128xf32>
    %c112_i32_241 = arith.constant 112 : i32
    %579 = tpu.dynamic_rotate %556 by %c112_i32_241 dim 1 : vector<24x128xf32>, i32 -> vector<24x128xf32>
    %580 = vector.broadcast %98 : vector<24x1xf32> to vector<24x128xf32>
    %581 = arith.mulf %579, %580 : vector<24x128xf32>
    %582 = arith.addf %578, %581 : vector<24x128xf32>
    %583 = vector.broadcast %104 : vector<24x1xf32> to vector<24x128xf32>
    %584 = arith.mulf %558, %583 : vector<24x128xf32>
    %585 = arith.addf %582, %584 : vector<24x128xf32>
    %c120_i32_242 = arith.constant 120 : i32
    %586 = tpu.dynamic_rotate %558 by %c120_i32_242 dim 1 : vector<24x128xf32>, i32 -> vector<24x128xf32>
    %587 = vector.broadcast %110 : vector<24x1xf32> to vector<24x128xf32>
    %588 = arith.mulf %586, %587 : vector<24x128xf32>
    %589 = arith.addf %585, %588 : vector<24x128xf32>
    %c112_i32_243 = arith.constant 112 : i32
    %590 = tpu.dynamic_rotate %558 by %c112_i32_243 dim 1 : vector<24x128xf32>, i32 -> vector<24x128xf32>
    %591 = vector.broadcast %116 : vector<24x1xf32> to vector<24x128xf32>
    %592 = arith.mulf %590, %591 : vector<24x128xf32>
    %593 = arith.addf %589, %592 : vector<24x128xf32>
    %594 = vector.broadcast %145 : vector<1x128xf32> to vector<24x128xf32>
    %595 = arith.mulf %593, %594 : vector<24x128xf32>
    %596 = arith.addf %559, %595 : vector<24x128xf32>
    %cst_244 = arith.constant 0.000000e+00 : f32
    %597 = vector.broadcast %cst_244 : f32 to vector<24x128xf32>
    %c127_i32_245 = arith.constant 127 : i32
    %598 = tpu.dynamic_rotate %554 by %c127_i32_245 dim 1 : vector<24x128xf32>, i32 -> vector<24x128xf32>
    %599 = vector.broadcast %70 : vector<24x1xf32> to vector<24x128xf32>
    %600 = arith.mulf %598, %599 : vector<24x128xf32>
    %601 = arith.addf %597, %600 : vector<24x128xf32>
    %c119_i32_246 = arith.constant 119 : i32
    %602 = tpu.dynamic_rotate %554 by %c119_i32_246 dim 1 : vector<24x128xf32>, i32 -> vector<24x128xf32>
    %603 = vector.broadcast %76 : vector<24x1xf32> to vector<24x128xf32>
    %604 = arith.mulf %602, %603 : vector<24x128xf32>
    %605 = arith.addf %601, %604 : vector<24x128xf32>
    %c111_i32_247 = arith.constant 111 : i32
    %606 = tpu.dynamic_rotate %554 by %c111_i32_247 dim 1 : vector<24x128xf32>, i32 -> vector<24x128xf32>
    %607 = vector.broadcast %82 : vector<24x1xf32> to vector<24x128xf32>
    %608 = arith.mulf %606, %607 : vector<24x128xf32>
    %609 = arith.addf %605, %608 : vector<24x128xf32>
    %c127_i32_248 = arith.constant 127 : i32
    %610 = tpu.dynamic_rotate %556 by %c127_i32_248 dim 1 : vector<24x128xf32>, i32 -> vector<24x128xf32>
    %611 = vector.broadcast %88 : vector<24x1xf32> to vector<24x128xf32>
    %612 = arith.mulf %610, %611 : vector<24x128xf32>
    %613 = arith.addf %609, %612 : vector<24x128xf32>
    %c119_i32_249 = arith.constant 119 : i32
    %614 = tpu.dynamic_rotate %556 by %c119_i32_249 dim 1 : vector<24x128xf32>, i32 -> vector<24x128xf32>
    %615 = vector.broadcast %94 : vector<24x1xf32> to vector<24x128xf32>
    %616 = arith.mulf %614, %615 : vector<24x128xf32>
    %617 = arith.addf %613, %616 : vector<24x128xf32>
    %c111_i32_250 = arith.constant 111 : i32
    %618 = tpu.dynamic_rotate %556 by %c111_i32_250 dim 1 : vector<24x128xf32>, i32 -> vector<24x128xf32>
    %619 = vector.broadcast %100 : vector<24x1xf32> to vector<24x128xf32>
    %620 = arith.mulf %618, %619 : vector<24x128xf32>
    %621 = arith.addf %617, %620 : vector<24x128xf32>
    %c127_i32_251 = arith.constant 127 : i32
    %622 = tpu.dynamic_rotate %558 by %c127_i32_251 dim 1 : vector<24x128xf32>, i32 -> vector<24x128xf32>
    %623 = vector.broadcast %106 : vector<24x1xf32> to vector<24x128xf32>
    %624 = arith.mulf %622, %623 : vector<24x128xf32>
    %625 = arith.addf %621, %624 : vector<24x128xf32>
    %c119_i32_252 = arith.constant 119 : i32
    %626 = tpu.dynamic_rotate %558 by %c119_i32_252 dim 1 : vector<24x128xf32>, i32 -> vector<24x128xf32>
    %627 = vector.broadcast %112 : vector<24x1xf32> to vector<24x128xf32>
    %628 = arith.mulf %626, %627 : vector<24x128xf32>
    %629 = arith.addf %625, %628 : vector<24x128xf32>
    %c111_i32_253 = arith.constant 111 : i32
    %630 = tpu.dynamic_rotate %558 by %c111_i32_253 dim 1 : vector<24x128xf32>, i32 -> vector<24x128xf32>
    %631 = vector.broadcast %118 : vector<24x1xf32> to vector<24x128xf32>
    %632 = arith.mulf %630, %631 : vector<24x128xf32>
    %633 = arith.addf %629, %632 : vector<24x128xf32>
    %634 = arith.addf %596, %633 : vector<24x128xf32>
    %cst_254 = arith.constant 0.000000e+00 : f32
    %635 = vector.broadcast %cst_254 : f32 to vector<24x128xf32>
    %c126_i32_255 = arith.constant 126 : i32
    %636 = tpu.dynamic_rotate %554 by %c126_i32_255 dim 1 : vector<24x128xf32>, i32 -> vector<24x128xf32>
    %637 = vector.broadcast %72 : vector<24x1xf32> to vector<24x128xf32>
    %638 = arith.mulf %636, %637 : vector<24x128xf32>
    %639 = arith.addf %635, %638 : vector<24x128xf32>
    %c118_i32_256 = arith.constant 118 : i32
    %640 = tpu.dynamic_rotate %554 by %c118_i32_256 dim 1 : vector<24x128xf32>, i32 -> vector<24x128xf32>
    %641 = vector.broadcast %78 : vector<24x1xf32> to vector<24x128xf32>
    %642 = arith.mulf %640, %641 : vector<24x128xf32>
    %643 = arith.addf %639, %642 : vector<24x128xf32>
    %c110_i32_257 = arith.constant 110 : i32
    %644 = tpu.dynamic_rotate %554 by %c110_i32_257 dim 1 : vector<24x128xf32>, i32 -> vector<24x128xf32>
    %645 = vector.broadcast %84 : vector<24x1xf32> to vector<24x128xf32>
    %646 = arith.mulf %644, %645 : vector<24x128xf32>
    %647 = arith.addf %643, %646 : vector<24x128xf32>
    %c126_i32_258 = arith.constant 126 : i32
    %648 = tpu.dynamic_rotate %556 by %c126_i32_258 dim 1 : vector<24x128xf32>, i32 -> vector<24x128xf32>
    %649 = vector.broadcast %90 : vector<24x1xf32> to vector<24x128xf32>
    %650 = arith.mulf %648, %649 : vector<24x128xf32>
    %651 = arith.addf %647, %650 : vector<24x128xf32>
    %c118_i32_259 = arith.constant 118 : i32
    %652 = tpu.dynamic_rotate %556 by %c118_i32_259 dim 1 : vector<24x128xf32>, i32 -> vector<24x128xf32>
    %653 = vector.broadcast %96 : vector<24x1xf32> to vector<24x128xf32>
    %654 = arith.mulf %652, %653 : vector<24x128xf32>
    %655 = arith.addf %651, %654 : vector<24x128xf32>
    %c110_i32_260 = arith.constant 110 : i32
    %656 = tpu.dynamic_rotate %556 by %c110_i32_260 dim 1 : vector<24x128xf32>, i32 -> vector<24x128xf32>
    %657 = vector.broadcast %102 : vector<24x1xf32> to vector<24x128xf32>
    %658 = arith.mulf %656, %657 : vector<24x128xf32>
    %659 = arith.addf %655, %658 : vector<24x128xf32>
    %c126_i32_261 = arith.constant 126 : i32
    %660 = tpu.dynamic_rotate %558 by %c126_i32_261 dim 1 : vector<24x128xf32>, i32 -> vector<24x128xf32>
    %661 = vector.broadcast %108 : vector<24x1xf32> to vector<24x128xf32>
    %662 = arith.mulf %660, %661 : vector<24x128xf32>
    %663 = arith.addf %659, %662 : vector<24x128xf32>
    %c118_i32_262 = arith.constant 118 : i32
    %664 = tpu.dynamic_rotate %558 by %c118_i32_262 dim 1 : vector<24x128xf32>, i32 -> vector<24x128xf32>
    %665 = vector.broadcast %114 : vector<24x1xf32> to vector<24x128xf32>
    %666 = arith.mulf %664, %665 : vector<24x128xf32>
    %667 = arith.addf %663, %666 : vector<24x128xf32>
    %c110_i32_263 = arith.constant 110 : i32
    %668 = tpu.dynamic_rotate %558 by %c110_i32_263 dim 1 : vector<24x128xf32>, i32 -> vector<24x128xf32>
    %669 = vector.broadcast %120 : vector<24x1xf32> to vector<24x128xf32>
    %670 = arith.mulf %668, %669 : vector<24x128xf32>
    %671 = arith.addf %667, %670 : vector<24x128xf32>
    %672 = vector.broadcast %152 : vector<1x128xf32> to vector<24x128xf32>
    %673 = arith.mulf %671, %672 : vector<24x128xf32>
    %674 = arith.addf %634, %673 : vector<24x128xf32>
    %675 = vector.extract_strided_slice %674 {offsets = [0, 0], sizes = [24, 64], strides = [1, 1]} : vector<24x128xf32> to vector<24x64xf32>
    %676 = vector.broadcast %121 : vector<24x1xf32> to vector<24x64xf32>
    %677 = arith.addf %675, %676 : vector<24x64xf32>
    %cst_264 = arith.constant 0.000000e+00 : f32
    %cst_265 = arith.constant 6.000000e+00 : f32
    %678 = vector.broadcast %cst_264 : f32 to vector<24x64xf32>
    %679 = arith.maximumf %678, %677 : vector<24x64xf32>
    %680 = vector.broadcast %cst_265 : f32 to vector<24x64xf32>
    %681 = arith.minimumf %680, %679 : vector<24x64xf32>
    %c0_266 = arith.constant 0 : index
    %c192 = arith.constant 192 : index
    %682 = vector.load %arg14[%c0_266, %c192] : memref<24x512xf32, #tpu.memory_space<vmem>>, vector<24x64xf32>
    tpu.vector_store %arg14[%c0_266, %c192], %681 {strides = array<i32>} : memref<24x512xf32, #tpu.memory_space<vmem>>, vector<24x64xf32>,
    %cst_267 = arith.constant dense<0.000000e+00> : vector<24xf32>
    %683 = vector.multi_reduction <add>, %681, %cst_267 [1] : vector<24x64xf32> to vector<24xf32>
    %684 = vector.shape_cast %683 : vector<24xf32> to vector<24x1xf32>
    %685 = arith.addf %552, %684 : vector<24x1xf32>
    %c4_268 = arith.constant 4 : index
    %c0_269 = arith.constant 0 : index
    %c0_270 = arith.constant 0 : index
    %686 = vector.load %arg13[%c4_268, %c0_269, %c0_270] : memref<10x24x128xf32, #tpu.memory_space<vmem>>, vector<1x24x128xf32>
    %687 = vector.shape_cast %686 : vector<1x24x128xf32> to vector<24x128xf32>
    %c5_271 = arith.constant 5 : index
    %c0_272 = arith.constant 0 : index
    %c0_273 = arith.constant 0 : index
    %688 = vector.load %arg13[%c5_271, %c0_272, %c0_273] : memref<10x24x128xf32, #tpu.memory_space<vmem>>, vector<1x24x128xf32>
    %689 = vector.shape_cast %688 : vector<1x24x128xf32> to vector<24x128xf32>
    %c6_274 = arith.constant 6 : index
    %c0_275 = arith.constant 0 : index
    %c0_276 = arith.constant 0 : index
    %690 = vector.load %arg13[%c6_274, %c0_275, %c0_276] : memref<10x24x128xf32, #tpu.memory_space<vmem>>, vector<1x24x128xf32>
    %691 = vector.shape_cast %690 : vector<1x24x128xf32> to vector<24x128xf32>
    %cst_277 = arith.constant 0.000000e+00 : f32
    %692 = vector.broadcast %cst_277 : f32 to vector<24x128xf32>
    %cst_278 = arith.constant 0.000000e+00 : f32
    %693 = vector.broadcast %cst_278 : f32 to vector<24x128xf32>
    %694 = vector.broadcast %68 : vector<24x1xf32> to vector<24x128xf32>
    %695 = arith.mulf %687, %694 : vector<24x128xf32>
    %696 = arith.addf %693, %695 : vector<24x128xf32>
    %c120_i32_279 = arith.constant 120 : i32
    %697 = tpu.dynamic_rotate %687 by %c120_i32_279 dim 1 : vector<24x128xf32>, i32 -> vector<24x128xf32>
    %698 = vector.broadcast %74 : vector<24x1xf32> to vector<24x128xf32>
    %699 = arith.mulf %697, %698 : vector<24x128xf32>
    %700 = arith.addf %696, %699 : vector<24x128xf32>
    %c112_i32_280 = arith.constant 112 : i32
    %701 = tpu.dynamic_rotate %687 by %c112_i32_280 dim 1 : vector<24x128xf32>, i32 -> vector<24x128xf32>
    %702 = vector.broadcast %80 : vector<24x1xf32> to vector<24x128xf32>
    %703 = arith.mulf %701, %702 : vector<24x128xf32>
    %704 = arith.addf %700, %703 : vector<24x128xf32>
    %705 = vector.broadcast %86 : vector<24x1xf32> to vector<24x128xf32>
    %706 = arith.mulf %689, %705 : vector<24x128xf32>
    %707 = arith.addf %704, %706 : vector<24x128xf32>
    %c120_i32_281 = arith.constant 120 : i32
    %708 = tpu.dynamic_rotate %689 by %c120_i32_281 dim 1 : vector<24x128xf32>, i32 -> vector<24x128xf32>
    %709 = vector.broadcast %92 : vector<24x1xf32> to vector<24x128xf32>
    %710 = arith.mulf %708, %709 : vector<24x128xf32>
    %711 = arith.addf %707, %710 : vector<24x128xf32>
    %c112_i32_282 = arith.constant 112 : i32
    %712 = tpu.dynamic_rotate %689 by %c112_i32_282 dim 1 : vector<24x128xf32>, i32 -> vector<24x128xf32>
    %713 = vector.broadcast %98 : vector<24x1xf32> to vector<24x128xf32>
    %714 = arith.mulf %712, %713 : vector<24x128xf32>
    %715 = arith.addf %711, %714 : vector<24x128xf32>
    %716 = vector.broadcast %104 : vector<24x1xf32> to vector<24x128xf32>
    %717 = arith.mulf %691, %716 : vector<24x128xf32>
    %718 = arith.addf %715, %717 : vector<24x128xf32>
    %c120_i32_283 = arith.constant 120 : i32
    %719 = tpu.dynamic_rotate %691 by %c120_i32_283 dim 1 : vector<24x128xf32>, i32 -> vector<24x128xf32>
    %720 = vector.broadcast %110 : vector<24x1xf32> to vector<24x128xf32>
    %721 = arith.mulf %719, %720 : vector<24x128xf32>
    %722 = arith.addf %718, %721 : vector<24x128xf32>
    %c112_i32_284 = arith.constant 112 : i32
    %723 = tpu.dynamic_rotate %691 by %c112_i32_284 dim 1 : vector<24x128xf32>, i32 -> vector<24x128xf32>
    %724 = vector.broadcast %116 : vector<24x1xf32> to vector<24x128xf32>
    %725 = arith.mulf %723, %724 : vector<24x128xf32>
    %726 = arith.addf %722, %725 : vector<24x128xf32>
    %727 = vector.broadcast %145 : vector<1x128xf32> to vector<24x128xf32>
    %728 = arith.mulf %726, %727 : vector<24x128xf32>
    %729 = arith.addf %692, %728 : vector<24x128xf32>
    %cst_285 = arith.constant 0.000000e+00 : f32
    %730 = vector.broadcast %cst_285 : f32 to vector<24x128xf32>
    %c127_i32_286 = arith.constant 127 : i32
    %731 = tpu.dynamic_rotate %687 by %c127_i32_286 dim 1 : vector<24x128xf32>, i32 -> vector<24x128xf32>
    %732 = vector.broadcast %70 : vector<24x1xf32> to vector<24x128xf32>
    %733 = arith.mulf %731, %732 : vector<24x128xf32>
    %734 = arith.addf %730, %733 : vector<24x128xf32>
    %c119_i32_287 = arith.constant 119 : i32
    %735 = tpu.dynamic_rotate %687 by %c119_i32_287 dim 1 : vector<24x128xf32>, i32 -> vector<24x128xf32>
    %736 = vector.broadcast %76 : vector<24x1xf32> to vector<24x128xf32>
    %737 = arith.mulf %735, %736 : vector<24x128xf32>
    %738 = arith.addf %734, %737 : vector<24x128xf32>
    %c111_i32_288 = arith.constant 111 : i32
    %739 = tpu.dynamic_rotate %687 by %c111_i32_288 dim 1 : vector<24x128xf32>, i32 -> vector<24x128xf32>
    %740 = vector.broadcast %82 : vector<24x1xf32> to vector<24x128xf32>
    %741 = arith.mulf %739, %740 : vector<24x128xf32>
    %742 = arith.addf %738, %741 : vector<24x128xf32>
    %c127_i32_289 = arith.constant 127 : i32
    %743 = tpu.dynamic_rotate %689 by %c127_i32_289 dim 1 : vector<24x128xf32>, i32 -> vector<24x128xf32>
    %744 = vector.broadcast %88 : vector<24x1xf32> to vector<24x128xf32>
    %745 = arith.mulf %743, %744 : vector<24x128xf32>
    %746 = arith.addf %742, %745 : vector<24x128xf32>
    %c119_i32_290 = arith.constant 119 : i32
    %747 = tpu.dynamic_rotate %689 by %c119_i32_290 dim 1 : vector<24x128xf32>, i32 -> vector<24x128xf32>
    %748 = vector.broadcast %94 : vector<24x1xf32> to vector<24x128xf32>
    %749 = arith.mulf %747, %748 : vector<24x128xf32>
    %750 = arith.addf %746, %749 : vector<24x128xf32>
    %c111_i32_291 = arith.constant 111 : i32
    %751 = tpu.dynamic_rotate %689 by %c111_i32_291 dim 1 : vector<24x128xf32>, i32 -> vector<24x128xf32>
    %752 = vector.broadcast %100 : vector<24x1xf32> to vector<24x128xf32>
    %753 = arith.mulf %751, %752 : vector<24x128xf32>
    %754 = arith.addf %750, %753 : vector<24x128xf32>
    %c127_i32_292 = arith.constant 127 : i32
    %755 = tpu.dynamic_rotate %691 by %c127_i32_292 dim 1 : vector<24x128xf32>, i32 -> vector<24x128xf32>
    %756 = vector.broadcast %106 : vector<24x1xf32> to vector<24x128xf32>
    %757 = arith.mulf %755, %756 : vector<24x128xf32>
    %758 = arith.addf %754, %757 : vector<24x128xf32>
    %c119_i32_293 = arith.constant 119 : i32
    %759 = tpu.dynamic_rotate %691 by %c119_i32_293 dim 1 : vector<24x128xf32>, i32 -> vector<24x128xf32>
    %760 = vector.broadcast %112 : vector<24x1xf32> to vector<24x128xf32>
    %761 = arith.mulf %759, %760 : vector<24x128xf32>
    %762 = arith.addf %758, %761 : vector<24x128xf32>
    %c111_i32_294 = arith.constant 111 : i32
    %763 = tpu.dynamic_rotate %691 by %c111_i32_294 dim 1 : vector<24x128xf32>, i32 -> vector<24x128xf32>
    %764 = vector.broadcast %118 : vector<24x1xf32> to vector<24x128xf32>
    %765 = arith.mulf %763, %764 : vector<24x128xf32>
    %766 = arith.addf %762, %765 : vector<24x128xf32>
    %767 = arith.addf %729, %766 : vector<24x128xf32>
    %cst_295 = arith.constant 0.000000e+00 : f32
    %768 = vector.broadcast %cst_295 : f32 to vector<24x128xf32>
    %c126_i32_296 = arith.constant 126 : i32
    %769 = tpu.dynamic_rotate %687 by %c126_i32_296 dim 1 : vector<24x128xf32>, i32 -> vector<24x128xf32>
    %770 = vector.broadcast %72 : vector<24x1xf32> to vector<24x128xf32>
    %771 = arith.mulf %769, %770 : vector<24x128xf32>
    %772 = arith.addf %768, %771 : vector<24x128xf32>
    %c118_i32_297 = arith.constant 118 : i32
    %773 = tpu.dynamic_rotate %687 by %c118_i32_297 dim 1 : vector<24x128xf32>, i32 -> vector<24x128xf32>
    %774 = vector.broadcast %78 : vector<24x1xf32> to vector<24x128xf32>
    %775 = arith.mulf %773, %774 : vector<24x128xf32>
    %776 = arith.addf %772, %775 : vector<24x128xf32>
    %c110_i32_298 = arith.constant 110 : i32
    %777 = tpu.dynamic_rotate %687 by %c110_i32_298 dim 1 : vector<24x128xf32>, i32 -> vector<24x128xf32>
    %778 = vector.broadcast %84 : vector<24x1xf32> to vector<24x128xf32>
    %779 = arith.mulf %777, %778 : vector<24x128xf32>
    %780 = arith.addf %776, %779 : vector<24x128xf32>
    %c126_i32_299 = arith.constant 126 : i32
    %781 = tpu.dynamic_rotate %689 by %c126_i32_299 dim 1 : vector<24x128xf32>, i32 -> vector<24x128xf32>
    %782 = vector.broadcast %90 : vector<24x1xf32> to vector<24x128xf32>
    %783 = arith.mulf %781, %782 : vector<24x128xf32>
    %784 = arith.addf %780, %783 : vector<24x128xf32>
    %c118_i32_300 = arith.constant 118 : i32
    %785 = tpu.dynamic_rotate %689 by %c118_i32_300 dim 1 : vector<24x128xf32>, i32 -> vector<24x128xf32>
    %786 = vector.broadcast %96 : vector<24x1xf32> to vector<24x128xf32>
    %787 = arith.mulf %785, %786 : vector<24x128xf32>
    %788 = arith.addf %784, %787 : vector<24x128xf32>
    %c110_i32_301 = arith.constant 110 : i32
    %789 = tpu.dynamic_rotate %689 by %c110_i32_301 dim 1 : vector<24x128xf32>, i32 -> vector<24x128xf32>
    %790 = vector.broadcast %102 : vector<24x1xf32> to vector<24x128xf32>
    %791 = arith.mulf %789, %790 : vector<24x128xf32>
    %792 = arith.addf %788, %791 : vector<24x128xf32>
    %c126_i32_302 = arith.constant 126 : i32
    %793 = tpu.dynamic_rotate %691 by %c126_i32_302 dim 1 : vector<24x128xf32>, i32 -> vector<24x128xf32>
    %794 = vector.broadcast %108 : vector<24x1xf32> to vector<24x128xf32>
    %795 = arith.mulf %793, %794 : vector<24x128xf32>
    %796 = arith.addf %792, %795 : vector<24x128xf32>
    %c118_i32_303 = arith.constant 118 : i32
    %797 = tpu.dynamic_rotate %691 by %c118_i32_303 dim 1 : vector<24x128xf32>, i32 -> vector<24x128xf32>
    %798 = vector.broadcast %114 : vector<24x1xf32> to vector<24x128xf32>
    %799 = arith.mulf %797, %798 : vector<24x128xf32>
    %800 = arith.addf %796, %799 : vector<24x128xf32>
    %c110_i32_304 = arith.constant 110 : i32
    %801 = tpu.dynamic_rotate %691 by %c110_i32_304 dim 1 : vector<24x128xf32>, i32 -> vector<24x128xf32>
    %802 = vector.broadcast %120 : vector<24x1xf32> to vector<24x128xf32>
    %803 = arith.mulf %801, %802 : vector<24x128xf32>
    %804 = arith.addf %800, %803 : vector<24x128xf32>
    %805 = vector.broadcast %152 : vector<1x128xf32> to vector<24x128xf32>
    %806 = arith.mulf %804, %805 : vector<24x128xf32>
    %807 = arith.addf %767, %806 : vector<24x128xf32>
    %808 = vector.extract_strided_slice %807 {offsets = [0, 0], sizes = [24, 64], strides = [1, 1]} : vector<24x128xf32> to vector<24x64xf32>
    %809 = vector.broadcast %121 : vector<24x1xf32> to vector<24x64xf32>
    %810 = arith.addf %808, %809 : vector<24x64xf32>
    %cst_305 = arith.constant 0.000000e+00 : f32
    %cst_306 = arith.constant 6.000000e+00 : f32
    %811 = vector.broadcast %cst_305 : f32 to vector<24x64xf32>
    %812 = arith.maximumf %811, %810 : vector<24x64xf32>
    %813 = vector.broadcast %cst_306 : f32 to vector<24x64xf32>
    %814 = arith.minimumf %813, %812 : vector<24x64xf32>
    %c0_307 = arith.constant 0 : index
    %c256 = arith.constant 256 : index
    %815 = vector.load %arg14[%c0_307, %c256] : memref<24x512xf32, #tpu.memory_space<vmem>>, vector<24x64xf32>
    tpu.vector_store %arg14[%c0_307, %c256], %814 {strides = array<i32>} : memref<24x512xf32, #tpu.memory_space<vmem>>, vector<24x64xf32>,
    %cst_308 = arith.constant dense<0.000000e+00> : vector<24xf32>
    %816 = vector.multi_reduction <add>, %814, %cst_308 [1] : vector<24x64xf32> to vector<24xf32>
    %817 = vector.shape_cast %816 : vector<24xf32> to vector<24x1xf32>
    %818 = arith.addf %685, %817 : vector<24x1xf32>
    %c5_309 = arith.constant 5 : index
    %c0_310 = arith.constant 0 : index
    %c0_311 = arith.constant 0 : index
    %819 = vector.load %arg13[%c5_309, %c0_310, %c0_311] : memref<10x24x128xf32, #tpu.memory_space<vmem>>, vector<1x24x128xf32>
    %820 = vector.shape_cast %819 : vector<1x24x128xf32> to vector<24x128xf32>
    %c6_312 = arith.constant 6 : index
    %c0_313 = arith.constant 0 : index
    %c0_314 = arith.constant 0 : index
    %821 = vector.load %arg13[%c6_312, %c0_313, %c0_314] : memref<10x24x128xf32, #tpu.memory_space<vmem>>, vector<1x24x128xf32>
    %822 = vector.shape_cast %821 : vector<1x24x128xf32> to vector<24x128xf32>
    %c7_315 = arith.constant 7 : index
    %c0_316 = arith.constant 0 : index
    %c0_317 = arith.constant 0 : index
    %823 = vector.load %arg13[%c7_315, %c0_316, %c0_317] : memref<10x24x128xf32, #tpu.memory_space<vmem>>, vector<1x24x128xf32>
    %824 = vector.shape_cast %823 : vector<1x24x128xf32> to vector<24x128xf32>
    %cst_318 = arith.constant 0.000000e+00 : f32
    %825 = vector.broadcast %cst_318 : f32 to vector<24x128xf32>
    %cst_319 = arith.constant 0.000000e+00 : f32
    %826 = vector.broadcast %cst_319 : f32 to vector<24x128xf32>
    %827 = vector.broadcast %68 : vector<24x1xf32> to vector<24x128xf32>
    %828 = arith.mulf %820, %827 : vector<24x128xf32>
    %829 = arith.addf %826, %828 : vector<24x128xf32>
    %c120_i32_320 = arith.constant 120 : i32
    %830 = tpu.dynamic_rotate %820 by %c120_i32_320 dim 1 : vector<24x128xf32>, i32 -> vector<24x128xf32>
    %831 = vector.broadcast %74 : vector<24x1xf32> to vector<24x128xf32>
    %832 = arith.mulf %830, %831 : vector<24x128xf32>
    %833 = arith.addf %829, %832 : vector<24x128xf32>
    %c112_i32_321 = arith.constant 112 : i32
    %834 = tpu.dynamic_rotate %820 by %c112_i32_321 dim 1 : vector<24x128xf32>, i32 -> vector<24x128xf32>
    %835 = vector.broadcast %80 : vector<24x1xf32> to vector<24x128xf32>
    %836 = arith.mulf %834, %835 : vector<24x128xf32>
    %837 = arith.addf %833, %836 : vector<24x128xf32>
    %838 = vector.broadcast %86 : vector<24x1xf32> to vector<24x128xf32>
    %839 = arith.mulf %822, %838 : vector<24x128xf32>
    %840 = arith.addf %837, %839 : vector<24x128xf32>
    %c120_i32_322 = arith.constant 120 : i32
    %841 = tpu.dynamic_rotate %822 by %c120_i32_322 dim 1 : vector<24x128xf32>, i32 -> vector<24x128xf32>
    %842 = vector.broadcast %92 : vector<24x1xf32> to vector<24x128xf32>
    %843 = arith.mulf %841, %842 : vector<24x128xf32>
    %844 = arith.addf %840, %843 : vector<24x128xf32>
    %c112_i32_323 = arith.constant 112 : i32
    %845 = tpu.dynamic_rotate %822 by %c112_i32_323 dim 1 : vector<24x128xf32>, i32 -> vector<24x128xf32>
    %846 = vector.broadcast %98 : vector<24x1xf32> to vector<24x128xf32>
    %847 = arith.mulf %845, %846 : vector<24x128xf32>
    %848 = arith.addf %844, %847 : vector<24x128xf32>
    %849 = vector.broadcast %104 : vector<24x1xf32> to vector<24x128xf32>
    %850 = arith.mulf %824, %849 : vector<24x128xf32>
    %851 = arith.addf %848, %850 : vector<24x128xf32>
    %c120_i32_324 = arith.constant 120 : i32
    %852 = tpu.dynamic_rotate %824 by %c120_i32_324 dim 1 : vector<24x128xf32>, i32 -> vector<24x128xf32>
    %853 = vector.broadcast %110 : vector<24x1xf32> to vector<24x128xf32>
    %854 = arith.mulf %852, %853 : vector<24x128xf32>
    %855 = arith.addf %851, %854 : vector<24x128xf32>
    %c112_i32_325 = arith.constant 112 : i32
    %856 = tpu.dynamic_rotate %824 by %c112_i32_325 dim 1 : vector<24x128xf32>, i32 -> vector<24x128xf32>
    %857 = vector.broadcast %116 : vector<24x1xf32> to vector<24x128xf32>
    %858 = arith.mulf %856, %857 : vector<24x128xf32>
    %859 = arith.addf %855, %858 : vector<24x128xf32>
    %860 = vector.broadcast %145 : vector<1x128xf32> to vector<24x128xf32>
    %861 = arith.mulf %859, %860 : vector<24x128xf32>
    %862 = arith.addf %825, %861 : vector<24x128xf32>
    %cst_326 = arith.constant 0.000000e+00 : f32
    %863 = vector.broadcast %cst_326 : f32 to vector<24x128xf32>
    %c127_i32_327 = arith.constant 127 : i32
    %864 = tpu.dynamic_rotate %820 by %c127_i32_327 dim 1 : vector<24x128xf32>, i32 -> vector<24x128xf32>
    %865 = vector.broadcast %70 : vector<24x1xf32> to vector<24x128xf32>
    %866 = arith.mulf %864, %865 : vector<24x128xf32>
    %867 = arith.addf %863, %866 : vector<24x128xf32>
    %c119_i32_328 = arith.constant 119 : i32
    %868 = tpu.dynamic_rotate %820 by %c119_i32_328 dim 1 : vector<24x128xf32>, i32 -> vector<24x128xf32>
    %869 = vector.broadcast %76 : vector<24x1xf32> to vector<24x128xf32>
    %870 = arith.mulf %868, %869 : vector<24x128xf32>
    %871 = arith.addf %867, %870 : vector<24x128xf32>
    %c111_i32_329 = arith.constant 111 : i32
    %872 = tpu.dynamic_rotate %820 by %c111_i32_329 dim 1 : vector<24x128xf32>, i32 -> vector<24x128xf32>
    %873 = vector.broadcast %82 : vector<24x1xf32> to vector<24x128xf32>
    %874 = arith.mulf %872, %873 : vector<24x128xf32>
    %875 = arith.addf %871, %874 : vector<24x128xf32>
    %c127_i32_330 = arith.constant 127 : i32
    %876 = tpu.dynamic_rotate %822 by %c127_i32_330 dim 1 : vector<24x128xf32>, i32 -> vector<24x128xf32>
    %877 = vector.broadcast %88 : vector<24x1xf32> to vector<24x128xf32>
    %878 = arith.mulf %876, %877 : vector<24x128xf32>
    %879 = arith.addf %875, %878 : vector<24x128xf32>
    %c119_i32_331 = arith.constant 119 : i32
    %880 = tpu.dynamic_rotate %822 by %c119_i32_331 dim 1 : vector<24x128xf32>, i32 -> vector<24x128xf32>
    %881 = vector.broadcast %94 : vector<24x1xf32> to vector<24x128xf32>
    %882 = arith.mulf %880, %881 : vector<24x128xf32>
    %883 = arith.addf %879, %882 : vector<24x128xf32>
    %c111_i32_332 = arith.constant 111 : i32
    %884 = tpu.dynamic_rotate %822 by %c111_i32_332 dim 1 : vector<24x128xf32>, i32 -> vector<24x128xf32>
    %885 = vector.broadcast %100 : vector<24x1xf32> to vector<24x128xf32>
    %886 = arith.mulf %884, %885 : vector<24x128xf32>
    %887 = arith.addf %883, %886 : vector<24x128xf32>
    %c127_i32_333 = arith.constant 127 : i32
    %888 = tpu.dynamic_rotate %824 by %c127_i32_333 dim 1 : vector<24x128xf32>, i32 -> vector<24x128xf32>
    %889 = vector.broadcast %106 : vector<24x1xf32> to vector<24x128xf32>
    %890 = arith.mulf %888, %889 : vector<24x128xf32>
    %891 = arith.addf %887, %890 : vector<24x128xf32>
    %c119_i32_334 = arith.constant 119 : i32
    %892 = tpu.dynamic_rotate %824 by %c119_i32_334 dim 1 : vector<24x128xf32>, i32 -> vector<24x128xf32>
    %893 = vector.broadcast %112 : vector<24x1xf32> to vector<24x128xf32>
    %894 = arith.mulf %892, %893 : vector<24x128xf32>
    %895 = arith.addf %891, %894 : vector<24x128xf32>
    %c111_i32_335 = arith.constant 111 : i32
    %896 = tpu.dynamic_rotate %824 by %c111_i32_335 dim 1 : vector<24x128xf32>, i32 -> vector<24x128xf32>
    %897 = vector.broadcast %118 : vector<24x1xf32> to vector<24x128xf32>
    %898 = arith.mulf %896, %897 : vector<24x128xf32>
    %899 = arith.addf %895, %898 : vector<24x128xf32>
    %900 = arith.addf %862, %899 : vector<24x128xf32>
    %cst_336 = arith.constant 0.000000e+00 : f32
    %901 = vector.broadcast %cst_336 : f32 to vector<24x128xf32>
    %c126_i32_337 = arith.constant 126 : i32
    %902 = tpu.dynamic_rotate %820 by %c126_i32_337 dim 1 : vector<24x128xf32>, i32 -> vector<24x128xf32>
    %903 = vector.broadcast %72 : vector<24x1xf32> to vector<24x128xf32>
    %904 = arith.mulf %902, %903 : vector<24x128xf32>
    %905 = arith.addf %901, %904 : vector<24x128xf32>
    %c118_i32_338 = arith.constant 118 : i32
    %906 = tpu.dynamic_rotate %820 by %c118_i32_338 dim 1 : vector<24x128xf32>, i32 -> vector<24x128xf32>
    %907 = vector.broadcast %78 : vector<24x1xf32> to vector<24x128xf32>
    %908 = arith.mulf %906, %907 : vector<24x128xf32>
    %909 = arith.addf %905, %908 : vector<24x128xf32>
    %c110_i32_339 = arith.constant 110 : i32
    %910 = tpu.dynamic_rotate %820 by %c110_i32_339 dim 1 : vector<24x128xf32>, i32 -> vector<24x128xf32>
    %911 = vector.broadcast %84 : vector<24x1xf32> to vector<24x128xf32>
    %912 = arith.mulf %910, %911 : vector<24x128xf32>
    %913 = arith.addf %909, %912 : vector<24x128xf32>
    %c126_i32_340 = arith.constant 126 : i32
    %914 = tpu.dynamic_rotate %822 by %c126_i32_340 dim 1 : vector<24x128xf32>, i32 -> vector<24x128xf32>
    %915 = vector.broadcast %90 : vector<24x1xf32> to vector<24x128xf32>
    %916 = arith.mulf %914, %915 : vector<24x128xf32>
    %917 = arith.addf %913, %916 : vector<24x128xf32>
    %c118_i32_341 = arith.constant 118 : i32
    %918 = tpu.dynamic_rotate %822 by %c118_i32_341 dim 1 : vector<24x128xf32>, i32 -> vector<24x128xf32>
    %919 = vector.broadcast %96 : vector<24x1xf32> to vector<24x128xf32>
    %920 = arith.mulf %918, %919 : vector<24x128xf32>
    %921 = arith.addf %917, %920 : vector<24x128xf32>
    %c110_i32_342 = arith.constant 110 : i32
    %922 = tpu.dynamic_rotate %822 by %c110_i32_342 dim 1 : vector<24x128xf32>, i32 -> vector<24x128xf32>
    %923 = vector.broadcast %102 : vector<24x1xf32> to vector<24x128xf32>
    %924 = arith.mulf %922, %923 : vector<24x128xf32>
    %925 = arith.addf %921, %924 : vector<24x128xf32>
    %c126_i32_343 = arith.constant 126 : i32
    %926 = tpu.dynamic_rotate %824 by %c126_i32_343 dim 1 : vector<24x128xf32>, i32 -> vector<24x128xf32>
    %927 = vector.broadcast %108 : vector<24x1xf32> to vector<24x128xf32>
    %928 = arith.mulf %926, %927 : vector<24x128xf32>
    %929 = arith.addf %925, %928 : vector<24x128xf32>
    %c118_i32_344 = arith.constant 118 : i32
    %930 = tpu.dynamic_rotate %824 by %c118_i32_344 dim 1 : vector<24x128xf32>, i32 -> vector<24x128xf32>
    %931 = vector.broadcast %114 : vector<24x1xf32> to vector<24x128xf32>
    %932 = arith.mulf %930, %931 : vector<24x128xf32>
    %933 = arith.addf %929, %932 : vector<24x128xf32>
    %c110_i32_345 = arith.constant 110 : i32
    %934 = tpu.dynamic_rotate %824 by %c110_i32_345 dim 1 : vector<24x128xf32>, i32 -> vector<24x128xf32>
    %935 = vector.broadcast %120 : vector<24x1xf32> to vector<24x128xf32>
    %936 = arith.mulf %934, %935 : vector<24x128xf32>
    %937 = arith.addf %933, %936 : vector<24x128xf32>
    %938 = vector.broadcast %152 : vector<1x128xf32> to vector<24x128xf32>
    %939 = arith.mulf %937, %938 : vector<24x128xf32>
    %940 = arith.addf %900, %939 : vector<24x128xf32>
    %941 = vector.extract_strided_slice %940 {offsets = [0, 0], sizes = [24, 64], strides = [1, 1]} : vector<24x128xf32> to vector<24x64xf32>
    %942 = vector.broadcast %121 : vector<24x1xf32> to vector<24x64xf32>
    %943 = arith.addf %941, %942 : vector<24x64xf32>
    %cst_346 = arith.constant 0.000000e+00 : f32
    %cst_347 = arith.constant 6.000000e+00 : f32
    %944 = vector.broadcast %cst_346 : f32 to vector<24x64xf32>
    %945 = arith.maximumf %944, %943 : vector<24x64xf32>
    %946 = vector.broadcast %cst_347 : f32 to vector<24x64xf32>
    %947 = arith.minimumf %946, %945 : vector<24x64xf32>
    %c0_348 = arith.constant 0 : index
    %c320 = arith.constant 320 : index
    %948 = vector.load %arg14[%c0_348, %c320] : memref<24x512xf32, #tpu.memory_space<vmem>>, vector<24x64xf32>
    tpu.vector_store %arg14[%c0_348, %c320], %947 {strides = array<i32>} : memref<24x512xf32, #tpu.memory_space<vmem>>, vector<24x64xf32>,
    %cst_349 = arith.constant dense<0.000000e+00> : vector<24xf32>
    %949 = vector.multi_reduction <add>, %947, %cst_349 [1] : vector<24x64xf32> to vector<24xf32>
    %950 = vector.shape_cast %949 : vector<24xf32> to vector<24x1xf32>
    %951 = arith.addf %818, %950 : vector<24x1xf32>
    %c6_350 = arith.constant 6 : index
    %c0_351 = arith.constant 0 : index
    %c0_352 = arith.constant 0 : index
    %952 = vector.load %arg13[%c6_350, %c0_351, %c0_352] : memref<10x24x128xf32, #tpu.memory_space<vmem>>, vector<1x24x128xf32>
    %953 = vector.shape_cast %952 : vector<1x24x128xf32> to vector<24x128xf32>
    %c7_353 = arith.constant 7 : index
    %c0_354 = arith.constant 0 : index
    %c0_355 = arith.constant 0 : index
    %954 = vector.load %arg13[%c7_353, %c0_354, %c0_355] : memref<10x24x128xf32, #tpu.memory_space<vmem>>, vector<1x24x128xf32>
    %955 = vector.shape_cast %954 : vector<1x24x128xf32> to vector<24x128xf32>
    %c8_356 = arith.constant 8 : index
    %c0_357 = arith.constant 0 : index
    %c0_358 = arith.constant 0 : index
    %956 = vector.load %arg13[%c8_356, %c0_357, %c0_358] : memref<10x24x128xf32, #tpu.memory_space<vmem>>, vector<1x24x128xf32>
    %957 = vector.shape_cast %956 : vector<1x24x128xf32> to vector<24x128xf32>
    %cst_359 = arith.constant 0.000000e+00 : f32
    %958 = vector.broadcast %cst_359 : f32 to vector<24x128xf32>
    %cst_360 = arith.constant 0.000000e+00 : f32
    %959 = vector.broadcast %cst_360 : f32 to vector<24x128xf32>
    %960 = vector.broadcast %68 : vector<24x1xf32> to vector<24x128xf32>
    %961 = arith.mulf %953, %960 : vector<24x128xf32>
    %962 = arith.addf %959, %961 : vector<24x128xf32>
    %c120_i32_361 = arith.constant 120 : i32
    %963 = tpu.dynamic_rotate %953 by %c120_i32_361 dim 1 : vector<24x128xf32>, i32 -> vector<24x128xf32>
    %964 = vector.broadcast %74 : vector<24x1xf32> to vector<24x128xf32>
    %965 = arith.mulf %963, %964 : vector<24x128xf32>
    %966 = arith.addf %962, %965 : vector<24x128xf32>
    %c112_i32_362 = arith.constant 112 : i32
    %967 = tpu.dynamic_rotate %953 by %c112_i32_362 dim 1 : vector<24x128xf32>, i32 -> vector<24x128xf32>
    %968 = vector.broadcast %80 : vector<24x1xf32> to vector<24x128xf32>
    %969 = arith.mulf %967, %968 : vector<24x128xf32>
    %970 = arith.addf %966, %969 : vector<24x128xf32>
    %971 = vector.broadcast %86 : vector<24x1xf32> to vector<24x128xf32>
    %972 = arith.mulf %955, %971 : vector<24x128xf32>
    %973 = arith.addf %970, %972 : vector<24x128xf32>
    %c120_i32_363 = arith.constant 120 : i32
    %974 = tpu.dynamic_rotate %955 by %c120_i32_363 dim 1 : vector<24x128xf32>, i32 -> vector<24x128xf32>
    %975 = vector.broadcast %92 : vector<24x1xf32> to vector<24x128xf32>
    %976 = arith.mulf %974, %975 : vector<24x128xf32>
    %977 = arith.addf %973, %976 : vector<24x128xf32>
    %c112_i32_364 = arith.constant 112 : i32
    %978 = tpu.dynamic_rotate %955 by %c112_i32_364 dim 1 : vector<24x128xf32>, i32 -> vector<24x128xf32>
    %979 = vector.broadcast %98 : vector<24x1xf32> to vector<24x128xf32>
    %980 = arith.mulf %978, %979 : vector<24x128xf32>
    %981 = arith.addf %977, %980 : vector<24x128xf32>
    %982 = vector.broadcast %104 : vector<24x1xf32> to vector<24x128xf32>
    %983 = arith.mulf %957, %982 : vector<24x128xf32>
    %984 = arith.addf %981, %983 : vector<24x128xf32>
    %c120_i32_365 = arith.constant 120 : i32
    %985 = tpu.dynamic_rotate %957 by %c120_i32_365 dim 1 : vector<24x128xf32>, i32 -> vector<24x128xf32>
    %986 = vector.broadcast %110 : vector<24x1xf32> to vector<24x128xf32>
    %987 = arith.mulf %985, %986 : vector<24x128xf32>
    %988 = arith.addf %984, %987 : vector<24x128xf32>
    %c112_i32_366 = arith.constant 112 : i32
    %989 = tpu.dynamic_rotate %957 by %c112_i32_366 dim 1 : vector<24x128xf32>, i32 -> vector<24x128xf32>
    %990 = vector.broadcast %116 : vector<24x1xf32> to vector<24x128xf32>
    %991 = arith.mulf %989, %990 : vector<24x128xf32>
    %992 = arith.addf %988, %991 : vector<24x128xf32>
    %993 = vector.broadcast %145 : vector<1x128xf32> to vector<24x128xf32>
    %994 = arith.mulf %992, %993 : vector<24x128xf32>
    %995 = arith.addf %958, %994 : vector<24x128xf32>
    %cst_367 = arith.constant 0.000000e+00 : f32
    %996 = vector.broadcast %cst_367 : f32 to vector<24x128xf32>
    %c127_i32_368 = arith.constant 127 : i32
    %997 = tpu.dynamic_rotate %953 by %c127_i32_368 dim 1 : vector<24x128xf32>, i32 -> vector<24x128xf32>
    %998 = vector.broadcast %70 : vector<24x1xf32> to vector<24x128xf32>
    %999 = arith.mulf %997, %998 : vector<24x128xf32>
    %1000 = arith.addf %996, %999 : vector<24x128xf32>
    %c119_i32_369 = arith.constant 119 : i32
    %1001 = tpu.dynamic_rotate %953 by %c119_i32_369 dim 1 : vector<24x128xf32>, i32 -> vector<24x128xf32>
    %1002 = vector.broadcast %76 : vector<24x1xf32> to vector<24x128xf32>
    %1003 = arith.mulf %1001, %1002 : vector<24x128xf32>
    %1004 = arith.addf %1000, %1003 : vector<24x128xf32>
    %c111_i32_370 = arith.constant 111 : i32
    %1005 = tpu.dynamic_rotate %953 by %c111_i32_370 dim 1 : vector<24x128xf32>, i32 -> vector<24x128xf32>
    %1006 = vector.broadcast %82 : vector<24x1xf32> to vector<24x128xf32>
    %1007 = arith.mulf %1005, %1006 : vector<24x128xf32>
    %1008 = arith.addf %1004, %1007 : vector<24x128xf32>
    %c127_i32_371 = arith.constant 127 : i32
    %1009 = tpu.dynamic_rotate %955 by %c127_i32_371 dim 1 : vector<24x128xf32>, i32 -> vector<24x128xf32>
    %1010 = vector.broadcast %88 : vector<24x1xf32> to vector<24x128xf32>
    %1011 = arith.mulf %1009, %1010 : vector<24x128xf32>
    %1012 = arith.addf %1008, %1011 : vector<24x128xf32>
    %c119_i32_372 = arith.constant 119 : i32
    %1013 = tpu.dynamic_rotate %955 by %c119_i32_372 dim 1 : vector<24x128xf32>, i32 -> vector<24x128xf32>
    %1014 = vector.broadcast %94 : vector<24x1xf32> to vector<24x128xf32>
    %1015 = arith.mulf %1013, %1014 : vector<24x128xf32>
    %1016 = arith.addf %1012, %1015 : vector<24x128xf32>
    %c111_i32_373 = arith.constant 111 : i32
    %1017 = tpu.dynamic_rotate %955 by %c111_i32_373 dim 1 : vector<24x128xf32>, i32 -> vector<24x128xf32>
    %1018 = vector.broadcast %100 : vector<24x1xf32> to vector<24x128xf32>
    %1019 = arith.mulf %1017, %1018 : vector<24x128xf32>
    %1020 = arith.addf %1016, %1019 : vector<24x128xf32>
    %c127_i32_374 = arith.constant 127 : i32
    %1021 = tpu.dynamic_rotate %957 by %c127_i32_374 dim 1 : vector<24x128xf32>, i32 -> vector<24x128xf32>
    %1022 = vector.broadcast %106 : vector<24x1xf32> to vector<24x128xf32>
    %1023 = arith.mulf %1021, %1022 : vector<24x128xf32>
    %1024 = arith.addf %1020, %1023 : vector<24x128xf32>
    %c119_i32_375 = arith.constant 119 : i32
    %1025 = tpu.dynamic_rotate %957 by %c119_i32_375 dim 1 : vector<24x128xf32>, i32 -> vector<24x128xf32>
    %1026 = vector.broadcast %112 : vector<24x1xf32> to vector<24x128xf32>
    %1027 = arith.mulf %1025, %1026 : vector<24x128xf32>
    %1028 = arith.addf %1024, %1027 : vector<24x128xf32>
    %c111_i32_376 = arith.constant 111 : i32
    %1029 = tpu.dynamic_rotate %957 by %c111_i32_376 dim 1 : vector<24x128xf32>, i32 -> vector<24x128xf32>
    %1030 = vector.broadcast %118 : vector<24x1xf32> to vector<24x128xf32>
    %1031 = arith.mulf %1029, %1030 : vector<24x128xf32>
    %1032 = arith.addf %1028, %1031 : vector<24x128xf32>
    %1033 = arith.addf %995, %1032 : vector<24x128xf32>
    %cst_377 = arith.constant 0.000000e+00 : f32
    %1034 = vector.broadcast %cst_377 : f32 to vector<24x128xf32>
    %c126_i32_378 = arith.constant 126 : i32
    %1035 = tpu.dynamic_rotate %953 by %c126_i32_378 dim 1 : vector<24x128xf32>, i32 -> vector<24x128xf32>
    %1036 = vector.broadcast %72 : vector<24x1xf32> to vector<24x128xf32>
    %1037 = arith.mulf %1035, %1036 : vector<24x128xf32>
    %1038 = arith.addf %1034, %1037 : vector<24x128xf32>
    %c118_i32_379 = arith.constant 118 : i32
    %1039 = tpu.dynamic_rotate %953 by %c118_i32_379 dim 1 : vector<24x128xf32>, i32 -> vector<24x128xf32>
    %1040 = vector.broadcast %78 : vector<24x1xf32> to vector<24x128xf32>
    %1041 = arith.mulf %1039, %1040 : vector<24x128xf32>
    %1042 = arith.addf %1038, %1041 : vector<24x128xf32>
    %c110_i32_380 = arith.constant 110 : i32
    %1043 = tpu.dynamic_rotate %953 by %c110_i32_380 dim 1 : vector<24x128xf32>, i32 -> vector<24x128xf32>
    %1044 = vector.broadcast %84 : vector<24x1xf32> to vector<24x128xf32>
    %1045 = arith.mulf %1043, %1044 : vector<24x128xf32>
    %1046 = arith.addf %1042, %1045 : vector<24x128xf32>
    %c126_i32_381 = arith.constant 126 : i32
    %1047 = tpu.dynamic_rotate %955 by %c126_i32_381 dim 1 : vector<24x128xf32>, i32 -> vector<24x128xf32>
    %1048 = vector.broadcast %90 : vector<24x1xf32> to vector<24x128xf32>
    %1049 = arith.mulf %1047, %1048 : vector<24x128xf32>
    %1050 = arith.addf %1046, %1049 : vector<24x128xf32>
    %c118_i32_382 = arith.constant 118 : i32
    %1051 = tpu.dynamic_rotate %955 by %c118_i32_382 dim 1 : vector<24x128xf32>, i32 -> vector<24x128xf32>
    %1052 = vector.broadcast %96 : vector<24x1xf32> to vector<24x128xf32>
    %1053 = arith.mulf %1051, %1052 : vector<24x128xf32>
    %1054 = arith.addf %1050, %1053 : vector<24x128xf32>
    %c110_i32_383 = arith.constant 110 : i32
    %1055 = tpu.dynamic_rotate %955 by %c110_i32_383 dim 1 : vector<24x128xf32>, i32 -> vector<24x128xf32>
    %1056 = vector.broadcast %102 : vector<24x1xf32> to vector<24x128xf32>
    %1057 = arith.mulf %1055, %1056 : vector<24x128xf32>
    %1058 = arith.addf %1054, %1057 : vector<24x128xf32>
    %c126_i32_384 = arith.constant 126 : i32
    %1059 = tpu.dynamic_rotate %957 by %c126_i32_384 dim 1 : vector<24x128xf32>, i32 -> vector<24x128xf32>
    %1060 = vector.broadcast %108 : vector<24x1xf32> to vector<24x128xf32>
    %1061 = arith.mulf %1059, %1060 : vector<24x128xf32>
    %1062 = arith.addf %1058, %1061 : vector<24x128xf32>
    %c118_i32_385 = arith.constant 118 : i32
    %1063 = tpu.dynamic_rotate %957 by %c118_i32_385 dim 1 : vector<24x128xf32>, i32 -> vector<24x128xf32>
    %1064 = vector.broadcast %114 : vector<24x1xf32> to vector<24x128xf32>
    %1065 = arith.mulf %1063, %1064 : vector<24x128xf32>
    %1066 = arith.addf %1062, %1065 : vector<24x128xf32>
    %c110_i32_386 = arith.constant 110 : i32
    %1067 = tpu.dynamic_rotate %957 by %c110_i32_386 dim 1 : vector<24x128xf32>, i32 -> vector<24x128xf32>
    %1068 = vector.broadcast %120 : vector<24x1xf32> to vector<24x128xf32>
    %1069 = arith.mulf %1067, %1068 : vector<24x128xf32>
    %1070 = arith.addf %1066, %1069 : vector<24x128xf32>
    %1071 = vector.broadcast %152 : vector<1x128xf32> to vector<24x128xf32>
    %1072 = arith.mulf %1070, %1071 : vector<24x128xf32>
    %1073 = arith.addf %1033, %1072 : vector<24x128xf32>
    %1074 = vector.extract_strided_slice %1073 {offsets = [0, 0], sizes = [24, 64], strides = [1, 1]} : vector<24x128xf32> to vector<24x64xf32>
    %1075 = vector.broadcast %121 : vector<24x1xf32> to vector<24x64xf32>
    %1076 = arith.addf %1074, %1075 : vector<24x64xf32>
    %cst_387 = arith.constant 0.000000e+00 : f32
    %cst_388 = arith.constant 6.000000e+00 : f32
    %1077 = vector.broadcast %cst_387 : f32 to vector<24x64xf32>
    %1078 = arith.maximumf %1077, %1076 : vector<24x64xf32>
    %1079 = vector.broadcast %cst_388 : f32 to vector<24x64xf32>
    %1080 = arith.minimumf %1079, %1078 : vector<24x64xf32>
    %c0_389 = arith.constant 0 : index
    %c384 = arith.constant 384 : index
    %1081 = vector.load %arg14[%c0_389, %c384] : memref<24x512xf32, #tpu.memory_space<vmem>>, vector<24x64xf32>
    tpu.vector_store %arg14[%c0_389, %c384], %1080 {strides = array<i32>} : memref<24x512xf32, #tpu.memory_space<vmem>>, vector<24x64xf32>,
    %cst_390 = arith.constant dense<0.000000e+00> : vector<24xf32>
    %1082 = vector.multi_reduction <add>, %1080, %cst_390 [1] : vector<24x64xf32> to vector<24xf32>
    %1083 = vector.shape_cast %1082 : vector<24xf32> to vector<24x1xf32>
    %1084 = arith.addf %951, %1083 : vector<24x1xf32>
    %c7_391 = arith.constant 7 : index
    %c0_392 = arith.constant 0 : index
    %c0_393 = arith.constant 0 : index
    %1085 = vector.load %arg13[%c7_391, %c0_392, %c0_393] : memref<10x24x128xf32, #tpu.memory_space<vmem>>, vector<1x24x128xf32>
    %1086 = vector.shape_cast %1085 : vector<1x24x128xf32> to vector<24x128xf32>
    %c8_394 = arith.constant 8 : index
    %c0_395 = arith.constant 0 : index
    %c0_396 = arith.constant 0 : index
    %1087 = vector.load %arg13[%c8_394, %c0_395, %c0_396] : memref<10x24x128xf32, #tpu.memory_space<vmem>>, vector<1x24x128xf32>
    %1088 = vector.shape_cast %1087 : vector<1x24x128xf32> to vector<24x128xf32>
    %c9_397 = arith.constant 9 : index
    %c0_398 = arith.constant 0 : index
    %c0_399 = arith.constant 0 : index
    %1089 = vector.load %arg13[%c9_397, %c0_398, %c0_399] : memref<10x24x128xf32, #tpu.memory_space<vmem>>, vector<1x24x128xf32>
    %1090 = vector.shape_cast %1089 : vector<1x24x128xf32> to vector<24x128xf32>
    %cst_400 = arith.constant 0.000000e+00 : f32
    %1091 = vector.broadcast %cst_400 : f32 to vector<24x128xf32>
    %cst_401 = arith.constant 0.000000e+00 : f32
    %1092 = vector.broadcast %cst_401 : f32 to vector<24x128xf32>
    %1093 = vector.broadcast %68 : vector<24x1xf32> to vector<24x128xf32>
    %1094 = arith.mulf %1086, %1093 : vector<24x128xf32>
    %1095 = arith.addf %1092, %1094 : vector<24x128xf32>
    %c120_i32_402 = arith.constant 120 : i32
    %1096 = tpu.dynamic_rotate %1086 by %c120_i32_402 dim 1 : vector<24x128xf32>, i32 -> vector<24x128xf32>
    %1097 = vector.broadcast %74 : vector<24x1xf32> to vector<24x128xf32>
    %1098 = arith.mulf %1096, %1097 : vector<24x128xf32>
    %1099 = arith.addf %1095, %1098 : vector<24x128xf32>
    %c112_i32_403 = arith.constant 112 : i32
    %1100 = tpu.dynamic_rotate %1086 by %c112_i32_403 dim 1 : vector<24x128xf32>, i32 -> vector<24x128xf32>
    %1101 = vector.broadcast %80 : vector<24x1xf32> to vector<24x128xf32>
    %1102 = arith.mulf %1100, %1101 : vector<24x128xf32>
    %1103 = arith.addf %1099, %1102 : vector<24x128xf32>
    %1104 = vector.broadcast %86 : vector<24x1xf32> to vector<24x128xf32>
    %1105 = arith.mulf %1088, %1104 : vector<24x128xf32>
    %1106 = arith.addf %1103, %1105 : vector<24x128xf32>
    %c120_i32_404 = arith.constant 120 : i32
    %1107 = tpu.dynamic_rotate %1088 by %c120_i32_404 dim 1 : vector<24x128xf32>, i32 -> vector<24x128xf32>
    %1108 = vector.broadcast %92 : vector<24x1xf32> to vector<24x128xf32>
    %1109 = arith.mulf %1107, %1108 : vector<24x128xf32>
    %1110 = arith.addf %1106, %1109 : vector<24x128xf32>
    %c112_i32_405 = arith.constant 112 : i32
    %1111 = tpu.dynamic_rotate %1088 by %c112_i32_405 dim 1 : vector<24x128xf32>, i32 -> vector<24x128xf32>
    %1112 = vector.broadcast %98 : vector<24x1xf32> to vector<24x128xf32>
    %1113 = arith.mulf %1111, %1112 : vector<24x128xf32>
    %1114 = arith.addf %1110, %1113 : vector<24x128xf32>
    %1115 = vector.broadcast %104 : vector<24x1xf32> to vector<24x128xf32>
    %1116 = arith.mulf %1090, %1115 : vector<24x128xf32>
    %1117 = arith.addf %1114, %1116 : vector<24x128xf32>
    %c120_i32_406 = arith.constant 120 : i32
    %1118 = tpu.dynamic_rotate %1090 by %c120_i32_406 dim 1 : vector<24x128xf32>, i32 -> vector<24x128xf32>
    %1119 = vector.broadcast %110 : vector<24x1xf32> to vector<24x128xf32>
    %1120 = arith.mulf %1118, %1119 : vector<24x128xf32>
    %1121 = arith.addf %1117, %1120 : vector<24x128xf32>
    %c112_i32_407 = arith.constant 112 : i32
    %1122 = tpu.dynamic_rotate %1090 by %c112_i32_407 dim 1 : vector<24x128xf32>, i32 -> vector<24x128xf32>
    %1123 = vector.broadcast %116 : vector<24x1xf32> to vector<24x128xf32>
    %1124 = arith.mulf %1122, %1123 : vector<24x128xf32>
    %1125 = arith.addf %1121, %1124 : vector<24x128xf32>
    %1126 = vector.broadcast %145 : vector<1x128xf32> to vector<24x128xf32>
    %1127 = arith.mulf %1125, %1126 : vector<24x128xf32>
    %1128 = arith.addf %1091, %1127 : vector<24x128xf32>
    %cst_408 = arith.constant 0.000000e+00 : f32
    %1129 = vector.broadcast %cst_408 : f32 to vector<24x128xf32>
    %c127_i32_409 = arith.constant 127 : i32
    %1130 = tpu.dynamic_rotate %1086 by %c127_i32_409 dim 1 : vector<24x128xf32>, i32 -> vector<24x128xf32>
    %1131 = vector.broadcast %70 : vector<24x1xf32> to vector<24x128xf32>
    %1132 = arith.mulf %1130, %1131 : vector<24x128xf32>
    %1133 = arith.addf %1129, %1132 : vector<24x128xf32>
    %c119_i32_410 = arith.constant 119 : i32
    %1134 = tpu.dynamic_rotate %1086 by %c119_i32_410 dim 1 : vector<24x128xf32>, i32 -> vector<24x128xf32>
    %1135 = vector.broadcast %76 : vector<24x1xf32> to vector<24x128xf32>
    %1136 = arith.mulf %1134, %1135 : vector<24x128xf32>
    %1137 = arith.addf %1133, %1136 : vector<24x128xf32>
    %c111_i32_411 = arith.constant 111 : i32
    %1138 = tpu.dynamic_rotate %1086 by %c111_i32_411 dim 1 : vector<24x128xf32>, i32 -> vector<24x128xf32>
    %1139 = vector.broadcast %82 : vector<24x1xf32> to vector<24x128xf32>
    %1140 = arith.mulf %1138, %1139 : vector<24x128xf32>
    %1141 = arith.addf %1137, %1140 : vector<24x128xf32>
    %c127_i32_412 = arith.constant 127 : i32
    %1142 = tpu.dynamic_rotate %1088 by %c127_i32_412 dim 1 : vector<24x128xf32>, i32 -> vector<24x128xf32>
    %1143 = vector.broadcast %88 : vector<24x1xf32> to vector<24x128xf32>
    %1144 = arith.mulf %1142, %1143 : vector<24x128xf32>
    %1145 = arith.addf %1141, %1144 : vector<24x128xf32>
    %c119_i32_413 = arith.constant 119 : i32
    %1146 = tpu.dynamic_rotate %1088 by %c119_i32_413 dim 1 : vector<24x128xf32>, i32 -> vector<24x128xf32>
    %1147 = vector.broadcast %94 : vector<24x1xf32> to vector<24x128xf32>
    %1148 = arith.mulf %1146, %1147 : vector<24x128xf32>
    %1149 = arith.addf %1145, %1148 : vector<24x128xf32>
    %c111_i32_414 = arith.constant 111 : i32
    %1150 = tpu.dynamic_rotate %1088 by %c111_i32_414 dim 1 : vector<24x128xf32>, i32 -> vector<24x128xf32>
    %1151 = vector.broadcast %100 : vector<24x1xf32> to vector<24x128xf32>
    %1152 = arith.mulf %1150, %1151 : vector<24x128xf32>
    %1153 = arith.addf %1149, %1152 : vector<24x128xf32>
    %c127_i32_415 = arith.constant 127 : i32
    %1154 = tpu.dynamic_rotate %1090 by %c127_i32_415 dim 1 : vector<24x128xf32>, i32 -> vector<24x128xf32>
    %1155 = vector.broadcast %106 : vector<24x1xf32> to vector<24x128xf32>
    %1156 = arith.mulf %1154, %1155 : vector<24x128xf32>
    %1157 = arith.addf %1153, %1156 : vector<24x128xf32>
    %c119_i32_416 = arith.constant 119 : i32
    %1158 = tpu.dynamic_rotate %1090 by %c119_i32_416 dim 1 : vector<24x128xf32>, i32 -> vector<24x128xf32>
    %1159 = vector.broadcast %112 : vector<24x1xf32> to vector<24x128xf32>
    %1160 = arith.mulf %1158, %1159 : vector<24x128xf32>
    %1161 = arith.addf %1157, %1160 : vector<24x128xf32>
    %c111_i32_417 = arith.constant 111 : i32
    %1162 = tpu.dynamic_rotate %1090 by %c111_i32_417 dim 1 : vector<24x128xf32>, i32 -> vector<24x128xf32>
    %1163 = vector.broadcast %118 : vector<24x1xf32> to vector<24x128xf32>
    %1164 = arith.mulf %1162, %1163 : vector<24x128xf32>
    %1165 = arith.addf %1161, %1164 : vector<24x128xf32>
    %1166 = arith.addf %1128, %1165 : vector<24x128xf32>
    %cst_418 = arith.constant 0.000000e+00 : f32
    %1167 = vector.broadcast %cst_418 : f32 to vector<24x128xf32>
    %c126_i32_419 = arith.constant 126 : i32
    %1168 = tpu.dynamic_rotate %1086 by %c126_i32_419 dim 1 : vector<24x128xf32>, i32 -> vector<24x128xf32>
    %1169 = vector.broadcast %72 : vector<24x1xf32> to vector<24x128xf32>
    %1170 = arith.mulf %1168, %1169 : vector<24x128xf32>
    %1171 = arith.addf %1167, %1170 : vector<24x128xf32>
    %c118_i32_420 = arith.constant 118 : i32
    %1172 = tpu.dynamic_rotate %1086 by %c118_i32_420 dim 1 : vector<24x128xf32>, i32 -> vector<24x128xf32>
    %1173 = vector.broadcast %78 : vector<24x1xf32> to vector<24x128xf32>
    %1174 = arith.mulf %1172, %1173 : vector<24x128xf32>
    %1175 = arith.addf %1171, %1174 : vector<24x128xf32>
    %c110_i32_421 = arith.constant 110 : i32
    %1176 = tpu.dynamic_rotate %1086 by %c110_i32_421 dim 1 : vector<24x128xf32>, i32 -> vector<24x128xf32>
    %1177 = vector.broadcast %84 : vector<24x1xf32> to vector<24x128xf32>
    %1178 = arith.mulf %1176, %1177 : vector<24x128xf32>
    %1179 = arith.addf %1175, %1178 : vector<24x128xf32>
    %c126_i32_422 = arith.constant 126 : i32
    %1180 = tpu.dynamic_rotate %1088 by %c126_i32_422 dim 1 : vector<24x128xf32>, i32 -> vector<24x128xf32>
    %1181 = vector.broadcast %90 : vector<24x1xf32> to vector<24x128xf32>
    %1182 = arith.mulf %1180, %1181 : vector<24x128xf32>
    %1183 = arith.addf %1179, %1182 : vector<24x128xf32>
    %c118_i32_423 = arith.constant 118 : i32
    %1184 = tpu.dynamic_rotate %1088 by %c118_i32_423 dim 1 : vector<24x128xf32>, i32 -> vector<24x128xf32>
    %1185 = vector.broadcast %96 : vector<24x1xf32> to vector<24x128xf32>
    %1186 = arith.mulf %1184, %1185 : vector<24x128xf32>
    %1187 = arith.addf %1183, %1186 : vector<24x128xf32>
    %c110_i32_424 = arith.constant 110 : i32
    %1188 = tpu.dynamic_rotate %1088 by %c110_i32_424 dim 1 : vector<24x128xf32>, i32 -> vector<24x128xf32>
    %1189 = vector.broadcast %102 : vector<24x1xf32> to vector<24x128xf32>
    %1190 = arith.mulf %1188, %1189 : vector<24x128xf32>
    %1191 = arith.addf %1187, %1190 : vector<24x128xf32>
    %c126_i32_425 = arith.constant 126 : i32
    %1192 = tpu.dynamic_rotate %1090 by %c126_i32_425 dim 1 : vector<24x128xf32>, i32 -> vector<24x128xf32>
    %1193 = vector.broadcast %108 : vector<24x1xf32> to vector<24x128xf32>
    %1194 = arith.mulf %1192, %1193 : vector<24x128xf32>
    %1195 = arith.addf %1191, %1194 : vector<24x128xf32>
    %c118_i32_426 = arith.constant 118 : i32
    %1196 = tpu.dynamic_rotate %1090 by %c118_i32_426 dim 1 : vector<24x128xf32>, i32 -> vector<24x128xf32>
    %1197 = vector.broadcast %114 : vector<24x1xf32> to vector<24x128xf32>
    %1198 = arith.mulf %1196, %1197 : vector<24x128xf32>
    %1199 = arith.addf %1195, %1198 : vector<24x128xf32>
    %c110_i32_427 = arith.constant 110 : i32
    %1200 = tpu.dynamic_rotate %1090 by %c110_i32_427 dim 1 : vector<24x128xf32>, i32 -> vector<24x128xf32>
    %1201 = vector.broadcast %120 : vector<24x1xf32> to vector<24x128xf32>
    %1202 = arith.mulf %1200, %1201 : vector<24x128xf32>
    %1203 = arith.addf %1199, %1202 : vector<24x128xf32>
    %1204 = vector.broadcast %152 : vector<1x128xf32> to vector<24x128xf32>
    %1205 = arith.mulf %1203, %1204 : vector<24x128xf32>
    %1206 = arith.addf %1166, %1205 : vector<24x128xf32>
    %1207 = vector.extract_strided_slice %1206 {offsets = [0, 0], sizes = [24, 64], strides = [1, 1]} : vector<24x128xf32> to vector<24x64xf32>
    %1208 = vector.broadcast %121 : vector<24x1xf32> to vector<24x64xf32>
    %1209 = arith.addf %1207, %1208 : vector<24x64xf32>
    %cst_428 = arith.constant 0.000000e+00 : f32
    %cst_429 = arith.constant 6.000000e+00 : f32
    %1210 = vector.broadcast %cst_428 : f32 to vector<24x64xf32>
    %1211 = arith.maximumf %1210, %1209 : vector<24x64xf32>
    %1212 = vector.broadcast %cst_429 : f32 to vector<24x64xf32>
    %1213 = arith.minimumf %1212, %1211 : vector<24x64xf32>
    %c0_430 = arith.constant 0 : index
    %c448 = arith.constant 448 : index
    %1214 = vector.load %arg14[%c0_430, %c448] : memref<24x512xf32, #tpu.memory_space<vmem>>, vector<24x64xf32>
    tpu.vector_store %arg14[%c0_430, %c448], %1213 {strides = array<i32>} : memref<24x512xf32, #tpu.memory_space<vmem>>, vector<24x64xf32>,
    %cst_431 = arith.constant dense<0.000000e+00> : vector<24xf32>
    %1215 = vector.multi_reduction <add>, %1213, %cst_431 [1] : vector<24x64xf32> to vector<24xf32>
    %1216 = vector.shape_cast %1215 : vector<24xf32> to vector<24x1xf32>
    %1217 = arith.addf %1084, %1216 : vector<24x1xf32>
    %cst_432 = arith.constant 0.001953125 : f32
    %1218 = vector.broadcast %cst_432 : f32 to vector<24x1xf32>
    %1219 = arith.mulf %1217, %1218 : vector<24x1xf32>
    %c0_433 = arith.constant 0 : index
    %c0_434 = arith.constant 0 : index
    %1220 = vector.load %arg6[%c0_433, %c0_434] : memref<24x6xf32, #tpu.memory_space<vmem>>, vector<24x6xf32>
    %1221 = vector.broadcast %1219 : vector<24x1xf32> to vector<24x6xf32>
    %1222 = arith.mulf %1220, %1221 : vector<24x6xf32>
    %cst_435 = arith.constant dense<0.000000e+00> : vector<6xf32>
    %1223 = vector.multi_reduction <add>, %1222, %cst_435 [0] : vector<24x6xf32> to vector<6xf32>
    %1224 = vector.shape_cast %1223 : vector<6xf32> to vector<1x6xf32>
    %c0_436 = arith.constant 0 : index
    %c0_437 = arith.constant 0 : index
    %1225 = vector.load %arg7[%c0_436, %c0_437] : memref<1x6xf32, #tpu.memory_space<vmem>>, vector<1x6xf32>
    %1226 = arith.addf %1224, %1225 : vector<1x6xf32>
    %cst_438 = arith.constant 0.000000e+00 : f32
    %1227 = vector.broadcast %cst_438 : f32 to vector<1x6xf32>
    %1228 = arith.maximumf %1226, %1227 : vector<1x6xf32>
    %c0_439 = arith.constant 0 : index
    %c0_440 = arith.constant 0 : index
    %1229 = vector.load %arg8[%c0_439, %c0_440] : memref<24x6xf32, #tpu.memory_space<vmem>>, vector<24x6xf32>
    %1230 = vector.broadcast %1228 : vector<1x6xf32> to vector<24x6xf32>
    %1231 = arith.mulf %1229, %1230 : vector<24x6xf32>
    %cst_441 = arith.constant dense<0.000000e+00> : vector<24xf32>
    %1232 = vector.multi_reduction <add>, %1231, %cst_441 [1] : vector<24x6xf32> to vector<24xf32>
    %1233 = vector.shape_cast %1232 : vector<24xf32> to vector<24x1xf32>
    %c0_442 = arith.constant 0 : index
    %c0_443 = arith.constant 0 : index
    %1234 = vector.load %arg9[%c0_442, %c0_443] : memref<24x1xf32, #tpu.memory_space<vmem>>, vector<24x1xf32>
    %1235 = arith.addf %1233, %1234 : vector<24x1xf32>
    %1236 = arith.negf %1235 : vector<24x1xf32>
    %1237 = math.exp %1236 : vector<24x1xf32>
    %cst_444 = arith.constant 1.000000e+00 : f32
    %1238 = vector.broadcast %cst_444 : f32 to vector<24x1xf32>
    %1239 = arith.addf %1238, %1237 : vector<24x1xf32>
    %1240 = arith.divf %1238, %1239 : vector<24x1xf32>
    %c0_445 = arith.constant 0 : index
    %c0_446 = arith.constant 0 : index
    %1241 = vector.load %arg14[%c0_445, %c0_446] : memref<24x512xf32, #tpu.memory_space<vmem>>, vector<24x512xf32>
    %1242 = vector.broadcast %1240 : vector<24x1xf32> to vector<24x512xf32>
    %1243 = arith.mulf %1241, %1242 : vector<24x512xf32>
    %c0_447 = arith.constant 0 : index
    %c0_448 = arith.constant 0 : index
    %1244 = vector.load %arg10[%c0_447, %c0_448] : memref<4x24xf32, #tpu.memory_space<vmem>>, vector<4x24xf32>
    %cst_449 = arith.constant dense<0.000000e+00> : vector<4x512xf32>
    %1245 = tpu.matmul %1244, %1243, %cst_449 {dimension_numbers = #tpu.dot_dimension_numbers<[1], [0], [0], [1], [0, 0, 1, 1], [], []>} : vector<4x24xf32>, vector<24x512xf32>, vector<4x512xf32> -> vector<4x512xf32>
    %c0_450 = arith.constant 0 : index
    %c0_451 = arith.constant 0 : index
    %1246 = vector.load %arg11[%c0_450, %c0_451] : memref<4x1xf32, #tpu.memory_space<vmem>>, vector<4x1xf32>
    %1247 = vector.broadcast %1246 : vector<4x1xf32> to vector<4x512xf32>
    %1248 = arith.addf %1245, %1247 : vector<4x512xf32>
    %1249 = arith.addf %1248, %1 : vector<4x512xf32>
    %c0_452 = arith.constant 0 : index
    %c0_453 = arith.constant 0 : index
    %c0_454 = arith.constant 0 : index
    %1250 = vector.load %arg12[%c0_452, %c0_453, %c0_454] : memref<1x4x512xf32, #tpu.memory_space<vmem>>, vector<1x4x512xf32>
    %1251 = vector.shape_cast %1250 : vector<1x4x512xf32> to vector<4x512xf32>
    %1252 = vector.shape_cast %1249 : vector<4x512xf32> to vector<1x4x512xf32>
    tpu.vector_store %arg12[%c0_452, %c0_453, %c0_454], %1252 {strides = array<i32>} : memref<1x4x512xf32, #tpu.memory_space<vmem>>, vector<1x4x512xf32>,
    return
  }
  func.func @transform_0(%arg0: i32) -> (i32, i32, i32) {
    %c0_i32 = arith.constant 0 : i32
    %c0_i32_0 = arith.constant 0 : i32
    %c0_i32_1 = arith.constant 0 : i32
    return %arg0, %c0_i32, %c0_i32_0 : i32, i32, i32
  }
  func.func @transform_1(%arg0: i32) -> (i32, i32) {
    %c0_i32 = arith.constant 0 : i32
    %c0_i32_0 = arith.constant 0 : i32
    %c0_i32_1 = arith.constant 0 : i32
    return %c0_i32, %c0_i32_0 : i32, i32
  }
  func.func @transform_2(%arg0: i32) -> (i32, i32) {
    %c0_i32 = arith.constant 0 : i32
    %c0_i32_0 = arith.constant 0 : i32
    %c0_i32_1 = arith.constant 0 : i32
    return %c0_i32, %c0_i32_0 : i32, i32
  }
  func.func @transform_3(%arg0: i32) -> (i32, i32, i32) {
    %c0_i32 = arith.constant 0 : i32
    %c0_i32_0 = arith.constant 0 : i32
    %c0_i32_1 = arith.constant 0 : i32
    %c0_i32_2 = arith.constant 0 : i32
    return %c0_i32, %c0_i32_0, %c0_i32_1 : i32, i32, i32
  }
  func.func @transform_4(%arg0: i32) -> (i32, i32) {
    %c0_i32 = arith.constant 0 : i32
    %c0_i32_0 = arith.constant 0 : i32
    %c0_i32_1 = arith.constant 0 : i32
    return %c0_i32, %c0_i32_0 : i32, i32
  }
  func.func @transform_5(%arg0: i32) -> (i32, i32) {
    %c0_i32 = arith.constant 0 : i32
    %c0_i32_0 = arith.constant 0 : i32
    %c0_i32_1 = arith.constant 0 : i32
    return %c0_i32, %c0_i32_0 : i32, i32
  }
  func.func @transform_6(%arg0: i32) -> (i32, i32) {
    %c0_i32 = arith.constant 0 : i32
    %c0_i32_0 = arith.constant 0 : i32
    %c0_i32_1 = arith.constant 0 : i32
    return %c0_i32, %c0_i32_0 : i32, i32
  }
  func.func @transform_7(%arg0: i32) -> (i32, i32) {
    %c0_i32 = arith.constant 0 : i32
    %c0_i32_0 = arith.constant 0 : i32
    %c0_i32_1 = arith.constant 0 : i32
    return %c0_i32, %c0_i32_0 : i32, i32
  }
  func.func @transform_8(%arg0: i32) -> (i32, i32) {
    %c0_i32 = arith.constant 0 : i32
    %c0_i32_0 = arith.constant 0 : i32
    %c0_i32_1 = arith.constant 0 : i32
    return %c0_i32, %c0_i32_0 : i32, i32
  }
  func.func @transform_9(%arg0: i32) -> (i32, i32) {
    %c0_i32 = arith.constant 0 : i32
    %c0_i32_0 = arith.constant 0 : i32
    %c0_i32_1 = arith.constant 0 : i32
    return %c0_i32, %c0_i32_0 : i32, i32
  }
  func.func @transform_10(%arg0: i32) -> (i32, i32) {
    %c0_i32 = arith.constant 0 : i32
    %c0_i32_0 = arith.constant 0 : i32
    %c0_i32_1 = arith.constant 0 : i32
    return %c0_i32, %c0_i32_0 : i32, i32
  }
  func.func @transform_11(%arg0: i32) -> (i32, i32, i32) {
    %c0_i32 = arith.constant 0 : i32
    %c0_i32_0 = arith.constant 0 : i32
    %c0_i32_1 = arith.constant 0 : i32
    return %arg0, %c0_i32, %c0_i32_0 : i32, i32, i32
  }
}

</mosaic_0001>

<llo_original>
// kernel: tpu_custom_call.1
$region0: #{tpu_custom_call.1}
  #allocation0 [shape = 'u32[]', space=smem, size = 0x4, offset = 0x4, fixed_abs, tag = 'smem constant byte address 0x4 - core index']
  #allocation1 [shape = 'u32[144,128]{1,0:T(1,128)}', space=vmem, size = 0x12000, scoped, tag = 'internal scratch']
  #allocation2 [shape = 'f32[10,24,128]{2,1,0:T(8,128)}', space=vmem, size = 0x1e000, scoped, tag = 'scratch operand']
  #allocation3 [shape = 'f32[24,512]{1,0:T(8,128)}', space=vmem, size = 0xc000, scoped, tag = 'scratch operand']
  %s0 = inlined_call_operand.vmem [shape: f32[2,4,512], index: 0, kind: input, shape index: {}]
  %s1 = inlined_call_operand.vmem [shape: f32[24,4], index: 1, kind: input, shape index: {}]
  %s2 = inlined_call_operand.vmem [shape: f32[24,1], index: 2, kind: input, shape index: {}]
  %s3 = inlined_call_operand.vmem [shape: f32[27,24,1], index: 3, kind: input, shape index: {}]
  %s4 = inlined_call_operand.vmem [shape: f32[24,1], index: 4, kind: input, shape index: {}]
  %s5 = inlined_call_operand.vmem [shape: f32[24,6], index: 5, kind: input, shape index: {}]
  %s6 = inlined_call_operand.vmem [shape: f32[1,6], index: 6, kind: input, shape index: {}]
  %s7 = inlined_call_operand.vmem [shape: f32[24,6], index: 7, kind: input, shape index: {}]
  %s8 = inlined_call_operand.vmem [shape: f32[24,1], index: 8, kind: input, shape index: {}]
  %s9 = inlined_call_operand.vmem [shape: f32[4,24], index: 9, kind: input, shape index: {}]
  %s10 = inlined_call_operand.vmem [shape: f32[4,1], index: 10, kind: input, shape index: {}]
  %s11 = inlined_call_operand.hbm [shape: f32[2,4,512], index: 11, kind: output, shape index: {}]
  %s12 = sld [smem:[#allocation0]]
  $region77: #{tpu_custom_call.1} parent=0
    _
  %s14 = ssub.s32 1, %s12
  %s15 = scalar_select 0, %s14, %s12
  $region1: #{tpu_custom_call.1} parent=0
    #allocation4 [shape = 'u8[16384]{0}', space=vmem, size = 0x4000, scoped, tag = 'output window, operand 0']
    #allocation5 [shape = 's32[2]{0}', space=sflag, size = 0x8, scoped, tag = 'scoped memory for tpu_custom_call.1']
    %16 = vsyncpa [#allocation5], 0
    %s17 = scalar_lea.sflag [#allocation5], 1
    %18 = vsyncpa %s17, 0
    loop: start=0, step=1, limit=4
    $region2: #{tpu_custom_call.1} parent=1 // loop_pre_header
      _
    $region3: #{tpu_custom_call.1} parent=1 // loop_header
      %s20 = sphi 0, %s24
      %p21 = scmp.ge.s32.totalorder %s20, 4
      %s30 = sphi 0, %s32
      %s33 = sphi 0, %s30
      %s34 = sphi 0, %s33
      %s50 = sphi 0, %s34
      %s54 = sphi 0, %s54
      %s56 = sphi 0, %s54
      %s57 = sphi 0, %s56
      %s71 = sphi 0, %s57
      %s75 = sphi 0, %s75
      %s77 = sphi 0, %s75
      %s78 = sphi 0, %s77
      %s92 = sphi 0, %s78
      %s96 = sphi 0, %s96
      %s98 = sphi 0, %s96
      %s99 = sphi 0, %s98
      %s113 = sphi 0, %s99
      %s117 = sphi 0, %s117
      %s119 = sphi 0, %s117
      %s120 = sphi 0, %s119
      %s134 = sphi 0, %s120
      %s138 = sphi 0, %s138
      %s140 = sphi 0, %s138
      %s141 = sphi 0, %s140
      %s155 = sphi 0, %s141
      %s159 = sphi 0, %s159
      %s161 = sphi 0, %s159
      %s162 = sphi 0, %s161
      %s176 = sphi 0, %s162
      %s180 = sphi 0, %s180
      %s182 = sphi 0, %s180
      %s183 = sphi 0, %s182
      %s197 = sphi 0, %s183
      %s201 = sphi 0, %s201
      %s203 = sphi 0, %s201
      %s204 = sphi 0, %s203
      %s218 = sphi 0, %s204
      %s222 = sphi 0, %s222
      %s224 = sphi 0, %s222
      %s225 = sphi 0, %s224
      %s239 = sphi 0, %s225
      %s243 = sphi 0, %s243
      %s245 = sphi 0, %s243
      %s246 = sphi 0, %s245
      %s260 = sphi 0, %s246
      %s266 = sphi 0, %s268
      %s269 = sphi 0, %s266
      %s270 = sphi 0, %s269
      %s286 = sphi 0, %s270
    $region4: #{tpu_custom_call.1} parent=1 // loop_header_branch
      %23 = sbr.rel (%p21) target = $region8
    $region5: #{tpu_custom_call.1} parent=1 // loop_body
      %s25 = ssub.s32 %s20, 1
      %s26 = ssub.s32 %s20, 2
      %s27 = sadd.s32 %s20, 1
      %s28 = ssub.s32 %s20, %s27
      %p29 = scmp.eq.s32.totalorder %s28, 0
      %s31 = sadd.s32 %s30, 1
      %s32 = scalar_select %p29, %s30, %s31
      %p35 = pneg %p29
      %p36 = scmp.eq.s32.totalorder %s20, 1
      %p37 = por %p35, %p36
      %p38 = scmp.ne.s32.totalorder %s30, %s33
      %p39 = scmp.eq.s32.totalorder %s20, 0
      %p40 = por %p38, %p39
      %p41 = scmp.ne.s32.totalorder %s30, %s33
      %p42 = scmp.eq.s32.totalorder %s25, 1
      %p43 = por %p41, %p42
      %p44 = scmp.ne.s32.totalorder %s33, %s34
      %p45 = scmp.eq.s32.totalorder %s25, 0
      %p46 = por %p44, %p45
      %p47 = scmp.ne.s32.totalorder %s33, %s34
      %p48 = scmp.eq.s32.totalorder %s26, 1
      %p49 = por %p47, %p48
      %p51 = scmp.ne.s32.totalorder %s34, %s50
      %p52 = scmp.eq.s32.totalorder %s26, 0
      %p53 = por %p51, %p52
      %s55 = sadd.s32 %s54, 1
      %p58 = scmp.eq.s32.totalorder %s20, 1
      %p59 = scmp.ne.s32.totalorder %s54, %s56
      %p60 = scmp.eq.s32.totalorder %s20, 0
      %p61 = por %p59, %p60
      %p62 = scmp.ne.s32.totalorder %s54, %s56
      %p63 = scmp.eq.s32.totalorder %s25, 1
      %p64 = por %p62, %p63
      %p65 = scmp.ne.s32.totalorder %s56, %s57
      %p66 = scmp.eq.s32.totalorder %s25, 0
      %p67 = por %p65, %p66
      %p68 = scmp.ne.s32.totalorder %s56, %s57
      %p69 = scmp.eq.s32.totalorder %s26, 1
      %p70 = por %p68, %p69
      %p72 = scmp.ne.s32.totalorder %s57, %s71
      %p73 = scmp.eq.s32.totalorder %s26, 0
      %p74 = por %p72, %p73
      %s76 = sadd.s32 %s75, 1
      %p79 = scmp.eq.s32.totalorder %s20, 1
      %p80 = scmp.ne.s32.totalorder %s75, %s77
      %p81 = scmp.eq.s32.totalorder %s20, 0
      %p82 = por %p80, %p81
      %p83 = scmp.ne.s32.totalorder %s75, %s77
      %p84 = scmp.eq.s32.totalorder %s25, 1
      %p85 = por %p83, %p84
      %p86 = scmp.ne.s32.totalorder %s77, %s78
      %p87 = scmp.eq.s32.totalorder %s25, 0
      %p88 = por %p86, %p87
      %p89 = scmp.ne.s32.totalorder %s77, %s78
      %p90 = scmp.eq.s32.totalorder %s26, 1
      %p91 = por %p89, %p90
      %p93 = scmp.ne.s32.totalorder %s78, %s92
      %p94 = scmp.eq.s32.totalorder %s26, 0
      %p95 = por %p93, %p94
      %s97 = sadd.s32 %s96, 1
      %p100 = scmp.eq.s32.totalorder %s20, 1
      %p101 = scmp.ne.s32.totalorder %s96, %s98
      %p102 = scmp.eq.s32.totalorder %s20, 0
      %p103 = por %p101, %p102
      %p104 = scmp.ne.s32.totalorder %s96, %s98
      %p105 = scmp.eq.s32.totalorder %s25, 1
      %p106 = por %p104, %p105
      %p107 = scmp.ne.s32.totalorder %s98, %s99
      %p108 = scmp.eq.s32.totalorder %s25, 0
      %p109 = por %p107, %p108
      %p110 = scmp.ne.s32.totalorder %s98, %s99
      %p111 = scmp.eq.s32.totalorder %s26, 1
      %p112 = por %p110, %p111
      %p114 = scmp.ne.s32.totalorder %s99, %s113
      %p115 = scmp.eq.s32.totalorder %s26, 0
      %p116 = por %p114, %p115
      %s118 = sadd.s32 %s117, 1
      %p121 = scmp.eq.s32.totalorder %s20, 1
      %p122 = scmp.ne.s32.totalorder %s117, %s119
      %p123 = scmp.eq.s32.totalorder %s20, 0
      %p124 = por %p122, %p123
      %p125 = scmp.ne.s32.totalorder %s117, %s119
      %p126 = scmp.eq.s32.totalorder %s25, 1
      %p127 = por %p125, %p126
      %p128 = scmp.ne.s32.totalorder %s119, %s120
      %p129 = scmp.eq.s32.totalorder %s25, 0
      %p130 = por %p128, %p129
      %p131 = scmp.ne.s32.totalorder %s119, %s120
      %p132 = scmp.eq.s32.totalorder %s26, 1
      %p133 = por %p131, %p132
      %p135 = scmp.ne.s32.totalorder %s120, %s134
      %p136 = scmp.eq.s32.totalorder %s26, 0
      %p137 = por %p135, %p136
      %s139 = sadd.s32 %s138, 1
      %p142 = scmp.eq.s32.totalorder %s20, 1
      %p143 = scmp.ne.s32.totalorder %s138, %s140
      %p144 = scmp.eq.s32.totalorder %s20, 0
      %p145 = por %p143, %p144
      %p146 = scmp.ne.s32.totalorder %s138, %s140
      %p147 = scmp.eq.s32.totalorder %s25, 1
      %p148 = por %p146, %p147
      %p149 = scmp.ne.s32.totalorder %s140, %s141
      %p150 = scmp.eq.s32.totalorder %s25, 0
      %p151 = por %p149, %p150
      %p152 = scmp.ne.s32.totalorder %s140, %s141
      %p153 = scmp.eq.s32.totalorder %s26, 1
      %p154 = por %p152, %p153
      %p156 = scmp.ne.s32.totalorder %s141, %s155
      %p157 = scmp.eq.s32.totalorder %s26, 0
      %p158 = por %p156, %p157
      %s160 = sadd.s32 %s159, 1
      %p163 = scmp.eq.s32.totalorder %s20, 1
      %p164 = scmp.ne.s32.totalorder %s159, %s161
      %p165 = scmp.eq.s32.totalorder %s20, 0
      %p166 = por %p164, %p165
      %p167 = scmp.ne.s32.totalorder %s159, %s161
      %p168 = scmp.eq.s32.totalorder %s25, 1
      %p169 = por %p167, %p168
      %p170 = scmp.ne.s32.totalorder %s161, %s162
      %p171 = scmp.eq.s32.totalorder %s25, 0
      %p172 = por %p170, %p171
      %p173 = scmp.ne.s32.totalorder %s161, %s162
      %p174 = scmp.eq.s32.totalorder %s26, 1
      %p175 = por %p173, %p174
      %p177 = scmp.ne.s32.totalorder %s162, %s176
      %p178 = scmp.eq.s32.totalorder %s26, 0
      %p179 = por %p177, %p178
      %s181 = sadd.s32 %s180, 1
      %p184 = scmp.eq.s32.totalorder %s20, 1
      %p185 = scmp.ne.s32.totalorder %s180, %s182
      %p186 = scmp.eq.s32.totalorder %s20, 0
      %p187 = por %p185, %p186
      %p188 = scmp.ne.s32.totalorder %s180, %s182
      %p189 = scmp.eq.s32.totalorder %s25, 1
      %p190 = por %p188, %p189
      %p191 = scmp.ne.s32.totalorder %s182, %s183
      %p192 = scmp.eq.s32.totalorder %s25, 0
      %p193 = por %p191, %p192
      %p194 = scmp.ne.s32.totalorder %s182, %s183
      %p195 = scmp.eq.s32.totalorder %s26, 1
      %p196 = por %p194, %p195
      %p198 = scmp.ne.s32.totalorder %s183, %s197
      %p199 = scmp.eq.s32.totalorder %s26, 0
      %p200 = por %p198, %p199
      %s202 = sadd.s32 %s201, 1
      %p205 = scmp.eq.s32.totalorder %s20, 1
      %p206 = scmp.ne.s32.totalorder %s201, %s203
      %p207 = scmp.eq.s32.totalorder %s20, 0
      %p208 = por %p206, %p207
      %p209 = scmp.ne.s32.totalorder %s201, %s203
      %p210 = scmp.eq.s32.totalorder %s25, 1
      %p211 = por %p209, %p210
      %p212 = scmp.ne.s32.totalorder %s203, %s204
      %p213 = scmp.eq.s32.totalorder %s25, 0
      %p214 = por %p212, %p213
      %p215 = scmp.ne.s32.totalorder %s203, %s204
      %p216 = scmp.eq.s32.totalorder %s26, 1
      %p217 = por %p215, %p216
      %p219 = scmp.ne.s32.totalorder %s204, %s218
      %p220 = scmp.eq.s32.totalorder %s26, 0
      %p221 = por %p219, %p220
      %s223 = sadd.s32 %s222, 1
      %p226 = scmp.eq.s32.totalorder %s20, 1
      %p227 = scmp.ne.s32.totalorder %s222, %s224
      %p228 = scmp.eq.s32.totalorder %s20, 0
      %p229 = por %p227, %p228
      %p230 = scmp.ne.s32.totalorder %s222, %s224
      %p231 = scmp.eq.s32.totalorder %s25, 1
      %p232 = por %p230, %p231
      %p233 = scmp.ne.s32.totalorder %s224, %s225
      %p234 = scmp.eq.s32.totalorder %s25, 0
      %p235 = por %p233, %p234
      %p236 = scmp.ne.s32.totalorder %s224, %s225
      %p237 = scmp.eq.s32.totalorder %s26, 1
      %p238 = por %p236, %p237
      %p240 = scmp.ne.s32.totalorder %s225, %s239
      %p241 = scmp.eq.s32.totalorder %s26, 0
      %p242 = por %p240, %p241
      %s244 = sadd.s32 %s243, 1
      %p247 = scmp.eq.s32.totalorder %s20, 1
      %p248 = scmp.ne.s32.totalorder %s243, %s245
      %p249 = scmp.eq.s32.totalorder %s20, 0
      %p250 = por %p248, %p249
      %p251 = scmp.ne.s32.totalorder %s243, %s245
      %p252 = scmp.eq.s32.totalorder %s25, 1
      %p253 = por %p251, %p252
      %p254 = scmp.ne.s32.totalorder %s245, %s246
      %p255 = scmp.eq.s32.totalorder %s25, 0
      %p256 = por %p254, %p255
      %p257 = scmp.ne.s32.totalorder %s245, %s246
      %p258 = scmp.eq.s32.totalorder %s26, 1
      %p259 = por %p257, %p258
      %p261 = scmp.ne.s32.totalorder %s246, %s260
      %p262 = scmp.eq.s32.totalorder %s26, 0
      %p263 = por %p261, %p262
      %s264 = ssub.s32 %s20, %s27
      %p265 = scmp.eq.s32.totalorder %s264, 0
      %s267 = sadd.s32 %s266, 1
      %s268 = scalar_select %p265, %s266, %s267
      %p271 = pneg %p265
      %p272 = scmp.eq.s32.totalorder %s20, 1
      %p273 = por %p271, %p272
      %p274 = scmp.ne.s32.totalorder %s266, %s269
      %p275 = scmp.eq.s32.totalorder %s20, 0
      %p276 = por %p274, %p275
      %p277 = scmp.ne.s32.totalorder %s266, %s269
      %p278 = scmp.eq.s32.totalorder %s25, 1
      %p279 = por %p277, %p278
      %p280 = scmp.ne.s32.totalorder %s269, %s270
      %p281 = scmp.eq.s32.totalorder %s25, 0
      %p282 = por %p280, %p281
      %p283 = scmp.ne.s32.totalorder %s269, %s270
      %p284 = scmp.eq.s32.totalorder %s26, 1
      %p285 = por %p283, %p284
      %p287 = scmp.ne.s32.totalorder %s270, %s286
      %p288 = scmp.eq.s32.totalorder %s26, 0
      %p289 = por %p287, %p288
      %p290 = scmp.le.s32.totalorder 1, %s20
      %p291 = scmp.lt.s32.totalorder %s20, 3
      %p292 = pnand %p290, %p291
      %p293 = pneg %p292
      // Predicated region
      $region9: #{tpu_custom_call.1} parent=5 // pred_check
        _
      $region10: #{tpu_custom_call.1} parent=5 // pred_check_branch
        %295 = sbr.rel (%p292) target = $region12
      $region11: #{tpu_custom_call.1} parent=5 // pred_region
        %s296 = ssub.s32 %s20, 1
        // Predicated region
        $region13: #{tpu_custom_call.1} parent=11 // pred_check
          %p297 = pneg %p67
        $region14: #{tpu_custom_call.1} parent=11 // pred_check_branch
          %299 = sbr.rel (%p297) target = $region16
        $region15: #{tpu_custom_call.1} parent=11 // pred_region
          _
        $region16: #{tpu_custom_call.1} parent=11 // pred_fallthru
          _
        // Predicated region
        $region17: #{tpu_custom_call.1} parent=11 // pred_check
          %p300 = pneg %p88
        $region18: #{tpu_custom_call.1} parent=11 // pred_check_branch
          %302 = sbr.rel (%p300) target = $region20
        $region19: #{tpu_custom_call.1} parent=11 // pred_region
          _
        $region20: #{tpu_custom_call.1} parent=11 // pred_fallthru
          _
        // Predicated region
        $region21: #{tpu_custom_call.1} parent=11 // pred_check
          %p303 = pneg %p109
        $region22: #{tpu_custom_call.1} parent=11 // pred_check_branch
          %305 = sbr.rel (%p303) target = $region24
        $region23: #{tpu_custom_call.1} parent=11 // pred_region
          _
        $region24: #{tpu_custom_call.1} parent=11 // pred_fallthru
          _
        // Predicated region
        $region25: #{tpu_custom_call.1} parent=11 // pred_check
          %p306 = pneg %p130
        $region26: #{tpu_custom_call.1} parent=11 // pred_check_branch
          %308 = sbr.rel (%p306) target = $region28
        $region27: #{tpu_custom_call.1} parent=11 // pred_region
          _
        $region28: #{tpu_custom_call.1} parent=11 // pred_fallthru
          _
        // Predicated region
        $region29: #{tpu_custom_call.1} parent=11 // pred_check
          %p309 = pneg %p151
        $region30: #{tpu_custom_call.1} parent=11 // pred_check_branch
          %311 = sbr.rel (%p309) target = $region32
        $region31: #{tpu_custom_call.1} parent=11 // pred_region
          _
        $region32: #{tpu_custom_call.1} parent=11 // pred_fallthru
          _
        // Predicated region
        $region33: #{tpu_custom_call.1} parent=11 // pred_check
          %p312 = pneg %p172
        $region34: #{tpu_custom_call.1} parent=11 // pred_check_branch
          %314 = sbr.rel (%p312) target = $region36
        $region35: #{tpu_custom_call.1} parent=11 // pred_region
          _
        $region36: #{tpu_custom_call.1} parent=11 // pred_fallthru
          _
        // Predicated region
        $region37: #{tpu_custom_call.1} parent=11 // pred_check
          %p315 = pneg %p193
        $region38: #{tpu_custom_call.1} parent=11 // pred_check_branch
          %317 = sbr.rel (%p315) target = $region40
        $region39: #{tpu_custom_call.1} parent=11 // pred_region
          _
        $region40: #{tpu_custom_call.1} parent=11 // pred_fallthru
          _
        // Predicated region
        $region41: #{tpu_custom_call.1} parent=11 // pred_check
          %p318 = pneg %p214
        $region42: #{tpu_custom_call.1} parent=11 // pred_check_branch
          %320 = sbr.rel (%p318) target = $region44
        $region43: #{tpu_custom_call.1} parent=11 // pred_region
          _
        $region44: #{tpu_custom_call.1} parent=11 // pred_fallthru
          _
        // Predicated region
        $region45: #{tpu_custom_call.1} parent=11 // pred_check
          %p321 = pneg %p235
        $region46: #{tpu_custom_call.1} parent=11 // pred_check_branch
          %323 = sbr.rel (%p321) target = $region48
        $region47: #{tpu_custom_call.1} parent=11 // pred_region
          _
        $region48: #{tpu_custom_call.1} parent=11 // pred_fallthru
          _
        // Predicated region
        $region49: #{tpu_custom_call.1} parent=11 // pred_check
          %p324 = pneg %p256
        $region50: #{tpu_custom_call.1} parent=11 // pred_check_branch
          %326 = sbr.rel (%p324) target = $region52
        $region51: #{tpu_custom_call.1} parent=11 // pred_region
          _
        $region52: #{tpu_custom_call.1} parent=11 // pred_fallthru
          _
      $region12: #{tpu_custom_call.1} parent=5 // pred_fallthru
        _
      %p327 = scmp.lt.s32.totalorder %s20, 2
      // Predicated region
      $region53: #{tpu_custom_call.1} parent=5 // pred_check
        %p328 = pneg %p327
      $region54: #{tpu_custom_call.1} parent=5 // pred_check_branch
        %330 = sbr.rel (%p328) target = $region56
      $region55: #{tpu_custom_call.1} parent=5 // pred_region
        // Predicated region
        $region57: #{tpu_custom_call.1} parent=55 // pred_check
          %p331 = pneg %p40
        $region58: #{tpu_custom_call.1} parent=55 // pred_check_branch
          %333 = sbr.rel (%p331) target = $region60
        $region59: #{tpu_custom_call.1} parent=55 // pred_region
          %p334 = scmp.lt.s32.totalorder %s20, 1
          %s335 = scalar_select %p334, %s20, 1
          %s336 = smul.addr %s335, 4
          %s337 = smul.addr %s336, 4
          %s338 = scalar_lea.vmem %s0, %s337
        $region60: #{tpu_custom_call.1} parent=55 // pred_fallthru
          _
      $region56: #{tpu_custom_call.1} parent=5 // pred_fallthru
        _
      %p339 = scmp.le.s32.totalorder 1, %s20
      %p340 = scmp.lt.s32.totalorder %s20, 3
      %p341 = pnand %p339, %p340
      %p342 = pneg %p341
      // Predicated region
      $region61: #{tpu_custom_call.1} parent=5 // pred_check
        _
      $region62: #{tpu_custom_call.1} parent=5 // pred_check_branch
        %344 = sbr.rel (%p341) target = $region64
      $region63: #{tpu_custom_call.1} parent=5 // pred_region
        %s345 = ssub.s32 %s20, 1
        %p346 = scmp.lt.s32.totalorder %s25, 1
        %s347 = scalar_select %p346, %s25, 1
        %s348 = smul.addr %s347, 4
        %s349 = smul.addr %s348, 4
        %s350 = scalar_lea.vmem %s0, %s349
        %p351 = pneg %p46
        %p352 = pneg %p43
        %p353 = pneg %p67
        %p354 = pneg %p64
        %p355 = pneg %p88
        %p356 = pneg %p85
        %p357 = pneg %p109
        %p358 = pneg %p106
        %p359 = pneg %p130
        %p360 = pneg %p127
        %p361 = pneg %p151
        %p362 = pneg %p148
        %p363 = pneg %p172
        %p364 = pneg %p169
        %p365 = pneg %p193
        %p366 = pneg %p190
        %p367 = pneg %p214
        %p368 = pneg %p211
        %p369 = pneg %p235
        %p370 = pneg %p232
        %p371 = pneg %p256
        %p372 = pneg %p253
        %p373 = pneg %p282
        %p374 = pneg %p279
        %s375 = sand.u32 %s269, 1
        %s376 = scalar_lea.sflag [#allocation5], %s375
        %s377 = sand.u32 %s269, 1
        %s378 = smul.addr %s377, 16
        %s379 = scalar_lea.vmem [#allocation4], %s378
        %p380 = scmp.lt.s32.totalorder %s25, 1
        %s381 = scalar_select %p380, %s25, 1
        %s382 = smul.addr %s381, 4
        %s383 = smul.addr %s382, 4
        %s384 = scalar_lea.vmem %s0, %s383
        %v385 = vld [vmem:[%s384] sm:$0xff]
        %v386 = vld [vmem:[%s384 + $0x8] sm:$0xff]
        %v387 = vld [vmem:[%s1] sm:$0xff]
        %v388 = vld [vmem:[%s1 + $0x8] sm:$0xff]
        %v389 = vld [vmem:[%s1 + $0x10] sm:$0xff]
        %v390 = vld [vmem:[%s2] sm:$0xff]
        %v391 = vld [vmem:[%s2 + $0x8] sm:$0xff]
        %v392 = vld [vmem:[%s2 + $0x10] sm:$0xff]
        %394 = vset.pattern.permute.xlu0 0
        %395 = vperm.xlu0 %394, %v390
        %v396 = vpop.permute.xlu0 %395
        %399 = vset.pattern.permute.xlu0 0
        %400 = vperm.xlu0 %399, %v391
        %v401 = vpop.permute.xlu0 %400
        %404 = vset.pattern.permute.xlu0 0
        %405 = vperm.xlu0 %404, %v392
        %v406 = vpop.permute.xlu0 %405
        %v410 = vcombine.high %v385, %v385
        %v411 = vcombine.high %v386, %v386
        %vm412 = vcmask 31744
        %v414 = vsel %vm412, %v387, 0
        %v417 = vsel %vm412, %v388, 0
        %v420 = vsel %vm412, %v389, 0
        %vm422 = vcmask 1043456
        %v423 = vsel %vm422, %v385, 0
        %v425 = vsel %vm422, %v410, 0
        %v427 = vsel %vm422, %v386, 0
        %v429 = vsel %vm422, %v411, 0
        %431 = vmatprep.subr.mxu0 %v425
        %432 = vmatpush1.msra.mxu0 %v423
        %433 = vmatprep.subr.mxu0 0.0
        %434 = vmatpush1.msra.mxu0 0.0
        %435 = vmatprep.subr.mxu0 0.0
        %436 = vmatpush1.msra.mxu0 0.0
        %437 = vmatprep.subr.mxu0 0.0
        %438 = vmatpush1.msra.mxu0 0.0
        %439 = vmatprep.subr.mxu0 0.0
        %440 = vmatpush1.msra.mxu0 0.0
        %441 = vmatprep.subr.mxu0 0.0
        %442 = vmatpush1.msra.mxu0 0.0
        %443 = vmatprep.subr.mxu0 0.0
        %444 = vmatpush1.msra.mxu0 0.0
        %445 = vmatprep.subr.mxu0 0.0
        %446 = vmatpush1.msra.mxu0 0.0
        %447 = vmatprep.subr.mxu0 0.0
        %448 = vmatpush1.msra.mxu0 0.0
        %449 = vmatprep.subr.mxu0 0.0
        %450 = vmatpush1.msra.mxu0 0.0
        %451 = vmatprep.subr.mxu0 0.0
        %452 = vmatpush1.msra.mxu0 0.0
        %453 = vmatprep.subr.mxu0 0.0
        %454 = vmatpush1.msra.mxu0 0.0
        %455 = vmatprep.subr.mxu0 0.0
        %456 = vmatpush1.msra.mxu0 0.0
        %457 = vmatprep.subr.mxu0 0.0
        %458 = vmatpush1.msra.mxu0 0.0
        %459 = vmatprep.subr.mxu0 0.0
        %460 = vmatpush1.msra.mxu0 0.0
        %461 = vmatprep.subr.mxu0 0.0
        %462 = vmatpush1.msra.mxu0 0.0
        %463 = vmatprep.subr.mxu0 0.0
        %464 = vmatpush1.msra.mxu0 0.0
        %465 = vmatprep.subr.mxu0 0.0
        %466 = vmatpush1.msra.mxu0 0.0
        %467 = vmatprep.subr.mxu0 0.0
        %468 = vmatpush1.msra.mxu0 0.0
        %469 = vmatprep.subr.mxu0 0.0
        %470 = vmatpush1.msra.mxu0 0.0
        %471 = vmatprep.subr.mxu0 0.0
        %472 = vmatpush1.msra.mxu0 0.0
        %473 = vmatprep.subr.mxu0 0.0
        %474 = vmatpush1.msra.mxu0 0.0
        %475 = vmatprep.subr.mxu0 0.0
        %476 = vmatpush1.msra.mxu0 0.0
        %477 = vmatprep.subr.mxu0 0.0
        %478 = vmatpush1.msra.mxu0 0.0
        %479 = vmatprep.subr.mxu0 0.0
        %480 = vmatpush1.msra.mxu0 0.0
        %481 = vmatprep.subr.mxu0 0.0
        %482 = vmatpush1.msra.mxu0 0.0
        %483 = vmatprep.subr.mxu0 0.0
        %484 = vmatpush1.msra.mxu0 0.0
        %485 = vmatprep.subr.mxu0 0.0
        %486 = vmatpush1.msra.mxu0 0.0
        %487 = vmatprep.subr.mxu0 0.0
        %488 = vmatpush1.msra.mxu0 0.0
        %489 = vmatprep.subr.mxu0 0.0
        %490 = vmatpush1.msra.mxu0 0.0
        %491 = vmatprep.subr.mxu0 0.0
        %492 = vmatpush1.msra.mxu0 0.0
        %493 = vmatprep.subr.mxu0 0.0
        %494 = vmatpush1.msra.mxu0 0.0
        %495 = vmatprep.mubr.f32.mxu0 0.0
        %496 = vmatmul.mubr.f32.gmra.mrb[0].mxu0 %v414
        %v497 = vpop.f32.mrb[0].mxu0
        %v498 = vadd.f32 %v396, %v497
        %v499 = vpop.f32.mrb[0].mxu0
        %v500 = vadd.f32 %v396, %v499
        %501 = vmatprep.mubr.f32.mxu0 0.0
        %502 = vmatmul.mubr.f32.gmra.mrb[0].mxu0 %v417
        %v503 = vpop.f32.mrb[0].mxu0
        %v504 = vadd.f32 %v401, %v503
        %v505 = vpop.f32.mrb[0].mxu0
        %v506 = vadd.f32 %v401, %v505
        %507 = vmatprep.mubr.f32.mxu0 0.0
        %508 = vmatmul.mubr.f32.gmra.mrb[0].mxu0 %v420
        %v509 = vpop.f32.mrb[0].mxu0
        %v510 = vadd.f32 %v406, %v509
        %v511 = vpop.f32.mrb[0].mxu0
        %v512 = vadd.f32 %v406, %v511
        %513 = vdwg.mxu0
        %514 = vmatprep.subr.mxu0 %v429
        %515 = vmatpush1.msra.mxu0 %v427
        %516 = vmatprep.subr.mxu0 0.0
        %517 = vmatpush1.msra.mxu0 0.0
        %518 = vmatprep.subr.mxu0 0.0
        %519 = vmatpush1.msra.mxu0 0.0
        %520 = vmatprep.subr.mxu0 0.0
        %521 = vmatpush1.msra.mxu0 0.0
        %522 = vmatprep.subr.mxu0 0.0
        %523 = vmatpush1.msra.mxu0 0.0
        %524 = vmatprep.subr.mxu0 0.0
        %525 = vmatpush1.msra.mxu0 0.0
        %526 = vmatprep.subr.mxu0 0.0
        %527 = vmatpush1.msra.mxu0 0.0
        %528 = vmatprep.subr.mxu0 0.0
        %529 = vmatpush1.msra.mxu0 0.0
        %530 = vmatprep.subr.mxu0 0.0
        %531 = vmatpush1.msra.mxu0 0.0
        %532 = vmatprep.subr.mxu0 0.0
        %533 = vmatpush1.msra.mxu0 0.0
        %534 = vmatprep.subr.mxu0 0.0
        %535 = vmatpush1.msra.mxu0 0.0
        %536 = vmatprep.subr.mxu0 0.0
        %537 = vmatpush1.msra.mxu0 0.0
        %538 = vmatprep.subr.mxu0 0.0
        %539 = vmatpush1.msra.mxu0 0.0
        %540 = vmatprep.subr.mxu0 0.0
        %541 = vmatpush1.msra.mxu0 0.0
        %542 = vmatprep.subr.mxu0 0.0
        %543 = vmatpush1.msra.mxu0 0.0
        %544 = vmatprep.subr.mxu0 0.0
        %545 = vmatpush1.msra.mxu0 0.0
        %546 = vmatprep.subr.mxu0 0.0
        %547 = vmatpush1.msra.mxu0 0.0
        %548 = vmatprep.subr.mxu0 0.0
        %549 = vmatpush1.msra.mxu0 0.0
        %550 = vmatprep.subr.mxu0 0.0
        %551 = vmatpush1.msra.mxu0 0.0
        %552 = vmatprep.subr.mxu0 0.0
        %553 = vmatpush1.msra.mxu0 0.0
        %554 = vmatprep.subr.mxu0 0.0
        %555 = vmatpush1.msra.mxu0 0.0
        %556 = vmatprep.subr.mxu0 0.0
        %557 = vmatpush1.msra.mxu0 0.0
        %558 = vmatprep.subr.mxu0 0.0
        %559 = vmatpush1.msra.mxu0 0.0
        %560 = vmatprep.subr.mxu0 0.0
        %561 = vmatpush1.msra.mxu0 0.0
        %562 = vmatprep.subr.mxu0 0.0
        %563 = vmatpush1.msra.mxu0 0.0
        %564 = vmatprep.subr.mxu0 0.0
        %565 = vmatpush1.msra.mxu0 0.0
        %566 = vmatprep.subr.mxu0 0.0
        %567 = vmatpush1.msra.mxu0 0.0
        %568 = vmatprep.subr.mxu0 0.0
        %569 = vmatpush1.msra.mxu0 0.0
        %570 = vmatprep.subr.mxu0 0.0
        %571 = vmatpush1.msra.mxu0 0.0
        %572 = vmatprep.subr.mxu0 0.0
        %573 = vmatpush1.msra.mxu0 0.0
        %574 = vmatprep.subr.mxu0 0.0
        %575 = vmatpush1.msra.mxu0 0.0
        %576 = vmatprep.subr.mxu0 0.0
        %577 = vmatpush1.msra.mxu0 0.0
        %578 = vmatprep.mubr.f32.mxu0 0.0
        %579 = vmatmul.mubr.f32.gmra.mrb[0].mxu0 %v414
        %v580 = vpop.f32.mrb[0].mxu0
        %v581 = vadd.f32 %v396, %v580
        %v582 = vpop.f32.mrb[0].mxu0
        %v583 = vadd.f32 %v396, %v582
        %584 = vmatprep.mubr.f32.mxu0 0.0
        %585 = vmatmul.mubr.f32.gmra.mrb[0].mxu0 %v417
        %v586 = vpop.f32.mrb[0].mxu0
        %v587 = vadd.f32 %v401, %v586
        %v588 = vpop.f32.mrb[0].mxu0
        %v589 = vadd.f32 %v401, %v588
        %590 = vmatprep.mubr.f32.mxu0 0.0
        %591 = vmatmul.mubr.f32.gmra.mrb[0].mxu0 %v420
        %v592 = vpop.f32.mrb[0].mxu0
        %v593 = vadd.f32 %v406, %v592
        %v594 = vpop.f32.mrb[0].mxu0
        %v595 = vadd.f32 %v406, %v594
        %596 = vdwg.mxu0
        %v597 = vmax.f32 %v498, 0.0
        %v598 = vmax.f32 %v500, 0.0
        %v599 = vmax.f32 %v581, 0.0
        %v600 = vmax.f32 %v583, 0.0
        %v601 = vmax.f32 %v504, 0.0
        %v602 = vmax.f32 %v506, 0.0
        %v603 = vmax.f32 %v587, 0.0
        %v604 = vmax.f32 %v589, 0.0
        %v605 = vmax.f32 %v510, 0.0
        %v606 = vmax.f32 %v512, 0.0
        %v607 = vmax.f32 %v593, 0.0
        %v608 = vmax.f32 %v595, 0.0
        %v609 = vmin.f32 %v597, 6.0
        %v610 = vmin.f32 %v598, 6.0
        %v611 = vmin.f32 %v599, 6.0
        %v612 = vmin.f32 %v600, 6.0
        %v613 = vmin.f32 %v601, 6.0
        %v614 = vmin.f32 %v602, 6.0
        %v615 = vmin.f32 %v603, 6.0
        %v616 = vmin.f32 %v604, 6.0
        %v617 = vmin.f32 %v605, 6.0
        %v618 = vmin.f32 %v606, 6.0
        %v619 = vmin.f32 %v607, 6.0
        %v620 = vmin.f32 %v608, 6.0
        %621 = vst [vmem:[#allocation2] sm:$0xff] 0.0
        %622 = vst [vmem:[#allocation2 + $0x8] sm:$0xff] 0.0
        %623 = vst [vmem:[#allocation2 + $0x10] sm:$0xff] 0.0
        %s624 = scalar_lea.vmem [#allocation2], 216
        %625 = vst [vmem:[%s624] sm:$0xff] 0.0
        %626 = vst [vmem:[%s624 + $0x8] sm:$0xff] 0.0
        %627 = vst [vmem:[%s624 + $0x10] sm:$0xff] 0.0
        %vm628 = vcmask 523264
        %v629 = vsel %vm628, %v609, 0.0
        %v630 = vsel %vm628, %v613, 0.0
        %v631 = vsel %vm628, %v617, 0.0
        %632 = vrot.lane.b32.xlu0 %v629, 9
        %v633 = vpop.permute.xlu0 %632
        %634 = vrot.lane.b32.xlu0 %v630, 9
        %v635 = vpop.permute.xlu0 %634
        %636 = vrot.lane.b32.xlu0 %v631, 9
        %v637 = vpop.permute.xlu0 %636
        %s638 = scalar_lea.vmem [#allocation2], 24
        %639 = vst [vmem:[%s638] sm:$0xff] %v633
        %640 = vst [vmem:[%s638 + $0x8] sm:$0xff] %v635
        %641 = vst [vmem:[%s638 + $0x10] sm:$0xff] %v637
        %645 = vrot.lane.b32.xlu0 %v609, 64
        %v646 = vpop.permute.xlu0 %645
        %647 = vrot.lane.b32.xlu0 %v613, 64
        %v648 = vpop.permute.xlu0 %647
        %649 = vrot.lane.b32.xlu0 %v617, 64
        %v650 = vpop.permute.xlu0 %649
        %v654 = vsel %vm628, %v646, 0.0
        %v655 = vsel %vm628, %v648, 0.0
        %v656 = vsel %vm628, %v650, 0.0
        %657 = vrot.lane.b32.xlu0 %v654, 9
        %v658 = vpop.permute.xlu0 %657
        %659 = vrot.lane.b32.xlu0 %v655, 9
        %v660 = vpop.permute.xlu0 %659
        %661 = vrot.lane.b32.xlu0 %v656, 9
        %v662 = vpop.permute.xlu0 %661
        %s663 = scalar_lea.vmem [#allocation2], 48
        %664 = vst [vmem:[%s663] sm:$0xff] %v658
        %665 = vst [vmem:[%s663 + $0x8] sm:$0xff] %v660
        %666 = vst [vmem:[%s663 + $0x10] sm:$0xff] %v662
        %v667 = vsel %vm628, %v610, 0.0
        %v668 = vsel %vm628, %v614, 0.0
        %v669 = vsel %vm628, %v618, 0.0
        %670 = vrot.lane.b32.xlu0 %v667, 9
        %v671 = vpop.permute.xlu0 %670
        %672 = vrot.lane.b32.xlu0 %v668, 9
        %v673 = vpop.permute.xlu0 %672
        %674 = vrot.lane.b32.xlu0 %v669, 9
        %v675 = vpop.permute.xlu0 %674
        %s676 = scalar_lea.vmem [#allocation2], 72
        %677 = vst [vmem:[%s676] sm:$0xff] %v671
        %678 = vst [vmem:[%s676 + $0x8] sm:$0xff] %v673
        %679 = vst [vmem:[%s676 + $0x10] sm:$0xff] %v675
        %683 = vrot.lane.b32.xlu0 %v610, 64
        %v684 = vpop.permute.xlu0 %683
        %685 = vrot.lane.b32.xlu0 %v614, 64
        %v686 = vpop.permute.xlu0 %685
        %687 = vrot.lane.b32.xlu0 %v618, 64
        %v688 = vpop.permute.xlu0 %687
        %v692 = vsel %vm628, %v684, 0.0
        %v693 = vsel %vm628, %v686, 0.0
        %v694 = vsel %vm628, %v688, 0.0
        %695 = vrot.lane.b32.xlu0 %v692, 9
        %v696 = vpop.permute.xlu0 %695
        %697 = vrot.lane.b32.xlu0 %v693, 9
        %v698 = vpop.permute.xlu0 %697
        %699 = vrot.lane.b32.xlu0 %v694, 9
        %v700 = vpop.permute.xlu0 %699
        %s701 = scalar_lea.vmem [#allocation2], 96
        %702 = vst [vmem:[%s701] sm:$0xff] %v696
        %703 = vst [vmem:[%s701 + $0x8] sm:$0xff] %v698
        %704 = vst [vmem:[%s701 + $0x10] sm:$0xff] %v700
        %v705 = vsel %vm628, %v611, 0.0
        %v706 = vsel %vm628, %v615, 0.0
        %v707 = vsel %vm628, %v619, 0.0
        %708 = vrot.lane.b32.xlu0 %v705, 9
        %v709 = vpop.permute.xlu0 %708
        %710 = vrot.lane.b32.xlu0 %v706, 9
        %v711 = vpop.permute.xlu0 %710
        %712 = vrot.lane.b32.xlu0 %v707, 9
        %v713 = vpop.permute.xlu0 %712
        %s714 = scalar_lea.vmem [#allocation2], 120
        %715 = vst [vmem:[%s714] sm:$0xff] %v709
        %716 = vst [vmem:[%s714 + $0x8] sm:$0xff] %v711
        %717 = vst [vmem:[%s714 + $0x10] sm:$0xff] %v713
        %721 = vrot.lane.b32.xlu0 %v611, 64
        %v722 = vpop.permute.xlu0 %721
        %723 = vrot.lane.b32.xlu0 %v615, 64
        %v724 = vpop.permute.xlu0 %723
        %725 = vrot.lane.b32.xlu0 %v619, 64
        %v726 = vpop.permute.xlu0 %725
        %v730 = vsel %vm628, %v722, 0.0
        %v731 = vsel %vm628, %v724, 0.0
        %v732 = vsel %vm628, %v726, 0.0
        %733 = vrot.lane.b32.xlu0 %v730, 9
        %v734 = vpop.permute.xlu0 %733
        %735 = vrot.lane.b32.xlu0 %v731, 9
        %v736 = vpop.permute.xlu0 %735
        %737 = vrot.lane.b32.xlu0 %v732, 9
        %v738 = vpop.permute.xlu0 %737
        %s739 = scalar_lea.vmem [#allocation2], 144
        %740 = vst [vmem:[%s739] sm:$0xff] %v734
        %741 = vst [vmem:[%s739 + $0x8] sm:$0xff] %v736
        %742 = vst [vmem:[%s739 + $0x10] sm:$0xff] %v738
        %v743 = vsel %vm628, %v612, 0.0
        %v744 = vsel %vm628, %v616, 0.0
        %v745 = vsel %vm628, %v620, 0.0
        %746 = vrot.lane.b32.xlu0 %v743, 9
        %v747 = vpop.permute.xlu0 %746
        %748 = vrot.lane.b32.xlu0 %v744, 9
        %v749 = vpop.permute.xlu0 %748
        %750 = vrot.lane.b32.xlu0 %v745, 9
        %v751 = vpop.permute.xlu0 %750
        %s752 = scalar_lea.vmem [#allocation2], 168
        %753 = vst [vmem:[%s752] sm:$0xff] %v747
        %754 = vst [vmem:[%s752 + $0x8] sm:$0xff] %v749
        %755 = vst [vmem:[%s752 + $0x10] sm:$0xff] %v751
        %759 = vrot.lane.b32.xlu0 %v612, 64
        %v760 = vpop.permute.xlu0 %759
        %761 = vrot.lane.b32.xlu0 %v616, 64
        %v762 = vpop.permute.xlu0 %761
        %763 = vrot.lane.b32.xlu0 %v620, 64
        %v764 = vpop.permute.xlu0 %763
        %v768 = vsel %vm628, %v760, 0.0
        %v769 = vsel %vm628, %v762, 0.0
        %v770 = vsel %vm628, %v764, 0.0
        %771 = vrot.lane.b32.xlu0 %v768, 9
        %v772 = vpop.permute.xlu0 %771
        %773 = vrot.lane.b32.xlu0 %v769, 9
        %v774 = vpop.permute.xlu0 %773
        %775 = vrot.lane.b32.xlu0 %v770, 9
        %v776 = vpop.permute.xlu0 %775
        %s777 = scalar_lea.vmem [#allocation2], 192
        %778 = vst [vmem:[%s777] sm:$0xff] %v772
        %779 = vst [vmem:[%s777 + $0x8] sm:$0xff] %v774
        %780 = vst [vmem:[%s777 + $0x10] sm:$0xff] %v776
        %v781 = vld [vmem:[%s3] sm:$0xff]
        %v782 = vld [vmem:[%s3 + $0x8] sm:$0xff]
        %v783 = vld [vmem:[%s3 + $0x10] sm:$0xff]
        %s784 = scalar_lea.vmem %s3, 24
        %v785 = vld [vmem:[%s784] sm:$0xff]
        %v786 = vld [vmem:[%s784 + $0x8] sm:$0xff]
        %v787 = vld [vmem:[%s784 + $0x10] sm:$0xff]
        %s788 = scalar_lea.vmem %s3, 48
        %v789 = vld [vmem:[%s788] sm:$0xff]
        %v790 = vld [vmem:[%s788 + $0x8] sm:$0xff]
        %v791 = vld [vmem:[%s788 + $0x10] sm:$0xff]
        %s792 = scalar_lea.vmem %s3, 72
        %v793 = vld [vmem:[%s792] sm:$0xff]
        %v794 = vld [vmem:[%s792 + $0x8] sm:$0xff]
        %v795 = vld [vmem:[%s792 + $0x10] sm:$0xff]
        %s796 = scalar_lea.vmem %s3, 96
        %v797 = vld [vmem:[%s796] sm:$0xff]
        %v798 = vld [vmem:[%s796 + $0x8] sm:$0xff]
        %v799 = vld [vmem:[%s796 + $0x10] sm:$0xff]
        %s800 = scalar_lea.vmem %s3, 120
        %v801 = vld [vmem:[%s800] sm:$0xff]
        %v802 = vld [vmem:[%s800 + $0x8] sm:$0xff]
        %v803 = vld [vmem:[%s800 + $0x10] sm:$0xff]
        %s804 = scalar_lea.vmem %s3, 144
        %v805 = vld [vmem:[%s804] sm:$0xff]
        %v806 = vld [vmem:[%s804 + $0x8] sm:$0xff]
        %v807 = vld [vmem:[%s804 + $0x10] sm:$0xff]
        %s808 = scalar_lea.vmem %s3, 168
        %v809 = vld [vmem:[%s808] sm:$0xff]
        %v810 = vld [vmem:[%s808 + $0x8] sm:$0xff]
        %v811 = vld [vmem:[%s808 + $0x10] sm:$0xff]
        %s812 = scalar_lea.vmem %s3, 192
        %v813 = vld [vmem:[%s812] sm:$0xff]
        %v814 = vld [vmem:[%s812 + $0x8] sm:$0xff]
        %v815 = vld [vmem:[%s812 + $0x10] sm:$0xff]
        %s816 = scalar_lea.vmem %s3, 216
        %v817 = vld [vmem:[%s816] sm:$0xff]
        %v818 = vld [vmem:[%s816 + $0x8] sm:$0xff]
        %v819 = vld [vmem:[%s816 + $0x10] sm:$0xff]
        %s820 = scalar_lea.vmem %s3, 240
        %v821 = vld [vmem:[%s820] sm:$0xff]
        %v822 = vld [vmem:[%s820 + $0x8] sm:$0xff]
        %v823 = vld [vmem:[%s820 + $0x10] sm:$0xff]
        %s824 = scalar_lea.vmem %s3, 264
        %v825 = vld [vmem:[%s824] sm:$0xff]
        %v826 = vld [vmem:[%s824 + $0x8] sm:$0xff]
        %v827 = vld [vmem:[%s824 + $0x10] sm:$0xff]
        %s828 = scalar_lea.vmem %s3, 288
        %v829 = vld [vmem:[%s828] sm:$0xff]
        %v830 = vld [vmem:[%s828 + $0x8] sm:$0xff]
        %v831 = vld [vmem:[%s828 + $0x10] sm:$0xff]
        %s832 = scalar_lea.vmem %s3, 312
        %v833 = vld [vmem:[%s832] sm:$0xff]
        %v834 = vld [vmem:[%s832 + $0x8] sm:$0xff]
        %v835 = vld [vmem:[%s832 + $0x10] sm:$0xff]
        %s836 = scalar_lea.vmem %s3, 336
        %v837 = vld [vmem:[%s836] sm:$0xff]
        %v838 = vld [vmem:[%s836 + $0x8] sm:$0xff]
        %v839 = vld [vmem:[%s836 + $0x10] sm:$0xff]
        %s840 = scalar_lea.vmem %s3, 360
        %v841 = vld [vmem:[%s840] sm:$0xff]
        %v842 = vld [vmem:[%s840 + $0x8] sm:$0xff]
        %v843 = vld [vmem:[%s840 + $0x10] sm:$0xff]
        %s844 = scalar_lea.vmem %s3, 384
        %v845 = vld [vmem:[%s844] sm:$0xff]
        %v846 = vld [vmem:[%s844 + $0x8] sm:$0xff]
        %v847 = vld [vmem:[%s844 + $0x10] sm:$0xff]
        %s848 = scalar_lea.vmem %s3, 408
        %v849 = vld [vmem:[%s848] sm:$0xff]
        %v850 = vld [vmem:[%s848 + $0x8] sm:$0xff]
        %v851 = vld [vmem:[%s848 + $0x10] sm:$0xff]
        %s852 = scalar_lea.vmem %s3, 432
        %v853 = vld [vmem:[%s852] sm:$0xff]
        %v854 = vld [vmem:[%s852 + $0x8] sm:$0xff]
        %v855 = vld [vmem:[%s852 + $0x10] sm:$0xff]
        %s856 = scalar_lea.vmem %s3, 456
        %v857 = vld [vmem:[%s856] sm:$0xff]
        %v858 = vld [vmem:[%s856 + $0x8] sm:$0xff]
        %v859 = vld [vmem:[%s856 + $0x10] sm:$0xff]
        %s860 = scalar_lea.vmem %s3, 480
        %v861 = vld [vmem:[%s860] sm:$0xff]
        %v862 = vld [vmem:[%s860 + $0x8] sm:$0xff]
        %v863 = vld [vmem:[%s860 + $0x10] sm:$0xff]
        %s864 = scalar_lea.vmem %s3, 504
        %v865 = vld [vmem:[%s864] sm:$0xff]
        %v866 = vld [vmem:[%s864 + $0x8] sm:$0xff]
        %v867 = vld [vmem:[%s864 + $0x10] sm:$0xff]
        %s868 = scalar_lea.vmem %s3, 528
        %v869 = vld [vmem:[%s868] sm:$0xff]
        %v870 = vld [vmem:[%s868 + $0x8] sm:$0xff]
        %v871 = vld [vmem:[%s868 + $0x10] sm:$0xff]
        %s872 = scalar_lea.vmem %s3, 552
        %v873 = vld [vmem:[%s872] sm:$0xff]
        %v874 = vld [vmem:[%s872 + $0x8] sm:$0xff]
        %v875 = vld [vmem:[%s872 + $0x10] sm:$0xff]
        %s876 = scalar_lea.vmem %s3, 576
        %v877 = vld [vmem:[%s876] sm:$0xff]
        %v878 = vld [vmem:[%s876 + $0x8] sm:$0xff]
        %v879 = vld [vmem:[%s876 + $0x10] sm:$0xff]
        %s880 = scalar_lea.vmem %s3, 600
        %v881 = vld [vmem:[%s880] sm:$0xff]
        %v882 = vld [vmem:[%s880 + $0x8] sm:$0xff]
        %v883 = vld [vmem:[%s880 + $0x10] sm:$0xff]
        %s884 = scalar_lea.vmem %s3, 624
        %v885 = vld [vmem:[%s884] sm:$0xff]
        %v886 = vld [vmem:[%s884 + $0x8] sm:$0xff]
        %v887 = vld [vmem:[%s884 + $0x10] sm:$0xff]
        %v888 = vld [vmem:[%s4] sm:$0xff]
        %v889 = vld [vmem:[%s4 + $0x8] sm:$0xff]
        %v890 = vld [vmem:[%s4 + $0x10] sm:$0xff]
        %v891 = vlaneseq
        %v892 = vand.u32 %v891, 127
        %vm893 = vcmp.lt.s32.totalorder %v892, 0
        %v894 = vsub.s32 0, %v892
        %v895 = vsel %vm893, %v894, %v892
        %v896 = vshrl.u32 %v895, 3
        %v897 = vand.u32 %v895, 7
        %v898 = vsub.s32 0, %v897
        %v899 = vsel %vm893, %v898, %v897
        %vm900 = vcmp.ne.s32.totalorder %v899, 0
        %vm901 = vcmp.lt.s32.totalorder %v899, 0
        %vm902 = vmand %vm901, %vm900
        %v903 = vadd.s32 %v899, 8
        %v904 = vsel %vm902, %v903, %v899
        %vm905 = vcmp.ge.s32.totalorder %v904, 1
        %vm906 = vcmp.lt.s32.totalorder %v904, 8
        %vm907 = vmand %vm905, %vm906
        %v908 = vsel %vm907, 1, 0
        %v909 = vcvt.s32.f32 %v908
        %vm910 = vcmp.ge.s32.totalorder %v904, 0
        %vm911 = vcmp.lt.s32.totalorder %v904, 7
        %vm912 = vmand %vm910, %vm911
        %v913 = vsel %vm912, 1, 0
        %v914 = vcvt.s32.f32 %v913
        %v915 = vld [vmem:[#allocation2] sm:$0xff]
        %v916 = vld [vmem:[#allocation2 + $0x8] sm:$0xff]
        %v917 = vld [vmem:[#allocation2 + $0x10] sm:$0xff]
        %v918 = vld [vmem:[%s638] sm:$0xff]
        %v919 = vld [vmem:[%s638 + $0x8] sm:$0xff]
        %v920 = vld [vmem:[%s638 + $0x10] sm:$0xff]
        %v921 = vld [vmem:[%s663] sm:$0xff]
        %v922 = vld [vmem:[%s663 + $0x8] sm:$0xff]
        %v923 = vld [vmem:[%s663 + $0x10] sm:$0xff]
        %925 = vset.pattern.permute.xlu0 0
        %926 = vperm.xlu0 %925, %v781
        %v927 = vpop.permute.xlu0 %926
        %930 = vset.pattern.permute.xlu0 0
        %931 = vperm.xlu0 %930, %v782
        %v932 = vpop.permute.xlu0 %931
        %935 = vset.pattern.permute.xlu0 0
        %936 = vperm.xlu0 %935, %v783
        %v937 = vpop.permute.xlu0 %936
        %v939 = vmul.f32 %v915, %v927
        %v940 = vmul.f32 %v916, %v932
        %v941 = vmul.f32 %v917, %v937
        %v942 = vadd.f32 %v939, 0.0
        %v943 = vadd.f32 %v940, 0.0
        %v944 = vadd.f32 %v941, 0.0
        %945 = vrot.lane.b32.xlu0 %v915, 120
        %v946 = vpop.permute.xlu0 %945
        %947 = vrot.lane.b32.xlu0 %v916, 120
        %v948 = vpop.permute.xlu0 %947
        %949 = vrot.lane.b32.xlu0 %v917, 120
        %v950 = vpop.permute.xlu0 %949
        %952 = vset.pattern.permute.xlu0 0
        %953 = vperm.xlu0 %952, %v793
        %v954 = vpop.permute.xlu0 %953
        %957 = vset.pattern.permute.xlu0 0
        %958 = vperm.xlu0 %957, %v794
        %v959 = vpop.permute.xlu0 %958
        %962 = vset.pattern.permute.xlu0 0
        %963 = vperm.xlu0 %962, %v795
        %v964 = vpop.permute.xlu0 %963
        %v966 = vmul.f32 %v946, %v954
        %v967 = vmul.f32 %v948, %v959
        %v968 = vmul.f32 %v950, %v964
        %v969 = vadd.f32 %v942, %v966
        %v970 = vadd.f32 %v943, %v967
        %v971 = vadd.f32 %v944, %v968
        %972 = vrot.lane.b32.xlu0 %v915, 112
        %v973 = vpop.permute.xlu0 %972
        %974 = vrot.lane.b32.xlu0 %v916, 112
        %v975 = vpop.permute.xlu0 %974
        %976 = vrot.lane.b32.xlu0 %v917, 112
        %v977 = vpop.permute.xlu0 %976
        %979 = vset.pattern.permute.xlu0 0
        %980 = vperm.xlu0 %979, %v805
        %v981 = vpop.permute.xlu0 %980
        %984 = vset.pattern.permute.xlu0 0
        %985 = vperm.xlu0 %984, %v806
        %v986 = vpop.permute.xlu0 %985
        %989 = vset.pattern.permute.xlu0 0
        %990 = vperm.xlu0 %989, %v807
        %v991 = vpop.permute.xlu0 %990
        %v993 = vmul.f32 %v973, %v981
        %v994 = vmul.f32 %v975, %v986
        %v995 = vmul.f32 %v977, %v991
        %v996 = vadd.f32 %v969, %v993
        %v997 = vadd.f32 %v970, %v994
        %v998 = vadd.f32 %v971, %v995
        %1000 = vset.pattern.permute.xlu0 0
        %1001 = vperm.xlu0 %1000, %v817
        %v1002 = vpop.permute.xlu0 %1001
        %1005 = vset.pattern.permute.xlu0 0
        %1006 = vperm.xlu0 %1005, %v818
        %v1007 = vpop.permute.xlu0 %1006
        %1010 = vset.pattern.permute.xlu0 0
        %1011 = vperm.xlu0 %1010, %v819
        %v1012 = vpop.permute.xlu0 %1011
        %v1014 = vmul.f32 %v918, %v1002
        %v1015 = vmul.f32 %v919, %v1007
        %v1016 = vmul.f32 %v920, %v1012
        %v1017 = vadd.f32 %v996, %v1014
        %v1018 = vadd.f32 %v997, %v1015
        %v1019 = vadd.f32 %v998, %v1016
        %1020 = vrot.lane.b32.xlu0 %v918, 120
        %v1021 = vpop.permute.xlu0 %1020
        %1022 = vrot.lane.b32.xlu0 %v919, 120
        %v1023 = vpop.permute.xlu0 %1022
        %1024 = vrot.lane.b32.xlu0 %v920, 120
        %v1025 = vpop.permute.xlu0 %1024
        %1027 = vset.pattern.permute.xlu0 0
        %1028 = vperm.xlu0 %1027, %v829
        %v1029 = vpop.permute.xlu0 %1028
        %1032 = vset.pattern.permute.xlu0 0
        %1033 = vperm.xlu0 %1032, %v830
        %v1034 = vpop.permute.xlu0 %1033
        %1037 = vset.pattern.permute.xlu0 0
        %1038 = vperm.xlu0 %1037, %v831
        %v1039 = vpop.permute.xlu0 %1038
        %v1041 = vmul.f32 %v1021, %v1029
        %v1042 = vmul.f32 %v1023, %v1034
        %v1043 = vmul.f32 %v1025, %v1039
        %v1044 = vadd.f32 %v1017, %v1041
        %v1045 = vadd.f32 %v1018, %v1042
        %v1046 = vadd.f32 %v1019, %v1043
        %1047 = vrot.lane.b32.xlu0 %v918, 112
        %v1048 = vpop.permute.xlu0 %1047
        %1049 = vrot.lane.b32.xlu0 %v919, 112
        %v1050 = vpop.permute.xlu0 %1049
        %1051 = vrot.lane.b32.xlu0 %v920, 112
        %v1052 = vpop.permute.xlu0 %1051
        %1054 = vset.pattern.permute.xlu0 0
        %1055 = vperm.xlu0 %1054, %v841
        %v1056 = vpop.permute.xlu0 %1055
        %1059 = vset.pattern.permute.xlu0 0
        %1060 = vperm.xlu0 %1059, %v842
        %v1061 = vpop.permute.xlu0 %1060
        %1064 = vset.pattern.permute.xlu0 0
        %1065 = vperm.xlu0 %1064, %v843
        %v1066 = vpop.permute.xlu0 %1065
        %v1068 = vmul.f32 %v1048, %v1056
        %v1069 = vmul.f32 %v1050, %v1061
        %v1070 = vmul.f32 %v1052, %v1066
        %v1071 = vadd.f32 %v1044, %v1068
        %v1072 = vadd.f32 %v1045, %v1069
        %v1073 = vadd.f32 %v1046, %v1070
        %1075 = vset.pattern.permute.xlu0 0
        %1076 = vperm.xlu0 %1075, %v853
        %v1077 = vpop.permute.xlu0 %1076
        %1080 = vset.pattern.permute.xlu0 0
        %1081 = vperm.xlu0 %1080, %v854
        %v1082 = vpop.permute.xlu0 %1081
        %1085 = vset.pattern.permute.xlu0 0
        %1086 = vperm.xlu0 %1085, %v855
        %v1087 = vpop.permute.xlu0 %1086
        %v1089 = vmul.f32 %v921, %v1077
        %v1090 = vmul.f32 %v922, %v1082
        %v1091 = vmul.f32 %v923, %v1087
        %v1092 = vadd.f32 %v1071, %v1089
        %v1093 = vadd.f32 %v1072, %v1090
        %v1094 = vadd.f32 %v1073, %v1091
        %1095 = vrot.lane.b32.xlu0 %v921, 120
        %v1096 = vpop.permute.xlu0 %1095
        %1097 = vrot.lane.b32.xlu0 %v922, 120
        %v1098 = vpop.permute.xlu0 %1097
        %1099 = vrot.lane.b32.xlu0 %v923, 120
        %v1100 = vpop.permute.xlu0 %1099
        %1102 = vset.pattern.permute.xlu0 0
        %1103 = vperm.xlu0 %1102, %v865
        %v1104 = vpop.permute.xlu0 %1103
        %1107 = vset.pattern.permute.xlu0 0
        %1108 = vperm.xlu0 %1107, %v866
        %v1109 = vpop.permute.xlu0 %1108
        %1112 = vset.pattern.permute.xlu0 0
        %1113 = vperm.xlu0 %1112, %v867
        %v1114 = vpop.permute.xlu0 %1113
        %v1116 = vmul.f32 %v1096, %v1104
        %v1117 = vmul.f32 %v1098, %v1109
        %v1118 = vmul.f32 %v1100, %v1114
        %v1119 = vadd.f32 %v1092, %v1116
        %v1120 = vadd.f32 %v1093, %v1117
        %v1121 = vadd.f32 %v1094, %v1118
        %1122 = vrot.lane.b32.xlu0 %v921, 112
        %v1123 = vpop.permute.xlu0 %1122
        %1124 = vrot.lane.b32.xlu0 %v922, 112
        %v1125 = vpop.permute.xlu0 %1124
        %1126 = vrot.lane.b32.xlu0 %v923, 112
        %v1127 = vpop.permute.xlu0 %1126
        %1129 = vset.pattern.permute.xlu0 0
        %1130 = vperm.xlu0 %1129, %v877
        %v1131 = vpop.permute.xlu0 %1130
        %1134 = vset.pattern.permute.xlu0 0
        %1135 = vperm.xlu0 %1134, %v878
        %v1136 = vpop.permute.xlu0 %1135
        %1139 = vset.pattern.permute.xlu0 0
        %1140 = vperm.xlu0 %1139, %v879
        %v1141 = vpop.permute.xlu0 %1140
        %v1143 = vmul.f32 %v1123, %v1131
        %v1144 = vmul.f32 %v1125, %v1136
        %v1145 = vmul.f32 %v1127, %v1141
        %v1146 = vadd.f32 %v1119, %v1143
        %v1147 = vadd.f32 %v1120, %v1144
        %v1148 = vadd.f32 %v1121, %v1145
        %v1149 = vmul.f32 %v1146, %v909
        %v1150 = vmul.f32 %v1147, %v909
        %v1151 = vmul.f32 %v1148, %v909
        %v1152 = vadd.f32 %v1149, 0.0
        %v1153 = vadd.f32 %v1150, 0.0
        %v1154 = vadd.f32 %v1151, 0.0
        %1155 = vrot.lane.b32.xlu0 %v915, 127
        %v1156 = vpop.permute.xlu0 %1155
        %1157 = vrot.lane.b32.xlu0 %v916, 127
        %v1158 = vpop.permute.xlu0 %1157
        %1159 = vrot.lane.b32.xlu0 %v917, 127
        %v1160 = vpop.permute.xlu0 %1159
        %1162 = vset.pattern.permute.xlu0 0
        %1163 = vperm.xlu0 %1162, %v785
        %v1164 = vpop.permute.xlu0 %1163
        %1167 = vset.pattern.permute.xlu0 0
        %1168 = vperm.xlu0 %1167, %v786
        %v1169 = vpop.permute.xlu0 %1168
        %1172 = vset.pattern.permute.xlu0 0
        %1173 = vperm.xlu0 %1172, %v787
        %v1174 = vpop.permute.xlu0 %1173
        %v1176 = vmul.f32 %v1156, %v1164
        %v1177 = vmul.f32 %v1158, %v1169
        %v1178 = vmul.f32 %v1160, %v1174
        %v1179 = vadd.f32 %v1176, 0.0
        %v1180 = vadd.f32 %v1177, 0.0
        %v1181 = vadd.f32 %v1178, 0.0
        %1182 = vrot.lane.b32.xlu0 %v915, 119
        %v1183 = vpop.permute.xlu0 %1182
        %1184 = vrot.lane.b32.xlu0 %v916, 119
        %v1185 = vpop.permute.xlu0 %1184
        %1186 = vrot.lane.b32.xlu0 %v917, 119
        %v1187 = vpop.permute.xlu0 %1186
        %1189 = vset.pattern.permute.xlu0 0
        %1190 = vperm.xlu0 %1189, %v797
        %v1191 = vpop.permute.xlu0 %1190
        %1194 = vset.pattern.permute.xlu0 0
        %1195 = vperm.xlu0 %1194, %v798
        %v1196 = vpop.permute.xlu0 %1195
        %1199 = vset.pattern.permute.xlu0 0
        %1200 = vperm.xlu0 %1199, %v799
        %v1201 = vpop.permute.xlu0 %1200
        %v1203 = vmul.f32 %v1183, %v1191
        %v1204 = vmul.f32 %v1185, %v1196
        %v1205 = vmul.f32 %v1187, %v1201
        %v1206 = vadd.f32 %v1179, %v1203
        %v1207 = vadd.f32 %v1180, %v1204
        %v1208 = vadd.f32 %v1181, %v1205
        %1209 = vrot.lane.b32.xlu0 %v915, 111
        %v1210 = vpop.permute.xlu0 %1209
        %1211 = vrot.lane.b32.xlu0 %v916, 111
        %v1212 = vpop.permute.xlu0 %1211
        %1213 = vrot.lane.b32.xlu0 %v917, 111
        %v1214 = vpop.permute.xlu0 %1213
        %1216 = vset.pattern.permute.xlu0 0
        %1217 = vperm.xlu0 %1216, %v809
        %v1218 = vpop.permute.xlu0 %1217
        %1221 = vset.pattern.permute.xlu0 0
        %1222 = vperm.xlu0 %1221, %v810
        %v1223 = vpop.permute.xlu0 %1222
        %1226 = vset.pattern.permute.xlu0 0
        %1227 = vperm.xlu0 %1226, %v811
        %v1228 = vpop.permute.xlu0 %1227
        %v1230 = vmul.f32 %v1210, %v1218
        %v1231 = vmul.f32 %v1212, %v1223
        %v1232 = vmul.f32 %v1214, %v1228
        %v1233 = vadd.f32 %v1206, %v1230
        %v1234 = vadd.f32 %v1207, %v1231
        %v1235 = vadd.f32 %v1208, %v1232
        %1236 = vrot.lane.b32.xlu0 %v918, 127
        %v1237 = vpop.permute.xlu0 %1236
        %1238 = vrot.lane.b32.xlu0 %v919, 127
        %v1239 = vpop.permute.xlu0 %1238
        %1240 = vrot.lane.b32.xlu0 %v920, 127
        %v1241 = vpop.permute.xlu0 %1240
        %1243 = vset.pattern.permute.xlu0 0
        %1244 = vperm.xlu0 %1243, %v821
        %v1245 = vpop.permute.xlu0 %1244
        %1248 = vset.pattern.permute.xlu0 0
        %1249 = vperm.xlu0 %1248, %v822
        %v1250 = vpop.permute.xlu0 %1249
        %1253 = vset.pattern.permute.xlu0 0
        %1254 = vperm.xlu0 %1253, %v823
        %v1255 = vpop.permute.xlu0 %1254
        %v1257 = vmul.f32 %v1237, %v1245
        %v1258 = vmul.f32 %v1239, %v1250
        %v1259 = vmul.f32 %v1241, %v1255
        %v1260 = vadd.f32 %v1233, %v1257
        %v1261 = vadd.f32 %v1234, %v1258
        %v1262 = vadd.f32 %v1235, %v1259
        %1263 = vrot.lane.b32.xlu0 %v918, 119
        %v1264 = vpop.permute.xlu0 %1263
        %1265 = vrot.lane.b32.xlu0 %v919, 119
        %v1266 = vpop.permute.xlu0 %1265
        %1267 = vrot.lane.b32.xlu0 %v920, 119
        %v1268 = vpop.permute.xlu0 %1267
        %1270 = vset.pattern.permute.xlu0 0
        %1271 = vperm.xlu0 %1270, %v833
        %v1272 = vpop.permute.xlu0 %1271
        %1275 = vset.pattern.permute.xlu0 0
        %1276 = vperm.xlu0 %1275, %v834
        %v1277 = vpop.permute.xlu0 %1276
        %1280 = vset.pattern.permute.xlu0 0
        %1281 = vperm.xlu0 %1280, %v835
        %v1282 = vpop.permute.xlu0 %1281
        %v1284 = vmul.f32 %v1264, %v1272
        %v1285 = vmul.f32 %v1266, %v1277
        %v1286 = vmul.f32 %v1268, %v1282
        %v1287 = vadd.f32 %v1260, %v1284
        %v1288 = vadd.f32 %v1261, %v1285
        %v1289 = vadd.f32 %v1262, %v1286
        %1290 = vrot.lane.b32.xlu0 %v918, 111
        %v1291 = vpop.permute.xlu0 %1290
        %1292 = vrot.lane.b32.xlu0 %v919, 111
        %v1293 = vpop.permute.xlu0 %1292
        %1294 = vrot.lane.b32.xlu0 %v920, 111
        %v1295 = vpop.permute.xlu0 %1294
        %1297 = vset.pattern.permute.xlu0 0
        %1298 = vperm.xlu0 %1297, %v845
        %v1299 = vpop.permute.xlu0 %1298
        %1302 = vset.pattern.permute.xlu0 0
        %1303 = vperm.xlu0 %1302, %v846
        %v1304 = vpop.permute.xlu0 %1303
        %1307 = vset.pattern.permute.xlu0 0
        %1308 = vperm.xlu0 %1307, %v847
        %v1309 = vpop.permute.xlu0 %1308
        %v1311 = vmul.f32 %v1291, %v1299
        %v1312 = vmul.f32 %v1293, %v1304
        %v1313 = vmul.f32 %v1295, %v1309
        %v1314 = vadd.f32 %v1287, %v1311
        %v1315 = vadd.f32 %v1288, %v1312
        %v1316 = vadd.f32 %v1289, %v1313
        %1317 = vrot.lane.b32.xlu0 %v921, 127
        %v1318 = vpop.permute.xlu0 %1317
        %1319 = vrot.lane.b32.xlu0 %v922, 127
        %v1320 = vpop.permute.xlu0 %1319
        %1321 = vrot.lane.b32.xlu0 %v923, 127
        %v1322 = vpop.permute.xlu0 %1321
        %1324 = vset.pattern.permute.xlu0 0
        %1325 = vperm.xlu0 %1324, %v857
        %v1326 = vpop.permute.xlu0 %1325
        %1329 = vset.pattern.permute.xlu0 0
        %1330 = vperm.xlu0 %1329, %v858
        %v1331 = vpop.permute.xlu0 %1330
        %1334 = vset.pattern.permute.xlu0 0
        %1335 = vperm.xlu0 %1334, %v859
        %v1336 = vpop.permute.xlu0 %1335
        %v1338 = vmul.f32 %v1318, %v1326
        %v1339 = vmul.f32 %v1320, %v1331
        %v1340 = vmul.f32 %v1322, %v1336
        %v1341 = vadd.f32 %v1314, %v1338
        %v1342 = vadd.f32 %v1315, %v1339
        %v1343 = vadd.f32 %v1316, %v1340
        %1344 = vrot.lane.b32.xlu0 %v921, 119
        %v1345 = vpop.permute.xlu0 %1344
        %1346 = vrot.lane.b32.xlu0 %v922, 119
        %v1347 = vpop.permute.xlu0 %1346
        %1348 = vrot.lane.b32.xlu0 %v923, 119
        %v1349 = vpop.permute.xlu0 %1348
        %1351 = vset.pattern.permute.xlu0 0
        %1352 = vperm.xlu0 %1351, %v869
        %v1353 = vpop.permute.xlu0 %1352
        %1356 = vset.pattern.permute.xlu0 0
        %1357 = vperm.xlu0 %1356, %v870
        %v1358 = vpop.permute.xlu0 %1357
        %1361 = vset.pattern.permute.xlu0 0
        %1362 = vperm.xlu0 %1361, %v871
        %v1363 = vpop.permute.xlu0 %1362
        %v1365 = vmul.f32 %v1345, %v1353
        %v1366 = vmul.f32 %v1347, %v1358
        %v1367 = vmul.f32 %v1349, %v1363
        %v1368 = vadd.f32 %v1341, %v1365
        %v1369 = vadd.f32 %v1342, %v1366
        %v1370 = vadd.f32 %v1343, %v1367
        %1371 = vrot.lane.b32.xlu0 %v921, 111
        %v1372 = vpop.permute.xlu0 %1371
        %1373 = vrot.lane.b32.xlu0 %v922, 111
        %v1374 = vpop.permute.xlu0 %1373
        %1375 = vrot.lane.b32.xlu0 %v923, 111
        %v1376 = vpop.permute.xlu0 %1375
        %1378 = vset.pattern.permute.xlu0 0
        %1379 = vperm.xlu0 %1378, %v881
        %v1380 = vpop.permute.xlu0 %1379
        %1383 = vset.pattern.permute.xlu0 0
        %1384 = vperm.xlu0 %1383, %v882
        %v1385 = vpop.permute.xlu0 %1384
        %1388 = vset.pattern.permute.xlu0 0
        %1389 = vperm.xlu0 %1388, %v883
        %v1390 = vpop.permute.xlu0 %1389
        %v1392 = vmul.f32 %v1372, %v1380
        %v1393 = vmul.f32 %v1374, %v1385
        %v1394 = vmul.f32 %v1376, %v1390
        %v1395 = vadd.f32 %v1368, %v1392
        %v1396 = vadd.f32 %v1369, %v1393
        %v1397 = vadd.f32 %v1370, %v1394
        %v1398 = vadd.f32 %v1152, %v1395
        %v1399 = vadd.f32 %v1153, %v1396
        %v1400 = vadd.f32 %v1154, %v1397
        %1401 = vrot.lane.b32.xlu0 %v915, 126
        %v1402 = vpop.permute.xlu0 %1401
        %1403 = vrot.lane.b32.xlu0 %v916, 126
        %v1404 = vpop.permute.xlu0 %1403
        %1405 = vrot.lane.b32.xlu0 %v917, 126
        %v1406 = vpop.permute.xlu0 %1405
        %1408 = vset.pattern.permute.xlu0 0
        %1409 = vperm.xlu0 %1408, %v789
        %v1410 = vpop.permute.xlu0 %1409
        %1413 = vset.pattern.permute.xlu0 0
        %1414 = vperm.xlu0 %1413, %v790
        %v1415 = vpop.permute.xlu0 %1414
        %1418 = vset.pattern.permute.xlu0 0
        %1419 = vperm.xlu0 %1418, %v791
        %v1420 = vpop.permute.xlu0 %1419
        %v1422 = vmul.f32 %v1402, %v1410
        %v1423 = vmul.f32 %v1404, %v1415
        %v1424 = vmul.f32 %v1406, %v1420
        %v1425 = vadd.f32 %v1422, 0.0
        %v1426 = vadd.f32 %v1423, 0.0
        %v1427 = vadd.f32 %v1424, 0.0
        %1428 = vrot.lane.b32.xlu0 %v915, 118
        %v1429 = vpop.permute.xlu0 %1428
        %1430 = vrot.lane.b32.xlu0 %v916, 118
        %v1431 = vpop.permute.xlu0 %1430
        %1432 = vrot.lane.b32.xlu0 %v917, 118
        %v1433 = vpop.permute.xlu0 %1432
        %1435 = vset.pattern.permute.xlu0 0
        %1436 = vperm.xlu0 %1435, %v801
        %v1437 = vpop.permute.xlu0 %1436
        %1440 = vset.pattern.permute.xlu0 0
        %1441 = vperm.xlu0 %1440, %v802
        %v1442 = vpop.permute.xlu0 %1441
        %1445 = vset.pattern.permute.xlu0 0
        %1446 = vperm.xlu0 %1445, %v803
        %v1447 = vpop.permute.xlu0 %1446
        %v1449 = vmul.f32 %v1429, %v1437
        %v1450 = vmul.f32 %v1431, %v1442
        %v1451 = vmul.f32 %v1433, %v1447
        %v1452 = vadd.f32 %v1425, %v1449
        %v1453 = vadd.f32 %v1426, %v1450
        %v1454 = vadd.f32 %v1427, %v1451
        %1455 = vrot.lane.b32.xlu0 %v915, 110
        %v1456 = vpop.permute.xlu0 %1455
        %1457 = vrot.lane.b32.xlu0 %v916, 110
        %v1458 = vpop.permute.xlu0 %1457
        %1459 = vrot.lane.b32.xlu0 %v917, 110
        %v1460 = vpop.permute.xlu0 %1459
        %1462 = vset.pattern.permute.xlu0 0
        %1463 = vperm.xlu0 %1462, %v813
        %v1464 = vpop.permute.xlu0 %1463
        %1467 = vset.pattern.permute.xlu0 0
        %1468 = vperm.xlu0 %1467, %v814
        %v1469 = vpop.permute.xlu0 %1468
        %1472 = vset.pattern.permute.xlu0 0
        %1473 = vperm.xlu0 %1472, %v815
        %v1474 = vpop.permute.xlu0 %1473
        %v1476 = vmul.f32 %v1456, %v1464
        %v1477 = vmul.f32 %v1458, %v1469
        %v1478 = vmul.f32 %v1460, %v1474
        %v1479 = vadd.f32 %v1452, %v1476
        %v1480 = vadd.f32 %v1453, %v1477
        %v1481 = vadd.f32 %v1454, %v1478
        %1482 = vrot.lane.b32.xlu0 %v918, 126
        %v1483 = vpop.permute.xlu0 %1482
        %1484 = vrot.lane.b32.xlu0 %v919, 126
        %v1485 = vpop.permute.xlu0 %1484
        %1486 = vrot.lane.b32.xlu0 %v920, 126
        %v1487 = vpop.permute.xlu0 %1486
        %1489 = vset.pattern.permute.xlu0 0
        %1490 = vperm.xlu0 %1489, %v825
        %v1491 = vpop.permute.xlu0 %1490
        %1494 = vset.pattern.permute.xlu0 0
        %1495 = vperm.xlu0 %1494, %v826
        %v1496 = vpop.permute.xlu0 %1495
        %1499 = vset.pattern.permute.xlu0 0
        %1500 = vperm.xlu0 %1499, %v827
        %v1501 = vpop.permute.xlu0 %1500
        %v1503 = vmul.f32 %v1483, %v1491
        %v1504 = vmul.f32 %v1485, %v1496
        %v1505 = vmul.f32 %v1487, %v1501
        %v1506 = vadd.f32 %v1479, %v1503
        %v1507 = vadd.f32 %v1480, %v1504
        %v1508 = vadd.f32 %v1481, %v1505
        %1509 = vrot.lane.b32.xlu0 %v918, 118
        %v1510 = vpop.permute.xlu0 %1509
        %1511 = vrot.lane.b32.xlu0 %v919, 118
        %v1512 = vpop.permute.xlu0 %1511
        %1513 = vrot.lane.b32.xlu0 %v920, 118
        %v1514 = vpop.permute.xlu0 %1513
        %1516 = vset.pattern.permute.xlu0 0
        %1517 = vperm.xlu0 %1516, %v837
        %v1518 = vpop.permute.xlu0 %1517
        %1521 = vset.pattern.permute.xlu0 0
        %1522 = vperm.xlu0 %1521, %v838
        %v1523 = vpop.permute.xlu0 %1522
        %1526 = vset.pattern.permute.xlu0 0
        %1527 = vperm.xlu0 %1526, %v839
        %v1528 = vpop.permute.xlu0 %1527
        %v1530 = vmul.f32 %v1510, %v1518
        %v1531 = vmul.f32 %v1512, %v1523
        %v1532 = vmul.f32 %v1514, %v1528
        %v1533 = vadd.f32 %v1506, %v1530
        %v1534 = vadd.f32 %v1507, %v1531
        %v1535 = vadd.f32 %v1508, %v1532
        %1536 = vrot.lane.b32.xlu0 %v918, 110
        %v1537 = vpop.permute.xlu0 %1536
        %1538 = vrot.lane.b32.xlu0 %v919, 110
        %v1539 = vpop.permute.xlu0 %1538
        %1540 = vrot.lane.b32.xlu0 %v920, 110
        %v1541 = vpop.permute.xlu0 %1540
        %1543 = vset.pattern.permute.xlu0 0
        %1544 = vperm.xlu0 %1543, %v849
        %v1545 = vpop.permute.xlu0 %1544
        %1548 = vset.pattern.permute.xlu0 0
        %1549 = vperm.xlu0 %1548, %v850
        %v1550 = vpop.permute.xlu0 %1549
        %1553 = vset.pattern.permute.xlu0 0
        %1554 = vperm.xlu0 %1553, %v851
        %v1555 = vpop.permute.xlu0 %1554
        %v1557 = vmul.f32 %v1537, %v1545
        %v1558 = vmul.f32 %v1539, %v1550
        %v1559 = vmul.f32 %v1541, %v1555
        %v1560 = vadd.f32 %v1533, %v1557
        %v1561 = vadd.f32 %v1534, %v1558
        %v1562 = vadd.f32 %v1535, %v1559
        %1563 = vrot.lane.b32.xlu0 %v921, 126
        %v1564 = vpop.permute.xlu0 %1563
        %1565 = vrot.lane.b32.xlu0 %v922, 126
        %v1566 = vpop.permute.xlu0 %1565
        %1567 = vrot.lane.b32.xlu0 %v923, 126
        %v1568 = vpop.permute.xlu0 %1567
        %1570 = vset.pattern.permute.xlu0 0
        %1571 = vperm.xlu0 %1570, %v861
        %v1572 = vpop.permute.xlu0 %1571
        %1575 = vset.pattern.permute.xlu0 0
        %1576 = vperm.xlu0 %1575, %v862
        %v1577 = vpop.permute.xlu0 %1576
        %1580 = vset.pattern.permute.xlu0 0
        %1581 = vperm.xlu0 %1580, %v863
        %v1582 = vpop.permute.xlu0 %1581
        %v1584 = vmul.f32 %v1564, %v1572
        %v1585 = vmul.f32 %v1566, %v1577
        %v1586 = vmul.f32 %v1568, %v1582
        %v1587 = vadd.f32 %v1560, %v1584
        %v1588 = vadd.f32 %v1561, %v1585
        %v1589 = vadd.f32 %v1562, %v1586
        %1590 = vrot.lane.b32.xlu0 %v921, 118
        %v1591 = vpop.permute.xlu0 %1590
        %1592 = vrot.lane.b32.xlu0 %v922, 118
        %v1593 = vpop.permute.xlu0 %1592
        %1594 = vrot.lane.b32.xlu0 %v923, 118
        %v1595 = vpop.permute.xlu0 %1594
        %1597 = vset.pattern.permute.xlu0 0
        %1598 = vperm.xlu0 %1597, %v873
        %v1599 = vpop.permute.xlu0 %1598
        %1602 = vset.pattern.permute.xlu0 0
        %1603 = vperm.xlu0 %1602, %v874
        %v1604 = vpop.permute.xlu0 %1603
        %1607 = vset.pattern.permute.xlu0 0
        %1608 = vperm.xlu0 %1607, %v875
        %v1609 = vpop.permute.xlu0 %1608
        %v1611 = vmul.f32 %v1591, %v1599
        %v1612 = vmul.f32 %v1593, %v1604
        %v1613 = vmul.f32 %v1595, %v1609
        %v1614 = vadd.f32 %v1587, %v1611
        %v1615 = vadd.f32 %v1588, %v1612
        %v1616 = vadd.f32 %v1589, %v1613
        %1617 = vrot.lane.b32.xlu0 %v921, 110
        %v1618 = vpop.permute.xlu0 %1617
        %1619 = vrot.lane.b32.xlu0 %v922, 110
        %v1620 = vpop.permute.xlu0 %1619
        %1621 = vrot.lane.b32.xlu0 %v923, 110
        %v1622 = vpop.permute.xlu0 %1621
        %1624 = vset.pattern.permute.xlu0 0
        %1625 = vperm.xlu0 %1624, %v885
        %v1626 = vpop.permute.xlu0 %1625
        %1629 = vset.pattern.permute.xlu0 0
        %1630 = vperm.xlu0 %1629, %v886
        %v1631 = vpop.permute.xlu0 %1630
        %1634 = vset.pattern.permute.xlu0 0
        %1635 = vperm.xlu0 %1634, %v887
        %v1636 = vpop.permute.xlu0 %1635
        %v1638 = vmul.f32 %v1618, %v1626
        %v1639 = vmul.f32 %v1620, %v1631
        %v1640 = vmul.f32 %v1622, %v1636
        %v1641 = vadd.f32 %v1614, %v1638
        %v1642 = vadd.f32 %v1615, %v1639
        %v1643 = vadd.f32 %v1616, %v1640
        %v1644 = vmul.f32 %v1641, %v914
        %v1645 = vmul.f32 %v1642, %v914
        %v1646 = vmul.f32 %v1643, %v914
        %v1647 = vadd.f32 %v1398, %v1644
        %v1648 = vadd.f32 %v1399, %v1645
        %v1649 = vadd.f32 %v1400, %v1646
        %1651 = vset.pattern.permute.xlu0 0
        %1652 = vperm.xlu0 %1651, %v888
        %v1653 = vpop.permute.xlu0 %1652
        %1656 = vset.pattern.permute.xlu0 0
        %1657 = vperm.xlu0 %1656, %v889
        %v1658 = vpop.permute.xlu0 %1657
        %1661 = vset.pattern.permute.xlu0 0
        %1662 = vperm.xlu0 %1661, %v890
        %v1663 = vpop.permute.xlu0 %1662
        %v1665 = vadd.f32 %v1647, %v1653
        %v1666 = vadd.f32 %v1648, %v1658
        %v1667 = vadd.f32 %v1649, %v1663
        %v1668 = vmax.f32 %v1665, 0.0
        %v1669 = vmax.f32 %v1666, 0.0
        %v1670 = vmax.f32 %v1667, 0.0
        %v1671 = vmin.f32 %v1668, 6.0
        %v1672 = vmin.f32 %v1669, 6.0
        %v1673 = vmin.f32 %v1670, 6.0
        %1674 = vst.msk [vmem:[#allocation3] sm:$0xff] %vm628, %v1671
        %1675 = vst.msk [vmem:[#allocation3 + $0x20] sm:$0xff] %vm628, %v1672
        %1676 = vst.msk [vmem:[#allocation3 + $0x40] sm:$0xff] %vm628, %v1673
        %v1677 = vsel %vm628, %v1671, 0.0
        %1678 = vadd.xlane.f32.xlu0 %v1677
        %v1679 = vpop.xlane.xlu0 %1678
        %v1680 = vsel %vm628, %v1672, 0.0
        %1681 = vadd.xlane.f32.xlu0 %v1680
        %v1682 = vpop.xlane.xlu0 %1681
        %v1683 = vsel %vm628, %v1673, 0.0
        %1684 = vadd.xlane.f32.xlu0 %v1683
        %v1685 = vpop.xlane.xlu0 %1684
        %v1686 = vadd.f32 %v1679, 0.0
        %v1687 = vadd.f32 %v1682, 0.0
        %v1688 = vadd.f32 %v1685, 0.0
        %v1689 = vld [vmem:[%s638] sm:$0xff]
        %v1690 = vld [vmem:[%s638 + $0x8] sm:$0xff]
        %v1691 = vld [vmem:[%s638 + $0x10] sm:$0xff]
        %v1692 = vld [vmem:[%s663] sm:$0xff]
        %v1693 = vld [vmem:[%s663 + $0x8] sm:$0xff]
        %v1694 = vld [vmem:[%s663 + $0x10] sm:$0xff]
        %v1695 = vld [vmem:[%s676] sm:$0xff]
        %v1696 = vld [vmem:[%s676 + $0x8] sm:$0xff]
        %v1697 = vld [vmem:[%s676 + $0x10] sm:$0xff]
        %v1698 = vmul.f32 %v1689, %v927
        %v1699 = vmul.f32 %v1690, %v932
        %v1700 = vmul.f32 %v1691, %v937
        %v1701 = vadd.f32 %v1698, 0.0
        %v1702 = vadd.f32 %v1699, 0.0
        %v1703 = vadd.f32 %v1700, 0.0
        %1704 = vrot.lane.b32.xlu0 %v1689, 120
        %v1705 = vpop.permute.xlu0 %1704
        %1706 = vrot.lane.b32.xlu0 %v1690, 120
        %v1707 = vpop.permute.xlu0 %1706
        %1708 = vrot.lane.b32.xlu0 %v1691, 120
        %v1709 = vpop.permute.xlu0 %1708
        %v1710 = vmul.f32 %v1705, %v954
        %v1711 = vmul.f32 %v1707, %v959
        %v1712 = vmul.f32 %v1709, %v964
        %v1713 = vadd.f32 %v1701, %v1710
        %v1714 = vadd.f32 %v1702, %v1711
        %v1715 = vadd.f32 %v1703, %v1712
        %1716 = vrot.lane.b32.xlu0 %v1689, 112
        %v1717 = vpop.permute.xlu0 %1716
        %1718 = vrot.lane.b32.xlu0 %v1690, 112
        %v1719 = vpop.permute.xlu0 %1718
        %1720 = vrot.lane.b32.xlu0 %v1691, 112
        %v1721 = vpop.permute.xlu0 %1720
        %v1722 = vmul.f32 %v1717, %v981
        %v1723 = vmul.f32 %v1719, %v986
        %v1724 = vmul.f32 %v1721, %v991
        %v1725 = vadd.f32 %v1713, %v1722
        %v1726 = vadd.f32 %v1714, %v1723
        %v1727 = vadd.f32 %v1715, %v1724
        %v1728 = vmul.f32 %v1692, %v1002
        %v1729 = vmul.f32 %v1693, %v1007
        %v1730 = vmul.f32 %v1694, %v1012
        %v1731 = vadd.f32 %v1725, %v1728
        %v1732 = vadd.f32 %v1726, %v1729
        %v1733 = vadd.f32 %v1727, %v1730
        %1734 = vrot.lane.b32.xlu0 %v1692, 120
        %v1735 = vpop.permute.xlu0 %1734
        %1736 = vrot.lane.b32.xlu0 %v1693, 120
        %v1737 = vpop.permute.xlu0 %1736
        %1738 = vrot.lane.b32.xlu0 %v1694, 120
        %v1739 = vpop.permute.xlu0 %1738
        %v1740 = vmul.f32 %v1735, %v1029
        %v1741 = vmul.f32 %v1737, %v1034
        %v1742 = vmul.f32 %v1739, %v1039
        %v1743 = vadd.f32 %v1731, %v1740
        %v1744 = vadd.f32 %v1732, %v1741
        %v1745 = vadd.f32 %v1733, %v1742
        %1746 = vrot.lane.b32.xlu0 %v1692, 112
        %v1747 = vpop.permute.xlu0 %1746
        %1748 = vrot.lane.b32.xlu0 %v1693, 112
        %v1749 = vpop.permute.xlu0 %1748
        %1750 = vrot.lane.b32.xlu0 %v1694, 112
        %v1751 = vpop.permute.xlu0 %1750
        %v1752 = vmul.f32 %v1747, %v1056
        %v1753 = vmul.f32 %v1749, %v1061
        %v1754 = vmul.f32 %v1751, %v1066
        %v1755 = vadd.f32 %v1743, %v1752
        %v1756 = vadd.f32 %v1744, %v1753
        %v1757 = vadd.f32 %v1745, %v1754
        %v1758 = vmul.f32 %v1695, %v1077
        %v1759 = vmul.f32 %v1696, %v1082
        %v1760 = vmul.f32 %v1697, %v1087
        %v1761 = vadd.f32 %v1755, %v1758
        %v1762 = vadd.f32 %v1756, %v1759
        %v1763 = vadd.f32 %v1757, %v1760
        %1764 = vrot.lane.b32.xlu0 %v1695, 120
        %v1765 = vpop.permute.xlu0 %1764
        %1766 = vrot.lane.b32.xlu0 %v1696, 120
        %v1767 = vpop.permute.xlu0 %1766
        %1768 = vrot.lane.b32.xlu0 %v1697, 120
        %v1769 = vpop.permute.xlu0 %1768
        %v1770 = vmul.f32 %v1765, %v1104
        %v1771 = vmul.f32 %v1767, %v1109
        %v1772 = vmul.f32 %v1769, %v1114
        %v1773 = vadd.f32 %v1761, %v1770
        %v1774 = vadd.f32 %v1762, %v1771
        %v1775 = vadd.f32 %v1763, %v1772
        %1776 = vrot.lane.b32.xlu0 %v1695, 112
        %v1777 = vpop.permute.xlu0 %1776
        %1778 = vrot.lane.b32.xlu0 %v1696, 112
        %v1779 = vpop.permute.xlu0 %1778
        %1780 = vrot.lane.b32.xlu0 %v1697, 112
        %v1781 = vpop.permute.xlu0 %1780
        %v1782 = vmul.f32 %v1777, %v1131
        %v1783 = vmul.f32 %v1779, %v1136
        %v1784 = vmul.f32 %v1781, %v1141
        %v1785 = vadd.f32 %v1773, %v1782
        %v1786 = vadd.f32 %v1774, %v1783
        %v1787 = vadd.f32 %v1775, %v1784
        %v1788 = vmul.f32 %v1785, %v909
        %v1789 = vmul.f32 %v1786, %v909
        %v1790 = vmul.f32 %v1787, %v909
        %v1791 = vadd.f32 %v1788, 0.0
        %v1792 = vadd.f32 %v1789, 0.0
        %v1793 = vadd.f32 %v1790, 0.0
        %1794 = vrot.lane.b32.xlu0 %v1689, 127
        %v1795 = vpop.permute.xlu0 %1794
        %1796 = vrot.lane.b32.xlu0 %v1690, 127
        %v1797 = vpop.permute.xlu0 %1796
        %1798 = vrot.lane.b32.xlu0 %v1691, 127
        %v1799 = vpop.permute.xlu0 %1798
        %v1800 = vmul.f32 %v1795, %v1164
        %v1801 = vmul.f32 %v1797, %v1169
        %v1802 = vmul.f32 %v1799, %v1174
        %v1803 = vadd.f32 %v1800, 0.0
        %v1804 = vadd.f32 %v1801, 0.0
        %v1805 = vadd.f32 %v1802, 0.0
        %1806 = vrot.lane.b32.xlu0 %v1689, 119
        %v1807 = vpop.permute.xlu0 %1806
        %1808 = vrot.lane.b32.xlu0 %v1690, 119
        %v1809 = vpop.permute.xlu0 %1808
        %1810 = vrot.lane.b32.xlu0 %v1691, 119
        %v1811 = vpop.permute.xlu0 %1810
        %v1812 = vmul.f32 %v1807, %v1191
        %v1813 = vmul.f32 %v1809, %v1196
        %v1814 = vmul.f32 %v1811, %v1201
        %v1815 = vadd.f32 %v1803, %v1812
        %v1816 = vadd.f32 %v1804, %v1813
        %v1817 = vadd.f32 %v1805, %v1814
        %1818 = vrot.lane.b32.xlu0 %v1689, 111
        %v1819 = vpop.permute.xlu0 %1818
        %1820 = vrot.lane.b32.xlu0 %v1690, 111
        %v1821 = vpop.permute.xlu0 %1820
        %1822 = vrot.lane.b32.xlu0 %v1691, 111
        %v1823 = vpop.permute.xlu0 %1822
        %v1824 = vmul.f32 %v1819, %v1218
        %v1825 = vmul.f32 %v1821, %v1223
        %v1826 = vmul.f32 %v1823, %v1228
        %v1827 = vadd.f32 %v1815, %v1824
        %v1828 = vadd.f32 %v1816, %v1825
        %v1829 = vadd.f32 %v1817, %v1826
        %1830 = vrot.lane.b32.xlu0 %v1692, 127
        %v1831 = vpop.permute.xlu0 %1830
        %1832 = vrot.lane.b32.xlu0 %v1693, 127
        %v1833 = vpop.permute.xlu0 %1832
        %1834 = vrot.lane.b32.xlu0 %v1694, 127
        %v1835 = vpop.permute.xlu0 %1834
        %v1836 = vmul.f32 %v1831, %v1245
        %v1837 = vmul.f32 %v1833, %v1250
        %v1838 = vmul.f32 %v1835, %v1255
        %v1839 = vadd.f32 %v1827, %v1836
        %v1840 = vadd.f32 %v1828, %v1837
        %v1841 = vadd.f32 %v1829, %v1838
        %1842 = vrot.lane.b32.xlu0 %v1692, 119
        %v1843 = vpop.permute.xlu0 %1842
        %1844 = vrot.lane.b32.xlu0 %v1693, 119
        %v1845 = vpop.permute.xlu0 %1844
        %1846 = vrot.lane.b32.xlu0 %v1694, 119
        %v1847 = vpop.permute.xlu0 %1846
        %v1848 = vmul.f32 %v1843, %v1272
        %v1849 = vmul.f32 %v1845, %v1277
        %v1850 = vmul.f32 %v1847, %v1282
        %v1851 = vadd.f32 %v1839, %v1848
        %v1852 = vadd.f32 %v1840, %v1849
        %v1853 = vadd.f32 %v1841, %v1850
        %1854 = vrot.lane.b32.xlu0 %v1692, 111
        %v1855 = vpop.permute.xlu0 %1854
        %1856 = vrot.lane.b32.xlu0 %v1693, 111
        %v1857 = vpop.permute.xlu0 %1856
        %1858 = vrot.lane.b32.xlu0 %v1694, 111
        %v1859 = vpop.permute.xlu0 %1858
        %v1860 = vmul.f32 %v1855, %v1299
        %v1861 = vmul.f32 %v1857, %v1304
        %v1862 = vmul.f32 %v1859, %v1309
        %v1863 = vadd.f32 %v1851, %v1860
        %v1864 = vadd.f32 %v1852, %v1861
        %v1865 = vadd.f32 %v1853, %v1862
        %1866 = vrot.lane.b32.xlu0 %v1695, 127
        %v1867 = vpop.permute.xlu0 %1866
        %1868 = vrot.lane.b32.xlu0 %v1696, 127
        %v1869 = vpop.permute.xlu0 %1868
        %1870 = vrot.lane.b32.xlu0 %v1697, 127
        %v1871 = vpop.permute.xlu0 %1870
        %v1872 = vmul.f32 %v1867, %v1326
        %v1873 = vmul.f32 %v1869, %v1331
        %v1874 = vmul.f32 %v1871, %v1336
        %v1875 = vadd.f32 %v1863, %v1872
        %v1876 = vadd.f32 %v1864, %v1873
        %v1877 = vadd.f32 %v1865, %v1874
        %1878 = vrot.lane.b32.xlu0 %v1695, 119
        %v1879 = vpop.permute.xlu0 %1878
        %1880 = vrot.lane.b32.xlu0 %v1696, 119
        %v1881 = vpop.permute.xlu0 %1880
        %1882 = vrot.lane.b32.xlu0 %v1697, 119
        %v1883 = vpop.permute.xlu0 %1882
        %v1884 = vmul.f32 %v1879, %v1353
        %v1885 = vmul.f32 %v1881, %v1358
        %v1886 = vmul.f32 %v1883, %v1363
        %v1887 = vadd.f32 %v1875, %v1884
        %v1888 = vadd.f32 %v1876, %v1885
        %v1889 = vadd.f32 %v1877, %v1886
        %1890 = vrot.lane.b32.xlu0 %v1695, 111
        %v1891 = vpop.permute.xlu0 %1890
        %1892 = vrot.lane.b32.xlu0 %v1696, 111
        %v1893 = vpop.permute.xlu0 %1892
        %1894 = vrot.lane.b32.xlu0 %v1697, 111
        %v1895 = vpop.permute.xlu0 %1894
        %v1896 = vmul.f32 %v1891, %v1380
        %v1897 = vmul.f32 %v1893, %v1385
        %v1898 = vmul.f32 %v1895, %v1390
        %v1899 = vadd.f32 %v1887, %v1896
        %v1900 = vadd.f32 %v1888, %v1897
        %v1901 = vadd.f32 %v1889, %v1898
        %v1902 = vadd.f32 %v1791, %v1899
        %v1903 = vadd.f32 %v1792, %v1900
        %v1904 = vadd.f32 %v1793, %v1901
        %1905 = vrot.lane.b32.xlu0 %v1689, 126
        %v1906 = vpop.permute.xlu0 %1905
        %1907 = vrot.lane.b32.xlu0 %v1690, 126
        %v1908 = vpop.permute.xlu0 %1907
        %1909 = vrot.lane.b32.xlu0 %v1691, 126
        %v1910 = vpop.permute.xlu0 %1909
        %v1911 = vmul.f32 %v1906, %v1410
        %v1912 = vmul.f32 %v1908, %v1415
        %v1913 = vmul.f32 %v1910, %v1420
        %v1914 = vadd.f32 %v1911, 0.0
        %v1915 = vadd.f32 %v1912, 0.0
        %v1916 = vadd.f32 %v1913, 0.0
        %1917 = vrot.lane.b32.xlu0 %v1689, 118
        %v1918 = vpop.permute.xlu0 %1917
        %1919 = vrot.lane.b32.xlu0 %v1690, 118
        %v1920 = vpop.permute.xlu0 %1919
        %1921 = vrot.lane.b32.xlu0 %v1691, 118
        %v1922 = vpop.permute.xlu0 %1921
        %v1923 = vmul.f32 %v1918, %v1437
        %v1924 = vmul.f32 %v1920, %v1442
        %v1925 = vmul.f32 %v1922, %v1447
        %v1926 = vadd.f32 %v1914, %v1923
        %v1927 = vadd.f32 %v1915, %v1924
        %v1928 = vadd.f32 %v1916, %v1925
        %1929 = vrot.lane.b32.xlu0 %v1689, 110
        %v1930 = vpop.permute.xlu0 %1929
        %1931 = vrot.lane.b32.xlu0 %v1690, 110
        %v1932 = vpop.permute.xlu0 %1931
        %1933 = vrot.lane.b32.xlu0 %v1691, 110
        %v1934 = vpop.permute.xlu0 %1933
        %v1935 = vmul.f32 %v1930, %v1464
        %v1936 = vmul.f32 %v1932, %v1469
        %v1937 = vmul.f32 %v1934, %v1474
        %v1938 = vadd.f32 %v1926, %v1935
        %v1939 = vadd.f32 %v1927, %v1936
        %v1940 = vadd.f32 %v1928, %v1937
        %1941 = vrot.lane.b32.xlu0 %v1692, 126
        %v1942 = vpop.permute.xlu0 %1941
        %1943 = vrot.lane.b32.xlu0 %v1693, 126
        %v1944 = vpop.permute.xlu0 %1943
        %1945 = vrot.lane.b32.xlu0 %v1694, 126
        %v1946 = vpop.permute.xlu0 %1945
        %v1947 = vmul.f32 %v1942, %v1491
        %v1948 = vmul.f32 %v1944, %v1496
        %v1949 = vmul.f32 %v1946, %v1501
        %v1950 = vadd.f32 %v1938, %v1947
        %v1951 = vadd.f32 %v1939, %v1948
        %v1952 = vadd.f32 %v1940, %v1949
        %1953 = vrot.lane.b32.xlu0 %v1692, 118
        %v1954 = vpop.permute.xlu0 %1953
        %1955 = vrot.lane.b32.xlu0 %v1693, 118
        %v1956 = vpop.permute.xlu0 %1955
        %1957 = vrot.lane.b32.xlu0 %v1694, 118
        %v1958 = vpop.permute.xlu0 %1957
        %v1959 = vmul.f32 %v1954, %v1518
        %v1960 = vmul.f32 %v1956, %v1523
        %v1961 = vmul.f32 %v1958, %v1528
        %v1962 = vadd.f32 %v1950, %v1959
        %v1963 = vadd.f32 %v1951, %v1960
        %v1964 = vadd.f32 %v1952, %v1961
        %1965 = vrot.lane.b32.xlu0 %v1692, 110
        %v1966 = vpop.permute.xlu0 %1965
        %1967 = vrot.lane.b32.xlu0 %v1693, 110
        %v1968 = vpop.permute.xlu0 %1967
        %1969 = vrot.lane.b32.xlu0 %v1694, 110
        %v1970 = vpop.permute.xlu0 %1969
        %v1971 = vmul.f32 %v1966, %v1545
        %v1972 = vmul.f32 %v1968, %v1550
        %v1973 = vmul.f32 %v1970, %v1555
        %v1974 = vadd.f32 %v1962, %v1971
        %v1975 = vadd.f32 %v1963, %v1972
        %v1976 = vadd.f32 %v1964, %v1973
        %1977 = vrot.lane.b32.xlu0 %v1695, 126
        %v1978 = vpop.permute.xlu0 %1977
        %1979 = vrot.lane.b32.xlu0 %v1696, 126
        %v1980 = vpop.permute.xlu0 %1979
        %1981 = vrot.lane.b32.xlu0 %v1697, 126
        %v1982 = vpop.permute.xlu0 %1981
        %v1983 = vmul.f32 %v1978, %v1572
        %v1984 = vmul.f32 %v1980, %v1577
        %v1985 = vmul.f32 %v1982, %v1582
        %v1986 = vadd.f32 %v1974, %v1983
        %v1987 = vadd.f32 %v1975, %v1984
        %v1988 = vadd.f32 %v1976, %v1985
        %1989 = vrot.lane.b32.xlu0 %v1695, 118
        %v1990 = vpop.permute.xlu0 %1989
        %1991 = vrot.lane.b32.xlu0 %v1696, 118
        %v1992 = vpop.permute.xlu0 %1991
        %1993 = vrot.lane.b32.xlu0 %v1697, 118
        %v1994 = vpop.permute.xlu0 %1993
        %v1995 = vmul.f32 %v1990, %v1599
        %v1996 = vmul.f32 %v1992, %v1604
        %v1997 = vmul.f32 %v1994, %v1609
        %v1998 = vadd.f32 %v1986, %v1995
        %v1999 = vadd.f32 %v1987, %v1996
        %v2000 = vadd.f32 %v1988, %v1997
        %2001 = vrot.lane.b32.xlu0 %v1695, 110
        %v2002 = vpop.permute.xlu0 %2001
        %2003 = vrot.lane.b32.xlu0 %v1696, 110
        %v2004 = vpop.permute.xlu0 %2003
        %2005 = vrot.lane.b32.xlu0 %v1697, 110
        %v2006 = vpop.permute.xlu0 %2005
        %v2007 = vmul.f32 %v2002, %v1626
        %v2008 = vmul.f32 %v2004, %v1631
        %v2009 = vmul.f32 %v2006, %v1636
        %v2010 = vadd.f32 %v1998, %v2007
        %v2011 = vadd.f32 %v1999, %v2008
        %v2012 = vadd.f32 %v2000, %v2009
        %v2013 = vmul.f32 %v2010, %v914
        %v2014 = vmul.f32 %v2011, %v914
        %v2015 = vmul.f32 %v2012, %v914
        %v2016 = vadd.f32 %v1902, %v2013
        %v2017 = vadd.f32 %v1903, %v2014
        %v2018 = vadd.f32 %v1904, %v2015
        %v2019 = vadd.f32 %v2016, %v1653
        %v2020 = vadd.f32 %v2017, %v1658
        %v2021 = vadd.f32 %v2018, %v1663
        %v2022 = vmax.f32 %v2019, 0.0
        %v2023 = vmax.f32 %v2020, 0.0
        %v2024 = vmax.f32 %v2021, 0.0
        %v2025 = vmin.f32 %v2022, 6.0
        %v2026 = vmin.f32 %v2023, 6.0
        %v2027 = vmin.f32 %v2024, 6.0
        %2031 = vrot.lane.b32.xlu0 %v2025, 64
        %v2032 = vpop.permute.xlu0 %2031
        %2033 = vrot.lane.b32.xlu0 %v2026, 64
        %v2034 = vpop.permute.xlu0 %2033
        %2035 = vrot.lane.b32.xlu0 %v2027, 64
        %v2036 = vpop.permute.xlu0 %2035
        %vm2040 = vcmask 1048064
        %2041 = vst.msk [vmem:[#allocation3] sm:$0xff] %vm2040, %v2032
        %2042 = vst.msk [vmem:[#allocation3 + $0x20] sm:$0xff] %vm2040, %v2034
        %2043 = vst.msk [vmem:[#allocation3 + $0x40] sm:$0xff] %vm2040, %v2036
        %v2044 = vsel %vm628, %v2025, 0.0
        %2045 = vadd.xlane.f32.xlu0 %v2044
        %v2046 = vpop.xlane.xlu0 %2045
        %v2047 = vsel %vm628, %v2026, 0.0
        %2048 = vadd.xlane.f32.xlu0 %v2047
        %v2049 = vpop.xlane.xlu0 %2048
        %v2050 = vsel %vm628, %v2027, 0.0
        %2051 = vadd.xlane.f32.xlu0 %v2050
        %v2052 = vpop.xlane.xlu0 %2051
        %v2053 = vadd.f32 %v1686, %v2046
        %v2054 = vadd.f32 %v1687, %v2049
        %v2055 = vadd.f32 %v1688, %v2052
        %v2056 = vld [vmem:[%s663] sm:$0xff]
        %v2057 = vld [vmem:[%s663 + $0x8] sm:$0xff]
        %v2058 = vld [vmem:[%s663 + $0x10] sm:$0xff]
        %v2059 = vld [vmem:[%s676] sm:$0xff]
        %v2060 = vld [vmem:[%s676 + $0x8] sm:$0xff]
        %v2061 = vld [vmem:[%s676 + $0x10] sm:$0xff]
        %v2062 = vld [vmem:[%s701] sm:$0xff]
        %v2063 = vld [vmem:[%s701 + $0x8] sm:$0xff]
        %v2064 = vld [vmem:[%s701 + $0x10] sm:$0xff]
        %v2065 = vmul.f32 %v2056, %v927
        %v2066 = vmul.f32 %v2057, %v932
        %v2067 = vmul.f32 %v2058, %v937
        %v2068 = vadd.f32 %v2065, 0.0
        %v2069 = vadd.f32 %v2066, 0.0
        %v2070 = vadd.f32 %v2067, 0.0
        %2071 = vrot.lane.b32.xlu0 %v2056, 120
        %v2072 = vpop.permute.xlu0 %2071
        %2073 = vrot.lane.b32.xlu0 %v2057, 120
        %v2074 = vpop.permute.xlu0 %2073
        %2075 = vrot.lane.b32.xlu0 %v2058, 120
        %v2076 = vpop.permute.xlu0 %2075
        %v2077 = vmul.f32 %v2072, %v954
        %v2078 = vmul.f32 %v2074, %v959
        %v2079 = vmul.f32 %v2076, %v964
        %v2080 = vadd.f32 %v2068, %v2077
        %v2081 = vadd.f32 %v2069, %v2078
        %v2082 = vadd.f32 %v2070, %v2079
        %2083 = vrot.lane.b32.xlu0 %v2056, 112
        %v2084 = vpop.permute.xlu0 %2083
        %2085 = vrot.lane.b32.xlu0 %v2057, 112
        %v2086 = vpop.permute.xlu0 %2085
        %2087 = vrot.lane.b32.xlu0 %v2058, 112
        %v2088 = vpop.permute.xlu0 %2087
        %v2089 = vmul.f32 %v2084, %v981
        %v2090 = vmul.f32 %v2086, %v986
        %v2091 = vmul.f32 %v2088, %v991
        %v2092 = vadd.f32 %v2080, %v2089
        %v2093 = vadd.f32 %v2081, %v2090
        %v2094 = vadd.f32 %v2082, %v2091
        %v2095 = vmul.f32 %v2059, %v1002
        %v2096 = vmul.f32 %v2060, %v1007
        %v2097 = vmul.f32 %v2061, %v1012
        %v2098 = vadd.f32 %v2092, %v2095
        %v2099 = vadd.f32 %v2093, %v2096
        %v2100 = vadd.f32 %v2094, %v2097
        %2101 = vrot.lane.b32.xlu0 %v2059, 120
        %v2102 = vpop.permute.xlu0 %2101
        %2103 = vrot.lane.b32.xlu0 %v2060, 120
        %v2104 = vpop.permute.xlu0 %2103
        %2105 = vrot.lane.b32.xlu0 %v2061, 120
        %v2106 = vpop.permute.xlu0 %2105
        %v2107 = vmul.f32 %v2102, %v1029
        %v2108 = vmul.f32 %v2104, %v1034
        %v2109 = vmul.f32 %v2106, %v1039
        %v2110 = vadd.f32 %v2098, %v2107
        %v2111 = vadd.f32 %v2099, %v2108
        %v2112 = vadd.f32 %v2100, %v2109
        %2113 = vrot.lane.b32.xlu0 %v2059, 112
        %v2114 = vpop.permute.xlu0 %2113
        %2115 = vrot.lane.b32.xlu0 %v2060, 112
        %v2116 = vpop.permute.xlu0 %2115
        %2117 = vrot.lane.b32.xlu0 %v2061, 112
        %v2118 = vpop.permute.xlu0 %2117
        %v2119 = vmul.f32 %v2114, %v1056
        %v2120 = vmul.f32 %v2116, %v1061
        %v2121 = vmul.f32 %v2118, %v1066
        %v2122 = vadd.f32 %v2110, %v2119
        %v2123 = vadd.f32 %v2111, %v2120
        %v2124 = vadd.f32 %v2112, %v2121
        %v2125 = vmul.f32 %v2062, %v1077
        %v2126 = vmul.f32 %v2063, %v1082
        %v2127 = vmul.f32 %v2064, %v1087
        %v2128 = vadd.f32 %v2122, %v2125
        %v2129 = vadd.f32 %v2123, %v2126
        %v2130 = vadd.f32 %v2124, %v2127
        %2131 = vrot.lane.b32.xlu0 %v2062, 120
        %v2132 = vpop.permute.xlu0 %2131
        %2133 = vrot.lane.b32.xlu0 %v2063, 120
        %v2134 = vpop.permute.xlu0 %2133
        %2135 = vrot.lane.b32.xlu0 %v2064, 120
        %v2136 = vpop.permute.xlu0 %2135
        %v2137 = vmul.f32 %v2132, %v1104
        %v2138 = vmul.f32 %v2134, %v1109
        %v2139 = vmul.f32 %v2136, %v1114
        %v2140 = vadd.f32 %v2128, %v2137
        %v2141 = vadd.f32 %v2129, %v2138
        %v2142 = vadd.f32 %v2130, %v2139
        %2143 = vrot.lane.b32.xlu0 %v2062, 112
        %v2144 = vpop.permute.xlu0 %2143
        %2145 = vrot.lane.b32.xlu0 %v2063, 112
        %v2146 = vpop.permute.xlu0 %2145
        %2147 = vrot.lane.b32.xlu0 %v2064, 112
        %v2148 = vpop.permute.xlu0 %2147
        %v2149 = vmul.f32 %v2144, %v1131
        %v2150 = vmul.f32 %v2146, %v1136
        %v2151 = vmul.f32 %v2148, %v1141
        %v2152 = vadd.f32 %v2140, %v2149
        %v2153 = vadd.f32 %v2141, %v2150
        %v2154 = vadd.f32 %v2142, %v2151
        %v2155 = vmul.f32 %v2152, %v909
        %v2156 = vmul.f32 %v2153, %v909
        %v2157 = vmul.f32 %v2154, %v909
        %v2158 = vadd.f32 %v2155, 0.0
        %v2159 = vadd.f32 %v2156, 0.0
        %v2160 = vadd.f32 %v2157, 0.0
        %2161 = vrot.lane.b32.xlu0 %v2056, 127
        %v2162 = vpop.permute.xlu0 %2161
        %2163 = vrot.lane.b32.xlu0 %v2057, 127
        %v2164 = vpop.permute.xlu0 %2163
        %2165 = vrot.lane.b32.xlu0 %v2058, 127
        %v2166 = vpop.permute.xlu0 %2165
        %v2167 = vmul.f32 %v2162, %v1164
        %v2168 = vmul.f32 %v2164, %v1169
        %v2169 = vmul.f32 %v2166, %v1174
        %v2170 = vadd.f32 %v2167, 0.0
        %v2171 = vadd.f32 %v2168, 0.0
        %v2172 = vadd.f32 %v2169, 0.0
        %2173 = vrot.lane.b32.xlu0 %v2056, 119
        %v2174 = vpop.permute.xlu0 %2173
        %2175 = vrot.lane.b32.xlu0 %v2057, 119
        %v2176 = vpop.permute.xlu0 %2175
        %2177 = vrot.lane.b32.xlu0 %v2058, 119
        %v2178 = vpop.permute.xlu0 %2177
        %v2179 = vmul.f32 %v2174, %v1191
        %v2180 = vmul.f32 %v2176, %v1196
        %v2181 = vmul.f32 %v2178, %v1201
        %v2182 = vadd.f32 %v2170, %v2179
        %v2183 = vadd.f32 %v2171, %v2180
        %v2184 = vadd.f32 %v2172, %v2181
        %2185 = vrot.lane.b32.xlu0 %v2056, 111
        %v2186 = vpop.permute.xlu0 %2185
        %2187 = vrot.lane.b32.xlu0 %v2057, 111
        %v2188 = vpop.permute.xlu0 %2187
        %2189 = vrot.lane.b32.xlu0 %v2058, 111
        %v2190 = vpop.permute.xlu0 %2189
        %v2191 = vmul.f32 %v2186, %v1218
        %v2192 = vmul.f32 %v2188, %v1223
        %v2193 = vmul.f32 %v2190, %v1228
        %v2194 = vadd.f32 %v2182, %v2191
        %v2195 = vadd.f32 %v2183, %v2192
        %v2196 = vadd.f32 %v2184, %v2193
        %2197 = vrot.lane.b32.xlu0 %v2059, 127
        %v2198 = vpop.permute.xlu0 %2197
        %2199 = vrot.lane.b32.xlu0 %v2060, 127
        %v2200 = vpop.permute.xlu0 %2199
        %2201 = vrot.lane.b32.xlu0 %v2061, 127
        %v2202 = vpop.permute.xlu0 %2201
        %v2203 = vmul.f32 %v2198, %v1245
        %v2204 = vmul.f32 %v2200, %v1250
        %v2205 = vmul.f32 %v2202, %v1255
        %v2206 = vadd.f32 %v2194, %v2203
        %v2207 = vadd.f32 %v2195, %v2204
        %v2208 = vadd.f32 %v2196, %v2205
        %2209 = vrot.lane.b32.xlu0 %v2059, 119
        %v2210 = vpop.permute.xlu0 %2209
        %2211 = vrot.lane.b32.xlu0 %v2060, 119
        %v2212 = vpop.permute.xlu0 %2211
        %2213 = vrot.lane.b32.xlu0 %v2061, 119
        %v2214 = vpop.permute.xlu0 %2213
        %v2215 = vmul.f32 %v2210, %v1272
        %v2216 = vmul.f32 %v2212, %v1277
        %v2217 = vmul.f32 %v2214, %v1282
        %v2218 = vadd.f32 %v2206, %v2215
        %v2219 = vadd.f32 %v2207, %v2216
        %v2220 = vadd.f32 %v2208, %v2217
        %2221 = vrot.lane.b32.xlu0 %v2059, 111
        %v2222 = vpop.permute.xlu0 %2221
        %2223 = vrot.lane.b32.xlu0 %v2060, 111
        %v2224 = vpop.permute.xlu0 %2223
        %2225 = vrot.lane.b32.xlu0 %v2061, 111
        %v2226 = vpop.permute.xlu0 %2225
        %v2227 = vmul.f32 %v2222, %v1299
        %v2228 = vmul.f32 %v2224, %v1304
        %v2229 = vmul.f32 %v2226, %v1309
        %v2230 = vadd.f32 %v2218, %v2227
        %v2231 = vadd.f32 %v2219, %v2228
        %v2232 = vadd.f32 %v2220, %v2229
        %2233 = vrot.lane.b32.xlu0 %v2062, 127
        %v2234 = vpop.permute.xlu0 %2233
        %2235 = vrot.lane.b32.xlu0 %v2063, 127
        %v2236 = vpop.permute.xlu0 %2235
        %2237 = vrot.lane.b32.xlu0 %v2064, 127
        %v2238 = vpop.permute.xlu0 %2237
        %v2239 = vmul.f32 %v2234, %v1326
        %v2240 = vmul.f32 %v2236, %v1331
        %v2241 = vmul.f32 %v2238, %v1336
        %v2242 = vadd.f32 %v2230, %v2239
        %v2243 = vadd.f32 %v2231, %v2240
        %v2244 = vadd.f32 %v2232, %v2241
        %2245 = vrot.lane.b32.xlu0 %v2062, 119
        %v2246 = vpop.permute.xlu0 %2245
        %2247 = vrot.lane.b32.xlu0 %v2063, 119
        %v2248 = vpop.permute.xlu0 %2247
        %2249 = vrot.lane.b32.xlu0 %v2064, 119
        %v2250 = vpop.permute.xlu0 %2249
        %v2251 = vmul.f32 %v2246, %v1353
        %v2252 = vmul.f32 %v2248, %v1358
        %v2253 = vmul.f32 %v2250, %v1363
        %v2254 = vadd.f32 %v2242, %v2251
        %v2255 = vadd.f32 %v2243, %v2252
        %v2256 = vadd.f32 %v2244, %v2253
        %2257 = vrot.lane.b32.xlu0 %v2062, 111
        %v2258 = vpop.permute.xlu0 %2257
        %2259 = vrot.lane.b32.xlu0 %v2063, 111
        %v2260 = vpop.permute.xlu0 %2259
        %2261 = vrot.lane.b32.xlu0 %v2064, 111
        %v2262 = vpop.permute.xlu0 %2261
        %v2263 = vmul.f32 %v2258, %v1380
        %v2264 = vmul.f32 %v2260, %v1385
        %v2265 = vmul.f32 %v2262, %v1390
        %v2266 = vadd.f32 %v2254, %v2263
        %v2267 = vadd.f32 %v2255, %v2264
        %v2268 = vadd.f32 %v2256, %v2265
        %v2269 = vadd.f32 %v2158, %v2266
        %v2270 = vadd.f32 %v2159, %v2267
        %v2271 = vadd.f32 %v2160, %v2268
        %2272 = vrot.lane.b32.xlu0 %v2056, 126
        %v2273 = vpop.permute.xlu0 %2272
        %2274 = vrot.lane.b32.xlu0 %v2057, 126
        %v2275 = vpop.permute.xlu0 %2274
        %2276 = vrot.lane.b32.xlu0 %v2058, 126
        %v2277 = vpop.permute.xlu0 %2276
        %v2278 = vmul.f32 %v2273, %v1410
        %v2279 = vmul.f32 %v2275, %v1415
        %v2280 = vmul.f32 %v2277, %v1420
        %v2281 = vadd.f32 %v2278, 0.0
        %v2282 = vadd.f32 %v2279, 0.0
        %v2283 = vadd.f32 %v2280, 0.0
        %2284 = vrot.lane.b32.xlu0 %v2056, 118
        %v2285 = vpop.permute.xlu0 %2284
        %2286 = vrot.lane.b32.xlu0 %v2057, 118
        %v2287 = vpop.permute.xlu0 %2286
        %2288 = vrot.lane.b32.xlu0 %v2058, 118
        %v2289 = vpop.permute.xlu0 %2288
        %v2290 = vmul.f32 %v2285, %v1437
        %v2291 = vmul.f32 %v2287, %v1442
        %v2292 = vmul.f32 %v2289, %v1447
        %v2293 = vadd.f32 %v2281, %v2290
        %v2294 = vadd.f32 %v2282, %v2291
        %v2295 = vadd.f32 %v2283, %v2292
        %2296 = vrot.lane.b32.xlu0 %v2056, 110
        %v2297 = vpop.permute.xlu0 %2296
        %2298 = vrot.lane.b32.xlu0 %v2057, 110
        %v2299 = vpop.permute.xlu0 %2298
        %2300 = vrot.lane.b32.xlu0 %v2058, 110
        %v2301 = vpop.permute.xlu0 %2300
        %v2302 = vmul.f32 %v2297, %v1464
        %v2303 = vmul.f32 %v2299, %v1469
        %v2304 = vmul.f32 %v2301, %v1474
        %v2305 = vadd.f32 %v2293, %v2302
        %v2306 = vadd.f32 %v2294, %v2303
        %v2307 = vadd.f32 %v2295, %v2304
        %2308 = vrot.lane.b32.xlu0 %v2059, 126
        %v2309 = vpop.permute.xlu0 %2308
        %2310 = vrot.lane.b32.xlu0 %v2060, 126
        %v2311 = vpop.permute.xlu0 %2310
        %2312 = vrot.lane.b32.xlu0 %v2061, 126
        %v2313 = vpop.permute.xlu0 %2312
        %v2314 = vmul.f32 %v2309, %v1491
        %v2315 = vmul.f32 %v2311, %v1496
        %v2316 = vmul.f32 %v2313, %v1501
        %v2317 = vadd.f32 %v2305, %v2314
        %v2318 = vadd.f32 %v2306, %v2315
        %v2319 = vadd.f32 %v2307, %v2316
        %2320 = vrot.lane.b32.xlu0 %v2059, 118
        %v2321 = vpop.permute.xlu0 %2320
        %2322 = vrot.lane.b32.xlu0 %v2060, 118
        %v2323 = vpop.permute.xlu0 %2322
        %2324 = vrot.lane.b32.xlu0 %v2061, 118
        %v2325 = vpop.permute.xlu0 %2324
        %v2326 = vmul.f32 %v2321, %v1518
        %v2327 = vmul.f32 %v2323, %v1523
        %v2328 = vmul.f32 %v2325, %v1528
        %v2329 = vadd.f32 %v2317, %v2326
        %v2330 = vadd.f32 %v2318, %v2327
        %v2331 = vadd.f32 %v2319, %v2328
        %2332 = vrot.lane.b32.xlu0 %v2059, 110
        %v2333 = vpop.permute.xlu0 %2332
        %2334 = vrot.lane.b32.xlu0 %v2060, 110
        %v2335 = vpop.permute.xlu0 %2334
        %2336 = vrot.lane.b32.xlu0 %v2061, 110
        %v2337 = vpop.permute.xlu0 %2336
        %v2338 = vmul.f32 %v2333, %v1545
        %v2339 = vmul.f32 %v2335, %v1550
        %v2340 = vmul.f32 %v2337, %v1555
        %v2341 = vadd.f32 %v2329, %v2338
        %v2342 = vadd.f32 %v2330, %v2339
        %v2343 = vadd.f32 %v2331, %v2340
        %2344 = vrot.lane.b32.xlu0 %v2062, 126
        %v2345 = vpop.permute.xlu0 %2344
        %2346 = vrot.lane.b32.xlu0 %v2063, 126
        %v2347 = vpop.permute.xlu0 %2346
        %2348 = vrot.lane.b32.xlu0 %v2064, 126
        %v2349 = vpop.permute.xlu0 %2348
        %v2350 = vmul.f32 %v2345, %v1572
        %v2351 = vmul.f32 %v2347, %v1577
        %v2352 = vmul.f32 %v2349, %v1582
        %v2353 = vadd.f32 %v2341, %v2350
        %v2354 = vadd.f32 %v2342, %v2351
        %v2355 = vadd.f32 %v2343, %v2352
        %2356 = vrot.lane.b32.xlu0 %v2062, 118
        %v2357 = vpop.permute.xlu0 %2356
        %2358 = vrot.lane.b32.xlu0 %v2063, 118
        %v2359 = vpop.permute.xlu0 %2358
        %2360 = vrot.lane.b32.xlu0 %v2064, 118
        %v2361 = vpop.permute.xlu0 %2360
        %v2362 = vmul.f32 %v2357, %v1599
        %v2363 = vmul.f32 %v2359, %v1604
        %v2364 = vmul.f32 %v2361, %v1609
        %v2365 = vadd.f32 %v2353, %v2362
        %v2366 = vadd.f32 %v2354, %v2363
        %v2367 = vadd.f32 %v2355, %v2364
        %2368 = vrot.lane.b32.xlu0 %v2062, 110
        %v2369 = vpop.permute.xlu0 %2368
        %2370 = vrot.lane.b32.xlu0 %v2063, 110
        %v2371 = vpop.permute.xlu0 %2370
        %2372 = vrot.lane.b32.xlu0 %v2064, 110
        %v2373 = vpop.permute.xlu0 %2372
        %v2374 = vmul.f32 %v2369, %v1626
        %v2375 = vmul.f32 %v2371, %v1631
        %v2376 = vmul.f32 %v2373, %v1636
        %v2377 = vadd.f32 %v2365, %v2374
        %v2378 = vadd.f32 %v2366, %v2375
        %v2379 = vadd.f32 %v2367, %v2376
        %v2380 = vmul.f32 %v2377, %v914
        %v2381 = vmul.f32 %v2378, %v914
        %v2382 = vmul.f32 %v2379, %v914
        %v2383 = vadd.f32 %v2269, %v2380
        %v2384 = vadd.f32 %v2270, %v2381
        %v2385 = vadd.f32 %v2271, %v2382
        %v2386 = vadd.f32 %v2383, %v1653
        %v2387 = vadd.f32 %v2384, %v1658
        %v2388 = vadd.f32 %v2385, %v1663
        %v2389 = vmax.f32 %v2386, 0.0
        %v2390 = vmax.f32 %v2387, 0.0
        %v2391 = vmax.f32 %v2388, 0.0
        %v2392 = vmin.f32 %v2389, 6.0
        %v2393 = vmin.f32 %v2390, 6.0
        %v2394 = vmin.f32 %v2391, 6.0
        %2395 = vst.msk [vmem:[#allocation3 + $0x8] sm:$0xff] %vm628, %v2392
        %2396 = vst.msk [vmem:[#allocation3 + $0x28] sm:$0xff] %vm628, %v2393
        %2397 = vst.msk [vmem:[#allocation3 + $0x48] sm:$0xff] %vm628, %v2394
        %v2398 = vsel %vm628, %v2392, 0.0
        %2399 = vadd.xlane.f32.xlu0 %v2398
        %v2400 = vpop.xlane.xlu0 %2399
        %v2401 = vsel %vm628, %v2393, 0.0
        %2402 = vadd.xlane.f32.xlu0 %v2401
        %v2403 = vpop.xlane.xlu0 %2402
        %v2404 = vsel %vm628, %v2394, 0.0
        %2405 = vadd.xlane.f32.xlu0 %v2404
        %v2406 = vpop.xlane.xlu0 %2405
        %v2407 = vadd.f32 %v2053, %v2400
        %v2408 = vadd.f32 %v2054, %v2403
        %v2409 = vadd.f32 %v2055, %v2406
        %v2410 = vld [vmem:[%s676] sm:$0xff]
        %v2411 = vld [vmem:[%s676 + $0x8] sm:$0xff]
        %v2412 = vld [vmem:[%s676 + $0x10] sm:$0xff]
        %v2413 = vld [vmem:[%s701] sm:$0xff]
        %v2414 = vld [vmem:[%s701 + $0x8] sm:$0xff]
        %v2415 = vld [vmem:[%s701 + $0x10] sm:$0xff]
        %v2416 = vld [vmem:[%s714] sm:$0xff]
        %v2417 = vld [vmem:[%s714 + $0x8] sm:$0xff]
        %v2418 = vld [vmem:[%s714 + $0x10] sm:$0xff]
        %v2419 = vmul.f32 %v2410, %v927
        %v2420 = vmul.f32 %v2411, %v932
        %v2421 = vmul.f32 %v2412, %v937
        %v2422 = vadd.f32 %v2419, 0.0
        %v2423 = vadd.f32 %v2420, 0.0
        %v2424 = vadd.f32 %v2421, 0.0
        %2425 = vrot.lane.b32.xlu0 %v2410, 120
        %v2426 = vpop.permute.xlu0 %2425
        %2427 = vrot.lane.b32.xlu0 %v2411, 120
        %v2428 = vpop.permute.xlu0 %2427
        %2429 = vrot.lane.b32.xlu0 %v2412, 120
        %v2430 = vpop.permute.xlu0 %2429
        %v2431 = vmul.f32 %v2426, %v954
        %v2432 = vmul.f32 %v2428, %v959
        %v2433 = vmul.f32 %v2430, %v964
        %v2434 = vadd.f32 %v2422, %v2431
        %v2435 = vadd.f32 %v2423, %v2432
        %v2436 = vadd.f32 %v2424, %v2433
        %2437 = vrot.lane.b32.xlu0 %v2410, 112
        %v2438 = vpop.permute.xlu0 %2437
        %2439 = vrot.lane.b32.xlu0 %v2411, 112
        %v2440 = vpop.permute.xlu0 %2439
        %2441 = vrot.lane.b32.xlu0 %v2412, 112
        %v2442 = vpop.permute.xlu0 %2441
        %v2443 = vmul.f32 %v2438, %v981
        %v2444 = vmul.f32 %v2440, %v986
        %v2445 = vmul.f32 %v2442, %v991
        %v2446 = vadd.f32 %v2434, %v2443
        %v2447 = vadd.f32 %v2435, %v2444
        %v2448 = vadd.f32 %v2436, %v2445
        %v2449 = vmul.f32 %v2413, %v1002
        %v2450 = vmul.f32 %v2414, %v1007
        %v2451 = vmul.f32 %v2415, %v1012
        %v2452 = vadd.f32 %v2446, %v2449
        %v2453 = vadd.f32 %v2447, %v2450
        %v2454 = vadd.f32 %v2448, %v2451
        %2455 = vrot.lane.b32.xlu0 %v2413, 120
        %v2456 = vpop.permute.xlu0 %2455
        %2457 = vrot.lane.b32.xlu0 %v2414, 120
        %v2458 = vpop.permute.xlu0 %2457
        %2459 = vrot.lane.b32.xlu0 %v2415, 120
        %v2460 = vpop.permute.xlu0 %2459
        %v2461 = vmul.f32 %v2456, %v1029
        %v2462 = vmul.f32 %v2458, %v1034
        %v2463 = vmul.f32 %v2460, %v1039
        %v2464 = vadd.f32 %v2452, %v2461
        %v2465 = vadd.f32 %v2453, %v2462
        %v2466 = vadd.f32 %v2454, %v2463
        %2467 = vrot.lane.b32.xlu0 %v2413, 112
        %v2468 = vpop.permute.xlu0 %2467
        %2469 = vrot.lane.b32.xlu0 %v2414, 112
        %v2470 = vpop.permute.xlu0 %2469
        %2471 = vrot.lane.b32.xlu0 %v2415, 112
        %v2472 = vpop.permute.xlu0 %2471
        %v2473 = vmul.f32 %v2468, %v1056
        %v2474 = vmul.f32 %v2470, %v1061
        %v2475 = vmul.f32 %v2472, %v1066
        %v2476 = vadd.f32 %v2464, %v2473
        %v2477 = vadd.f32 %v2465, %v2474
        %v2478 = vadd.f32 %v2466, %v2475
        %v2479 = vmul.f32 %v2416, %v1077
        %v2480 = vmul.f32 %v2417, %v1082
        %v2481 = vmul.f32 %v2418, %v1087
        %v2482 = vadd.f32 %v2476, %v2479
        %v2483 = vadd.f32 %v2477, %v2480
        %v2484 = vadd.f32 %v2478, %v2481
        %2485 = vrot.lane.b32.xlu0 %v2416, 120
        %v2486 = vpop.permute.xlu0 %2485
        %2487 = vrot.lane.b32.xlu0 %v2417, 120
        %v2488 = vpop.permute.xlu0 %2487
        %2489 = vrot.lane.b32.xlu0 %v2418, 120
        %v2490 = vpop.permute.xlu0 %2489
        %v2491 = vmul.f32 %v2486, %v1104
        %v2492 = vmul.f32 %v2488, %v1109
        %v2493 = vmul.f32 %v2490, %v1114
        %v2494 = vadd.f32 %v2482, %v2491
        %v2495 = vadd.f32 %v2483, %v2492
        %v2496 = vadd.f32 %v2484, %v2493
        %2497 = vrot.lane.b32.xlu0 %v2416, 112
        %v2498 = vpop.permute.xlu0 %2497
        %2499 = vrot.lane.b32.xlu0 %v2417, 112
        %v2500 = vpop.permute.xlu0 %2499
        %2501 = vrot.lane.b32.xlu0 %v2418, 112
        %v2502 = vpop.permute.xlu0 %2501
        %v2503 = vmul.f32 %v2498, %v1131
        %v2504 = vmul.f32 %v2500, %v1136
        %v2505 = vmul.f32 %v2502, %v1141
        %v2506 = vadd.f32 %v2494, %v2503
        %v2507 = vadd.f32 %v2495, %v2504
        %v2508 = vadd.f32 %v2496, %v2505
        %v2509 = vmul.f32 %v2506, %v909
        %v2510 = vmul.f32 %v2507, %v909
        %v2511 = vmul.f32 %v2508, %v909
        %v2512 = vadd.f32 %v2509, 0.0
        %v2513 = vadd.f32 %v2510, 0.0
        %v2514 = vadd.f32 %v2511, 0.0
        %2515 = vrot.lane.b32.xlu0 %v2410, 127
        %v2516 = vpop.permute.xlu0 %2515
        %2517 = vrot.lane.b32.xlu0 %v2411, 127
        %v2518 = vpop.permute.xlu0 %2517
        %2519 = vrot.lane.b32.xlu0 %v2412, 127
        %v2520 = vpop.permute.xlu0 %2519
        %v2521 = vmul.f32 %v2516, %v1164
        %v2522 = vmul.f32 %v2518, %v1169
        %v2523 = vmul.f32 %v2520, %v1174
        %v2524 = vadd.f32 %v2521, 0.0
        %v2525 = vadd.f32 %v2522, 0.0
        %v2526 = vadd.f32 %v2523, 0.0
        %2527 = vrot.lane.b32.xlu0 %v2410, 119
        %v2528 = vpop.permute.xlu0 %2527
        %2529 = vrot.lane.b32.xlu0 %v2411, 119
        %v2530 = vpop.permute.xlu0 %2529
        %2531 = vrot.lane.b32.xlu0 %v2412, 119
        %v2532 = vpop.permute.xlu0 %2531
        %v2533 = vmul.f32 %v2528, %v1191
        %v2534 = vmul.f32 %v2530, %v1196
        %v2535 = vmul.f32 %v2532, %v1201
        %v2536 = vadd.f32 %v2524, %v2533
        %v2537 = vadd.f32 %v2525, %v2534
        %v2538 = vadd.f32 %v2526, %v2535
        %2539 = vrot.lane.b32.xlu0 %v2410, 111
        %v2540 = vpop.permute.xlu0 %2539
        %2541 = vrot.lane.b32.xlu0 %v2411, 111
        %v2542 = vpop.permute.xlu0 %2541
        %2543 = vrot.lane.b32.xlu0 %v2412, 111
        %v2544 = vpop.permute.xlu0 %2543
        %v2545 = vmul.f32 %v2540, %v1218
        %v2546 = vmul.f32 %v2542, %v1223
        %v2547 = vmul.f32 %v2544, %v1228
        %v2548 = vadd.f32 %v2536, %v2545
        %v2549 = vadd.f32 %v2537, %v2546
        %v2550 = vadd.f32 %v2538, %v2547
        %2551 = vrot.lane.b32.xlu0 %v2413, 127
        %v2552 = vpop.permute.xlu0 %2551
        %2553 = vrot.lane.b32.xlu0 %v2414, 127
        %v2554 = vpop.permute.xlu0 %2553
        %2555 = vrot.lane.b32.xlu0 %v2415, 127
        %v2556 = vpop.permute.xlu0 %2555
        %v2557 = vmul.f32 %v2552, %v1245
        %v2558 = vmul.f32 %v2554, %v1250
        %v2559 = vmul.f32 %v2556, %v1255
        %v2560 = vadd.f32 %v2548, %v2557
        %v2561 = vadd.f32 %v2549, %v2558
        %v2562 = vadd.f32 %v2550, %v2559
        %2563 = vrot.lane.b32.xlu0 %v2413, 119
        %v2564 = vpop.permute.xlu0 %2563
        %2565 = vrot.lane.b32.xlu0 %v2414, 119
        %v2566 = vpop.permute.xlu0 %2565
        %2567 = vrot.lane.b32.xlu0 %v2415, 119
        %v2568 = vpop.permute.xlu0 %2567
        %v2569 = vmul.f32 %v2564, %v1272
        %v2570 = vmul.f32 %v2566, %v1277
        %v2571 = vmul.f32 %v2568, %v1282
        %v2572 = vadd.f32 %v2560, %v2569
        %v2573 = vadd.f32 %v2561, %v2570
        %v2574 = vadd.f32 %v2562, %v2571
        %2575 = vrot.lane.b32.xlu0 %v2413, 111
        %v2576 = vpop.permute.xlu0 %2575
        %2577 = vrot.lane.b32.xlu0 %v2414, 111
        %v2578 = vpop.permute.xlu0 %2577
        %2579 = vrot.lane.b32.xlu0 %v2415, 111
        %v2580 = vpop.permute.xlu0 %2579
        %v2581 = vmul.f32 %v2576, %v1299
        %v2582 = vmul.f32 %v2578, %v1304
        %v2583 = vmul.f32 %v2580, %v1309
        %v2584 = vadd.f32 %v2572, %v2581
        %v2585 = vadd.f32 %v2573, %v2582
        %v2586 = vadd.f32 %v2574, %v2583
        %2587 = vrot.lane.b32.xlu0 %v2416, 127
        %v2588 = vpop.permute.xlu0 %2587
        %2589 = vrot.lane.b32.xlu0 %v2417, 127
        %v2590 = vpop.permute.xlu0 %2589
        %2591 = vrot.lane.b32.xlu0 %v2418, 127
        %v2592 = vpop.permute.xlu0 %2591
        %v2593 = vmul.f32 %v2588, %v1326
        %v2594 = vmul.f32 %v2590, %v1331
        %v2595 = vmul.f32 %v2592, %v1336
        %v2596 = vadd.f32 %v2584, %v2593
        %v2597 = vadd.f32 %v2585, %v2594
        %v2598 = vadd.f32 %v2586, %v2595
        %2599 = vrot.lane.b32.xlu0 %v2416, 119
        %v2600 = vpop.permute.xlu0 %2599
        %2601 = vrot.lane.b32.xlu0 %v2417, 119
        %v2602 = vpop.permute.xlu0 %2601
        %2603 = vrot.lane.b32.xlu0 %v2418, 119
        %v2604 = vpop.permute.xlu0 %2603
        %v2605 = vmul.f32 %v2600, %v1353
        %v2606 = vmul.f32 %v2602, %v1358
        %v2607 = vmul.f32 %v2604, %v1363
        %v2608 = vadd.f32 %v2596, %v2605
        %v2609 = vadd.f32 %v2597, %v2606
        %v2610 = vadd.f32 %v2598, %v2607
        %2611 = vrot.lane.b32.xlu0 %v2416, 111
        %v2612 = vpop.permute.xlu0 %2611
        %2613 = vrot.lane.b32.xlu0 %v2417, 111
        %v2614 = vpop.permute.xlu0 %2613
        %2615 = vrot.lane.b32.xlu0 %v2418, 111
        %v2616 = vpop.permute.xlu0 %2615
        %v2617 = vmul.f32 %v2612, %v1380
        %v2618 = vmul.f32 %v2614, %v1385
        %v2619 = vmul.f32 %v2616, %v1390
        %v2620 = vadd.f32 %v2608, %v2617
        %v2621 = vadd.f32 %v2609, %v2618
        %v2622 = vadd.f32 %v2610, %v2619
        %v2623 = vadd.f32 %v2512, %v2620
        %v2624 = vadd.f32 %v2513, %v2621
        %v2625 = vadd.f32 %v2514, %v2622
        %2626 = vrot.lane.b32.xlu0 %v2410, 126
        %v2627 = vpop.permute.xlu0 %2626
        %2628 = vrot.lane.b32.xlu0 %v2411, 126
        %v2629 = vpop.permute.xlu0 %2628
        %2630 = vrot.lane.b32.xlu0 %v2412, 126
        %v2631 = vpop.permute.xlu0 %2630
        %v2632 = vmul.f32 %v2627, %v1410
        %v2633 = vmul.f32 %v2629, %v1415
        %v2634 = vmul.f32 %v2631, %v1420
        %v2635 = vadd.f32 %v2632, 0.0
        %v2636 = vadd.f32 %v2633, 0.0
        %v2637 = vadd.f32 %v2634, 0.0
        %2638 = vrot.lane.b32.xlu0 %v2410, 118
        %v2639 = vpop.permute.xlu0 %2638
        %2640 = vrot.lane.b32.xlu0 %v2411, 118
        %v2641 = vpop.permute.xlu0 %2640
        %2642 = vrot.lane.b32.xlu0 %v2412, 118
        %v2643 = vpop.permute.xlu0 %2642
        %v2644 = vmul.f32 %v2639, %v1437
        %v2645 = vmul.f32 %v2641, %v1442
        %v2646 = vmul.f32 %v2643, %v1447
        %v2647 = vadd.f32 %v2635, %v2644
        %v2648 = vadd.f32 %v2636, %v2645
        %v2649 = vadd.f32 %v2637, %v2646
        %2650 = vrot.lane.b32.xlu0 %v2410, 110
        %v2651 = vpop.permute.xlu0 %2650
        %2652 = vrot.lane.b32.xlu0 %v2411, 110
        %v2653 = vpop.permute.xlu0 %2652
        %2654 = vrot.lane.b32.xlu0 %v2412, 110
        %v2655 = vpop.permute.xlu0 %2654
        %v2656 = vmul.f32 %v2651, %v1464
        %v2657 = vmul.f32 %v2653, %v1469
        %v2658 = vmul.f32 %v2655, %v1474
        %v2659 = vadd.f32 %v2647, %v2656
        %v2660 = vadd.f32 %v2648, %v2657
        %v2661 = vadd.f32 %v2649, %v2658
        %2662 = vrot.lane.b32.xlu0 %v2413, 126
        %v2663 = vpop.permute.xlu0 %2662
        %2664 = vrot.lane.b32.xlu0 %v2414, 126
        %v2665 = vpop.permute.xlu0 %2664
        %2666 = vrot.lane.b32.xlu0 %v2415, 126
        %v2667 = vpop.permute.xlu0 %2666
        %v2668 = vmul.f32 %v2663, %v1491
        %v2669 = vmul.f32 %v2665, %v1496
        %v2670 = vmul.f32 %v2667, %v1501
        %v2671 = vadd.f32 %v2659, %v2668
        %v2672 = vadd.f32 %v2660, %v2669
        %v2673 = vadd.f32 %v2661, %v2670
        %2674 = vrot.lane.b32.xlu0 %v2413, 118
        %v2675 = vpop.permute.xlu0 %2674
        %2676 = vrot.lane.b32.xlu0 %v2414, 118
        %v2677 = vpop.permute.xlu0 %2676
        %2678 = vrot.lane.b32.xlu0 %v2415, 118
        %v2679 = vpop.permute.xlu0 %2678
        %v2680 = vmul.f32 %v2675, %v1518
        %v2681 = vmul.f32 %v2677, %v1523
        %v2682 = vmul.f32 %v2679, %v1528
        %v2683 = vadd.f32 %v2671, %v2680
        %v2684 = vadd.f32 %v2672, %v2681
        %v2685 = vadd.f32 %v2673, %v2682
        %2686 = vrot.lane.b32.xlu0 %v2413, 110
        %v2687 = vpop.permute.xlu0 %2686
        %2688 = vrot.lane.b32.xlu0 %v2414, 110
        %v2689 = vpop.permute.xlu0 %2688
        %2690 = vrot.lane.b32.xlu0 %v2415, 110
        %v2691 = vpop.permute.xlu0 %2690
        %v2692 = vmul.f32 %v2687, %v1545
        %v2693 = vmul.f32 %v2689, %v1550
        %v2694 = vmul.f32 %v2691, %v1555
        %v2695 = vadd.f32 %v2683, %v2692
        %v2696 = vadd.f32 %v2684, %v2693
        %v2697 = vadd.f32 %v2685, %v2694
        %2698 = vrot.lane.b32.xlu0 %v2416, 126
        %v2699 = vpop.permute.xlu0 %2698
        %2700 = vrot.lane.b32.xlu0 %v2417, 126
        %v2701 = vpop.permute.xlu0 %2700
        %2702 = vrot.lane.b32.xlu0 %v2418, 126
        %v2703 = vpop.permute.xlu0 %2702
        %v2704 = vmul.f32 %v2699, %v1572
        %v2705 = vmul.f32 %v2701, %v1577
        %v2706 = vmul.f32 %v2703, %v1582
        %v2707 = vadd.f32 %v2695, %v2704
        %v2708 = vadd.f32 %v2696, %v2705
        %v2709 = vadd.f32 %v2697, %v2706
        %2710 = vrot.lane.b32.xlu0 %v2416, 118
        %v2711 = vpop.permute.xlu0 %2710
        %2712 = vrot.lane.b32.xlu0 %v2417, 118
        %v2713 = vpop.permute.xlu0 %2712
        %2714 = vrot.lane.b32.xlu0 %v2418, 118
        %v2715 = vpop.permute.xlu0 %2714
        %v2716 = vmul.f32 %v2711, %v1599
        %v2717 = vmul.f32 %v2713, %v1604
        %v2718 = vmul.f32 %v2715, %v1609
        %v2719 = vadd.f32 %v2707, %v2716
        %v2720 = vadd.f32 %v2708, %v2717
        %v2721 = vadd.f32 %v2709, %v2718
        %2722 = vrot.lane.b32.xlu0 %v2416, 110
        %v2723 = vpop.permute.xlu0 %2722
        %2724 = vrot.lane.b32.xlu0 %v2417, 110
        %v2725 = vpop.permute.xlu0 %2724
        %2726 = vrot.lane.b32.xlu0 %v2418, 110
        %v2727 = vpop.permute.xlu0 %2726
        %v2728 = vmul.f32 %v2723, %v1626
        %v2729 = vmul.f32 %v2725, %v1631
        %v2730 = vmul.f32 %v2727, %v1636
        %v2731 = vadd.f32 %v2719, %v2728
        %v2732 = vadd.f32 %v2720, %v2729
        %v2733 = vadd.f32 %v2721, %v2730
        %v2734 = vmul.f32 %v2731, %v914
        %v2735 = vmul.f32 %v2732, %v914
        %v2736 = vmul.f32 %v2733, %v914
        %v2737 = vadd.f32 %v2623, %v2734
        %v2738 = vadd.f32 %v2624, %v2735
        %v2739 = vadd.f32 %v2625, %v2736
        %v2740 = vadd.f32 %v2737, %v1653
        %v2741 = vadd.f32 %v2738, %v1658
        %v2742 = vadd.f32 %v2739, %v1663
        %v2743 = vmax.f32 %v2740, 0.0
        %v2744 = vmax.f32 %v2741, 0.0
        %v2745 = vmax.f32 %v2742, 0.0
        %v2746 = vmin.f32 %v2743, 6.0
        %v2747 = vmin.f32 %v2744, 6.0
        %v2748 = vmin.f32 %v2745, 6.0
        %2752 = vrot.lane.b32.xlu0 %v2746, 64
        %v2753 = vpop.permute.xlu0 %2752
        %2754 = vrot.lane.b32.xlu0 %v2747, 64
        %v2755 = vpop.permute.xlu0 %2754
        %2756 = vrot.lane.b32.xlu0 %v2748, 64
        %v2757 = vpop.permute.xlu0 %2756
        %2761 = vst.msk [vmem:[#allocation3 + $0x8] sm:$0xff] %vm2040, %v2753
        %2762 = vst.msk [vmem:[#allocation3 + $0x28] sm:$0xff] %vm2040, %v2755
        %2763 = vst.msk [vmem:[#allocation3 + $0x48] sm:$0xff] %vm2040, %v2757
        %v2764 = vsel %vm628, %v2746, 0.0
        %2765 = vadd.xlane.f32.xlu0 %v2764
        %v2766 = vpop.xlane.xlu0 %2765
        %v2767 = vsel %vm628, %v2747, 0.0
        %2768 = vadd.xlane.f32.xlu0 %v2767
        %v2769 = vpop.xlane.xlu0 %2768
        %v2770 = vsel %vm628, %v2748, 0.0
        %2771 = vadd.xlane.f32.xlu0 %v2770
        %v2772 = vpop.xlane.xlu0 %2771
        %v2773 = vadd.f32 %v2407, %v2766
        %v2774 = vadd.f32 %v2408, %v2769
        %v2775 = vadd.f32 %v2409, %v2772
        %v2776 = vld [vmem:[%s701] sm:$0xff]
        %v2777 = vld [vmem:[%s701 + $0x8] sm:$0xff]
        %v2778 = vld [vmem:[%s701 + $0x10] sm:$0xff]
        %v2779 = vld [vmem:[%s714] sm:$0xff]
        %v2780 = vld [vmem:[%s714 + $0x8] sm:$0xff]
        %v2781 = vld [vmem:[%s714 + $0x10] sm:$0xff]
        %v2782 = vld [vmem:[%s739] sm:$0xff]
        %v2783 = vld [vmem:[%s739 + $0x8] sm:$0xff]
        %v2784 = vld [vmem:[%s739 + $0x10] sm:$0xff]
        %v2785 = vmul.f32 %v2776, %v927
        %v2786 = vmul.f32 %v2777, %v932
        %v2787 = vmul.f32 %v2778, %v937
        %v2788 = vadd.f32 %v2785, 0.0
        %v2789 = vadd.f32 %v2786, 0.0
        %v2790 = vadd.f32 %v2787, 0.0
        %2791 = vrot.lane.b32.xlu0 %v2776, 120
        %v2792 = vpop.permute.xlu0 %2791
        %2793 = vrot.lane.b32.xlu0 %v2777, 120
        %v2794 = vpop.permute.xlu0 %2793
        %2795 = vrot.lane.b32.xlu0 %v2778, 120
        %v2796 = vpop.permute.xlu0 %2795
        %v2797 = vmul.f32 %v2792, %v954
        %v2798 = vmul.f32 %v2794, %v959
        %v2799 = vmul.f32 %v2796, %v964
        %v2800 = vadd.f32 %v2788, %v2797
        %v2801 = vadd.f32 %v2789, %v2798
        %v2802 = vadd.f32 %v2790, %v2799
        %2803 = vrot.lane.b32.xlu0 %v2776, 112
        %v2804 = vpop.permute.xlu0 %2803
        %2805 = vrot.lane.b32.xlu0 %v2777, 112
        %v2806 = vpop.permute.xlu0 %2805
        %2807 = vrot.lane.b32.xlu0 %v2778, 112
        %v2808 = vpop.permute.xlu0 %2807
        %v2809 = vmul.f32 %v2804, %v981
        %v2810 = vmul.f32 %v2806, %v986
        %v2811 = vmul.f32 %v2808, %v991
        %v2812 = vadd.f32 %v2800, %v2809
        %v2813 = vadd.f32 %v2801, %v2810
        %v2814 = vadd.f32 %v2802, %v2811
        %v2815 = vmul.f32 %v2779, %v1002
        %v2816 = vmul.f32 %v2780, %v1007
        %v2817 = vmul.f32 %v2781, %v1012
        %v2818 = vadd.f32 %v2812, %v2815
        %v2819 = vadd.f32 %v2813, %v2816
        %v2820 = vadd.f32 %v2814, %v2817
        %2821 = vrot.lane.b32.xlu0 %v2779, 120
        %v2822 = vpop.permute.xlu0 %2821
        %2823 = vrot.lane.b32.xlu0 %v2780, 120
        %v2824 = vpop.permute.xlu0 %2823
        %2825 = vrot.lane.b32.xlu0 %v2781, 120
        %v2826 = vpop.permute.xlu0 %2825
        %v2827 = vmul.f32 %v2822, %v1029
        %v2828 = vmul.f32 %v2824, %v1034
        %v2829 = vmul.f32 %v2826, %v1039
        %v2830 = vadd.f32 %v2818, %v2827
        %v2831 = vadd.f32 %v2819, %v2828
        %v2832 = vadd.f32 %v2820, %v2829
        %2833 = vrot.lane.b32.xlu0 %v2779, 112
        %v2834 = vpop.permute.xlu0 %2833
        %2835 = vrot.lane.b32.xlu0 %v2780, 112
        %v2836 = vpop.permute.xlu0 %2835
        %2837 = vrot.lane.b32.xlu0 %v2781, 112
        %v2838 = vpop.permute.xlu0 %2837
        %v2839 = vmul.f32 %v2834, %v1056
        %v2840 = vmul.f32 %v2836, %v1061
        %v2841 = vmul.f32 %v2838, %v1066
        %v2842 = vadd.f32 %v2830, %v2839
        %v2843 = vadd.f32 %v2831, %v2840
        %v2844 = vadd.f32 %v2832, %v2841
        %v2845 = vmul.f32 %v2782, %v1077
        %v2846 = vmul.f32 %v2783, %v1082
        %v2847 = vmul.f32 %v2784, %v1087
        %v2848 = vadd.f32 %v2842, %v2845
        %v2849 = vadd.f32 %v2843, %v2846
        %v2850 = vadd.f32 %v2844, %v2847
        %2851 = vrot.lane.b32.xlu0 %v2782, 120
        %v2852 = vpop.permute.xlu0 %2851
        %2853 = vrot.lane.b32.xlu0 %v2783, 120
        %v2854 = vpop.permute.xlu0 %2853
        %2855 = vrot.lane.b32.xlu0 %v2784, 120
        %v2856 = vpop.permute.xlu0 %2855
        %v2857 = vmul.f32 %v2852, %v1104
        %v2858 = vmul.f32 %v2854, %v1109
        %v2859 = vmul.f32 %v2856, %v1114
        %v2860 = vadd.f32 %v2848, %v2857
        %v2861 = vadd.f32 %v2849, %v2858
        %v2862 = vadd.f32 %v2850, %v2859
        %2863 = vrot.lane.b32.xlu0 %v2782, 112
        %v2864 = vpop.permute.xlu0 %2863
        %2865 = vrot.lane.b32.xlu0 %v2783, 112
        %v2866 = vpop.permute.xlu0 %2865
        %2867 = vrot.lane.b32.xlu0 %v2784, 112
        %v2868 = vpop.permute.xlu0 %2867
        %v2869 = vmul.f32 %v2864, %v1131
        %v2870 = vmul.f32 %v2866, %v1136
        %v2871 = vmul.f32 %v2868, %v1141
        %v2872 = vadd.f32 %v2860, %v2869
        %v2873 = vadd.f32 %v2861, %v2870
        %v2874 = vadd.f32 %v2862, %v2871
        %v2875 = vmul.f32 %v2872, %v909
        %v2876 = vmul.f32 %v2873, %v909
        %v2877 = vmul.f32 %v2874, %v909
        %v2878 = vadd.f32 %v2875, 0.0
        %v2879 = vadd.f32 %v2876, 0.0
        %v2880 = vadd.f32 %v2877, 0.0
        %2881 = vrot.lane.b32.xlu0 %v2776, 127
        %v2882 = vpop.permute.xlu0 %2881
        %2883 = vrot.lane.b32.xlu0 %v2777, 127
        %v2884 = vpop.permute.xlu0 %2883
        %2885 = vrot.lane.b32.xlu0 %v2778, 127
        %v2886 = vpop.permute.xlu0 %2885
        %v2887 = vmul.f32 %v2882, %v1164
        %v2888 = vmul.f32 %v2884, %v1169
        %v2889 = vmul.f32 %v2886, %v1174
        %v2890 = vadd.f32 %v2887, 0.0
        %v2891 = vadd.f32 %v2888, 0.0
        %v2892 = vadd.f32 %v2889, 0.0
        %2893 = vrot.lane.b32.xlu0 %v2776, 119
        %v2894 = vpop.permute.xlu0 %2893
        %2895 = vrot.lane.b32.xlu0 %v2777, 119
        %v2896 = vpop.permute.xlu0 %2895
        %2897 = vrot.lane.b32.xlu0 %v2778, 119
        %v2898 = vpop.permute.xlu0 %2897
        %v2899 = vmul.f32 %v2894, %v1191
        %v2900 = vmul.f32 %v2896, %v1196
        %v2901 = vmul.f32 %v2898, %v1201
        %v2902 = vadd.f32 %v2890, %v2899
        %v2903 = vadd.f32 %v2891, %v2900
        %v2904 = vadd.f32 %v2892, %v2901
        %2905 = vrot.lane.b32.xlu0 %v2776, 111
        %v2906 = vpop.permute.xlu0 %2905
        %2907 = vrot.lane.b32.xlu0 %v2777, 111
        %v2908 = vpop.permute.xlu0 %2907
        %2909 = vrot.lane.b32.xlu0 %v2778, 111
        %v2910 = vpop.permute.xlu0 %2909
        %v2911 = vmul.f32 %v2906, %v1218
        %v2912 = vmul.f32 %v2908, %v1223
        %v2913 = vmul.f32 %v2910, %v1228
        %v2914 = vadd.f32 %v2902, %v2911
        %v2915 = vadd.f32 %v2903, %v2912
        %v2916 = vadd.f32 %v2904, %v2913
        %2917 = vrot.lane.b32.xlu0 %v2779, 127
        %v2918 = vpop.permute.xlu0 %2917
        %2919 = vrot.lane.b32.xlu0 %v2780, 127
        %v2920 = vpop.permute.xlu0 %2919
        %2921 = vrot.lane.b32.xlu0 %v2781, 127
        %v2922 = vpop.permute.xlu0 %2921
        %v2923 = vmul.f32 %v2918, %v1245
        %v2924 = vmul.f32 %v2920, %v1250
        %v2925 = vmul.f32 %v2922, %v1255
        %v2926 = vadd.f32 %v2914, %v2923
        %v2927 = vadd.f32 %v2915, %v2924
        %v2928 = vadd.f32 %v2916, %v2925
        %2929 = vrot.lane.b32.xlu0 %v2779, 119
        %v2930 = vpop.permute.xlu0 %2929
        %2931 = vrot.lane.b32.xlu0 %v2780, 119
        %v2932 = vpop.permute.xlu0 %2931
        %2933 = vrot.lane.b32.xlu0 %v2781, 119
        %v2934 = vpop.permute.xlu0 %2933
        %v2935 = vmul.f32 %v2930, %v1272
        %v2936 = vmul.f32 %v2932, %v1277
        %v2937 = vmul.f32 %v2934, %v1282
        %v2938 = vadd.f32 %v2926, %v2935
        %v2939 = vadd.f32 %v2927, %v2936
        %v2940 = vadd.f32 %v2928, %v2937
        %2941 = vrot.lane.b32.xlu0 %v2779, 111
        %v2942 = vpop.permute.xlu0 %2941
        %2943 = vrot.lane.b32.xlu0 %v2780, 111
        %v2944 = vpop.permute.xlu0 %2943
        %2945 = vrot.lane.b32.xlu0 %v2781, 111
        %v2946 = vpop.permute.xlu0 %2945
        %v2947 = vmul.f32 %v2942, %v1299
        %v2948 = vmul.f32 %v2944, %v1304
        %v2949 = vmul.f32 %v2946, %v1309
        %v2950 = vadd.f32 %v2938, %v2947
        %v2951 = vadd.f32 %v2939, %v2948
        %v2952 = vadd.f32 %v2940, %v2949
        %2953 = vrot.lane.b32.xlu0 %v2782, 127
        %v2954 = vpop.permute.xlu0 %2953
        %2955 = vrot.lane.b32.xlu0 %v2783, 127
        %v2956 = vpop.permute.xlu0 %2955
        %2957 = vrot.lane.b32.xlu0 %v2784, 127
        %v2958 = vpop.permute.xlu0 %2957
        %v2959 = vmul.f32 %v2954, %v1326
        %v2960 = vmul.f32 %v2956, %v1331
        %v2961 = vmul.f32 %v2958, %v1336
        %v2962 = vadd.f32 %v2950, %v2959
        %v2963 = vadd.f32 %v2951, %v2960
        %v2964 = vadd.f32 %v2952, %v2961
        %2965 = vrot.lane.b32.xlu0 %v2782, 119
        %v2966 = vpop.permute.xlu0 %2965
        %2967 = vrot.lane.b32.xlu0 %v2783, 119
        %v2968 = vpop.permute.xlu0 %2967
        %2969 = vrot.lane.b32.xlu0 %v2784, 119
        %v2970 = vpop.permute.xlu0 %2969
        %v2971 = vmul.f32 %v2966, %v1353
        %v2972 = vmul.f32 %v2968, %v1358
        %v2973 = vmul.f32 %v2970, %v1363
        %v2974 = vadd.f32 %v2962, %v2971
        %v2975 = vadd.f32 %v2963, %v2972
        %v2976 = vadd.f32 %v2964, %v2973
        %2977 = vrot.lane.b32.xlu0 %v2782, 111
        %v2978 = vpop.permute.xlu0 %2977
        %2979 = vrot.lane.b32.xlu0 %v2783, 111
        %v2980 = vpop.permute.xlu0 %2979
        %2981 = vrot.lane.b32.xlu0 %v2784, 111
        %v2982 = vpop.permute.xlu0 %2981
        %v2983 = vmul.f32 %v2978, %v1380
        %v2984 = vmul.f32 %v2980, %v1385
        %v2985 = vmul.f32 %v2982, %v1390
        %v2986 = vadd.f32 %v2974, %v2983
        %v2987 = vadd.f32 %v2975, %v2984
        %v2988 = vadd.f32 %v2976, %v2985
        %v2989 = vadd.f32 %v2878, %v2986
        %v2990 = vadd.f32 %v2879, %v2987
        %v2991 = vadd.f32 %v2880, %v2988
        %2992 = vrot.lane.b32.xlu0 %v2776, 126
        %v2993 = vpop.permute.xlu0 %2992
        %2994 = vrot.lane.b32.xlu0 %v2777, 126
        %v2995 = vpop.permute.xlu0 %2994
        %2996 = vrot.lane.b32.xlu0 %v2778, 126
        %v2997 = vpop.permute.xlu0 %2996
        %v2998 = vmul.f32 %v2993, %v1410
        %v2999 = vmul.f32 %v2995, %v1415
        %v3000 = vmul.f32 %v2997, %v1420
        %v3001 = vadd.f32 %v2998, 0.0
        %v3002 = vadd.f32 %v2999, 0.0
        %v3003 = vadd.f32 %v3000, 0.0
        %3004 = vrot.lane.b32.xlu0 %v2776, 118
        %v3005 = vpop.permute.xlu0 %3004
        %3006 = vrot.lane.b32.xlu0 %v2777, 118
        %v3007 = vpop.permute.xlu0 %3006
        %3008 = vrot.lane.b32.xlu0 %v2778, 118
        %v3009 = vpop.permute.xlu0 %3008
        %v3010 = vmul.f32 %v3005, %v1437
        %v3011 = vmul.f32 %v3007, %v1442
        %v3012 = vmul.f32 %v3009, %v1447
        %v3013 = vadd.f32 %v3001, %v3010
        %v3014 = vadd.f32 %v3002, %v3011
        %v3015 = vadd.f32 %v3003, %v3012
        %3016 = vrot.lane.b32.xlu0 %v2776, 110
        %v3017 = vpop.permute.xlu0 %3016
        %3018 = vrot.lane.b32.xlu0 %v2777, 110
        %v3019 = vpop.permute.xlu0 %3018
        %3020 = vrot.lane.b32.xlu0 %v2778, 110
        %v3021 = vpop.permute.xlu0 %3020
        %v3022 = vmul.f32 %v3017, %v1464
        %v3023 = vmul.f32 %v3019, %v1469
        %v3024 = vmul.f32 %v3021, %v1474
        %v3025 = vadd.f32 %v3013, %v3022
        %v3026 = vadd.f32 %v3014, %v3023
        %v3027 = vadd.f32 %v3015, %v3024
        %3028 = vrot.lane.b32.xlu0 %v2779, 126
        %v3029 = vpop.permute.xlu0 %3028
        %3030 = vrot.lane.b32.xlu0 %v2780, 126
        %v3031 = vpop.permute.xlu0 %3030
        %3032 = vrot.lane.b32.xlu0 %v2781, 126
        %v3033 = vpop.permute.xlu0 %3032
        %v3034 = vmul.f32 %v3029, %v1491
        %v3035 = vmul.f32 %v3031, %v1496
        %v3036 = vmul.f32 %v3033, %v1501
        %v3037 = vadd.f32 %v3025, %v3034
        %v3038 = vadd.f32 %v3026, %v3035
        %v3039 = vadd.f32 %v3027, %v3036
        %3040 = vrot.lane.b32.xlu0 %v2779, 118
        %v3041 = vpop.permute.xlu0 %3040
        %3042 = vrot.lane.b32.xlu0 %v2780, 118
        %v3043 = vpop.permute.xlu0 %3042
        %3044 = vrot.lane.b32.xlu0 %v2781, 118
        %v3045 = vpop.permute.xlu0 %3044
        %v3046 = vmul.f32 %v3041, %v1518
        %v3047 = vmul.f32 %v3043, %v1523
        %v3048 = vmul.f32 %v3045, %v1528
        %v3049 = vadd.f32 %v3037, %v3046
        %v3050 = vadd.f32 %v3038, %v3047
        %v3051 = vadd.f32 %v3039, %v3048
        %3052 = vrot.lane.b32.xlu0 %v2779, 110
        %v3053 = vpop.permute.xlu0 %3052
        %3054 = vrot.lane.b32.xlu0 %v2780, 110
        %v3055 = vpop.permute.xlu0 %3054
        %3056 = vrot.lane.b32.xlu0 %v2781, 110
        %v3057 = vpop.permute.xlu0 %3056
        %v3058 = vmul.f32 %v3053, %v1545
        %v3059 = vmul.f32 %v3055, %v1550
        %v3060 = vmul.f32 %v3057, %v1555
        %v3061 = vadd.f32 %v3049, %v3058
        %v3062 = vadd.f32 %v3050, %v3059
        %v3063 = vadd.f32 %v3051, %v3060
        %3064 = vrot.lane.b32.xlu0 %v2782, 126
        %v3065 = vpop.permute.xlu0 %3064
        %3066 = vrot.lane.b32.xlu0 %v2783, 126
        %v3067 = vpop.permute.xlu0 %3066
        %3068 = vrot.lane.b32.xlu0 %v2784, 126
        %v3069 = vpop.permute.xlu0 %3068
        %v3070 = vmul.f32 %v3065, %v1572
        %v3071 = vmul.f32 %v3067, %v1577
        %v3072 = vmul.f32 %v3069, %v1582
        %v3073 = vadd.f32 %v3061, %v3070
        %v3074 = vadd.f32 %v3062, %v3071
        %v3075 = vadd.f32 %v3063, %v3072
        %3076 = vrot.lane.b32.xlu0 %v2782, 118
        %v3077 = vpop.permute.xlu0 %3076
        %3078 = vrot.lane.b32.xlu0 %v2783, 118
        %v3079 = vpop.permute.xlu0 %3078
        %3080 = vrot.lane.b32.xlu0 %v2784, 118
        %v3081 = vpop.permute.xlu0 %3080
        %v3082 = vmul.f32 %v3077, %v1599
        %v3083 = vmul.f32 %v3079, %v1604
        %v3084 = vmul.f32 %v3081, %v1609
        %v3085 = vadd.f32 %v3073, %v3082
        %v3086 = vadd.f32 %v3074, %v3083
        %v3087 = vadd.f32 %v3075, %v3084
        %3088 = vrot.lane.b32.xlu0 %v2782, 110
        %v3089 = vpop.permute.xlu0 %3088
        %3090 = vrot.lane.b32.xlu0 %v2783, 110
        %v3091 = vpop.permute.xlu0 %3090
        %3092 = vrot.lane.b32.xlu0 %v2784, 110
        %v3093 = vpop.permute.xlu0 %3092
        %v3094 = vmul.f32 %v3089, %v1626
        %v3095 = vmul.f32 %v3091, %v1631
        %v3096 = vmul.f32 %v3093, %v1636
        %v3097 = vadd.f32 %v3085, %v3094
        %v3098 = vadd.f32 %v3086, %v3095
        %v3099 = vadd.f32 %v3087, %v3096
        %v3100 = vmul.f32 %v3097, %v914
        %v3101 = vmul.f32 %v3098, %v914
        %v3102 = vmul.f32 %v3099, %v914
        %v3103 = vadd.f32 %v2989, %v3100
        %v3104 = vadd.f32 %v2990, %v3101
        %v3105 = vadd.f32 %v2991, %v3102
        %v3106 = vadd.f32 %v3103, %v1653
        %v3107 = vadd.f32 %v3104, %v1658
        %v3108 = vadd.f32 %v3105, %v1663
        %v3109 = vmax.f32 %v3106, 0.0
        %v3110 = vmax.f32 %v3107, 0.0
        %v3111 = vmax.f32 %v3108, 0.0
        %v3112 = vmin.f32 %v3109, 6.0
        %v3113 = vmin.f32 %v3110, 6.0
        %v3114 = vmin.f32 %v3111, 6.0
        %3115 = vst.msk [vmem:[#allocation3 + $0x10] sm:$0xff] %vm628, %v3112
        %3116 = vst.msk [vmem:[#allocation3 + $0x30] sm:$0xff] %vm628, %v3113
        %3117 = vst.msk [vmem:[#allocation3 + $0x50] sm:$0xff] %vm628, %v3114
        %v3118 = vsel %vm628, %v3112, 0.0
        %3119 = vadd.xlane.f32.xlu0 %v3118
        %v3120 = vpop.xlane.xlu0 %3119
        %v3121 = vsel %vm628, %v3113, 0.0
        %3122 = vadd.xlane.f32.xlu0 %v3121
        %v3123 = vpop.xlane.xlu0 %3122
        %v3124 = vsel %vm628, %v3114, 0.0
        %3125 = vadd.xlane.f32.xlu0 %v3124
        %v3126 = vpop.xlane.xlu0 %3125
        %v3127 = vadd.f32 %v2773, %v3120
        %v3128 = vadd.f32 %v2774, %v3123
        %v3129 = vadd.f32 %v2775, %v3126
        %v3130 = vld [vmem:[%s714] sm:$0xff]
        %v3131 = vld [vmem:[%s714 + $0x8] sm:$0xff]
        %v3132 = vld [vmem:[%s714 + $0x10] sm:$0xff]
        %v3133 = vld [vmem:[%s739] sm:$0xff]
        %v3134 = vld [vmem:[%s739 + $0x8] sm:$0xff]
        %v3135 = vld [vmem:[%s739 + $0x10] sm:$0xff]
        %v3136 = vld [vmem:[%s752] sm:$0xff]
        %v3137 = vld [vmem:[%s752 + $0x8] sm:$0xff]
        %v3138 = vld [vmem:[%s752 + $0x10] sm:$0xff]
        %v3139 = vmul.f32 %v3130, %v927
        %v3140 = vmul.f32 %v3131, %v932
        %v3141 = vmul.f32 %v3132, %v937
        %v3142 = vadd.f32 %v3139, 0.0
        %v3143 = vadd.f32 %v3140, 0.0
        %v3144 = vadd.f32 %v3141, 0.0
        %3145 = vrot.lane.b32.xlu0 %v3130, 120
        %v3146 = vpop.permute.xlu0 %3145
        %3147 = vrot.lane.b32.xlu0 %v3131, 120
        %v3148 = vpop.permute.xlu0 %3147
        %3149 = vrot.lane.b32.xlu0 %v3132, 120
        %v3150 = vpop.permute.xlu0 %3149
        %v3151 = vmul.f32 %v3146, %v954
        %v3152 = vmul.f32 %v3148, %v959
        %v3153 = vmul.f32 %v3150, %v964
        %v3154 = vadd.f32 %v3142, %v3151
        %v3155 = vadd.f32 %v3143, %v3152
        %v3156 = vadd.f32 %v3144, %v3153
        %3157 = vrot.lane.b32.xlu0 %v3130, 112
        %v3158 = vpop.permute.xlu0 %3157
        %3159 = vrot.lane.b32.xlu0 %v3131, 112
        %v3160 = vpop.permute.xlu0 %3159
        %3161 = vrot.lane.b32.xlu0 %v3132, 112
        %v3162 = vpop.permute.xlu0 %3161
        %v3163 = vmul.f32 %v3158, %v981
        %v3164 = vmul.f32 %v3160, %v986
        %v3165 = vmul.f32 %v3162, %v991
        %v3166 = vadd.f32 %v3154, %v3163
        %v3167 = vadd.f32 %v3155, %v3164
        %v3168 = vadd.f32 %v3156, %v3165
        %v3169 = vmul.f32 %v3133, %v1002
        %v3170 = vmul.f32 %v3134, %v1007
        %v3171 = vmul.f32 %v3135, %v1012
        %v3172 = vadd.f32 %v3166, %v3169
        %v3173 = vadd.f32 %v3167, %v3170
        %v3174 = vadd.f32 %v3168, %v3171
        %3175 = vrot.lane.b32.xlu0 %v3133, 120
        %v3176 = vpop.permute.xlu0 %3175
        %3177 = vrot.lane.b32.xlu0 %v3134, 120
        %v3178 = vpop.permute.xlu0 %3177
        %3179 = vrot.lane.b32.xlu0 %v3135, 120
        %v3180 = vpop.permute.xlu0 %3179
        %v3181 = vmul.f32 %v3176, %v1029
        %v3182 = vmul.f32 %v3178, %v1034
        %v3183 = vmul.f32 %v3180, %v1039
        %v3184 = vadd.f32 %v3172, %v3181
        %v3185 = vadd.f32 %v3173, %v3182
        %v3186 = vadd.f32 %v3174, %v3183
        %3187 = vrot.lane.b32.xlu0 %v3133, 112
        %v3188 = vpop.permute.xlu0 %3187
        %3189 = vrot.lane.b32.xlu0 %v3134, 112
        %v3190 = vpop.permute.xlu0 %3189
        %3191 = vrot.lane.b32.xlu0 %v3135, 112
        %v3192 = vpop.permute.xlu0 %3191
        %v3193 = vmul.f32 %v3188, %v1056
        %v3194 = vmul.f32 %v3190, %v1061
        %v3195 = vmul.f32 %v3192, %v1066
        %v3196 = vadd.f32 %v3184, %v3193
        %v3197 = vadd.f32 %v3185, %v3194
        %v3198 = vadd.f32 %v3186, %v3195
        %v3199 = vmul.f32 %v3136, %v1077
        %v3200 = vmul.f32 %v3137, %v1082
        %v3201 = vmul.f32 %v3138, %v1087
        %v3202 = vadd.f32 %v3196, %v3199
        %v3203 = vadd.f32 %v3197, %v3200
        %v3204 = vadd.f32 %v3198, %v3201
        %3205 = vrot.lane.b32.xlu0 %v3136, 120
        %v3206 = vpop.permute.xlu0 %3205
        %3207 = vrot.lane.b32.xlu0 %v3137, 120
        %v3208 = vpop.permute.xlu0 %3207
        %3209 = vrot.lane.b32.xlu0 %v3138, 120
        %v3210 = vpop.permute.xlu0 %3209
        %v3211 = vmul.f32 %v3206, %v1104
        %v3212 = vmul.f32 %v3208, %v1109
        %v3213 = vmul.f32 %v3210, %v1114
        %v3214 = vadd.f32 %v3202, %v3211
        %v3215 = vadd.f32 %v3203, %v3212
        %v3216 = vadd.f32 %v3204, %v3213
        %3217 = vrot.lane.b32.xlu0 %v3136, 112
        %v3218 = vpop.permute.xlu0 %3217
        %3219 = vrot.lane.b32.xlu0 %v3137, 112
        %v3220 = vpop.permute.xlu0 %3219
        %3221 = vrot.lane.b32.xlu0 %v3138, 112
        %v3222 = vpop.permute.xlu0 %3221
        %v3223 = vmul.f32 %v3218, %v1131
        %v3224 = vmul.f32 %v3220, %v1136
        %v3225 = vmul.f32 %v3222, %v1141
        %v3226 = vadd.f32 %v3214, %v3223
        %v3227 = vadd.f32 %v3215, %v3224
        %v3228 = vadd.f32 %v3216, %v3225
        %v3229 = vmul.f32 %v3226, %v909
        %v3230 = vmul.f32 %v3227, %v909
        %v3231 = vmul.f32 %v3228, %v909
        %v3232 = vadd.f32 %v3229, 0.0
        %v3233 = vadd.f32 %v3230, 0.0
        %v3234 = vadd.f32 %v3231, 0.0
        %3235 = vrot.lane.b32.xlu0 %v3130, 127
        %v3236 = vpop.permute.xlu0 %3235
        %3237 = vrot.lane.b32.xlu0 %v3131, 127
        %v3238 = vpop.permute.xlu0 %3237
        %3239 = vrot.lane.b32.xlu0 %v3132, 127
        %v3240 = vpop.permute.xlu0 %3239
        %v3241 = vmul.f32 %v3236, %v1164
        %v3242 = vmul.f32 %v3238, %v1169
        %v3243 = vmul.f32 %v3240, %v1174
        %v3244 = vadd.f32 %v3241, 0.0
        %v3245 = vadd.f32 %v3242, 0.0
        %v3246 = vadd.f32 %v3243, 0.0
        %3247 = vrot.lane.b32.xlu0 %v3130, 119
        %v3248 = vpop.permute.xlu0 %3247
        %3249 = vrot.lane.b32.xlu0 %v3131, 119
        %v3250 = vpop.permute.xlu0 %3249
        %3251 = vrot.lane.b32.xlu0 %v3132, 119
        %v3252 = vpop.permute.xlu0 %3251
        %v3253 = vmul.f32 %v3248, %v1191
        %v3254 = vmul.f32 %v3250, %v1196
        %v3255 = vmul.f32 %v3252, %v1201
        %v3256 = vadd.f32 %v3244, %v3253
        %v3257 = vadd.f32 %v3245, %v3254
        %v3258 = vadd.f32 %v3246, %v3255
        %3259 = vrot.lane.b32.xlu0 %v3130, 111
        %v3260 = vpop.permute.xlu0 %3259
        %3261 = vrot.lane.b32.xlu0 %v3131, 111
        %v3262 = vpop.permute.xlu0 %3261
        %3263 = vrot.lane.b32.xlu0 %v3132, 111
        %v3264 = vpop.permute.xlu0 %3263
        %v3265 = vmul.f32 %v3260, %v1218
        %v3266 = vmul.f32 %v3262, %v1223
        %v3267 = vmul.f32 %v3264, %v1228
        %v3268 = vadd.f32 %v3256, %v3265
        %v3269 = vadd.f32 %v3257, %v3266
        %v3270 = vadd.f32 %v3258, %v3267
        %3271 = vrot.lane.b32.xlu0 %v3133, 127
        %v3272 = vpop.permute.xlu0 %3271
        %3273 = vrot.lane.b32.xlu0 %v3134, 127
        %v3274 = vpop.permute.xlu0 %3273
        %3275 = vrot.lane.b32.xlu0 %v3135, 127
        %v3276 = vpop.permute.xlu0 %3275
        %v3277 = vmul.f32 %v3272, %v1245
        %v3278 = vmul.f32 %v3274, %v1250
        %v3279 = vmul.f32 %v3276, %v1255
        %v3280 = vadd.f32 %v3268, %v3277
        %v3281 = vadd.f32 %v3269, %v3278
        %v3282 = vadd.f32 %v3270, %v3279
        %3283 = vrot.lane.b32.xlu0 %v3133, 119
        %v3284 = vpop.permute.xlu0 %3283
        %3285 = vrot.lane.b32.xlu0 %v3134, 119
        %v3286 = vpop.permute.xlu0 %3285
        %3287 = vrot.lane.b32.xlu0 %v3135, 119
        %v3288 = vpop.permute.xlu0 %3287
        %v3289 = vmul.f32 %v3284, %v1272
        %v3290 = vmul.f32 %v3286, %v1277
        %v3291 = vmul.f32 %v3288, %v1282
        %v3292 = vadd.f32 %v3280, %v3289
        %v3293 = vadd.f32 %v3281, %v3290
        %v3294 = vadd.f32 %v3282, %v3291
        %3295 = vrot.lane.b32.xlu0 %v3133, 111
        %v3296 = vpop.permute.xlu0 %3295
        %3297 = vrot.lane.b32.xlu0 %v3134, 111
        %v3298 = vpop.permute.xlu0 %3297
        %3299 = vrot.lane.b32.xlu0 %v3135, 111
        %v3300 = vpop.permute.xlu0 %3299
        %v3301 = vmul.f32 %v3296, %v1299
        %v3302 = vmul.f32 %v3298, %v1304
        %v3303 = vmul.f32 %v3300, %v1309
        %v3304 = vadd.f32 %v3292, %v3301
        %v3305 = vadd.f32 %v3293, %v3302
        %v3306 = vadd.f32 %v3294, %v3303
        %3307 = vrot.lane.b32.xlu0 %v3136, 127
        %v3308 = vpop.permute.xlu0 %3307
        %3309 = vrot.lane.b32.xlu0 %v3137, 127
        %v3310 = vpop.permute.xlu0 %3309
        %3311 = vrot.lane.b32.xlu0 %v3138, 127
        %v3312 = vpop.permute.xlu0 %3311
        %v3313 = vmul.f32 %v3308, %v1326
        %v3314 = vmul.f32 %v3310, %v1331
        %v3315 = vmul.f32 %v3312, %v1336
        %v3316 = vadd.f32 %v3304, %v3313
        %v3317 = vadd.f32 %v3305, %v3314
        %v3318 = vadd.f32 %v3306, %v3315
        %3319 = vrot.lane.b32.xlu0 %v3136, 119
        %v3320 = vpop.permute.xlu0 %3319
        %3321 = vrot.lane.b32.xlu0 %v3137, 119
        %v3322 = vpop.permute.xlu0 %3321
        %3323 = vrot.lane.b32.xlu0 %v3138, 119
        %v3324 = vpop.permute.xlu0 %3323
        %v3325 = vmul.f32 %v3320, %v1353
        %v3326 = vmul.f32 %v3322, %v1358
        %v3327 = vmul.f32 %v3324, %v1363
        %v3328 = vadd.f32 %v3316, %v3325
        %v3329 = vadd.f32 %v3317, %v3326
        %v3330 = vadd.f32 %v3318, %v3327
        %3331 = vrot.lane.b32.xlu0 %v3136, 111
        %v3332 = vpop.permute.xlu0 %3331
        %3333 = vrot.lane.b32.xlu0 %v3137, 111
        %v3334 = vpop.permute.xlu0 %3333
        %3335 = vrot.lane.b32.xlu0 %v3138, 111
        %v3336 = vpop.permute.xlu0 %3335
        %v3337 = vmul.f32 %v3332, %v1380
        %v3338 = vmul.f32 %v3334, %v1385
        %v3339 = vmul.f32 %v3336, %v1390
        %v3340 = vadd.f32 %v3328, %v3337
        %v3341 = vadd.f32 %v3329, %v3338
        %v3342 = vadd.f32 %v3330, %v3339
        %v3343 = vadd.f32 %v3232, %v3340
        %v3344 = vadd.f32 %v3233, %v3341
        %v3345 = vadd.f32 %v3234, %v3342
        %3346 = vrot.lane.b32.xlu0 %v3130, 126
        %v3347 = vpop.permute.xlu0 %3346
        %3348 = vrot.lane.b32.xlu0 %v3131, 126
        %v3349 = vpop.permute.xlu0 %3348
        %3350 = vrot.lane.b32.xlu0 %v3132, 126
        %v3351 = vpop.permute.xlu0 %3350
        %v3352 = vmul.f32 %v3347, %v1410
        %v3353 = vmul.f32 %v3349, %v1415
        %v3354 = vmul.f32 %v3351, %v1420
        %v3355 = vadd.f32 %v3352, 0.0
        %v3356 = vadd.f32 %v3353, 0.0
        %v3357 = vadd.f32 %v3354, 0.0
        %3358 = vrot.lane.b32.xlu0 %v3130, 118
        %v3359 = vpop.permute.xlu0 %3358
        %3360 = vrot.lane.b32.xlu0 %v3131, 118
        %v3361 = vpop.permute.xlu0 %3360
        %3362 = vrot.lane.b32.xlu0 %v3132, 118
        %v3363 = vpop.permute.xlu0 %3362
        %v3364 = vmul.f32 %v3359, %v1437
        %v3365 = vmul.f32 %v3361, %v1442
        %v3366 = vmul.f32 %v3363, %v1447
        %v3367 = vadd.f32 %v3355, %v3364
        %v3368 = vadd.f32 %v3356, %v3365
        %v3369 = vadd.f32 %v3357, %v3366
        %3370 = vrot.lane.b32.xlu0 %v3130, 110
        %v3371 = vpop.permute.xlu0 %3370
        %3372 = vrot.lane.b32.xlu0 %v3131, 110
        %v3373 = vpop.permute.xlu0 %3372
        %3374 = vrot.lane.b32.xlu0 %v3132, 110
        %v3375 = vpop.permute.xlu0 %3374
        %v3376 = vmul.f32 %v3371, %v1464
        %v3377 = vmul.f32 %v3373, %v1469
        %v3378 = vmul.f32 %v3375, %v1474
        %v3379 = vadd.f32 %v3367, %v3376
        %v3380 = vadd.f32 %v3368, %v3377
        %v3381 = vadd.f32 %v3369, %v3378
        %3382 = vrot.lane.b32.xlu0 %v3133, 126
        %v3383 = vpop.permute.xlu0 %3382
        %3384 = vrot.lane.b32.xlu0 %v3134, 126
        %v3385 = vpop.permute.xlu0 %3384
        %3386 = vrot.lane.b32.xlu0 %v3135, 126
        %v3387 = vpop.permute.xlu0 %3386
        %v3388 = vmul.f32 %v3383, %v1491
        %v3389 = vmul.f32 %v3385, %v1496
        %v3390 = vmul.f32 %v3387, %v1501
        %v3391 = vadd.f32 %v3379, %v3388
        %v3392 = vadd.f32 %v3380, %v3389
        %v3393 = vadd.f32 %v3381, %v3390
        %3394 = vrot.lane.b32.xlu0 %v3133, 118
        %v3395 = vpop.permute.xlu0 %3394
        %3396 = vrot.lane.b32.xlu0 %v3134, 118
        %v3397 = vpop.permute.xlu0 %3396
        %3398 = vrot.lane.b32.xlu0 %v3135, 118
        %v3399 = vpop.permute.xlu0 %3398
        %v3400 = vmul.f32 %v3395, %v1518
        %v3401 = vmul.f32 %v3397, %v1523
        %v3402 = vmul.f32 %v3399, %v1528
        %v3403 = vadd.f32 %v3391, %v3400
        %v3404 = vadd.f32 %v3392, %v3401
        %v3405 = vadd.f32 %v3393, %v3402
        %3406 = vrot.lane.b32.xlu0 %v3133, 110
        %v3407 = vpop.permute.xlu0 %3406
        %3408 = vrot.lane.b32.xlu0 %v3134, 110
        %v3409 = vpop.permute.xlu0 %3408
        %3410 = vrot.lane.b32.xlu0 %v3135, 110
        %v3411 = vpop.permute.xlu0 %3410
        %v3412 = vmul.f32 %v3407, %v1545
        %v3413 = vmul.f32 %v3409, %v1550
        %v3414 = vmul.f32 %v3411, %v1555
        %v3415 = vadd.f32 %v3403, %v3412
        %v3416 = vadd.f32 %v3404, %v3413
        %v3417 = vadd.f32 %v3405, %v3414
        %3418 = vrot.lane.b32.xlu0 %v3136, 126
        %v3419 = vpop.permute.xlu0 %3418
        %3420 = vrot.lane.b32.xlu0 %v3137, 126
        %v3421 = vpop.permute.xlu0 %3420
        %3422 = vrot.lane.b32.xlu0 %v3138, 126
        %v3423 = vpop.permute.xlu0 %3422
        %v3424 = vmul.f32 %v3419, %v1572
        %v3425 = vmul.f32 %v3421, %v1577
        %v3426 = vmul.f32 %v3423, %v1582
        %v3427 = vadd.f32 %v3415, %v3424
        %v3428 = vadd.f32 %v3416, %v3425
        %v3429 = vadd.f32 %v3417, %v3426
        %3430 = vrot.lane.b32.xlu0 %v3136, 118
        %v3431 = vpop.permute.xlu0 %3430
        %3432 = vrot.lane.b32.xlu0 %v3137, 118
        %v3433 = vpop.permute.xlu0 %3432
        %3434 = vrot.lane.b32.xlu0 %v3138, 118
        %v3435 = vpop.permute.xlu0 %3434
        %v3436 = vmul.f32 %v3431, %v1599
        %v3437 = vmul.f32 %v3433, %v1604
        %v3438 = vmul.f32 %v3435, %v1609
        %v3439 = vadd.f32 %v3427, %v3436
        %v3440 = vadd.f32 %v3428, %v3437
        %v3441 = vadd.f32 %v3429, %v3438
        %3442 = vrot.lane.b32.xlu0 %v3136, 110
        %v3443 = vpop.permute.xlu0 %3442
        %3444 = vrot.lane.b32.xlu0 %v3137, 110
        %v3445 = vpop.permute.xlu0 %3444
        %3446 = vrot.lane.b32.xlu0 %v3138, 110
        %v3447 = vpop.permute.xlu0 %3446
        %v3448 = vmul.f32 %v3443, %v1626
        %v3449 = vmul.f32 %v3445, %v1631
        %v3450 = vmul.f32 %v3447, %v1636
        %v3451 = vadd.f32 %v3439, %v3448
        %v3452 = vadd.f32 %v3440, %v3449
        %v3453 = vadd.f32 %v3441, %v3450
        %v3454 = vmul.f32 %v3451, %v914
        %v3455 = vmul.f32 %v3452, %v914
        %v3456 = vmul.f32 %v3453, %v914
        %v3457 = vadd.f32 %v3343, %v3454
        %v3458 = vadd.f32 %v3344, %v3455
        %v3459 = vadd.f32 %v3345, %v3456
        %v3460 = vadd.f32 %v3457, %v1653
        %v3461 = vadd.f32 %v3458, %v1658
        %v3462 = vadd.f32 %v3459, %v1663
        %v3463 = vmax.f32 %v3460, 0.0
        %v3464 = vmax.f32 %v3461, 0.0
        %v3465 = vmax.f32 %v3462, 0.0
        %v3466 = vmin.f32 %v3463, 6.0
        %v3467 = vmin.f32 %v3464, 6.0
        %v3468 = vmin.f32 %v3465, 6.0
        %3472 = vrot.lane.b32.xlu0 %v3466, 64
        %v3473 = vpop.permute.xlu0 %3472
        %3474 = vrot.lane.b32.xlu0 %v3467, 64
        %v3475 = vpop.permute.xlu0 %3474
        %3476 = vrot.lane.b32.xlu0 %v3468, 64
        %v3477 = vpop.permute.xlu0 %3476
        %3481 = vst.msk [vmem:[#allocation3 + $0x10] sm:$0xff] %vm2040, %v3473
        %3482 = vst.msk [vmem:[#allocation3 + $0x30] sm:$0xff] %vm2040, %v3475
        %3483 = vst.msk [vmem:[#allocation3 + $0x50] sm:$0xff] %vm2040, %v3477
        %v3484 = vsel %vm628, %v3466, 0.0
        %3485 = vadd.xlane.f32.xlu0 %v3484
        %v3486 = vpop.xlane.xlu0 %3485
        %v3487 = vsel %vm628, %v3467, 0.0
        %3488 = vadd.xlane.f32.xlu0 %v3487
        %v3489 = vpop.xlane.xlu0 %3488
        %v3490 = vsel %vm628, %v3468, 0.0
        %3491 = vadd.xlane.f32.xlu0 %v3490
        %v3492 = vpop.xlane.xlu0 %3491
        %v3493 = vadd.f32 %v3127, %v3486
        %v3494 = vadd.f32 %v3128, %v3489
        %v3495 = vadd.f32 %v3129, %v3492
        %v3496 = vld [vmem:[%s739] sm:$0xff]
        %v3497 = vld [vmem:[%s739 + $0x8] sm:$0xff]
        %v3498 = vld [vmem:[%s739 + $0x10] sm:$0xff]
        %v3499 = vld [vmem:[%s752] sm:$0xff]
        %v3500 = vld [vmem:[%s752 + $0x8] sm:$0xff]
        %v3501 = vld [vmem:[%s752 + $0x10] sm:$0xff]
        %v3502 = vld [vmem:[%s777] sm:$0xff]
        %v3503 = vld [vmem:[%s777 + $0x8] sm:$0xff]
        %v3504 = vld [vmem:[%s777 + $0x10] sm:$0xff]
        %v3505 = vmul.f32 %v3496, %v927
        %v3506 = vmul.f32 %v3497, %v932
        %v3507 = vmul.f32 %v3498, %v937
        %v3508 = vadd.f32 %v3505, 0.0
        %v3509 = vadd.f32 %v3506, 0.0
        %v3510 = vadd.f32 %v3507, 0.0
        %3511 = vrot.lane.b32.xlu0 %v3496, 120
        %v3512 = vpop.permute.xlu0 %3511
        %3513 = vrot.lane.b32.xlu0 %v3497, 120
        %v3514 = vpop.permute.xlu0 %3513
        %3515 = vrot.lane.b32.xlu0 %v3498, 120
        %v3516 = vpop.permute.xlu0 %3515
        %v3517 = vmul.f32 %v3512, %v954
        %v3518 = vmul.f32 %v3514, %v959
        %v3519 = vmul.f32 %v3516, %v964
        %v3520 = vadd.f32 %v3508, %v3517
        %v3521 = vadd.f32 %v3509, %v3518
        %v3522 = vadd.f32 %v3510, %v3519
        %3523 = vrot.lane.b32.xlu0 %v3496, 112
        %v3524 = vpop.permute.xlu0 %3523
        %3525 = vrot.lane.b32.xlu0 %v3497, 112
        %v3526 = vpop.permute.xlu0 %3525
        %3527 = vrot.lane.b32.xlu0 %v3498, 112
        %v3528 = vpop.permute.xlu0 %3527
        %v3529 = vmul.f32 %v3524, %v981
        %v3530 = vmul.f32 %v3526, %v986
        %v3531 = vmul.f32 %v3528, %v991
        %v3532 = vadd.f32 %v3520, %v3529
        %v3533 = vadd.f32 %v3521, %v3530
        %v3534 = vadd.f32 %v3522, %v3531
        %v3535 = vmul.f32 %v3499, %v1002
        %v3536 = vmul.f32 %v3500, %v1007
        %v3537 = vmul.f32 %v3501, %v1012
        %v3538 = vadd.f32 %v3532, %v3535
        %v3539 = vadd.f32 %v3533, %v3536
        %v3540 = vadd.f32 %v3534, %v3537
        %3541 = vrot.lane.b32.xlu0 %v3499, 120
        %v3542 = vpop.permute.xlu0 %3541
        %3543 = vrot.lane.b32.xlu0 %v3500, 120
        %v3544 = vpop.permute.xlu0 %3543
        %3545 = vrot.lane.b32.xlu0 %v3501, 120
        %v3546 = vpop.permute.xlu0 %3545
        %v3547 = vmul.f32 %v3542, %v1029
        %v3548 = vmul.f32 %v3544, %v1034
        %v3549 = vmul.f32 %v3546, %v1039
        %v3550 = vadd.f32 %v3538, %v3547
        %v3551 = vadd.f32 %v3539, %v3548
        %v3552 = vadd.f32 %v3540, %v3549
        %3553 = vrot.lane.b32.xlu0 %v3499, 112
        %v3554 = vpop.permute.xlu0 %3553
        %3555 = vrot.lane.b32.xlu0 %v3500, 112
        %v3556 = vpop.permute.xlu0 %3555
        %3557 = vrot.lane.b32.xlu0 %v3501, 112
        %v3558 = vpop.permute.xlu0 %3557
        %v3559 = vmul.f32 %v3554, %v1056
        %v3560 = vmul.f32 %v3556, %v1061
        %v3561 = vmul.f32 %v3558, %v1066
        %v3562 = vadd.f32 %v3550, %v3559
        %v3563 = vadd.f32 %v3551, %v3560
        %v3564 = vadd.f32 %v3552, %v3561
        %v3565 = vmul.f32 %v3502, %v1077
        %v3566 = vmul.f32 %v3503, %v1082
        %v3567 = vmul.f32 %v3504, %v1087
        %v3568 = vadd.f32 %v3562, %v3565
        %v3569 = vadd.f32 %v3563, %v3566
        %v3570 = vadd.f32 %v3564, %v3567
        %3571 = vrot.lane.b32.xlu0 %v3502, 120
        %v3572 = vpop.permute.xlu0 %3571
        %3573 = vrot.lane.b32.xlu0 %v3503, 120
        %v3574 = vpop.permute.xlu0 %3573
        %3575 = vrot.lane.b32.xlu0 %v3504, 120
        %v3576 = vpop.permute.xlu0 %3575
        %v3577 = vmul.f32 %v3572, %v1104
        %v3578 = vmul.f32 %v3574, %v1109
        %v3579 = vmul.f32 %v3576, %v1114
        %v3580 = vadd.f32 %v3568, %v3577
        %v3581 = vadd.f32 %v3569, %v3578
        %v3582 = vadd.f32 %v3570, %v3579
        %3583 = vrot.lane.b32.xlu0 %v3502, 112
        %v3584 = vpop.permute.xlu0 %3583
        %3585 = vrot.lane.b32.xlu0 %v3503, 112
        %v3586 = vpop.permute.xlu0 %3585
        %3587 = vrot.lane.b32.xlu0 %v3504, 112
        %v3588 = vpop.permute.xlu0 %3587
        %v3589 = vmul.f32 %v3584, %v1131
        %v3590 = vmul.f32 %v3586, %v1136
        %v3591 = vmul.f32 %v3588, %v1141
        %v3592 = vadd.f32 %v3580, %v3589
        %v3593 = vadd.f32 %v3581, %v3590
        %v3594 = vadd.f32 %v3582, %v3591
        %v3595 = vmul.f32 %v3592, %v909
        %v3596 = vmul.f32 %v3593, %v909
        %v3597 = vmul.f32 %v3594, %v909
        %v3598 = vadd.f32 %v3595, 0.0
        %v3599 = vadd.f32 %v3596, 0.0
        %v3600 = vadd.f32 %v3597, 0.0
        %3601 = vrot.lane.b32.xlu0 %v3496, 127
        %v3602 = vpop.permute.xlu0 %3601
        %3603 = vrot.lane.b32.xlu0 %v3497, 127
        %v3604 = vpop.permute.xlu0 %3603
        %3605 = vrot.lane.b32.xlu0 %v3498, 127
        %v3606 = vpop.permute.xlu0 %3605
        %v3607 = vmul.f32 %v3602, %v1164
        %v3608 = vmul.f32 %v3604, %v1169
        %v3609 = vmul.f32 %v3606, %v1174
        %v3610 = vadd.f32 %v3607, 0.0
        %v3611 = vadd.f32 %v3608, 0.0
        %v3612 = vadd.f32 %v3609, 0.0
        %3613 = vrot.lane.b32.xlu0 %v3496, 119
        %v3614 = vpop.permute.xlu0 %3613
        %3615 = vrot.lane.b32.xlu0 %v3497, 119
        %v3616 = vpop.permute.xlu0 %3615
        %3617 = vrot.lane.b32.xlu0 %v3498, 119
        %v3618 = vpop.permute.xlu0 %3617
        %v3619 = vmul.f32 %v3614, %v1191
        %v3620 = vmul.f32 %v3616, %v1196
        %v3621 = vmul.f32 %v3618, %v1201
        %v3622 = vadd.f32 %v3610, %v3619
        %v3623 = vadd.f32 %v3611, %v3620
        %v3624 = vadd.f32 %v3612, %v3621
        %3625 = vrot.lane.b32.xlu0 %v3496, 111
        %v3626 = vpop.permute.xlu0 %3625
        %3627 = vrot.lane.b32.xlu0 %v3497, 111
        %v3628 = vpop.permute.xlu0 %3627
        %3629 = vrot.lane.b32.xlu0 %v3498, 111
        %v3630 = vpop.permute.xlu0 %3629
        %v3631 = vmul.f32 %v3626, %v1218
        %v3632 = vmul.f32 %v3628, %v1223
        %v3633 = vmul.f32 %v3630, %v1228
        %v3634 = vadd.f32 %v3622, %v3631
        %v3635 = vadd.f32 %v3623, %v3632
        %v3636 = vadd.f32 %v3624, %v3633
        %3637 = vrot.lane.b32.xlu0 %v3499, 127
        %v3638 = vpop.permute.xlu0 %3637
        %3639 = vrot.lane.b32.xlu0 %v3500, 127
        %v3640 = vpop.permute.xlu0 %3639
        %3641 = vrot.lane.b32.xlu0 %v3501, 127
        %v3642 = vpop.permute.xlu0 %3641
        %v3643 = vmul.f32 %v3638, %v1245
        %v3644 = vmul.f32 %v3640, %v1250
        %v3645 = vmul.f32 %v3642, %v1255
        %v3646 = vadd.f32 %v3634, %v3643
        %v3647 = vadd.f32 %v3635, %v3644
        %v3648 = vadd.f32 %v3636, %v3645
        %3649 = vrot.lane.b32.xlu0 %v3499, 119
        %v3650 = vpop.permute.xlu0 %3649
        %3651 = vrot.lane.b32.xlu0 %v3500, 119
        %v3652 = vpop.permute.xlu0 %3651
        %3653 = vrot.lane.b32.xlu0 %v3501, 119
        %v3654 = vpop.permute.xlu0 %3653
        %v3655 = vmul.f32 %v3650, %v1272
        %v3656 = vmul.f32 %v3652, %v1277
        %v3657 = vmul.f32 %v3654, %v1282
        %v3658 = vadd.f32 %v3646, %v3655
        %v3659 = vadd.f32 %v3647, %v3656
        %v3660 = vadd.f32 %v3648, %v3657
        %3661 = vrot.lane.b32.xlu0 %v3499, 111
        %v3662 = vpop.permute.xlu0 %3661
        %3663 = vrot.lane.b32.xlu0 %v3500, 111
        %v3664 = vpop.permute.xlu0 %3663
        %3665 = vrot.lane.b32.xlu0 %v3501, 111
        %v3666 = vpop.permute.xlu0 %3665
        %v3667 = vmul.f32 %v3662, %v1299
        %v3668 = vmul.f32 %v3664, %v1304
        %v3669 = vmul.f32 %v3666, %v1309
        %v3670 = vadd.f32 %v3658, %v3667
        %v3671 = vadd.f32 %v3659, %v3668
        %v3672 = vadd.f32 %v3660, %v3669
        %3673 = vrot.lane.b32.xlu0 %v3502, 127
        %v3674 = vpop.permute.xlu0 %3673
        %3675 = vrot.lane.b32.xlu0 %v3503, 127
        %v3676 = vpop.permute.xlu0 %3675
        %3677 = vrot.lane.b32.xlu0 %v3504, 127
        %v3678 = vpop.permute.xlu0 %3677
        %v3679 = vmul.f32 %v3674, %v1326
        %v3680 = vmul.f32 %v3676, %v1331
        %v3681 = vmul.f32 %v3678, %v1336
        %v3682 = vadd.f32 %v3670, %v3679
        %v3683 = vadd.f32 %v3671, %v3680
        %v3684 = vadd.f32 %v3672, %v3681
        %3685 = vrot.lane.b32.xlu0 %v3502, 119
        %v3686 = vpop.permute.xlu0 %3685
        %3687 = vrot.lane.b32.xlu0 %v3503, 119
        %v3688 = vpop.permute.xlu0 %3687
        %3689 = vrot.lane.b32.xlu0 %v3504, 119
        %v3690 = vpop.permute.xlu0 %3689
        %v3691 = vmul.f32 %v3686, %v1353
        %v3692 = vmul.f32 %v3688, %v1358
        %v3693 = vmul.f32 %v3690, %v1363
        %v3694 = vadd.f32 %v3682, %v3691
        %v3695 = vadd.f32 %v3683, %v3692
        %v3696 = vadd.f32 %v3684, %v3693
        %3697 = vrot.lane.b32.xlu0 %v3502, 111
        %v3698 = vpop.permute.xlu0 %3697
        %3699 = vrot.lane.b32.xlu0 %v3503, 111
        %v3700 = vpop.permute.xlu0 %3699
        %3701 = vrot.lane.b32.xlu0 %v3504, 111
        %v3702 = vpop.permute.xlu0 %3701
        %v3703 = vmul.f32 %v3698, %v1380
        %v3704 = vmul.f32 %v3700, %v1385
        %v3705 = vmul.f32 %v3702, %v1390
        %v3706 = vadd.f32 %v3694, %v3703
        %v3707 = vadd.f32 %v3695, %v3704
        %v3708 = vadd.f32 %v3696, %v3705
        %v3709 = vadd.f32 %v3598, %v3706
        %v3710 = vadd.f32 %v3599, %v3707
        %v3711 = vadd.f32 %v3600, %v3708
        %3712 = vrot.lane.b32.xlu0 %v3496, 126
        %v3713 = vpop.permute.xlu0 %3712
        %3714 = vrot.lane.b32.xlu0 %v3497, 126
        %v3715 = vpop.permute.xlu0 %3714
        %3716 = vrot.lane.b32.xlu0 %v3498, 126
        %v3717 = vpop.permute.xlu0 %3716
        %v3718 = vmul.f32 %v3713, %v1410
        %v3719 = vmul.f32 %v3715, %v1415
        %v3720 = vmul.f32 %v3717, %v1420
        %v3721 = vadd.f32 %v3718, 0.0
        %v3722 = vadd.f32 %v3719, 0.0
        %v3723 = vadd.f32 %v3720, 0.0
        %3724 = vrot.lane.b32.xlu0 %v3496, 118
        %v3725 = vpop.permute.xlu0 %3724
        %3726 = vrot.lane.b32.xlu0 %v3497, 118
        %v3727 = vpop.permute.xlu0 %3726
        %3728 = vrot.lane.b32.xlu0 %v3498, 118
        %v3729 = vpop.permute.xlu0 %3728
        %v3730 = vmul.f32 %v3725, %v1437
        %v3731 = vmul.f32 %v3727, %v1442
        %v3732 = vmul.f32 %v3729, %v1447
        %v3733 = vadd.f32 %v3721, %v3730
        %v3734 = vadd.f32 %v3722, %v3731
        %v3735 = vadd.f32 %v3723, %v3732
        %3736 = vrot.lane.b32.xlu0 %v3496, 110
        %v3737 = vpop.permute.xlu0 %3736
        %3738 = vrot.lane.b32.xlu0 %v3497, 110
        %v3739 = vpop.permute.xlu0 %3738
        %3740 = vrot.lane.b32.xlu0 %v3498, 110
        %v3741 = vpop.permute.xlu0 %3740
        %v3742 = vmul.f32 %v3737, %v1464
        %v3743 = vmul.f32 %v3739, %v1469
        %v3744 = vmul.f32 %v3741, %v1474
        %v3745 = vadd.f32 %v3733, %v3742
        %v3746 = vadd.f32 %v3734, %v3743
        %v3747 = vadd.f32 %v3735, %v3744
        %3748 = vrot.lane.b32.xlu0 %v3499, 126
        %v3749 = vpop.permute.xlu0 %3748
        %3750 = vrot.lane.b32.xlu0 %v3500, 126
        %v3751 = vpop.permute.xlu0 %3750
        %3752 = vrot.lane.b32.xlu0 %v3501, 126
        %v3753 = vpop.permute.xlu0 %3752
        %v3754 = vmul.f32 %v3749, %v1491
        %v3755 = vmul.f32 %v3751, %v1496
        %v3756 = vmul.f32 %v3753, %v1501
        %v3757 = vadd.f32 %v3745, %v3754
        %v3758 = vadd.f32 %v3746, %v3755
        %v3759 = vadd.f32 %v3747, %v3756
        %3760 = vrot.lane.b32.xlu0 %v3499, 118
        %v3761 = vpop.permute.xlu0 %3760
        %3762 = vrot.lane.b32.xlu0 %v3500, 118
        %v3763 = vpop.permute.xlu0 %3762
        %3764 = vrot.lane.b32.xlu0 %v3501, 118
        %v3765 = vpop.permute.xlu0 %3764
        %v3766 = vmul.f32 %v3761, %v1518
        %v3767 = vmul.f32 %v3763, %v1523
        %v3768 = vmul.f32 %v3765, %v1528
        %v3769 = vadd.f32 %v3757, %v3766
        %v3770 = vadd.f32 %v3758, %v3767
        %v3771 = vadd.f32 %v3759, %v3768
        %3772 = vrot.lane.b32.xlu0 %v3499, 110
        %v3773 = vpop.permute.xlu0 %3772
        %3774 = vrot.lane.b32.xlu0 %v3500, 110
        %v3775 = vpop.permute.xlu0 %3774
        %3776 = vrot.lane.b32.xlu0 %v3501, 110
        %v3777 = vpop.permute.xlu0 %3776
        %v3778 = vmul.f32 %v3773, %v1545
        %v3779 = vmul.f32 %v3775, %v1550
        %v3780 = vmul.f32 %v3777, %v1555
        %v3781 = vadd.f32 %v3769, %v3778
        %v3782 = vadd.f32 %v3770, %v3779
        %v3783 = vadd.f32 %v3771, %v3780
        %3784 = vrot.lane.b32.xlu0 %v3502, 126
        %v3785 = vpop.permute.xlu0 %3784
        %3786 = vrot.lane.b32.xlu0 %v3503, 126
        %v3787 = vpop.permute.xlu0 %3786
        %3788 = vrot.lane.b32.xlu0 %v3504, 126
        %v3789 = vpop.permute.xlu0 %3788
        %v3790 = vmul.f32 %v3785, %v1572
        %v3791 = vmul.f32 %v3787, %v1577
        %v3792 = vmul.f32 %v3789, %v1582
        %v3793 = vadd.f32 %v3781, %v3790
        %v3794 = vadd.f32 %v3782, %v3791
        %v3795 = vadd.f32 %v3783, %v3792
        %3796 = vrot.lane.b32.xlu0 %v3502, 118
        %v3797 = vpop.permute.xlu0 %3796
        %3798 = vrot.lane.b32.xlu0 %v3503, 118
        %v3799 = vpop.permute.xlu0 %3798
        %3800 = vrot.lane.b32.xlu0 %v3504, 118
        %v3801 = vpop.permute.xlu0 %3800
        %v3802 = vmul.f32 %v3797, %v1599
        %v3803 = vmul.f32 %v3799, %v1604
        %v3804 = vmul.f32 %v3801, %v1609
        %v3805 = vadd.f32 %v3793, %v3802
        %v3806 = vadd.f32 %v3794, %v3803
        %v3807 = vadd.f32 %v3795, %v3804
        %3808 = vrot.lane.b32.xlu0 %v3502, 110
        %v3809 = vpop.permute.xlu0 %3808
        %3810 = vrot.lane.b32.xlu0 %v3503, 110
        %v3811 = vpop.permute.xlu0 %3810
        %3812 = vrot.lane.b32.xlu0 %v3504, 110
        %v3813 = vpop.permute.xlu0 %3812
        %v3814 = vmul.f32 %v3809, %v1626
        %v3815 = vmul.f32 %v3811, %v1631
        %v3816 = vmul.f32 %v3813, %v1636
        %v3817 = vadd.f32 %v3805, %v3814
        %v3818 = vadd.f32 %v3806, %v3815
        %v3819 = vadd.f32 %v3807, %v3816
        %v3820 = vmul.f32 %v3817, %v914
        %v3821 = vmul.f32 %v3818, %v914
        %v3822 = vmul.f32 %v3819, %v914
        %v3823 = vadd.f32 %v3709, %v3820
        %v3824 = vadd.f32 %v3710, %v3821
        %v3825 = vadd.f32 %v3711, %v3822
        %v3826 = vadd.f32 %v3823, %v1653
        %v3827 = vadd.f32 %v3824, %v1658
        %v3828 = vadd.f32 %v3825, %v1663
        %v3829 = vmax.f32 %v3826, 0.0
        %v3830 = vmax.f32 %v3827, 0.0
        %v3831 = vmax.f32 %v3828, 0.0
        %v3832 = vmin.f32 %v3829, 6.0
        %v3833 = vmin.f32 %v3830, 6.0
        %v3834 = vmin.f32 %v3831, 6.0
        %3835 = vst.msk [vmem:[#allocation3 + $0x18] sm:$0xff] %vm628, %v3832
        %3836 = vst.msk [vmem:[#allocation3 + $0x38] sm:$0xff] %vm628, %v3833
        %3837 = vst.msk [vmem:[#allocation3 + $0x58] sm:$0xff] %vm628, %v3834
        %v3838 = vsel %vm628, %v3832, 0.0
        %3839 = vadd.xlane.f32.xlu0 %v3838
        %v3840 = vpop.xlane.xlu0 %3839
        %v3841 = vsel %vm628, %v3833, 0.0
        %3842 = vadd.xlane.f32.xlu0 %v3841
        %v3843 = vpop.xlane.xlu0 %3842
        %v3844 = vsel %vm628, %v3834, 0.0
        %3845 = vadd.xlane.f32.xlu0 %v3844
        %v3846 = vpop.xlane.xlu0 %3845
        %v3847 = vadd.f32 %v3493, %v3840
        %v3848 = vadd.f32 %v3494, %v3843
        %v3849 = vadd.f32 %v3495, %v3846
        %v3850 = vld [vmem:[%s752] sm:$0xff]
        %v3851 = vld [vmem:[%s752 + $0x8] sm:$0xff]
        %v3852 = vld [vmem:[%s752 + $0x10] sm:$0xff]
        %v3853 = vld [vmem:[%s777] sm:$0xff]
        %v3854 = vld [vmem:[%s777 + $0x8] sm:$0xff]
        %v3855 = vld [vmem:[%s777 + $0x10] sm:$0xff]
        %v3856 = vld [vmem:[%s624] sm:$0xff]
        %v3857 = vld [vmem:[%s624 + $0x8] sm:$0xff]
        %v3858 = vld [vmem:[%s624 + $0x10] sm:$0xff]
        %v3859 = vmul.f32 %v3850, %v927
        %v3860 = vmul.f32 %v3851, %v932
        %v3861 = vmul.f32 %v3852, %v937
        %v3862 = vadd.f32 %v3859, 0.0
        %v3863 = vadd.f32 %v3860, 0.0
        %v3864 = vadd.f32 %v3861, 0.0
        %3865 = vrot.lane.b32.xlu0 %v3850, 120
        %v3866 = vpop.permute.xlu0 %3865
        %3867 = vrot.lane.b32.xlu0 %v3851, 120
        %v3868 = vpop.permute.xlu0 %3867
        %3869 = vrot.lane.b32.xlu0 %v3852, 120
        %v3870 = vpop.permute.xlu0 %3869
        %v3871 = vmul.f32 %v3866, %v954
        %v3872 = vmul.f32 %v3868, %v959
        %v3873 = vmul.f32 %v3870, %v964
        %v3874 = vadd.f32 %v3862, %v3871
        %v3875 = vadd.f32 %v3863, %v3872
        %v3876 = vadd.f32 %v3864, %v3873
        %3877 = vrot.lane.b32.xlu0 %v3850, 112
        %v3878 = vpop.permute.xlu0 %3877
        %3879 = vrot.lane.b32.xlu0 %v3851, 112
        %v3880 = vpop.permute.xlu0 %3879
        %3881 = vrot.lane.b32.xlu0 %v3852, 112
        %v3882 = vpop.permute.xlu0 %3881
        %v3883 = vmul.f32 %v3878, %v981
        %v3884 = vmul.f32 %v3880, %v986
        %v3885 = vmul.f32 %v3882, %v991
        %v3886 = vadd.f32 %v3874, %v3883
        %v3887 = vadd.f32 %v3875, %v3884
        %v3888 = vadd.f32 %v3876, %v3885
        %v3889 = vmul.f32 %v3853, %v1002
        %v3890 = vmul.f32 %v3854, %v1007
        %v3891 = vmul.f32 %v3855, %v1012
        %v3892 = vadd.f32 %v3886, %v3889
        %v3893 = vadd.f32 %v3887, %v3890
        %v3894 = vadd.f32 %v3888, %v3891
        %3895 = vrot.lane.b32.xlu0 %v3853, 120
        %v3896 = vpop.permute.xlu0 %3895
        %3897 = vrot.lane.b32.xlu0 %v3854, 120
        %v3898 = vpop.permute.xlu0 %3897
        %3899 = vrot.lane.b32.xlu0 %v3855, 120
        %v3900 = vpop.permute.xlu0 %3899
        %v3901 = vmul.f32 %v3896, %v1029
        %v3902 = vmul.f32 %v3898, %v1034
        %v3903 = vmul.f32 %v3900, %v1039
        %v3904 = vadd.f32 %v3892, %v3901
        %v3905 = vadd.f32 %v3893, %v3902
        %v3906 = vadd.f32 %v3894, %v3903
        %3907 = vrot.lane.b32.xlu0 %v3853, 112
        %v3908 = vpop.permute.xlu0 %3907
        %3909 = vrot.lane.b32.xlu0 %v3854, 112
        %v3910 = vpop.permute.xlu0 %3909
        %3911 = vrot.lane.b32.xlu0 %v3855, 112
        %v3912 = vpop.permute.xlu0 %3911
        %v3913 = vmul.f32 %v3908, %v1056
        %v3914 = vmul.f32 %v3910, %v1061
        %v3915 = vmul.f32 %v3912, %v1066
        %v3916 = vadd.f32 %v3904, %v3913
        %v3917 = vadd.f32 %v3905, %v3914
        %v3918 = vadd.f32 %v3906, %v3915
        %v3919 = vmul.f32 %v3856, %v1077
        %v3920 = vmul.f32 %v3857, %v1082
        %v3921 = vmul.f32 %v3858, %v1087
        %v3922 = vadd.f32 %v3916, %v3919
        %v3923 = vadd.f32 %v3917, %v3920
        %v3924 = vadd.f32 %v3918, %v3921
        %3925 = vrot.lane.b32.xlu0 %v3856, 120
        %v3926 = vpop.permute.xlu0 %3925
        %3927 = vrot.lane.b32.xlu0 %v3857, 120
        %v3928 = vpop.permute.xlu0 %3927
        %3929 = vrot.lane.b32.xlu0 %v3858, 120
        %v3930 = vpop.permute.xlu0 %3929
        %v3931 = vmul.f32 %v3926, %v1104
        %v3932 = vmul.f32 %v3928, %v1109
        %v3933 = vmul.f32 %v3930, %v1114
        %v3934 = vadd.f32 %v3922, %v3931
        %v3935 = vadd.f32 %v3923, %v3932
        %v3936 = vadd.f32 %v3924, %v3933
        %3937 = vrot.lane.b32.xlu0 %v3856, 112
        %v3938 = vpop.permute.xlu0 %3937
        %3939 = vrot.lane.b32.xlu0 %v3857, 112
        %v3940 = vpop.permute.xlu0 %3939
        %3941 = vrot.lane.b32.xlu0 %v3858, 112
        %v3942 = vpop.permute.xlu0 %3941
        %v3943 = vmul.f32 %v3938, %v1131
        %v3944 = vmul.f32 %v3940, %v1136
        %v3945 = vmul.f32 %v3942, %v1141
        %v3946 = vadd.f32 %v3934, %v3943
        %v3947 = vadd.f32 %v3935, %v3944
        %v3948 = vadd.f32 %v3936, %v3945
        %v3949 = vmul.f32 %v3946, %v909
        %v3950 = vmul.f32 %v3947, %v909
        %v3951 = vmul.f32 %v3948, %v909
        %v3952 = vadd.f32 %v3949, 0.0
        %v3953 = vadd.f32 %v3950, 0.0
        %v3954 = vadd.f32 %v3951, 0.0
        %3955 = vrot.lane.b32.xlu0 %v3850, 127
        %v3956 = vpop.permute.xlu0 %3955
        %3957 = vrot.lane.b32.xlu0 %v3851, 127
        %v3958 = vpop.permute.xlu0 %3957
        %3959 = vrot.lane.b32.xlu0 %v3852, 127
        %v3960 = vpop.permute.xlu0 %3959
        %v3961 = vmul.f32 %v3956, %v1164
        %v3962 = vmul.f32 %v3958, %v1169
        %v3963 = vmul.f32 %v3960, %v1174
        %v3964 = vadd.f32 %v3961, 0.0
        %v3965 = vadd.f32 %v3962, 0.0
        %v3966 = vadd.f32 %v3963, 0.0
        %3967 = vrot.lane.b32.xlu0 %v3850, 119
        %v3968 = vpop.permute.xlu0 %3967
        %3969 = vrot.lane.b32.xlu0 %v3851, 119
        %v3970 = vpop.permute.xlu0 %3969
        %3971 = vrot.lane.b32.xlu0 %v3852, 119
        %v3972 = vpop.permute.xlu0 %3971
        %v3973 = vmul.f32 %v3968, %v1191
        %v3974 = vmul.f32 %v3970, %v1196
        %v3975 = vmul.f32 %v3972, %v1201
        %v3976 = vadd.f32 %v3964, %v3973
        %v3977 = vadd.f32 %v3965, %v3974
        %v3978 = vadd.f32 %v3966, %v3975
        %3979 = vrot.lane.b32.xlu0 %v3850, 111
        %v3980 = vpop.permute.xlu0 %3979
        %3981 = vrot.lane.b32.xlu0 %v3851, 111
        %v3982 = vpop.permute.xlu0 %3981
        %3983 = vrot.lane.b32.xlu0 %v3852, 111
        %v3984 = vpop.permute.xlu0 %3983
        %v3985 = vmul.f32 %v3980, %v1218
        %v3986 = vmul.f32 %v3982, %v1223
        %v3987 = vmul.f32 %v3984, %v1228
        %v3988 = vadd.f32 %v3976, %v3985
        %v3989 = vadd.f32 %v3977, %v3986
        %v3990 = vadd.f32 %v3978, %v3987
        %3991 = vrot.lane.b32.xlu0 %v3853, 127
        %v3992 = vpop.permute.xlu0 %3991
        %3993 = vrot.lane.b32.xlu0 %v3854, 127
        %v3994 = vpop.permute.xlu0 %3993
        %3995 = vrot.lane.b32.xlu0 %v3855, 127
        %v3996 = vpop.permute.xlu0 %3995
        %v3997 = vmul.f32 %v3992, %v1245
        %v3998 = vmul.f32 %v3994, %v1250
        %v3999 = vmul.f32 %v3996, %v1255
        %v4000 = vadd.f32 %v3988, %v3997
        %v4001 = vadd.f32 %v3989, %v3998
        %v4002 = vadd.f32 %v3990, %v3999
        %4003 = vrot.lane.b32.xlu0 %v3853, 119
        %v4004 = vpop.permute.xlu0 %4003
        %4005 = vrot.lane.b32.xlu0 %v3854, 119
        %v4006 = vpop.permute.xlu0 %4005
        %4007 = vrot.lane.b32.xlu0 %v3855, 119
        %v4008 = vpop.permute.xlu0 %4007
        %v4009 = vmul.f32 %v4004, %v1272
        %v4010 = vmul.f32 %v4006, %v1277
        %v4011 = vmul.f32 %v4008, %v1282
        %v4012 = vadd.f32 %v4000, %v4009
        %v4013 = vadd.f32 %v4001, %v4010
        %v4014 = vadd.f32 %v4002, %v4011
        %4015 = vrot.lane.b32.xlu0 %v3853, 111
        %v4016 = vpop.permute.xlu0 %4015
        %4017 = vrot.lane.b32.xlu0 %v3854, 111
        %v4018 = vpop.permute.xlu0 %4017
        %4019 = vrot.lane.b32.xlu0 %v3855, 111
        %v4020 = vpop.permute.xlu0 %4019
        %v4021 = vmul.f32 %v4016, %v1299
        %v4022 = vmul.f32 %v4018, %v1304
        %v4023 = vmul.f32 %v4020, %v1309
        %v4024 = vadd.f32 %v4012, %v4021
        %v4025 = vadd.f32 %v4013, %v4022
        %v4026 = vadd.f32 %v4014, %v4023
        %4027 = vrot.lane.b32.xlu0 %v3856, 127
        %v4028 = vpop.permute.xlu0 %4027
        %4029 = vrot.lane.b32.xlu0 %v3857, 127
        %v4030 = vpop.permute.xlu0 %4029
        %4031 = vrot.lane.b32.xlu0 %v3858, 127
        %v4032 = vpop.permute.xlu0 %4031
        %v4033 = vmul.f32 %v4028, %v1326
        %v4034 = vmul.f32 %v4030, %v1331
        %v4035 = vmul.f32 %v4032, %v1336
        %v4036 = vadd.f32 %v4024, %v4033
        %v4037 = vadd.f32 %v4025, %v4034
        %v4038 = vadd.f32 %v4026, %v4035
        %4039 = vrot.lane.b32.xlu0 %v3856, 119
        %v4040 = vpop.permute.xlu0 %4039
        %4041 = vrot.lane.b32.xlu0 %v3857, 119
        %v4042 = vpop.permute.xlu0 %4041
        %4043 = vrot.lane.b32.xlu0 %v3858, 119
        %v4044 = vpop.permute.xlu0 %4043
        %v4045 = vmul.f32 %v4040, %v1353
        %v4046 = vmul.f32 %v4042, %v1358
        %v4047 = vmul.f32 %v4044, %v1363
        %v4048 = vadd.f32 %v4036, %v4045
        %v4049 = vadd.f32 %v4037, %v4046
        %v4050 = vadd.f32 %v4038, %v4047
        %4051 = vrot.lane.b32.xlu0 %v3856, 111
        %v4052 = vpop.permute.xlu0 %4051
        %4053 = vrot.lane.b32.xlu0 %v3857, 111
        %v4054 = vpop.permute.xlu0 %4053
        %4055 = vrot.lane.b32.xlu0 %v3858, 111
        %v4056 = vpop.permute.xlu0 %4055
        %v4057 = vmul.f32 %v4052, %v1380
        %v4058 = vmul.f32 %v4054, %v1385
        %v4059 = vmul.f32 %v4056, %v1390
        %v4060 = vadd.f32 %v4048, %v4057
        %v4061 = vadd.f32 %v4049, %v4058
        %v4062 = vadd.f32 %v4050, %v4059
        %v4063 = vadd.f32 %v3952, %v4060
        %v4064 = vadd.f32 %v3953, %v4061
        %v4065 = vadd.f32 %v3954, %v4062
        %4066 = vrot.lane.b32.xlu0 %v3850, 126
        %v4067 = vpop.permute.xlu0 %4066
        %4068 = vrot.lane.b32.xlu0 %v3851, 126
        %v4069 = vpop.permute.xlu0 %4068
        %4070 = vrot.lane.b32.xlu0 %v3852, 126
        %v4071 = vpop.permute.xlu0 %4070
        %v4072 = vmul.f32 %v4067, %v1410
        %v4073 = vmul.f32 %v4069, %v1415
        %v4074 = vmul.f32 %v4071, %v1420
        %v4075 = vadd.f32 %v4072, 0.0
        %v4076 = vadd.f32 %v4073, 0.0
        %v4077 = vadd.f32 %v4074, 0.0
        %4078 = vrot.lane.b32.xlu0 %v3850, 118
        %v4079 = vpop.permute.xlu0 %4078
        %4080 = vrot.lane.b32.xlu0 %v3851, 118
        %v4081 = vpop.permute.xlu0 %4080
        %4082 = vrot.lane.b32.xlu0 %v3852, 118
        %v4083 = vpop.permute.xlu0 %4082
        %v4084 = vmul.f32 %v4079, %v1437
        %v4085 = vmul.f32 %v4081, %v1442
        %v4086 = vmul.f32 %v4083, %v1447
        %v4087 = vadd.f32 %v4075, %v4084
        %v4088 = vadd.f32 %v4076, %v4085
        %v4089 = vadd.f32 %v4077, %v4086
        %4090 = vrot.lane.b32.xlu0 %v3850, 110
        %v4091 = vpop.permute.xlu0 %4090
        %4092 = vrot.lane.b32.xlu0 %v3851, 110
        %v4093 = vpop.permute.xlu0 %4092
        %4094 = vrot.lane.b32.xlu0 %v3852, 110
        %v4095 = vpop.permute.xlu0 %4094
        %v4096 = vmul.f32 %v4091, %v1464
        %v4097 = vmul.f32 %v4093, %v1469
        %v4098 = vmul.f32 %v4095, %v1474
        %v4099 = vadd.f32 %v4087, %v4096
        %v4100 = vadd.f32 %v4088, %v4097
        %v4101 = vadd.f32 %v4089, %v4098
        %4102 = vrot.lane.b32.xlu0 %v3853, 126
        %v4103 = vpop.permute.xlu0 %4102
        %4104 = vrot.lane.b32.xlu0 %v3854, 126
        %v4105 = vpop.permute.xlu0 %4104
        %4106 = vrot.lane.b32.xlu0 %v3855, 126
        %v4107 = vpop.permute.xlu0 %4106
        %v4108 = vmul.f32 %v4103, %v1491
        %v4109 = vmul.f32 %v4105, %v1496
        %v4110 = vmul.f32 %v4107, %v1501
        %v4111 = vadd.f32 %v4099, %v4108
        %v4112 = vadd.f32 %v4100, %v4109
        %v4113 = vadd.f32 %v4101, %v4110
        %4114 = vrot.lane.b32.xlu0 %v3853, 118
        %v4115 = vpop.permute.xlu0 %4114
        %4116 = vrot.lane.b32.xlu0 %v3854, 118
        %v4117 = vpop.permute.xlu0 %4116
        %4118 = vrot.lane.b32.xlu0 %v3855, 118
        %v4119 = vpop.permute.xlu0 %4118
        %v4120 = vmul.f32 %v4115, %v1518
        %v4121 = vmul.f32 %v4117, %v1523
        %v4122 = vmul.f32 %v4119, %v1528
        %v4123 = vadd.f32 %v4111, %v4120
        %v4124 = vadd.f32 %v4112, %v4121
        %v4125 = vadd.f32 %v4113, %v4122
        %4126 = vrot.lane.b32.xlu0 %v3853, 110
        %v4127 = vpop.permute.xlu0 %4126
        %4128 = vrot.lane.b32.xlu0 %v3854, 110
        %v4129 = vpop.permute.xlu0 %4128
        %4130 = vrot.lane.b32.xlu0 %v3855, 110
        %v4131 = vpop.permute.xlu0 %4130
        %v4132 = vmul.f32 %v4127, %v1545
        %v4133 = vmul.f32 %v4129, %v1550
        %v4134 = vmul.f32 %v4131, %v1555
        %v4135 = vadd.f32 %v4123, %v4132
        %v4136 = vadd.f32 %v4124, %v4133
        %v4137 = vadd.f32 %v4125, %v4134
        %4138 = vrot.lane.b32.xlu0 %v3856, 126
        %v4139 = vpop.permute.xlu0 %4138
        %4140 = vrot.lane.b32.xlu0 %v3857, 126
        %v4141 = vpop.permute.xlu0 %4140
        %4142 = vrot.lane.b32.xlu0 %v3858, 126
        %v4143 = vpop.permute.xlu0 %4142
        %v4144 = vmul.f32 %v4139, %v1572
        %v4145 = vmul.f32 %v4141, %v1577
        %v4146 = vmul.f32 %v4143, %v1582
        %v4147 = vadd.f32 %v4135, %v4144
        %v4148 = vadd.f32 %v4136, %v4145
        %v4149 = vadd.f32 %v4137, %v4146
        %4150 = vrot.lane.b32.xlu0 %v3856, 118
        %v4151 = vpop.permute.xlu0 %4150
        %4152 = vrot.lane.b32.xlu0 %v3857, 118
        %v4153 = vpop.permute.xlu0 %4152
        %4154 = vrot.lane.b32.xlu0 %v3858, 118
        %v4155 = vpop.permute.xlu0 %4154
        %v4156 = vmul.f32 %v4151, %v1599
        %v4157 = vmul.f32 %v4153, %v1604
        %v4158 = vmul.f32 %v4155, %v1609
        %v4159 = vadd.f32 %v4147, %v4156
        %v4160 = vadd.f32 %v4148, %v4157
        %v4161 = vadd.f32 %v4149, %v4158
        %4162 = vrot.lane.b32.xlu0 %v3856, 110
        %v4163 = vpop.permute.xlu0 %4162
        %4164 = vrot.lane.b32.xlu0 %v3857, 110
        %v4165 = vpop.permute.xlu0 %4164
        %4166 = vrot.lane.b32.xlu0 %v3858, 110
        %v4167 = vpop.permute.xlu0 %4166
        %v4168 = vmul.f32 %v4163, %v1626
        %v4169 = vmul.f32 %v4165, %v1631
        %v4170 = vmul.f32 %v4167, %v1636
        %v4171 = vadd.f32 %v4159, %v4168
        %v4172 = vadd.f32 %v4160, %v4169
        %v4173 = vadd.f32 %v4161, %v4170
        %v4174 = vmul.f32 %v4171, %v914
        %v4175 = vmul.f32 %v4172, %v914
        %v4176 = vmul.f32 %v4173, %v914
        %v4177 = vadd.f32 %v4063, %v4174
        %v4178 = vadd.f32 %v4064, %v4175
        %v4179 = vadd.f32 %v4065, %v4176
        %v4180 = vadd.f32 %v4177, %v1653
        %v4181 = vadd.f32 %v4178, %v1658
        %v4182 = vadd.f32 %v4179, %v1663
        %v4183 = vmax.f32 %v4180, 0.0
        %v4184 = vmax.f32 %v4181, 0.0
        %v4185 = vmax.f32 %v4182, 0.0
        %v4186 = vmin.f32 %v4183, 6.0
        %v4187 = vmin.f32 %v4184, 6.0
        %v4188 = vmin.f32 %v4185, 6.0
        %4192 = vrot.lane.b32.xlu0 %v4186, 64
        %v4193 = vpop.permute.xlu0 %4192
        %4194 = vrot.lane.b32.xlu0 %v4187, 64
        %v4195 = vpop.permute.xlu0 %4194
        %4196 = vrot.lane.b32.xlu0 %v4188, 64
        %v4197 = vpop.permute.xlu0 %4196
        %4201 = vst.msk [vmem:[#allocation3 + $0x18] sm:$0xff] %vm2040, %v4193
        %4202 = vst.msk [vmem:[#allocation3 + $0x38] sm:$0xff] %vm2040, %v4195
        %4203 = vst.msk [vmem:[#allocation3 + $0x58] sm:$0xff] %vm2040, %v4197
        %v4204 = vsel %vm628, %v4186, 0.0
        %4205 = vadd.xlane.f32.xlu0 %v4204
        %v4206 = vpop.xlane.xlu0 %4205
        %v4207 = vsel %vm628, %v4187, 0.0
        %4208 = vadd.xlane.f32.xlu0 %v4207
        %v4209 = vpop.xlane.xlu0 %4208
        %v4210 = vsel %vm628, %v4188, 0.0
        %4211 = vadd.xlane.f32.xlu0 %v4210
        %v4212 = vpop.xlane.xlu0 %4211
        %v4213 = vadd.f32 %v3847, %v4206
        %v4214 = vadd.f32 %v3848, %v4209
        %v4215 = vadd.f32 %v3849, %v4212
        %v4216 = vmul.f32 %v4213, 0.001953125
        %v4217 = vmul.f32 %v4214, 0.001953125
        %v4218 = vmul.f32 %v4215, 0.001953125
        %v4219 = vld [vmem:[%s5] sm:$0xff]
        %v4220 = vld [vmem:[%s5 + $0x8] sm:$0xff]
        %v4221 = vld [vmem:[%s5 + $0x10] sm:$0xff]
        %v4222 = vmul.f32 %v4219, %v4216
        %v4223 = vmul.f32 %v4220, %v4217
        %v4224 = vmul.f32 %v4221, %v4218
        %vm4225 = vcmask 48128
        %v4226 = vsel %vm4225, %v4222, 0.0
        %v4227 = vsel %vm4225, %v4223, 0.0
        %v4228 = vadd.f32 %v4226, %v4227
        %v4229 = vsel %vm4225, %v4224, 0.0
        %v4230 = vadd.f32 %v4228, %v4229
        %v4231 = vrot.slane %v4230, 4
        %v4232 = vadd.f32 %v4230, %v4231
        %v4233 = vrot.slane %v4232, 2
        %v4234 = vadd.f32 %v4232, %v4233
        %v4235 = vrot.slane %v4234, 1
        %v4236 = vadd.f32 %v4234, %v4235
        %v4237 = vld [vmem:[%s6] sm:$0x1]
        %v4238 = vadd.f32 %v4236, %v4237
        %v4239 = vmax.f32 %v4238, 0.0
        %v4240 = vld [vmem:[%s7] sm:$0xff]
        %v4241 = vld [vmem:[%s7 + $0x8] sm:$0xff]
        %v4242 = vld [vmem:[%s7 + $0x10] sm:$0xff]
        %v4243 = vlaneseq
        %v4244 = vshrl.u32 %v4243, 7
        %v4245 = vsub.s32 0, %v4244
        %v4246 = vrot.slane %v4239, %v4245
        %v4247 = vmul.f32 %v4240, %v4246
        %v4248 = vmul.f32 %v4241, %v4246
        %v4249 = vmul.f32 %v4242, %v4246
        %v4250 = vsel %vm4225, %v4247, 0.0
        %4251 = vadd.xlane.f32.xlu0 %v4250
        %v4252 = vpop.xlane.xlu0 %4251
        %v4253 = vsel %vm4225, %v4248, 0.0
        %4254 = vadd.xlane.f32.xlu0 %v4253
        %v4255 = vpop.xlane.xlu0 %4254
        %v4256 = vsel %vm4225, %v4249, 0.0
        %4257 = vadd.xlane.f32.xlu0 %v4256
        %v4258 = vpop.xlane.xlu0 %4257
        %v4259 = vld [vmem:[%s8] sm:$0xff]
        %v4260 = vld [vmem:[%s8 + $0x8] sm:$0xff]
        %v4261 = vld [vmem:[%s8 + $0x10] sm:$0xff]
        %v4262 = vadd.f32 %v4252, %v4259
        %v4263 = vadd.f32 %v4255, %v4260
        %v4264 = vadd.f32 %v4258, %v4261
        %v4265 = vxor.u32 %v4262, 2147483648
        %v4266 = vxor.u32 %v4263, 2147483648
        %v4267 = vxor.u32 %v4264, 2147483648
        %v4268 = vmul.f32 %v4265, 1.442695
        %v4269 = vpow.pop %v4268
        %v4270 = vmul.f32 %v4266, 1.442695
        %v4271 = vpow.pop %v4270
        %v4272 = vmul.f32 %v4267, 1.442695
        %v4273 = vpow.pop %v4272
        %v4274 = vadd.f32 %v4269, 1.0
        %v4275 = vadd.f32 %v4271, 1.0
        %v4276 = vadd.f32 %v4273, 1.0
        %v4277 = vrcp.pop %v4274
        %v4278 = vmul.f32 1.0, %v4277
        %v4279 = vrcp.pop %v4275
        %v4280 = vmul.f32 1.0, %v4279
        %v4281 = vrcp.pop %v4276
        %v4282 = vmul.f32 1.0, %v4281
        %v4283 = vld [vmem:[#allocation3] sm:$0xff]
        %v4284 = vld [vmem:[#allocation3 + $0x8] sm:$0xff]
        %v4285 = vld [vmem:[#allocation3 + $0x10] sm:$0xff]
        %v4286 = vld [vmem:[#allocation3 + $0x18] sm:$0xff]
        %v4287 = vld [vmem:[#allocation3 + $0x20] sm:$0xff]
        %v4288 = vld [vmem:[#allocation3 + $0x28] sm:$0xff]
        %v4289 = vld [vmem:[#allocation3 + $0x30] sm:$0xff]
        %v4290 = vld [vmem:[#allocation3 + $0x38] sm:$0xff]
        %v4291 = vld [vmem:[#allocation3 + $0x40] sm:$0xff]
        %v4292 = vld [vmem:[#allocation3 + $0x48] sm:$0xff]
        %v4293 = vld [vmem:[#allocation3 + $0x50] sm:$0xff]
        %v4294 = vld [vmem:[#allocation3 + $0x58] sm:$0xff]
        %4296 = vset.pattern.permute.xlu0 0
        %4297 = vperm.xlu0 %4296, %v4278
        %v4298 = vpop.permute.xlu0 %4297
        %4301 = vset.pattern.permute.xlu0 0
        %4302 = vperm.xlu0 %4301, %v4280
        %v4303 = vpop.permute.xlu0 %4302
        %4306 = vset.pattern.permute.xlu0 0
        %4307 = vperm.xlu0 %4306, %v4282
        %v4308 = vpop.permute.xlu0 %4307
        %v4310 = vmul.f32 %v4283, %v4298
        %v4311 = vmul.f32 %v4284, %v4298
        %v4312 = vmul.f32 %v4285, %v4298
        %v4313 = vmul.f32 %v4286, %v4298
        %v4314 = vmul.f32 %v4287, %v4303
        %v4315 = vmul.f32 %v4288, %v4303
        %v4316 = vmul.f32 %v4289, %v4303
        %v4317 = vmul.f32 %v4290, %v4303
        %v4318 = vmul.f32 %v4291, %v4308
        %v4319 = vmul.f32 %v4292, %v4308
        %v4320 = vmul.f32 %v4293, %v4308
        %v4321 = vmul.f32 %v4294, %v4308
        %v4322 = vld [vmem:[%s9] sm:$0xf]
        %v4323 = vld [vmem:[%s10] sm:$0xf]
        %4325 = vset.pattern.permute.xlu0 0
        %4326 = vperm.xlu0 %4325, %v4323
        %v4327 = vpop.permute.xlu0 %4326
        %vm4329 = vcmask 195584
        %v4331 = vsel %vm4329, %v4322, 0
        %4333 = vmatprep.subr.mxu0 %v4311
        %4334 = vmatpush1.msra.mxu0 %v4310
        %4335 = vmatprep.subr.mxu0 %v4315
        %4336 = vmatpush1.msra.mxu0 %v4314
        %4337 = vmatprep.subr.mxu0 %v4319
        %4338 = vmatpush1.msra.mxu0 %v4318
        %4339 = vmatprep.subr.mxu0 0.0
        %4340 = vmatpush1.msra.mxu0 0.0
        %4341 = vmatprep.subr.mxu0 0.0
        %4342 = vmatpush1.msra.mxu0 0.0
        %4343 = vmatprep.subr.mxu0 0.0
        %4344 = vmatpush1.msra.mxu0 0.0
        %4345 = vmatprep.subr.mxu0 0.0
        %4346 = vmatpush1.msra.mxu0 0.0
        %4347 = vmatprep.subr.mxu0 0.0
        %4348 = vmatpush1.msra.mxu0 0.0
        %4349 = vmatprep.subr.mxu0 0.0
        %4350 = vmatpush1.msra.mxu0 0.0
        %4351 = vmatprep.subr.mxu0 0.0
        %4352 = vmatpush1.msra.mxu0 0.0
        %4353 = vmatprep.subr.mxu0 0.0
        %4354 = vmatpush1.msra.mxu0 0.0
        %4355 = vmatprep.subr.mxu0 0.0
        %4356 = vmatpush1.msra.mxu0 0.0
        %4357 = vmatprep.subr.mxu0 0.0
        %4358 = vmatpush1.msra.mxu0 0.0
        %4359 = vmatprep.subr.mxu0 0.0
        %4360 = vmatpush1.msra.mxu0 0.0
        %4361 = vmatprep.subr.mxu0 0.0
        %4362 = vmatpush1.msra.mxu0 0.0
        %4363 = vmatprep.subr.mxu0 0.0
        %4364 = vmatpush1.msra.mxu0 0.0
        %4365 = vmatprep.subr.mxu0 0.0
        %4366 = vmatpush1.msra.mxu0 0.0
        %4367 = vmatprep.subr.mxu0 0.0
        %4368 = vmatpush1.msra.mxu0 0.0
        %4369 = vmatprep.subr.mxu0 0.0
        %4370 = vmatpush1.msra.mxu0 0.0
        %4371 = vmatprep.subr.mxu0 0.0
        %4372 = vmatpush1.msra.mxu0 0.0
        %4373 = vmatprep.subr.mxu0 0.0
        %4374 = vmatpush1.msra.mxu0 0.0
        %4375 = vmatprep.subr.mxu0 0.0
        %4376 = vmatpush1.msra.mxu0 0.0
        %4377 = vmatprep.subr.mxu0 0.0
        %4378 = vmatpush1.msra.mxu0 0.0
        %4379 = vmatprep.subr.mxu0 0.0
        %4380 = vmatpush1.msra.mxu0 0.0
        %4381 = vmatprep.subr.mxu0 0.0
        %4382 = vmatpush1.msra.mxu0 0.0
        %4383 = vmatprep.subr.mxu0 0.0
        %4384 = vmatpush1.msra.mxu0 0.0
        %4385 = vmatprep.subr.mxu0 0.0
        %4386 = vmatpush1.msra.mxu0 0.0
        %4387 = vmatprep.subr.mxu0 0.0
        %4388 = vmatpush1.msra.mxu0 0.0
        %4389 = vmatprep.subr.mxu0 0.0
        %4390 = vmatpush1.msra.mxu0 0.0
        %4391 = vmatprep.subr.mxu0 0.0
        %4392 = vmatpush1.msra.mxu0 0.0
        %4393 = vmatprep.subr.mxu0 0.0
        %4394 = vmatpush1.msra.mxu0 0.0
        %4395 = vmatprep.subr.mxu0 0.0
        %4396 = vmatpush1.msra.mxu0 0.0
        %4397 = vmatprep.mubr.f32.mxu0 0.0
        %4398 = vmatmul.mubr.f32.gmra.mrb[0].mxu0 %v4331
        %v4399 = vpop.f32.mrb[0].mxu0
        %v4400 = vadd.f32 %v4327, %v4399
        %v4401 = vpop.f32.mrb[0].mxu0
        %v4402 = vadd.f32 %v4327, %v4401
        %4403 = vdwg.mxu0
        %4404 = vmatprep.subr.mxu0 %v4313
        %4405 = vmatpush1.msra.mxu0 %v4312
        %4406 = vmatprep.subr.mxu0 %v4317
        %4407 = vmatpush1.msra.mxu0 %v4316
        %4408 = vmatprep.subr.mxu0 %v4321
        %4409 = vmatpush1.msra.mxu0 %v4320
        %4410 = vmatprep.subr.mxu0 0.0
        %4411 = vmatpush1.msra.mxu0 0.0
        %4412 = vmatprep.subr.mxu0 0.0
        %4413 = vmatpush1.msra.mxu0 0.0
        %4414 = vmatprep.subr.mxu0 0.0
        %4415 = vmatpush1.msra.mxu0 0.0
        %4416 = vmatprep.subr.mxu0 0.0
        %4417 = vmatpush1.msra.mxu0 0.0
        %4418 = vmatprep.subr.mxu0 0.0
        %4419 = vmatpush1.msra.mxu0 0.0
        %4420 = vmatprep.subr.mxu0 0.0
        %4421 = vmatpush1.msra.mxu0 0.0
        %4422 = vmatprep.subr.mxu0 0.0
        %4423 = vmatpush1.msra.mxu0 0.0
        %4424 = vmatprep.subr.mxu0 0.0
        %4425 = vmatpush1.msra.mxu0 0.0
        %4426 = vmatprep.subr.mxu0 0.0
        %4427 = vmatpush1.msra.mxu0 0.0
        %4428 = vmatprep.subr.mxu0 0.0
        %4429 = vmatpush1.msra.mxu0 0.0
        %4430 = vmatprep.subr.mxu0 0.0
        %4431 = vmatpush1.msra.mxu0 0.0
        %4432 = vmatprep.subr.mxu0 0.0
        %4433 = vmatpush1.msra.mxu0 0.0
        %4434 = vmatprep.subr.mxu0 0.0
        %4435 = vmatpush1.msra.mxu0 0.0
        %4436 = vmatprep.subr.mxu0 0.0
        %4437 = vmatpush1.msra.mxu0 0.0
        %4438 = vmatprep.subr.mxu0 0.0
        %4439 = vmatpush1.msra.mxu0 0.0
        %4440 = vmatprep.subr.mxu0 0.0
        %4441 = vmatpush1.msra.mxu0 0.0
        %4442 = vmatprep.subr.mxu0 0.0
        %4443 = vmatpush1.msra.mxu0 0.0
        %4444 = vmatprep.subr.mxu0 0.0
        %4445 = vmatpush1.msra.mxu0 0.0
        %4446 = vmatprep.subr.mxu0 0.0
        %4447 = vmatpush1.msra.mxu0 0.0
        %4448 = vmatprep.subr.mxu0 0.0
        %4449 = vmatpush1.msra.mxu0 0.0
        %4450 = vmatprep.subr.mxu0 0.0
        %4451 = vmatpush1.msra.mxu0 0.0
        %4452 = vmatprep.subr.mxu0 0.0
        %4453 = vmatpush1.msra.mxu0 0.0
        %4454 = vmatprep.subr.mxu0 0.0
        %4455 = vmatpush1.msra.mxu0 0.0
        %4456 = vmatprep.subr.mxu0 0.0
        %4457 = vmatpush1.msra.mxu0 0.0
        %4458 = vmatprep.subr.mxu0 0.0
        %4459 = vmatpush1.msra.mxu0 0.0
        %4460 = vmatprep.subr.mxu0 0.0
        %4461 = vmatpush1.msra.mxu0 0.0
        %4462 = vmatprep.subr.mxu0 0.0
        %4463 = vmatpush1.msra.mxu0 0.0
        %4464 = vmatprep.subr.mxu0 0.0
        %4465 = vmatpush1.msra.mxu0 0.0
        %4466 = vmatprep.subr.mxu0 0.0
        %4467 = vmatpush1.msra.mxu0 0.0
        %4468 = vmatprep.mubr.f32.mxu0 0.0
        %4469 = vmatmul.mubr.f32.gmra.mrb[0].mxu0 %v4331
        %v4470 = vpop.f32.mrb[0].mxu0
        %v4471 = vadd.f32 %v4327, %v4470
        %v4472 = vpop.f32.mrb[0].mxu0
        %v4473 = vadd.f32 %v4327, %v4472
        %4474 = vdwg.mxu0
        %v4477 = vadd.f32 %v4400, %v385
        %v4478 = vadd.f32 %v4402, %v410
        %v4479 = vadd.f32 %v4471, %v386
        %v4480 = vadd.f32 %v4473, %v411
        %v4485 = vcombine.low %v4477, %v4478
        %v4486 = vcombine.low %v4479, %v4480
        %4489 = vst [vmem:[%s379] sm:$0xff] %v4485
        %4490 = vst [vmem:[%s379 + $0x8] sm:$0xff] %v4486
        %s4491 = sand.u32 %s269, 1
        %s4492 = scalar_lea.sflag [#allocation5], %s4491
        %s4493 = sand.u32 %s269, 1
        %s4494 = smul.addr %s4493, 16
        %s4495 = scalar_lea.vmem [#allocation4], %s4494
        // Predicated region
        $region65: #{tpu_custom_call.1} parent=63 // pred_check
          %p4496 = pneg %p279
        $region66: #{tpu_custom_call.1} parent=63 // pred_check_branch
          %4498 = sbr.rel (%p4496) target = $region68
        $region67: #{tpu_custom_call.1} parent=63 // pred_region
          %s4500 = ssub.s32 256, 256
          %4501 = vsyncadd %s4492, %s4500
          %s4502 = smul.addr %s25, 4
          %s4503 = smul.addr %s4502, 64
          %s4504 = scalar_lea.hbm %s11, %s4503
          %s4506 = sshll.u32 %s4495, 4
          %s4507 = int_to_ptr.vmem [resolvable:$true] %s4506
          %4509 = dma.vmem_to_hbm [thread:$0]  %s4507, 256, %s4504, %s4492
        $region68: #{tpu_custom_call.1} parent=63 // pred_fallthru
          _
      $region64: #{tpu_custom_call.1} parent=5 // pred_fallthru
        _
      %p4510 = scmp.le.s32.totalorder 2, %s20
      // Predicated region
      $region69: #{tpu_custom_call.1} parent=5 // pred_check
        %p4511 = pneg %p4510
      $region70: #{tpu_custom_call.1} parent=5 // pred_check_branch
        %4513 = sbr.rel (%p4511) target = $region72
      $region71: #{tpu_custom_call.1} parent=5 // pred_region
        %s4514 = ssub.s32 %s20, 2
        // Predicated region
        $region73: #{tpu_custom_call.1} parent=71 // pred_check
          %p4515 = pneg %p285
        $region74: #{tpu_custom_call.1} parent=71 // pred_check_branch
          %4517 = sbr.rel (%p4515) target = $region76
        $region75: #{tpu_custom_call.1} parent=71 // pred_region
          %s4518 = sand.u32 %s270, 1
          %s4519 = scalar_lea.sflag [#allocation5], %s4518
          %s4520 = sand.u32 %s270, 1
          %s4521 = smul.addr %s4520, 16
          %s4522 = scalar_lea.vmem [#allocation4], %s4521
          %4523 = dma.done %s4519, 256
        $region76: #{tpu_custom_call.1} parent=71 // pred_fallthru
          _
      $region72: #{tpu_custom_call.1} parent=5 // pred_fallthru
        _
    $region6: #{tpu_custom_call.1} parent=1 // loop_footer
      %s24 = sadd.s32 1, %s20
    $region7: #{tpu_custom_call.1} parent=1 // loop_footer_branch
      %19 = sbr.rel target = $region3
    $region8: #{tpu_custom_call.1} parent=1 // loop_exit
      _
    %4524 = vsyncpa [#allocation5], 1
    %s4525 = scalar_lea.sflag [#allocation5], 1
    %4526 = vsyncpa %s4525, 1

</llo_original>
